<compile_context>
chip_gen: v6e
topology: v6e:2x2x1
jax: 0.10.0
libtpu: 0.0.40
codegen_flags: <defaults>
</compile_context>

<pallas_src>
import functools

import jax
import jax.numpy as jnp
from jax.experimental import pallas as pl
from jax.experimental.pallas import tpu as pltpu

EPS = 1e-5          # PyTorch BatchNorm default eps
LEAKY_SLOPE = 0.01  # PyTorch LeakyReLU default negative_slope


# --------------------------------------------------------------------------
# small in-kernel helpers
# --------------------------------------------------------------------------
def _layer1(x, w1):
    """in_ch -> 64 1x1 conv.  For tiny in_ch, run the contraction on the VPU as
    unrolled broadcast-FMAs (a 4-deep MXU contraction wastes ~97% of the MXU);
    larger in_ch falls back to a regular f32 matmul (layer 1 is never the
    bottleneck)."""
    cin = w1.shape[0]
    if cin <= 8:
        h = x[:, 0:1] * w1[0:1, :]
        for c in range(1, cin):
            h = h + x[:, c:c + 1] * w1[c:c + 1, :]
        return h
    return jnp.dot(x, w1, preferred_element_type=jnp.float32)


def _bn_relu(h, ss):
    """Apply a pre-computed per-channel affine BN (ss = [scale; shift]) + ReLU."""
    return jnp.maximum(h * ss[0:1, :] + ss[1:2, :], 0.0)


def _scale_shift(acc, gamma, beta, rows):
    """acc = [sum; sum_sq] over `rows` samples -> (scale, shift) with
    y = h*scale + shift  ==  (h - mean) * rsqrt(var + eps) * gamma + beta."""
    inv_r = 1.0 / rows
    mean = acc[0:1, :] * inv_r
    var = jnp.maximum(acc[1:2, :] * inv_r - mean * mean, 0.0)   # biased variance
    scale = gamma * jax.lax.rsqrt(var + EPS)
    shift = beta - mean * scale
    return scale, shift


# --------------------------------------------------------------------------
# pass 1: BN1 batch statistics
# --------------------------------------------------------------------------
def _stats1_kernel(x_ref, w1_ref, g1_ref, b1_ref, out_ref, acc_ref, *, rows):
    i = pl.program_id(0)

    @pl.when(i == 0)
    def _init():
        acc_ref[...] = jnp.zeros_like(acc_ref)

    h1 = _layer1(x_ref[...], w1_ref[...])                       # (tn, 64) f32
    acc_ref[0:1, :] += jnp.sum(h1, axis=0, keepdims=True)
    acc_ref[1:2, :] += jnp.sum(h1 * h1, axis=0, keepdims=True)

    @pl.when(i == pl.num_programs(0) - 1)
    def _fin():
        scale, shift = _scale_shift(acc_ref[...], g1_ref[...], b1_ref[...], rows)
        out_ref[0:1, :] = scale
        out_ref[1:2, :] = shift


# --------------------------------------------------------------------------
# pass 2: BN2 batch statistics
# --------------------------------------------------------------------------
def _stats2_kernel(x_ref, w1_ref, ss1_ref, w2_ref, g2_ref, b2_ref,
                   out_ref, acc_ref, *, rows):
    i = pl.program_id(0)

    @pl.when(i == 0)
    def _init():
        acc_ref[...] = jnp.zeros_like(acc_ref)

    a1 = _bn_relu(_layer1(x_ref[...], w1_ref[...]), ss1_ref[...])
    h2 = jnp.dot(a1.astype(jnp.bfloat16), w2_ref[...],
                 preferred_element_type=jnp.float32)            # (tn, 128) f32
    acc_ref[0:1, :] += jnp.sum(h2, axis=0, keepdims=True)
    acc_ref[1:2, :] += jnp.sum(h2 * h2, axis=0, keepdims=True)

    @pl.when(i == pl.num_programs(0) - 1)
    def _fin():
        scale, shift = _scale_shift(acc_ref[...], g2_ref[...], b2_ref[...], rows)
        out_ref[0:1, :] = scale
        out_ref[1:2, :] = shift


# --------------------------------------------------------------------------
# pass 3: BN3 batch statistics via the Gram-matrix trick.
#   h3 = a2 @ W3, so  mean(h3) = (sum(a2) @ W3)/R  and
#   E[h3_c^2] = W3[:,c]^T (a2^T a2) W3[:,c] / R  -- no 128->1024 matmul needed.
# --------------------------------------------------------------------------
def _stats3_kernel(x_ref, w1_ref, ss1_ref, w2_ref, ss2_ref, w3_ref,
                   g3_ref, b3_ref, out_ref, gram_ref, sa_ref, *, rows):
    i = pl.program_id(0)

    @pl.when(i == 0)
    def _init():
        gram_ref[...] = jnp.zeros_like(gram_ref)
        sa_ref[...] = jnp.zeros_like(sa_ref)

    a1 = _bn_relu(_layer1(x_ref[...], w1_ref[...]), ss1_ref[...])
    h2 = jnp.dot(a1.astype(jnp.bfloat16), w2_ref[...],
                 preferred_element_type=jnp.float32)
    a2 = _bn_relu(h2, ss2_ref[...])                             # (tn, 128) f32

    a2b = a2.astype(jnp.bfloat16)
    gram_ref[...] += jax.lax.dot_general(                       # a2^T @ a2
        a2b, a2b, (((0,), (0,)), ((), ())),
        preferred_element_type=jnp.float32)                     # (128, 128)
    sa_ref[...] += jnp.sum(a2, axis=0, keepdims=True)           # (1, 128)

    @pl.when(i == pl.num_programs(0) - 1)
    def _fin():
        inv_r = 1.0 / rows
        w3f = w3_ref[...].astype(jnp.float32)                   # (128, 1024)
        mean = jnp.dot(sa_ref[...], w3f,
                       preferred_element_type=jnp.float32) * inv_r      # (1,1024)
        ex2 = jnp.sum(w3f * jnp.dot(gram_ref[...], w3f,
                                    preferred_element_type=jnp.float32),
                      axis=0, keepdims=True) * inv_r                     # (1,1024)
        var = jnp.maximum(ex2 - mean * mean, 0.0)
        scale = g3_ref[...] * jax.lax.rsqrt(var + EPS)
        out_ref[0:1, :] = scale
        out_ref[1:2, :] = b3_ref[...] - mean * scale


# --------------------------------------------------------------------------
# pass 4: full conv stack + fused per-batch max pool (running accumulator)
# --------------------------------------------------------------------------
def _pool_kernel(x_ref, w1_ref, ss1_ref, w2_ref, ss2_ref, w3_ref, ss3_ref,
                 o_ref, acc_ref):
    j = pl.program_id(1)

    a1 = _bn_relu(_layer1(x_ref[...], w1_ref[...]), ss1_ref[...])
    h2 = jnp.dot(a1.astype(jnp.bfloat16), w2_ref[...],
                 preferred_element_type=jnp.float32)
    a2 = _bn_relu(h2, ss2_ref[...])
    h3 = jnp.dot(a2.astype(jnp.bfloat16), w3_ref[...],
                 preferred_element_type=jnp.float32)            # (tn, 1024)
    a3 = _bn_relu(h3, ss3_ref[...])
    tile_max = jnp.max(a3, axis=0, keepdims=True)               # (1, 1024)

    @pl.when(j == 0)
    def _init():
        acc_ref[...] = jnp.full(acc_ref.shape, -jnp.inf, acc_ref.dtype)

    acc_ref[...] = jnp.maximum(acc_ref[...], tile_max)

    @pl.when(j == pl.num_programs(1) - 1)
    def _fin():
        o_ref[0] = acc_ref[...]


# --------------------------------------------------------------------------
# F2 head: Linear + BN1d(train) + LeakyReLU (x2) + Linear (+identity, folded
# into the padded bias).  Tiny — whole-array, no grid.
# --------------------------------------------------------------------------
def _head_kernel(p_ref, fw1_ref, fb1_ref, fg1_ref, fbb1_ref,
                 fw2_ref, fb2_ref, fg2_ref, fbb2_ref,
                 fw3_ref, fb3_ref, o_ref):
    def bn_lrelu(f, gamma, beta):
        mean = jnp.mean(f, axis=0, keepdims=True)
        var = jnp.mean(jnp.square(f - mean), axis=0, keepdims=True)
        y = (f - mean) * jax.lax.rsqrt(var + EPS) * gamma + beta
        return jnp.where(y > 0, y, LEAKY_SLOPE * y)

    p = p_ref[...]                                              # (B, 1024) f32
    f = jnp.dot(p.astype(jnp.bfloat16), fw1_ref[...],
                preferred_element_type=jnp.float32) + fb1_ref[...]
    f = bn_lrelu(f, fg1_ref[...], fbb1_ref[...])
    f = jnp.dot(f.astype(jnp.bfloat16), fw2_ref[...],
                preferred_element_type=jnp.float32) + fb2_ref[...]
    f = bn_lrelu(f, fg2_ref[...], fbb2_ref[...])
    o_ref[...] = jnp.dot(f.astype(jnp.bfloat16), fw3_ref[...],
                         preferred_element_type=jnp.float32) + fb3_ref[...]


# --------------------------------------------------------------------------
# wrapper
# --------------------------------------------------------------------------
def _pick_row_tile(n_points, target=1024):
    """Largest row tile that (a) divides N so tiles never cross a batch
    boundary and (b) is a multiple of 8 (sublane tiling)."""
    # TODO(synk): pad the point dimension instead of asserting for N % 8 != 0.
    assert n_points % 8 == 0, "number of points N must be a multiple of 8"
    t = min(n_points, target)
    t -= t % 8
    while n_points % t != 0:
        t -= 8
    return t


def _vmem_limit_bytes():
    """Raise the scoped-VMEM limit above the 16/32 MiB defaults, leaving headroom."""
    try:
        cap = pltpu.get_tpu_info().vmem_capacity_bytes
    except Exception:
        cap = 64 * 1024 * 1024
    return int(min(cap - 8 * 1024 * 1024, 96 * 1024 * 1024))


def _const_spec(shape, grid_ndim):
    zeros = (0,) * len(shape)
    if grid_ndim == 1:
        return pl.BlockSpec(shape, lambda i: zeros)
    return pl.BlockSpec(shape, lambda b, j: zeros)


def make_params(in_ch, K=3, seed=0):
    """Deterministic synthetic parameters (shapes from the module __init__)."""
    keys = jax.random.split(jax.random.PRNGKey(seed), 10)

    def w(k, shape, scale):
        return scale * jax.random.normal(k, shape, dtype=jnp.float32)

    f32 = jnp.float32
    return dict(
        # F1 convs (1x1, bias=False) stored as (Cin, Cout) matmul weights
        w1=w(keys[0], (in_ch, 64), 0.10),
        g1=jnp.ones((1, 64), f32), b1=jnp.zeros((1, 64), f32),
        w2=w(keys[1], (64, 128), 0.10),
        g2=jnp.ones((1, 128), f32), b2=jnp.zeros((1, 128), f32),
        w3=w(keys[2], (128, 1024), 0.05),
        g3=jnp.ones((1, 1024), f32), b3=jnp.zeros((1, 1024), f32),
        # F2 linears (with bias) + BN1d
        fw1=w(keys[3], (1024, 512), 0.03), fb1=w(keys[4], (1, 512), 0.03),
        fg1=jnp.ones((1, 512), f32), fbb1=jnp.zeros((1, 512), f32),
        fw2=w(keys[5], (512, 256), 0.05), fb2=w(keys[6], (1, 256), 0.05),
        fg2=jnp.ones((1, 256), f32), fbb2=jnp.zeros((1, 256), f32),
        fw3=w(keys[7], (256, K * K), 0.05), fb3=w(keys[8], (1, K * K), 0.05),
    )


@functools.partial(jax.jit, static_argnames=("K",))
def transform_net_forward(x_nchw, params, K=3):
    """x_nchw: (B, in_ch, N, 1) float32, matching the PyTorch NCHW input."""
    B, C, N, W = x_nchw.shape
    # F2's Linear(1024, 512) after view(B, -1) implies the last spatial dim is 1.
    assert W == 1, "transform_net requires the last spatial dim to be 1"
    KK = K * K
    assert KK <= 128, "K*K must fit in one 128-lane slab"

    R = B * N
    tn = _pick_row_tile(N)         # ~1024-row tiles: good for v5e/v6e/v7x budgets
    nj = N // tn                   # row tiles per batch
    nt = R // tn                   # total row tiles
    rows = float(R)
    vlim = _vmem_limit_bytes()

    # Layout glue: NCHW (B, C, N, 1) -> (B*N, C).  x is tiny (in_ch channels),
    # so this one-time transpose is negligible next to the 1024-wide stage.
    x2d = jnp.transpose(x_nchw[..., 0], (0, 2, 1)).reshape(R, C)

    # Weights: layer-1 stays f32 (VPU path); MXU operands are cast to bf16 once.
    w1 = params["w1"]
    w2 = params["w2"].astype(jnp.bfloat16)
    w3 = params["w3"].astype(jnp.bfloat16)
    fw1 = params["fw1"].astype(jnp.bfloat16)
    fw2 = params["fw2"].astype(jnp.bfloat16)
    # Final linear padded to 128 lanes (lane-dense store); bias + identity folded.
    fw3p = (jnp.zeros((params["fw3"].shape[0], 128), jnp.float32)
            .at[:, :KK].set(params["fw3"]).astype(jnp.bfloat16))
    fb3p = (jnp.zeros((1, 128), jnp.float32)
            .at[:, :KK].set(params["fb3"]
                            + jnp.eye(K, dtype=jnp.float32).reshape(1, KK)))

    x_spec = pl.BlockSpec((tn, C), lambda i: (i, 0))
    cp_arb = pltpu.CompilerParams(dimension_semantics=("arbitrary",),
                                  vmem_limit_bytes=vlim)

    # ---- pass 1: BN1 scale/shift ----
    ss1 = pl.pallas_call(
        functools.partial(_stats1_kernel, rows=rows),
        out_shape=jax.ShapeDtypeStruct((2, 64), jnp.float32),
        grid=(nt,),
        in_specs=[x_spec, _const_spec((C, 64), 1),
                  _const_spec((1, 64), 1), _const_spec((1, 64), 1)],
        out_specs=_const_spec((2, 64), 1),
        scratch_shapes=[pltpu.VMEM((2, 64), jnp.float32)],
        compiler_params=cp_arb,
    )(x2d, w1, params["g1"], params["b1"])

    # ---- pass 2: BN2 scale/shift ----
    ss2 = pl.pallas_call(
        functools.partial(_stats2_kernel, rows=rows),
        out_shape=jax.ShapeDtypeStruct((2, 128), jnp.float32),
        grid=(nt,),
        in_specs=[x_spec, _const_spec((C, 64), 1), _const_spec((2, 64), 1),
                  _const_spec((64, 128), 1),
                  _const_spec((1, 128), 1), _const_spec((1, 128), 1)],
        out_specs=_const_spec((2, 128), 1),
        scratch_shapes=[pltpu.VMEM((2, 128), jnp.float32)],
        compiler_params=cp_arb,
    )(x2d, w1, ss1, w2, params["g2"], params["b2"])

    # ---- pass 3: BN3 scale/shift via Gram trick ----
    ss3 = pl.pallas_call(
        functools.partial(_stats3_kernel, rows=rows),
        out_shape=jax.ShapeDtypeStruct((2, 1024), jnp.float32),
        grid=(nt,),
        in_specs=[x_spec, _const_spec((C, 64), 1), _const_spec((2, 64), 1),
                  _const_spec((64, 128), 1), _const_spec((2, 128), 1),
                  _const_spec((128, 1024), 1),
                  _const_spec((1, 1024), 1), _const_spec((1, 1024), 1)],
        out_specs=_const_spec((2, 1024), 1),
        scratch_shapes=[pltpu.VMEM((128, 128), jnp.float32),
                        pltpu.VMEM((1, 128), jnp.float32)],
        compiler_params=cp_arb,
    )(x2d, w1, ss1, w2, ss2, w3, params["g3"], params["b3"])

    # ---- pass 4: conv path + per-batch max pool.  Batch axis is the megacore
    # 'parallel' axis; the per-batch row-tile axis carries the max accumulator.
    pooled = pl.pallas_call(
        _pool_kernel,
        out_shape=jax.ShapeDtypeStruct((B, 1, 1024), jnp.float32),
        grid=(B, nj),
        in_specs=[pl.BlockSpec((tn, C), lambda b, j: (b * nj + j, 0)),
                  _const_spec((C, 64), 2), _const_spec((2, 64), 2),
                  _const_spec((64, 128), 2), _const_spec((2, 128), 2),
                  _const_spec((128, 1024), 2), _const_spec((2, 1024), 2)],
        out_specs=pl.BlockSpec((1, 1, 1024), lambda b, j: (b, 0, 0)),
        scratch_shapes=[pltpu.VMEM((1, 1024), jnp.float32)],
        compiler_params=pltpu.CompilerParams(
            dimension_semantics=("parallel", "arbitrary"),
            vmem_limit_bytes=vlim),
    )(x2d, w1, ss1, w2, ss2, w3, ss3).reshape(B, 1024)

    # ---- F2 head: tiny, un-gridded, separate call (keeps its weights out of
    # the streaming loop's VMEM budget). ----
    vmem = pl.BlockSpec(memory_space=pltpu.MemorySpace.VMEM)
    head = pl.pallas_call(
        _head_kernel,
        out_shape=jax.ShapeDtypeStruct((B, 128), jnp.float32),
        in_specs=[vmem] * 11,
        out_specs=vmem,
        compiler_params=pltpu.CompilerParams(vmem_limit_bytes=vlim),
    )(pooled, fw1, params["fb1"], params["fg1"], params["fbb1"],
      fw2, params["fb2"], params["fg2"], params["fbb2"], fw3p, fb3p)

    return head[:, :KK].reshape(B, K, K)


if __name__ == "__main__":
    B, in_ch, N, K = 2, 4, 16, 3
    key = jax.random.PRNGKey(0)
    x = jax.random.normal(key, (B, in_ch, N, 1), dtype=jnp.float32)  # NCHW

    params = make_params(in_ch, K=K, seed=0)
    y = transform_net_forward(x, params, K=K)
    jax.block_until_ready(y)

    assert y.shape == (B, K, K)
    assert bool(jnp.all(jnp.isfinite(y)))
    print("KERNEL_OK")
</pallas_src>

<mosaic_0001>
module attributes {stable_mosaic.version = 11 : i64} {
  func.func @_stats1_kernel(%arg0: i32, %arg1: memref<16x4xf32, #tpu.memory_space<vmem>>, %arg2: memref<4x64xf32, #tpu.memory_space<vmem>>, %arg3: memref<1x64xf32, #tpu.memory_space<vmem>>, %arg4: memref<1x64xf32, #tpu.memory_space<vmem>>, %arg5: memref<2x64xf32, #tpu.memory_space<vmem>>, %arg6: memref<2x64xf32, #tpu.memory_space<vmem>>) attributes {dimension_semantics = [#tpu.dimension_semantics<arbitrary>], iteration_bounds = array<i64: 2>, scalar_prefetch = 0 : i64, scratch_operands = 1 : i64, tpu.core_type = #tpu.core_type<tc>, window_params = [{transform_indices = @transform_0, window_bounds = array<i64: 16, 4>}, {pipeline_mode = #tpu.pipeline_mode<synchronous>, transform_indices = @transform_1, window_bounds = array<i64: 4, 64>}, {pipeline_mode = #tpu.pipeline_mode<synchronous>, transform_indices = @transform_2, window_bounds = array<i64: 1, 64>}, {pipeline_mode = #tpu.pipeline_mode<synchronous>, transform_indices = @transform_3, window_bounds = array<i64: 1, 64>}, {pipeline_mode = #tpu.pipeline_mode<synchronous>, transform_indices = @transform_4, window_bounds = array<i64: 2, 64>}]} {
    %c0_i32 = arith.constant 0 : i32
    %0 = arith.cmpi eq, %arg0, %c0_i32 : i32
    %1 = arith.extui %0 : i1 to i32
    %c0_i32_0 = arith.constant 0 : i32
    %2 = arith.cmpi ne, %1, %c0_i32_0 : i32
    scf.if %2 {
      %cst_13 = arith.constant 0.000000e+00 : f32
      %42 = vector.broadcast %cst_13 : f32 to vector<2x64xf32>
      %c0_14 = arith.constant 0 : index
      %c0_15 = arith.constant 0 : index
      %43 = vector.load %arg6[%c0_14, %c0_15] : memref<2x64xf32, #tpu.memory_space<vmem>>, vector<2x64xf32>
      tpu.vector_store %arg6[%c0_14, %c0_15], %42 {strides = array<i32>} : memref<2x64xf32, #tpu.memory_space<vmem>>, vector<2x64xf32>,
    } else {
    }
    %c0 = arith.constant 0 : index
    %c0_1 = arith.constant 0 : index
    %3 = vector.load %arg1[%c0, %c0_1] : memref<16x4xf32, #tpu.memory_space<vmem>>, vector<16x4xf32>
    %c0_2 = arith.constant 0 : index
    %c0_3 = arith.constant 0 : index
    %4 = vector.load %arg2[%c0_2, %c0_3] : memref<4x64xf32, #tpu.memory_space<vmem>>, vector<4x64xf32>
    %5 = vector.extract_strided_slice %3 {offsets = [0, 0], sizes = [16, 1], strides = [1, 1]} : vector<16x4xf32> to vector<16x1xf32>
    %6 = vector.extract_strided_slice %4 {offsets = [0, 0], sizes = [1, 64], strides = [1, 1]} : vector<4x64xf32> to vector<1x64xf32>
    %7 = vector.broadcast %5 : vector<16x1xf32> to vector<16x64xf32>
    %8 = vector.broadcast %6 : vector<1x64xf32> to vector<16x64xf32>
    %9 = arith.mulf %7, %8 : vector<16x64xf32>
    %10 = vector.extract_strided_slice %3 {offsets = [0, 1], sizes = [16, 1], strides = [1, 1]} : vector<16x4xf32> to vector<16x1xf32>
    %11 = vector.extract_strided_slice %4 {offsets = [1, 0], sizes = [1, 64], strides = [1, 1]} : vector<4x64xf32> to vector<1x64xf32>
    %12 = vector.broadcast %10 : vector<16x1xf32> to vector<16x64xf32>
    %13 = vector.broadcast %11 : vector<1x64xf32> to vector<16x64xf32>
    %14 = arith.mulf %12, %13 : vector<16x64xf32>
    %15 = arith.addf %9, %14 : vector<16x64xf32>
    %16 = vector.extract_strided_slice %3 {offsets = [0, 2], sizes = [16, 1], strides = [1, 1]} : vector<16x4xf32> to vector<16x1xf32>
    %17 = vector.extract_strided_slice %4 {offsets = [2, 0], sizes = [1, 64], strides = [1, 1]} : vector<4x64xf32> to vector<1x64xf32>
    %18 = vector.broadcast %16 : vector<16x1xf32> to vector<16x64xf32>
    %19 = vector.broadcast %17 : vector<1x64xf32> to vector<16x64xf32>
    %20 = arith.mulf %18, %19 : vector<16x64xf32>
    %21 = arith.addf %15, %20 : vector<16x64xf32>
    %22 = vector.extract_strided_slice %3 {offsets = [0, 3], sizes = [16, 1], strides = [1, 1]} : vector<16x4xf32> to vector<16x1xf32>
    %23 = vector.extract_strided_slice %4 {offsets = [3, 0], sizes = [1, 64], strides = [1, 1]} : vector<4x64xf32> to vector<1x64xf32>
    %24 = vector.broadcast %22 : vector<16x1xf32> to vector<16x64xf32>
    %25 = vector.broadcast %23 : vector<1x64xf32> to vector<16x64xf32>
    %26 = arith.mulf %24, %25 : vector<16x64xf32>
    %27 = arith.addf %21, %26 : vector<16x64xf32>
    %c0_4 = arith.constant 0 : index
    %c0_5 = arith.constant 0 : index
    %28 = vector.load %arg6[%c0_4, %c0_5] : memref<2x64xf32, #tpu.memory_space<vmem>>, vector<1x64xf32>
    %cst = arith.constant dense<0.000000e+00> : vector<64xf32>
    %29 = vector.multi_reduction <add>, %27, %cst [0] : vector<16x64xf32> to vector<64xf32>
    %30 = vector.shape_cast %29 : vector<64xf32> to vector<1x64xf32>
    %31 = arith.addf %28, %30 : vector<1x64xf32>
    %c0_6 = arith.constant 0 : index
    %c0_7 = arith.constant 0 : index
    %32 = vector.load %arg6[%c0_6, %c0_7] : memref<2x64xf32, #tpu.memory_space<vmem>>, vector<1x64xf32>
    tpu.vector_store %arg6[%c0_6, %c0_7], %31 {strides = array<i32>} : memref<2x64xf32, #tpu.memory_space<vmem>>, vector<1x64xf32>,
    %c1 = arith.constant 1 : index
    %c0_8 = arith.constant 0 : index
    %33 = vector.load %arg6[%c1, %c0_8] : memref<2x64xf32, #tpu.memory_space<vmem>>, vector<1x64xf32>
    %34 = arith.mulf %27, %27 : vector<16x64xf32>
    %cst_9 = arith.constant dense<0.000000e+00> : vector<64xf32>
    %35 = vector.multi_reduction <add>, %34, %cst_9 [0] : vector<16x64xf32> to vector<64xf32>
    %36 = vector.shape_cast %35 : vector<64xf32> to vector<1x64xf32>
    %37 = arith.addf %33, %36 : vector<1x64xf32>
    %c1_10 = arith.constant 1 : index
    %c0_11 = arith.constant 0 : index
    %38 = vector.load %arg6[%c1_10, %c0_11] : memref<2x64xf32, #tpu.memory_space<vmem>>, vector<1x64xf32>
    tpu.vector_store %arg6[%c1_10, %c0_11], %37 {strides = array<i32>} : memref<2x64xf32, #tpu.memory_space<vmem>>, vector<1x64xf32>,
    %c1_i32 = arith.constant 1 : i32
    %39 = arith.cmpi eq, %arg0, %c1_i32 : i32
    %40 = arith.extui %39 : i1 to i32
    %c0_i32_12 = arith.constant 0 : i32
    %41 = arith.cmpi ne, %40, %c0_i32_12 : i32
    scf.if %41 {
      %c0_13 = arith.constant 0 : index
      %c0_14 = arith.constant 0 : index
      %42 = vector.load %arg6[%c0_13, %c0_14] : memref<2x64xf32, #tpu.memory_space<vmem>>, vector<2x64xf32>
      %c0_15 = arith.constant 0 : index
      %c0_16 = arith.constant 0 : index
      %43 = vector.load %arg3[%c0_15, %c0_16] : memref<1x64xf32, #tpu.memory_space<vmem>>, vector<1x64xf32>
      %c0_17 = arith.constant 0 : index
      %c0_18 = arith.constant 0 : index
      %44 = vector.load %arg4[%c0_17, %c0_18] : memref<1x64xf32, #tpu.memory_space<vmem>>, vector<1x64xf32>
      %45 = vector.extract_strided_slice %42 {offsets = [0, 0], sizes = [1, 64], strides = [1, 1]} : vector<2x64xf32> to vector<1x64xf32>
      %cst_19 = arith.constant 3.125000e-02 : f32
      %46 = vector.broadcast %cst_19 : f32 to vector<1x64xf32>
      %47 = arith.mulf %45, %46 : vector<1x64xf32>
      %48 = vector.extract_strided_slice %42 {offsets = [1, 0], sizes = [1, 64], strides = [1, 1]} : vector<2x64xf32> to vector<1x64xf32>
      %cst_20 = arith.constant 3.125000e-02 : f32
      %49 = vector.broadcast %cst_20 : f32 to vector<1x64xf32>
      %50 = arith.mulf %48, %49 : vector<1x64xf32>
      %51 = arith.mulf %47, %47 : vector<1x64xf32>
      %52 = arith.subf %50, %51 : vector<1x64xf32>
      %cst_21 = arith.constant 0.000000e+00 : f32
      %53 = vector.broadcast %cst_21 : f32 to vector<1x64xf32>
      %54 = arith.maximumf %52, %53 : vector<1x64xf32>
      %cst_22 = arith.constant 9.99999974E-6 : f32
      %55 = vector.broadcast %cst_22 : f32 to vector<1x64xf32>
      %56 = arith.addf %54, %55 : vector<1x64xf32>
      %57 = math.rsqrt %56 : vector<1x64xf32>
      %58 = arith.mulf %43, %57 : vector<1x64xf32>
      %59 = arith.mulf %47, %58 : vector<1x64xf32>
      %60 = arith.subf %44, %59 : vector<1x64xf32>
      %c0_23 = arith.constant 0 : index
      %c0_24 = arith.constant 0 : index
      %61 = vector.load %arg5[%c0_23, %c0_24] : memref<2x64xf32, #tpu.memory_space<vmem>>, vector<1x64xf32>
      tpu.vector_store %arg5[%c0_23, %c0_24], %58 {strides = array<i32>} : memref<2x64xf32, #tpu.memory_space<vmem>>, vector<1x64xf32>,
      %c1_25 = arith.constant 1 : index
      %c0_26 = arith.constant 0 : index
      %62 = vector.load %arg5[%c1_25, %c0_26] : memref<2x64xf32, #tpu.memory_space<vmem>>, vector<1x64xf32>
      tpu.vector_store %arg5[%c1_25, %c0_26], %60 {strides = array<i32>} : memref<2x64xf32, #tpu.memory_space<vmem>>, vector<1x64xf32>,
    } else {
    }
    return
  }
  func.func @transform_0(%arg0: i32) -> (i32, i32) {
    %c0_i32 = arith.constant 0 : i32
    %c0_i32_0 = arith.constant 0 : i32
    return %arg0, %c0_i32 : i32, i32
  }
  func.func @transform_1(%arg0: i32) -> (i32, i32) {
    %c0_i32 = arith.constant 0 : i32
    %c0_i32_0 = arith.constant 0 : i32
    %c0_i32_1 = arith.constant 0 : i32
    return %c0_i32, %c0_i32_0 : i32, i32
  }
  func.func @transform_2(%arg0: i32) -> (i32, i32) {
    %c0_i32 = arith.constant 0 : i32
    %c0_i32_0 = arith.constant 0 : i32
    %c0_i32_1 = arith.constant 0 : i32
    return %c0_i32, %c0_i32_0 : i32, i32
  }
  func.func @transform_3(%arg0: i32) -> (i32, i32) {
    %c0_i32 = arith.constant 0 : i32
    %c0_i32_0 = arith.constant 0 : i32
    %c0_i32_1 = arith.constant 0 : i32
    return %c0_i32, %c0_i32_0 : i32, i32
  }
  func.func @transform_4(%arg0: i32) -> (i32, i32) {
    %c0_i32 = arith.constant 0 : i32
    %c0_i32_0 = arith.constant 0 : i32
    %c0_i32_1 = arith.constant 0 : i32
    return %c0_i32, %c0_i32_0 : i32, i32
  }
}

module attributes {stable_mosaic.version = 11 : i64} {
  func.func @_stats2_kernel(%arg0: i32, %arg1: memref<16x4xf32, #tpu.memory_space<vmem>>, %arg2: memref<4x64xf32, #tpu.memory_space<vmem>>, %arg3: memref<2x64xf32, #tpu.memory_space<vmem>>, %arg4: memref<64x128xbf16, #tpu.memory_space<vmem>>, %arg5: memref<1x128xf32, #tpu.memory_space<vmem>>, %arg6: memref<1x128xf32, #tpu.memory_space<vmem>>, %arg7: memref<2x128xf32, #tpu.memory_space<vmem>>, %arg8: memref<2x128xf32, #tpu.memory_space<vmem>>) attributes {dimension_semantics = [#tpu.dimension_semantics<arbitrary>], iteration_bounds = array<i64: 2>, scalar_prefetch = 0 : i64, scratch_operands = 1 : i64, tpu.core_type = #tpu.core_type<tc>, window_params = [{transform_indices = @transform_0, window_bounds = array<i64: 16, 4>}, {pipeline_mode = #tpu.pipeline_mode<synchronous>, transform_indices = @transform_1, window_bounds = array<i64: 4, 64>}, {pipeline_mode = #tpu.pipeline_mode<synchronous>, transform_indices = @transform_2, window_bounds = array<i64: 2, 64>}, {pipeline_mode = #tpu.pipeline_mode<synchronous>, transform_indices = @transform_3, window_bounds = array<i64: 64, 128>}, {pipeline_mode = #tpu.pipeline_mode<synchronous>, transform_indices = @transform_4, window_bounds = array<i64: 1, 128>}, {pipeline_mode = #tpu.pipeline_mode<synchronous>, transform_indices = @transform_5, window_bounds = array<i64: 1, 128>}, {pipeline_mode = #tpu.pipeline_mode<synchronous>, transform_indices = @transform_6, window_bounds = array<i64: 2, 128>}]} {
    %c0_i32 = arith.constant 0 : i32
    %0 = arith.cmpi eq, %arg0, %c0_i32 : i32
    %1 = arith.extui %0 : i1 to i32
    %c0_i32_0 = arith.constant 0 : i32
    %2 = arith.cmpi ne, %1, %c0_i32_0 : i32
    scf.if %2 {
      %cst_19 = arith.constant 0.000000e+00 : f32
      %54 = vector.broadcast %cst_19 : f32 to vector<2x128xf32>
      %c0_20 = arith.constant 0 : index
      %c0_21 = arith.constant 0 : index
      %55 = vector.load %arg8[%c0_20, %c0_21] : memref<2x128xf32, #tpu.memory_space<vmem>>, vector<2x128xf32>
      tpu.vector_store %arg8[%c0_20, %c0_21], %54 {strides = array<i32>} : memref<2x128xf32, #tpu.memory_space<vmem>>, vector<2x128xf32>,
    } else {
    }
    %c0 = arith.constant 0 : index
    %c0_1 = arith.constant 0 : index
    %3 = vector.load %arg1[%c0, %c0_1] : memref<16x4xf32, #tpu.memory_space<vmem>>, vector<16x4xf32>
    %c0_2 = arith.constant 0 : index
    %c0_3 = arith.constant 0 : index
    %4 = vector.load %arg2[%c0_2, %c0_3] : memref<4x64xf32, #tpu.memory_space<vmem>>, vector<4x64xf32>
    %5 = vector.extract_strided_slice %3 {offsets = [0, 0], sizes = [16, 1], strides = [1, 1]} : vector<16x4xf32> to vector<16x1xf32>
    %6 = vector.extract_strided_slice %4 {offsets = [0, 0], sizes = [1, 64], strides = [1, 1]} : vector<4x64xf32> to vector<1x64xf32>
    %7 = vector.broadcast %5 : vector<16x1xf32> to vector<16x64xf32>
    %8 = vector.broadcast %6 : vector<1x64xf32> to vector<16x64xf32>
    %9 = arith.mulf %7, %8 : vector<16x64xf32>
    %10 = vector.extract_strided_slice %3 {offsets = [0, 1], sizes = [16, 1], strides = [1, 1]} : vector<16x4xf32> to vector<16x1xf32>
    %11 = vector.extract_strided_slice %4 {offsets = [1, 0], sizes = [1, 64], strides = [1, 1]} : vector<4x64xf32> to vector<1x64xf32>
    %12 = vector.broadcast %10 : vector<16x1xf32> to vector<16x64xf32>
    %13 = vector.broadcast %11 : vector<1x64xf32> to vector<16x64xf32>
    %14 = arith.mulf %12, %13 : vector<16x64xf32>
    %15 = arith.addf %9, %14 : vector<16x64xf32>
    %16 = vector.extract_strided_slice %3 {offsets = [0, 2], sizes = [16, 1], strides = [1, 1]} : vector<16x4xf32> to vector<16x1xf32>
    %17 = vector.extract_strided_slice %4 {offsets = [2, 0], sizes = [1, 64], strides = [1, 1]} : vector<4x64xf32> to vector<1x64xf32>
    %18 = vector.broadcast %16 : vector<16x1xf32> to vector<16x64xf32>
    %19 = vector.broadcast %17 : vector<1x64xf32> to vector<16x64xf32>
    %20 = arith.mulf %18, %19 : vector<16x64xf32>
    %21 = arith.addf %15, %20 : vector<16x64xf32>
    %22 = vector.extract_strided_slice %3 {offsets = [0, 3], sizes = [16, 1], strides = [1, 1]} : vector<16x4xf32> to vector<16x1xf32>
    %23 = vector.extract_strided_slice %4 {offsets = [3, 0], sizes = [1, 64], strides = [1, 1]} : vector<4x64xf32> to vector<1x64xf32>
    %24 = vector.broadcast %22 : vector<16x1xf32> to vector<16x64xf32>
    %25 = vector.broadcast %23 : vector<1x64xf32> to vector<16x64xf32>
    %26 = arith.mulf %24, %25 : vector<16x64xf32>
    %27 = arith.addf %21, %26 : vector<16x64xf32>
    %c0_4 = arith.constant 0 : index
    %c0_5 = arith.constant 0 : index
    %28 = vector.load %arg3[%c0_4, %c0_5] : memref<2x64xf32, #tpu.memory_space<vmem>>, vector<2x64xf32>
    %29 = vector.extract_strided_slice %28 {offsets = [0, 0], sizes = [1, 64], strides = [1, 1]} : vector<2x64xf32> to vector<1x64xf32>
    %30 = vector.broadcast %29 : vector<1x64xf32> to vector<16x64xf32>
    %31 = arith.mulf %27, %30 : vector<16x64xf32>
    %32 = vector.extract_strided_slice %28 {offsets = [1, 0], sizes = [1, 64], strides = [1, 1]} : vector<2x64xf32> to vector<1x64xf32>
    %33 = vector.broadcast %32 : vector<1x64xf32> to vector<16x64xf32>
    %34 = arith.addf %31, %33 : vector<16x64xf32>
    %cst = arith.constant 0.000000e+00 : f32
    %35 = vector.broadcast %cst : f32 to vector<16x64xf32>
    %36 = arith.maximumf %34, %35 : vector<16x64xf32>
    %37 = arith.truncf %36 : vector<16x64xf32> to vector<16x64xbf16>
    %c0_6 = arith.constant 0 : index
    %c0_7 = arith.constant 0 : index
    %38 = vector.load %arg4[%c0_6, %c0_7] : memref<64x128xbf16, #tpu.memory_space<vmem>>, vector<64x128xbf16>
    %cst_8 = arith.constant dense<0.000000e+00> : vector<16x128xf32>
    %39 = tpu.matmul %37, %38, %cst_8 {dimension_numbers = #tpu.dot_dimension_numbers<[1], [0], [0], [1], [0, 0, 1, 1], [], []>} : vector<16x64xbf16>, vector<64x128xbf16>, vector<16x128xf32> -> vector<16x128xf32>
    %c0_9 = arith.constant 0 : index
    %c0_10 = arith.constant 0 : index
    %40 = vector.load %arg8[%c0_9, %c0_10] : memref<2x128xf32, #tpu.memory_space<vmem>>, vector<1x128xf32>
    %cst_11 = arith.constant dense<0.000000e+00> : vector<128xf32>
    %41 = vector.multi_reduction <add>, %39, %cst_11 [0] : vector<16x128xf32> to vector<128xf32>
    %42 = vector.shape_cast %41 : vector<128xf32> to vector<1x128xf32>
    %43 = arith.addf %40, %42 : vector<1x128xf32>
    %c0_12 = arith.constant 0 : index
    %c0_13 = arith.constant 0 : index
    %44 = vector.load %arg8[%c0_12, %c0_13] : memref<2x128xf32, #tpu.memory_space<vmem>>, vector<1x128xf32>
    tpu.vector_store %arg8[%c0_12, %c0_13], %43 {strides = array<i32>} : memref<2x128xf32, #tpu.memory_space<vmem>>, vector<1x128xf32>,
    %c1 = arith.constant 1 : index
    %c0_14 = arith.constant 0 : index
    %45 = vector.load %arg8[%c1, %c0_14] : memref<2x128xf32, #tpu.memory_space<vmem>>, vector<1x128xf32>
    %46 = arith.mulf %39, %39 : vector<16x128xf32>
    %cst_15 = arith.constant dense<0.000000e+00> : vector<128xf32>
    %47 = vector.multi_reduction <add>, %46, %cst_15 [0] : vector<16x128xf32> to vector<128xf32>
    %48 = vector.shape_cast %47 : vector<128xf32> to vector<1x128xf32>
    %49 = arith.addf %45, %48 : vector<1x128xf32>
    %c1_16 = arith.constant 1 : index
    %c0_17 = arith.constant 0 : index
    %50 = vector.load %arg8[%c1_16, %c0_17] : memref<2x128xf32, #tpu.memory_space<vmem>>, vector<1x128xf32>
    tpu.vector_store %arg8[%c1_16, %c0_17], %49 {strides = array<i32>} : memref<2x128xf32, #tpu.memory_space<vmem>>, vector<1x128xf32>,
    %c1_i32 = arith.constant 1 : i32
    %51 = arith.cmpi eq, %arg0, %c1_i32 : i32
    %52 = arith.extui %51 : i1 to i32
    %c0_i32_18 = arith.constant 0 : i32
    %53 = arith.cmpi ne, %52, %c0_i32_18 : i32
    scf.if %53 {
      %c0_19 = arith.constant 0 : index
      %c0_20 = arith.constant 0 : index
      %54 = vector.load %arg8[%c0_19, %c0_20] : memref<2x128xf32, #tpu.memory_space<vmem>>, vector<2x128xf32>
      %c0_21 = arith.constant 0 : index
      %c0_22 = arith.constant 0 : index
      %55 = vector.load %arg5[%c0_21, %c0_22] : memref<1x128xf32, #tpu.memory_space<vmem>>, vector<1x128xf32>
      %c0_23 = arith.constant 0 : index
      %c0_24 = arith.constant 0 : index
      %56 = vector.load %arg6[%c0_23, %c0_24] : memref<1x128xf32, #tpu.memory_space<vmem>>, vector<1x128xf32>
      %57 = vector.extract_strided_slice %54 {offsets = [0, 0], sizes = [1, 128], strides = [1, 1]} : vector<2x128xf32> to vector<1x128xf32>
      %cst_25 = arith.constant 3.125000e-02 : f32
      %58 = vector.broadcast %cst_25 : f32 to vector<1x128xf32>
      %59 = arith.mulf %57, %58 : vector<1x128xf32>
      %60 = vector.extract_strided_slice %54 {offsets = [1, 0], sizes = [1, 128], strides = [1, 1]} : vector<2x128xf32> to vector<1x128xf32>
      %cst_26 = arith.constant 3.125000e-02 : f32
      %61 = vector.broadcast %cst_26 : f32 to vector<1x128xf32>
      %62 = arith.mulf %60, %61 : vector<1x128xf32>
      %63 = arith.mulf %59, %59 : vector<1x128xf32>
      %64 = arith.subf %62, %63 : vector<1x128xf32>
      %cst_27 = arith.constant 0.000000e+00 : f32
      %65 = vector.broadcast %cst_27 : f32 to vector<1x128xf32>
      %66 = arith.maximumf %64, %65 : vector<1x128xf32>
      %cst_28 = arith.constant 9.99999974E-6 : f32
      %67 = vector.broadcast %cst_28 : f32 to vector<1x128xf32>
      %68 = arith.addf %66, %67 : vector<1x128xf32>
      %69 = math.rsqrt %68 : vector<1x128xf32>
      %70 = arith.mulf %55, %69 : vector<1x128xf32>
      %71 = arith.mulf %59, %70 : vector<1x128xf32>
      %72 = arith.subf %56, %71 : vector<1x128xf32>
      %c0_29 = arith.constant 0 : index
      %c0_30 = arith.constant 0 : index
      %73 = vector.load %arg7[%c0_29, %c0_30] : memref<2x128xf32, #tpu.memory_space<vmem>>, vector<1x128xf32>
      tpu.vector_store %arg7[%c0_29, %c0_30], %70 {strides = array<i32>} : memref<2x128xf32, #tpu.memory_space<vmem>>, vector<1x128xf32>,
      %c1_31 = arith.constant 1 : index
      %c0_32 = arith.constant 0 : index
      %74 = vector.load %arg7[%c1_31, %c0_32] : memref<2x128xf32, #tpu.memory_space<vmem>>, vector<1x128xf32>
      tpu.vector_store %arg7[%c1_31, %c0_32], %72 {strides = array<i32>} : memref<2x128xf32, #tpu.memory_space<vmem>>, vector<1x128xf32>,
    } else {
    }
    return
  }
  func.func @transform_0(%arg0: i32) -> (i32, i32) {
    %c0_i32 = arith.constant 0 : i32
    %c0_i32_0 = arith.constant 0 : i32
    return %arg0, %c0_i32 : i32, i32
  }
  func.func @transform_1(%arg0: i32) -> (i32, i32) {
    %c0_i32 = arith.constant 0 : i32
    %c0_i32_0 = arith.constant 0 : i32
    %c0_i32_1 = arith.constant 0 : i32
    return %c0_i32, %c0_i32_0 : i32, i32
  }
  func.func @transform_2(%arg0: i32) -> (i32, i32) {
    %c0_i32 = arith.constant 0 : i32
    %c0_i32_0 = arith.constant 0 : i32
    %c0_i32_1 = arith.constant 0 : i32
    return %c0_i32, %c0_i32_0 : i32, i32
  }
  func.func @transform_3(%arg0: i32) -> (i32, i32) {
    %c0_i32 = arith.constant 0 : i32
    %c0_i32_0 = arith.constant 0 : i32
    %c0_i32_1 = arith.constant 0 : i32
    return %c0_i32, %c0_i32_0 : i32, i32
  }
  func.func @transform_4(%arg0: i32) -> (i32, i32) {
    %c0_i32 = arith.constant 0 : i32
    %c0_i32_0 = arith.constant 0 : i32
    %c0_i32_1 = arith.constant 0 : i32
    return %c0_i32, %c0_i32_0 : i32, i32
  }
  func.func @transform_5(%arg0: i32) -> (i32, i32) {
    %c0_i32 = arith.constant 0 : i32
    %c0_i32_0 = arith.constant 0 : i32
    %c0_i32_1 = arith.constant 0 : i32
    return %c0_i32, %c0_i32_0 : i32, i32
  }
  func.func @transform_6(%arg0: i32) -> (i32, i32) {
    %c0_i32 = arith.constant 0 : i32
    %c0_i32_0 = arith.constant 0 : i32
    %c0_i32_1 = arith.constant 0 : i32
    return %c0_i32, %c0_i32_0 : i32, i32
  }
}

module attributes {stable_mosaic.version = 11 : i64} {
  func.func @_stats3_kernel(%arg0: i32, %arg1: memref<16x4xf32, #tpu.memory_space<vmem>>, %arg2: memref<4x64xf32, #tpu.memory_space<vmem>>, %arg3: memref<2x64xf32, #tpu.memory_space<vmem>>, %arg4: memref<64x128xbf16, #tpu.memory_space<vmem>>, %arg5: memref<2x128xf32, #tpu.memory_space<vmem>>, %arg6: memref<128x1024xbf16, #tpu.memory_space<vmem>>, %arg7: memref<1x1024xf32, #tpu.memory_space<vmem>>, %arg8: memref<1x1024xf32, #tpu.memory_space<vmem>>, %arg9: memref<2x1024xf32, #tpu.memory_space<vmem>>, %arg10: memref<128x128xf32, #tpu.memory_space<vmem>>, %arg11: memref<1x128xf32, #tpu.memory_space<vmem>>) attributes {dimension_semantics = [#tpu.dimension_semantics<arbitrary>], iteration_bounds = array<i64: 2>, scalar_prefetch = 0 : i64, scratch_operands = 2 : i64, tpu.core_type = #tpu.core_type<tc>, window_params = [{transform_indices = @transform_0, window_bounds = array<i64: 16, 4>}, {pipeline_mode = #tpu.pipeline_mode<synchronous>, transform_indices = @transform_1, window_bounds = array<i64: 4, 64>}, {pipeline_mode = #tpu.pipeline_mode<synchronous>, transform_indices = @transform_2, window_bounds = array<i64: 2, 64>}, {pipeline_mode = #tpu.pipeline_mode<synchronous>, transform_indices = @transform_3, window_bounds = array<i64: 64, 128>}, {pipeline_mode = #tpu.pipeline_mode<synchronous>, transform_indices = @transform_4, window_bounds = array<i64: 2, 128>}, {pipeline_mode = #tpu.pipeline_mode<synchronous>, transform_indices = @transform_5, window_bounds = array<i64: 128, 1024>}, {pipeline_mode = #tpu.pipeline_mode<synchronous>, transform_indices = @transform_6, window_bounds = array<i64: 1, 1024>}, {pipeline_mode = #tpu.pipeline_mode<synchronous>, transform_indices = @transform_7, window_bounds = array<i64: 1, 1024>}, {pipeline_mode = #tpu.pipeline_mode<synchronous>, transform_indices = @transform_8, window_bounds = array<i64: 2, 1024>}]} {
    %c0_i32 = arith.constant 0 : i32
    %0 = arith.cmpi eq, %arg0, %c0_i32 : i32
    %1 = arith.extui %0 : i1 to i32
    %c0_i32_0 = arith.constant 0 : i32
    %2 = arith.cmpi ne, %1, %c0_i32_0 : i32
    scf.if %2 {
      %cst_23 = arith.constant 0.000000e+00 : f32
      %62 = vector.broadcast %cst_23 : f32 to vector<128x128xf32>
      %c0_24 = arith.constant 0 : index
      %c0_25 = arith.constant 0 : index
      %63 = vector.load %arg10[%c0_24, %c0_25] : memref<128x128xf32, #tpu.memory_space<vmem>>, vector<128x128xf32>
      tpu.vector_store %arg10[%c0_24, %c0_25], %62 {strides = array<i32>} : memref<128x128xf32, #tpu.memory_space<vmem>>, vector<128x128xf32>,
      %cst_26 = arith.constant 0.000000e+00 : f32
      %64 = vector.broadcast %cst_26 : f32 to vector<1x128xf32>
      %c0_27 = arith.constant 0 : index
      %c0_28 = arith.constant 0 : index
      %65 = vector.load %arg11[%c0_27, %c0_28] : memref<1x128xf32, #tpu.memory_space<vmem>>, vector<1x128xf32>
      tpu.vector_store %arg11[%c0_27, %c0_28], %64 {strides = array<i32>} : memref<1x128xf32, #tpu.memory_space<vmem>>, vector<1x128xf32>,
    } else {
    }
    %c0 = arith.constant 0 : index
    %c0_1 = arith.constant 0 : index
    %3 = vector.load %arg1[%c0, %c0_1] : memref<16x4xf32, #tpu.memory_space<vmem>>, vector<16x4xf32>
    %c0_2 = arith.constant 0 : index
    %c0_3 = arith.constant 0 : index
    %4 = vector.load %arg2[%c0_2, %c0_3] : memref<4x64xf32, #tpu.memory_space<vmem>>, vector<4x64xf32>
    %5 = vector.extract_strided_slice %3 {offsets = [0, 0], sizes = [16, 1], strides = [1, 1]} : vector<16x4xf32> to vector<16x1xf32>
    %6 = vector.extract_strided_slice %4 {offsets = [0, 0], sizes = [1, 64], strides = [1, 1]} : vector<4x64xf32> to vector<1x64xf32>
    %7 = vector.broadcast %5 : vector<16x1xf32> to vector<16x64xf32>
    %8 = vector.broadcast %6 : vector<1x64xf32> to vector<16x64xf32>
    %9 = arith.mulf %7, %8 : vector<16x64xf32>
    %10 = vector.extract_strided_slice %3 {offsets = [0, 1], sizes = [16, 1], strides = [1, 1]} : vector<16x4xf32> to vector<16x1xf32>
    %11 = vector.extract_strided_slice %4 {offsets = [1, 0], sizes = [1, 64], strides = [1, 1]} : vector<4x64xf32> to vector<1x64xf32>
    %12 = vector.broadcast %10 : vector<16x1xf32> to vector<16x64xf32>
    %13 = vector.broadcast %11 : vector<1x64xf32> to vector<16x64xf32>
    %14 = arith.mulf %12, %13 : vector<16x64xf32>
    %15 = arith.addf %9, %14 : vector<16x64xf32>
    %16 = vector.extract_strided_slice %3 {offsets = [0, 2], sizes = [16, 1], strides = [1, 1]} : vector<16x4xf32> to vector<16x1xf32>
    %17 = vector.extract_strided_slice %4 {offsets = [2, 0], sizes = [1, 64], strides = [1, 1]} : vector<4x64xf32> to vector<1x64xf32>
    %18 = vector.broadcast %16 : vector<16x1xf32> to vector<16x64xf32>
    %19 = vector.broadcast %17 : vector<1x64xf32> to vector<16x64xf32>
    %20 = arith.mulf %18, %19 : vector<16x64xf32>
    %21 = arith.addf %15, %20 : vector<16x64xf32>
    %22 = vector.extract_strided_slice %3 {offsets = [0, 3], sizes = [16, 1], strides = [1, 1]} : vector<16x4xf32> to vector<16x1xf32>
    %23 = vector.extract_strided_slice %4 {offsets = [3, 0], sizes = [1, 64], strides = [1, 1]} : vector<4x64xf32> to vector<1x64xf32>
    %24 = vector.broadcast %22 : vector<16x1xf32> to vector<16x64xf32>
    %25 = vector.broadcast %23 : vector<1x64xf32> to vector<16x64xf32>
    %26 = arith.mulf %24, %25 : vector<16x64xf32>
    %27 = arith.addf %21, %26 : vector<16x64xf32>
    %c0_4 = arith.constant 0 : index
    %c0_5 = arith.constant 0 : index
    %28 = vector.load %arg3[%c0_4, %c0_5] : memref<2x64xf32, #tpu.memory_space<vmem>>, vector<2x64xf32>
    %29 = vector.extract_strided_slice %28 {offsets = [0, 0], sizes = [1, 64], strides = [1, 1]} : vector<2x64xf32> to vector<1x64xf32>
    %30 = vector.broadcast %29 : vector<1x64xf32> to vector<16x64xf32>
    %31 = arith.mulf %27, %30 : vector<16x64xf32>
    %32 = vector.extract_strided_slice %28 {offsets = [1, 0], sizes = [1, 64], strides = [1, 1]} : vector<2x64xf32> to vector<1x64xf32>
    %33 = vector.broadcast %32 : vector<1x64xf32> to vector<16x64xf32>
    %34 = arith.addf %31, %33 : vector<16x64xf32>
    %cst = arith.constant 0.000000e+00 : f32
    %35 = vector.broadcast %cst : f32 to vector<16x64xf32>
    %36 = arith.maximumf %34, %35 : vector<16x64xf32>
    %37 = arith.truncf %36 : vector<16x64xf32> to vector<16x64xbf16>
    %c0_6 = arith.constant 0 : index
    %c0_7 = arith.constant 0 : index
    %38 = vector.load %arg4[%c0_6, %c0_7] : memref<64x128xbf16, #tpu.memory_space<vmem>>, vector<64x128xbf16>
    %cst_8 = arith.constant dense<0.000000e+00> : vector<16x128xf32>
    %39 = tpu.matmul %37, %38, %cst_8 {dimension_numbers = #tpu.dot_dimension_numbers<[1], [0], [0], [1], [0, 0, 1, 1], [], []>} : vector<16x64xbf16>, vector<64x128xbf16>, vector<16x128xf32> -> vector<16x128xf32>
    %c0_9 = arith.constant 0 : index
    %c0_10 = arith.constant 0 : index
    %40 = vector.load %arg5[%c0_9, %c0_10] : memref<2x128xf32, #tpu.memory_space<vmem>>, vector<2x128xf32>
    %41 = vector.extract_strided_slice %40 {offsets = [0, 0], sizes = [1, 128], strides = [1, 1]} : vector<2x128xf32> to vector<1x128xf32>
    %42 = vector.broadcast %41 : vector<1x128xf32> to vector<16x128xf32>
    %43 = arith.mulf %39, %42 : vector<16x128xf32>
    %44 = vector.extract_strided_slice %40 {offsets = [1, 0], sizes = [1, 128], strides = [1, 1]} : vector<2x128xf32> to vector<1x128xf32>
    %45 = vector.broadcast %44 : vector<1x128xf32> to vector<16x128xf32>
    %46 = arith.addf %43, %45 : vector<16x128xf32>
    %cst_11 = arith.constant 0.000000e+00 : f32
    %47 = vector.broadcast %cst_11 : f32 to vector<16x128xf32>
    %48 = arith.maximumf %46, %47 : vector<16x128xf32>
    %49 = arith.truncf %48 : vector<16x128xf32> to vector<16x128xbf16>
    %c0_12 = arith.constant 0 : index
    %c0_13 = arith.constant 0 : index
    %50 = vector.load %arg10[%c0_12, %c0_13] : memref<128x128xf32, #tpu.memory_space<vmem>>, vector<128x128xf32>
    %cst_14 = arith.constant dense<0.000000e+00> : vector<128x128xf32>
    %51 = tpu.matmul %49, %49, %cst_14 {dimension_numbers = #tpu.dot_dimension_numbers<[0], [0], [1], [1], [0, 1, 1, 1], [], []>} : vector<16x128xbf16>, vector<16x128xbf16>, vector<128x128xf32> -> vector<128x128xf32>
    %52 = arith.addf %50, %51 : vector<128x128xf32>
    %c0_15 = arith.constant 0 : index
    %c0_16 = arith.constant 0 : index
    %53 = vector.load %arg10[%c0_15, %c0_16] : memref<128x128xf32, #tpu.memory_space<vmem>>, vector<128x128xf32>
    tpu.vector_store %arg10[%c0_15, %c0_16], %52 {strides = array<i32>} : memref<128x128xf32, #tpu.memory_space<vmem>>, vector<128x128xf32>,
    %c0_17 = arith.constant 0 : index
    %c0_18 = arith.constant 0 : index
    %54 = vector.load %arg11[%c0_17, %c0_18] : memref<1x128xf32, #tpu.memory_space<vmem>>, vector<1x128xf32>
    %cst_19 = arith.constant dense<0.000000e+00> : vector<128xf32>
    %55 = vector.multi_reduction <add>, %48, %cst_19 [0] : vector<16x128xf32> to vector<128xf32>
    %56 = vector.shape_cast %55 : vector<128xf32> to vector<1x128xf32>
    %57 = arith.addf %54, %56 : vector<1x128xf32>
    %c0_20 = arith.constant 0 : index
    %c0_21 = arith.constant 0 : index
    %58 = vector.load %arg11[%c0_20, %c0_21] : memref<1x128xf32, #tpu.memory_space<vmem>>, vector<1x128xf32>
    tpu.vector_store %arg11[%c0_20, %c0_21], %57 {strides = array<i32>} : memref<1x128xf32, #tpu.memory_space<vmem>>, vector<1x128xf32>,
    %c1_i32 = arith.constant 1 : i32
    %59 = arith.cmpi eq, %arg0, %c1_i32 : i32
    %60 = arith.extui %59 : i1 to i32
    %c0_i32_22 = arith.constant 0 : i32
    %61 = arith.cmpi ne, %60, %c0_i32_22 : i32
    scf.if %61 {
      %c0_23 = arith.constant 0 : index
      %c0_24 = arith.constant 0 : index
      %62 = vector.load %arg6[%c0_23, %c0_24] : memref<128x1024xbf16, #tpu.memory_space<vmem>>, vector<128x1024xbf16>
      %63 = arith.extf %62 : vector<128x1024xbf16> to vector<128x1024xf32>
      %c0_25 = arith.constant 0 : index
      %c0_26 = arith.constant 0 : index
      %64 = vector.load %arg11[%c0_25, %c0_26] : memref<1x128xf32, #tpu.memory_space<vmem>>, vector<1x128xf32>
      %cst_27 = arith.constant dense<0.000000e+00> : vector<1x1024xf32>
      %65 = tpu.matmul %64, %63, %cst_27 {dimension_numbers = #tpu.dot_dimension_numbers<[1], [0], [0], [1], [0, 0, 1, 1], [], []>} : vector<1x128xf32>, vector<128x1024xf32>, vector<1x1024xf32> -> vector<1x1024xf32>
      %cst_28 = arith.constant 3.125000e-02 : f32
      %66 = vector.broadcast %cst_28 : f32 to vector<1x1024xf32>
      %67 = arith.mulf %65, %66 : vector<1x1024xf32>
      %c0_29 = arith.constant 0 : index
      %c0_30 = arith.constant 0 : index
      %68 = vector.load %arg10[%c0_29, %c0_30] : memref<128x128xf32, #tpu.memory_space<vmem>>, vector<128x128xf32>
      %cst_31 = arith.constant dense<0.000000e+00> : vector<128x1024xf32>
      %69 = tpu.matmul %68, %63, %cst_31 {dimension_numbers = #tpu.dot_dimension_numbers<[1], [0], [0], [1], [0, 0, 1, 1], [], []>} : vector<128x128xf32>, vector<128x1024xf32>, vector<128x1024xf32> -> vector<128x1024xf32>
      %70 = arith.mulf %63, %69 : vector<128x1024xf32>
      %cst_32 = arith.constant dense<0.000000e+00> : vector<1024xf32>
      %71 = vector.multi_reduction <add>, %70, %cst_32 [0] : vector<128x1024xf32> to vector<1024xf32>
      %72 = vector.shape_cast %71 : vector<1024xf32> to vector<1x1024xf32>
      %cst_33 = arith.constant 3.125000e-02 : f32
      %73 = vector.broadcast %cst_33 : f32 to vector<1x1024xf32>
      %74 = arith.mulf %72, %73 : vector<1x1024xf32>
      %75 = arith.mulf %67, %67 : vector<1x1024xf32>
      %76 = arith.subf %74, %75 : vector<1x1024xf32>
      %cst_34 = arith.constant 0.000000e+00 : f32
      %77 = vector.broadcast %cst_34 : f32 to vector<1x1024xf32>
      %78 = arith.maximumf %76, %77 : vector<1x1024xf32>
      %c0_35 = arith.constant 0 : index
      %c0_36 = arith.constant 0 : index
      %79 = vector.load %arg7[%c0_35, %c0_36] : memref<1x1024xf32, #tpu.memory_space<vmem>>, vector<1x1024xf32>
      %cst_37 = arith.constant 9.99999974E-6 : f32
      %80 = vector.broadcast %cst_37 : f32 to vector<1x1024xf32>
      %81 = arith.addf %78, %80 : vector<1x1024xf32>
      %82 = math.rsqrt %81 : vector<1x1024xf32>
      %83 = arith.mulf %79, %82 : vector<1x1024xf32>
      %c0_38 = arith.constant 0 : index
      %c0_39 = arith.constant 0 : index
      %84 = vector.load %arg9[%c0_38, %c0_39] : memref<2x1024xf32, #tpu.memory_space<vmem>>, vector<1x1024xf32>
      tpu.vector_store %arg9[%c0_38, %c0_39], %83 {strides = array<i32>} : memref<2x1024xf32, #tpu.memory_space<vmem>>, vector<1x1024xf32>,
      %c0_40 = arith.constant 0 : index
      %c0_41 = arith.constant 0 : index
      %85 = vector.load %arg8[%c0_40, %c0_41] : memref<1x1024xf32, #tpu.memory_space<vmem>>, vector<1x1024xf32>
      %86 = arith.mulf %67, %83 : vector<1x1024xf32>
      %87 = arith.subf %85, %86 : vector<1x1024xf32>
      %c1 = arith.constant 1 : index
      %c0_42 = arith.constant 0 : index
      %88 = vector.load %arg9[%c1, %c0_42] : memref<2x1024xf32, #tpu.memory_space<vmem>>, vector<1x1024xf32>
      tpu.vector_store %arg9[%c1, %c0_42], %87 {strides = array<i32>} : memref<2x1024xf32, #tpu.memory_space<vmem>>, vector<1x1024xf32>,
    } else {
    }
    return
  }
  func.func @transform_0(%arg0: i32) -> (i32, i32) {
    %c0_i32 = arith.constant 0 : i32
    %c0_i32_0 = arith.constant 0 : i32
    return %arg0, %c0_i32 : i32, i32
  }
  func.func @transform_1(%arg0: i32) -> (i32, i32) {
    %c0_i32 = arith.constant 0 : i32
    %c0_i32_0 = arith.constant 0 : i32
    %c0_i32_1 = arith.constant 0 : i32
    return %c0_i32, %c0_i32_0 : i32, i32
  }
  func.func @transform_2(%arg0: i32) -> (i32, i32) {
    %c0_i32 = arith.constant 0 : i32
    %c0_i32_0 = arith.constant 0 : i32
    %c0_i32_1 = arith.constant 0 : i32
    return %c0_i32, %c0_i32_0 : i32, i32
  }
  func.func @transform_3(%arg0: i32) -> (i32, i32) {
    %c0_i32 = arith.constant 0 : i32
    %c0_i32_0 = arith.constant 0 : i32
    %c0_i32_1 = arith.constant 0 : i32
    return %c0_i32, %c0_i32_0 : i32, i32
  }
  func.func @transform_4(%arg0: i32) -> (i32, i32) {
    %c0_i32 = arith.constant 0 : i32
    %c0_i32_0 = arith.constant 0 : i32
    %c0_i32_1 = arith.constant 0 : i32
    return %c0_i32, %c0_i32_0 : i32, i32
  }
  func.func @transform_5(%arg0: i32) -> (i32, i32) {
    %c0_i32 = arith.constant 0 : i32
    %c0_i32_0 = arith.constant 0 : i32
    %c0_i32_1 = arith.constant 0 : i32
    return %c0_i32, %c0_i32_0 : i32, i32
  }
  func.func @transform_6(%arg0: i32) -> (i32, i32) {
    %c0_i32 = arith.constant 0 : i32
    %c0_i32_0 = arith.constant 0 : i32
    %c0_i32_1 = arith.constant 0 : i32
    return %c0_i32, %c0_i32_0 : i32, i32
  }
  func.func @transform_7(%arg0: i32) -> (i32, i32) {
    %c0_i32 = arith.constant 0 : i32
    %c0_i32_0 = arith.constant 0 : i32
    %c0_i32_1 = arith.constant 0 : i32
    return %c0_i32, %c0_i32_0 : i32, i32
  }
  func.func @transform_8(%arg0: i32) -> (i32, i32) {
    %c0_i32 = arith.constant 0 : i32
    %c0_i32_0 = arith.constant 0 : i32
    %c0_i32_1 = arith.constant 0 : i32
    return %c0_i32, %c0_i32_0 : i32, i32
  }
}

module attributes {stable_mosaic.version = 11 : i64} {
  func.func @_pool_kernel(%arg0: i32, %arg1: i32, %arg2: memref<16x4xf32, #tpu.memory_space<vmem>>, %arg3: memref<4x64xf32, #tpu.memory_space<vmem>>, %arg4: memref<2x64xf32, #tpu.memory_space<vmem>>, %arg5: memref<64x128xbf16, #tpu.memory_space<vmem>>, %arg6: memref<2x128xf32, #tpu.memory_space<vmem>>, %arg7: memref<128x1024xbf16, #tpu.memory_space<vmem>>, %arg8: memref<2x1024xf32, #tpu.memory_space<vmem>>, %arg9: memref<1x1x1024xf32, #tpu.memory_space<vmem>>, %arg10: memref<1x1024xf32, #tpu.memory_space<vmem>>) attributes {dimension_semantics = [#tpu.dimension_semantics<parallel>, #tpu.dimension_semantics<arbitrary>], iteration_bounds = array<i64: 2, 1>, scalar_prefetch = 0 : i64, scratch_operands = 1 : i64, tpu.core_type = #tpu.core_type<tc>, window_params = [{transform_indices = @transform_0, window_bounds = array<i64: 16, 4>}, {pipeline_mode = #tpu.pipeline_mode<synchronous>, transform_indices = @transform_1, window_bounds = array<i64: 4, 64>}, {pipeline_mode = #tpu.pipeline_mode<synchronous>, transform_indices = @transform_2, window_bounds = array<i64: 2, 64>}, {pipeline_mode = #tpu.pipeline_mode<synchronous>, transform_indices = @transform_3, window_bounds = array<i64: 64, 128>}, {pipeline_mode = #tpu.pipeline_mode<synchronous>, transform_indices = @transform_4, window_bounds = array<i64: 2, 128>}, {pipeline_mode = #tpu.pipeline_mode<synchronous>, transform_indices = @transform_5, window_bounds = array<i64: 128, 1024>}, {pipeline_mode = #tpu.pipeline_mode<synchronous>, transform_indices = @transform_6, window_bounds = array<i64: 2, 1024>}, {transform_indices = @transform_7, window_bounds = array<i64: 1, 1, 1024>}]} {
    %c0 = arith.constant 0 : index
    %c0_0 = arith.constant 0 : index
    %0 = vector.load %arg2[%c0, %c0_0] : memref<16x4xf32, #tpu.memory_space<vmem>>, vector<16x4xf32>
    %c0_1 = arith.constant 0 : index
    %c0_2 = arith.constant 0 : index
    %1 = vector.load %arg3[%c0_1, %c0_2] : memref<4x64xf32, #tpu.memory_space<vmem>>, vector<4x64xf32>
    %2 = vector.extract_strided_slice %0 {offsets = [0, 0], sizes = [16, 1], strides = [1, 1]} : vector<16x4xf32> to vector<16x1xf32>
    %3 = vector.extract_strided_slice %1 {offsets = [0, 0], sizes = [1, 64], strides = [1, 1]} : vector<4x64xf32> to vector<1x64xf32>
    %4 = vector.broadcast %2 : vector<16x1xf32> to vector<16x64xf32>
    %5 = vector.broadcast %3 : vector<1x64xf32> to vector<16x64xf32>
    %6 = arith.mulf %4, %5 : vector<16x64xf32>
    %7 = vector.extract_strided_slice %0 {offsets = [0, 1], sizes = [16, 1], strides = [1, 1]} : vector<16x4xf32> to vector<16x1xf32>
    %8 = vector.extract_strided_slice %1 {offsets = [1, 0], sizes = [1, 64], strides = [1, 1]} : vector<4x64xf32> to vector<1x64xf32>
    %9 = vector.broadcast %7 : vector<16x1xf32> to vector<16x64xf32>
    %10 = vector.broadcast %8 : vector<1x64xf32> to vector<16x64xf32>
    %11 = arith.mulf %9, %10 : vector<16x64xf32>
    %12 = arith.addf %6, %11 : vector<16x64xf32>
    %13 = vector.extract_strided_slice %0 {offsets = [0, 2], sizes = [16, 1], strides = [1, 1]} : vector<16x4xf32> to vector<16x1xf32>
    %14 = vector.extract_strided_slice %1 {offsets = [2, 0], sizes = [1, 64], strides = [1, 1]} : vector<4x64xf32> to vector<1x64xf32>
    %15 = vector.broadcast %13 : vector<16x1xf32> to vector<16x64xf32>
    %16 = vector.broadcast %14 : vector<1x64xf32> to vector<16x64xf32>
    %17 = arith.mulf %15, %16 : vector<16x64xf32>
    %18 = arith.addf %12, %17 : vector<16x64xf32>
    %19 = vector.extract_strided_slice %0 {offsets = [0, 3], sizes = [16, 1], strides = [1, 1]} : vector<16x4xf32> to vector<16x1xf32>
    %20 = vector.extract_strided_slice %1 {offsets = [3, 0], sizes = [1, 64], strides = [1, 1]} : vector<4x64xf32> to vector<1x64xf32>
    %21 = vector.broadcast %19 : vector<16x1xf32> to vector<16x64xf32>
    %22 = vector.broadcast %20 : vector<1x64xf32> to vector<16x64xf32>
    %23 = arith.mulf %21, %22 : vector<16x64xf32>
    %24 = arith.addf %18, %23 : vector<16x64xf32>
    %c0_3 = arith.constant 0 : index
    %c0_4 = arith.constant 0 : index
    %25 = vector.load %arg4[%c0_3, %c0_4] : memref<2x64xf32, #tpu.memory_space<vmem>>, vector<2x64xf32>
    %26 = vector.extract_strided_slice %25 {offsets = [0, 0], sizes = [1, 64], strides = [1, 1]} : vector<2x64xf32> to vector<1x64xf32>
    %27 = vector.broadcast %26 : vector<1x64xf32> to vector<16x64xf32>
    %28 = arith.mulf %24, %27 : vector<16x64xf32>
    %29 = vector.extract_strided_slice %25 {offsets = [1, 0], sizes = [1, 64], strides = [1, 1]} : vector<2x64xf32> to vector<1x64xf32>
    %30 = vector.broadcast %29 : vector<1x64xf32> to vector<16x64xf32>
    %31 = arith.addf %28, %30 : vector<16x64xf32>
    %cst = arith.constant 0.000000e+00 : f32
    %32 = vector.broadcast %cst : f32 to vector<16x64xf32>
    %33 = arith.maximumf %31, %32 : vector<16x64xf32>
    %34 = arith.truncf %33 : vector<16x64xf32> to vector<16x64xbf16>
    %c0_5 = arith.constant 0 : index
    %c0_6 = arith.constant 0 : index
    %35 = vector.load %arg5[%c0_5, %c0_6] : memref<64x128xbf16, #tpu.memory_space<vmem>>, vector<64x128xbf16>
    %cst_7 = arith.constant dense<0.000000e+00> : vector<16x128xf32>
    %36 = tpu.matmul %34, %35, %cst_7 {dimension_numbers = #tpu.dot_dimension_numbers<[1], [0], [0], [1], [0, 0, 1, 1], [], []>} : vector<16x64xbf16>, vector<64x128xbf16>, vector<16x128xf32> -> vector<16x128xf32>
    %c0_8 = arith.constant 0 : index
    %c0_9 = arith.constant 0 : index
    %37 = vector.load %arg6[%c0_8, %c0_9] : memref<2x128xf32, #tpu.memory_space<vmem>>, vector<2x128xf32>
    %38 = vector.extract_strided_slice %37 {offsets = [0, 0], sizes = [1, 128], strides = [1, 1]} : vector<2x128xf32> to vector<1x128xf32>
    %39 = vector.broadcast %38 : vector<1x128xf32> to vector<16x128xf32>
    %40 = arith.mulf %36, %39 : vector<16x128xf32>
    %41 = vector.extract_strided_slice %37 {offsets = [1, 0], sizes = [1, 128], strides = [1, 1]} : vector<2x128xf32> to vector<1x128xf32>
    %42 = vector.broadcast %41 : vector<1x128xf32> to vector<16x128xf32>
    %43 = arith.addf %40, %42 : vector<16x128xf32>
    %cst_10 = arith.constant 0.000000e+00 : f32
    %44 = vector.broadcast %cst_10 : f32 to vector<16x128xf32>
    %45 = arith.maximumf %43, %44 : vector<16x128xf32>
    %46 = arith.truncf %45 : vector<16x128xf32> to vector<16x128xbf16>
    %c0_11 = arith.constant 0 : index
    %c0_12 = arith.constant 0 : index
    %47 = vector.load %arg7[%c0_11, %c0_12] : memref<128x1024xbf16, #tpu.memory_space<vmem>>, vector<128x1024xbf16>
    %cst_13 = arith.constant dense<0.000000e+00> : vector<16x1024xf32>
    %48 = tpu.matmul %46, %47, %cst_13 {dimension_numbers = #tpu.dot_dimension_numbers<[1], [0], [0], [1], [0, 0, 1, 1], [], []>} : vector<16x128xbf16>, vector<128x1024xbf16>, vector<16x1024xf32> -> vector<16x1024xf32>
    %c0_14 = arith.constant 0 : index
    %c0_15 = arith.constant 0 : index
    %49 = vector.load %arg8[%c0_14, %c0_15] : memref<2x1024xf32, #tpu.memory_space<vmem>>, vector<2x1024xf32>
    %50 = vector.extract_strided_slice %49 {offsets = [0, 0], sizes = [1, 1024], strides = [1, 1]} : vector<2x1024xf32> to vector<1x1024xf32>
    %51 = vector.broadcast %50 : vector<1x1024xf32> to vector<16x1024xf32>
    %52 = arith.mulf %48, %51 : vector<16x1024xf32>
    %53 = vector.extract_strided_slice %49 {offsets = [1, 0], sizes = [1, 1024], strides = [1, 1]} : vector<2x1024xf32> to vector<1x1024xf32>
    %54 = vector.broadcast %53 : vector<1x1024xf32> to vector<16x1024xf32>
    %55 = arith.addf %52, %54 : vector<16x1024xf32>
    %cst_16 = arith.constant 0.000000e+00 : f32
    %56 = vector.broadcast %cst_16 : f32 to vector<16x1024xf32>
    %57 = arith.maximumf %55, %56 : vector<16x1024xf32>
    %cst_17 = arith.constant dense<0xFF800000> : vector<1024xf32>
    %58 = vector.multi_reduction <maximumf>, %57, %cst_17 [0] : vector<16x1024xf32> to vector<1024xf32>
    %59 = vector.shape_cast %58 : vector<1024xf32> to vector<1x1024xf32>
    %c0_i32 = arith.constant 0 : i32
    %60 = arith.cmpi eq, %arg1, %c0_i32 : i32
    %61 = arith.extui %60 : i1 to i32
    %c0_i32_18 = arith.constant 0 : i32
    %62 = arith.cmpi ne, %61, %c0_i32_18 : i32
    scf.if %62 {
      %cst_25 = arith.constant 0xFF800000 : f32
      %69 = vector.broadcast %cst_25 : f32 to vector<1x1024xf32>
      %c0_26 = arith.constant 0 : index
      %c0_27 = arith.constant 0 : index
      %70 = vector.load %arg10[%c0_26, %c0_27] : memref<1x1024xf32, #tpu.memory_space<vmem>>, vector<1x1024xf32>
      tpu.vector_store %arg10[%c0_26, %c0_27], %69 {strides = array<i32>} : memref<1x1024xf32, #tpu.memory_space<vmem>>, vector<1x1024xf32>,
    } else {
    }
    %c0_19 = arith.constant 0 : index
    %c0_20 = arith.constant 0 : index
    %63 = vector.load %arg10[%c0_19, %c0_20] : memref<1x1024xf32, #tpu.memory_space<vmem>>, vector<1x1024xf32>
    %64 = arith.maximumf %63, %59 : vector<1x1024xf32>
    %c0_21 = arith.constant 0 : index
    %c0_22 = arith.constant 0 : index
    %65 = vector.load %arg10[%c0_21, %c0_22] : memref<1x1024xf32, #tpu.memory_space<vmem>>, vector<1x1024xf32>
    tpu.vector_store %arg10[%c0_21, %c0_22], %64 {strides = array<i32>} : memref<1x1024xf32, #tpu.memory_space<vmem>>, vector<1x1024xf32>,
    %c0_i32_23 = arith.constant 0 : i32
    %66 = arith.cmpi eq, %arg1, %c0_i32_23 : i32
    %67 = arith.extui %66 : i1 to i32
    %c0_i32_24 = arith.constant 0 : i32
    %68 = arith.cmpi ne, %67, %c0_i32_24 : i32
    scf.if %68 {
      %c0_25 = arith.constant 0 : index
      %c0_26 = arith.constant 0 : index
      %69 = vector.load %arg10[%c0_25, %c0_26] : memref<1x1024xf32, #tpu.memory_space<vmem>>, vector<1x1024xf32>
      %c0_27 = arith.constant 0 : index
      %c0_28 = arith.constant 0 : index
      %c0_29 = arith.constant 0 : index
      %70 = vector.load %arg9[%c0_27, %c0_28, %c0_29] : memref<1x1x1024xf32, #tpu.memory_space<vmem>>, vector<1x1x1024xf32>
      %71 = vector.shape_cast %70 : vector<1x1x1024xf32> to vector<1x1024xf32>
      %72 = vector.shape_cast %69 : vector<1x1024xf32> to vector<1x1x1024xf32>
      tpu.vector_store %arg9[%c0_27, %c0_28, %c0_29], %72 {strides = array<i32>} : memref<1x1x1024xf32, #tpu.memory_space<vmem>>, vector<1x1x1024xf32>,
    } else {
    }
    return
  }
  func.func @transform_0(%arg0: i32, %arg1: i32) -> (i32, i32) {
    %c1_i32 = arith.constant 1 : i32
    %0 = arith.muli %arg0, %c1_i32 : i32
    %1 = arith.addi %0, %arg1 : i32
    %c0_i32 = arith.constant 0 : i32
    %c0_i32_0 = arith.constant 0 : i32
    return %1, %c0_i32 : i32, i32
  }
  func.func @transform_1(%arg0: i32, %arg1: i32) -> (i32, i32) {
    %c0_i32 = arith.constant 0 : i32
    %c0_i32_0 = arith.constant 0 : i32
    %c0_i32_1 = arith.constant 0 : i32
    return %c0_i32, %c0_i32_0 : i32, i32
  }
  func.func @transform_2(%arg0: i32, %arg1: i32) -> (i32, i32) {
    %c0_i32 = arith.constant 0 : i32
    %c0_i32_0 = arith.constant 0 : i32
    %c0_i32_1 = arith.constant 0 : i32
    return %c0_i32, %c0_i32_0 : i32, i32
  }
  func.func @transform_3(%arg0: i32, %arg1: i32) -> (i32, i32) {
    %c0_i32 = arith.constant 0 : i32
    %c0_i32_0 = arith.constant 0 : i32
    %c0_i32_1 = arith.constant 0 : i32
    return %c0_i32, %c0_i32_0 : i32, i32
  }
  func.func @transform_4(%arg0: i32, %arg1: i32) -> (i32, i32) {
    %c0_i32 = arith.constant 0 : i32
    %c0_i32_0 = arith.constant 0 : i32
    %c0_i32_1 = arith.constant 0 : i32
    return %c0_i32, %c0_i32_0 : i32, i32
  }
  func.func @transform_5(%arg0: i32, %arg1: i32) -> (i32, i32) {
    %c0_i32 = arith.constant 0 : i32
    %c0_i32_0 = arith.constant 0 : i32
    %c0_i32_1 = arith.constant 0 : i32
    return %c0_i32, %c0_i32_0 : i32, i32
  }
  func.func @transform_6(%arg0: i32, %arg1: i32) -> (i32, i32) {
    %c0_i32 = arith.constant 0 : i32
    %c0_i32_0 = arith.constant 0 : i32
    %c0_i32_1 = arith.constant 0 : i32
    return %c0_i32, %c0_i32_0 : i32, i32
  }
  func.func @transform_7(%arg0: i32, %arg1: i32) -> (i32, i32, i32) {
    %c0_i32 = arith.constant 0 : i32
    %c0_i32_0 = arith.constant 0 : i32
    %c0_i32_1 = arith.constant 0 : i32
    return %arg0, %c0_i32, %c0_i32_0 : i32, i32, i32
  }
}

module attributes {stable_mosaic.version = 11 : i64} {
  func.func @_head_kernel(%arg0: memref<2x1024xf32, #tpu.memory_space<vmem>>, %arg1: memref<1024x512xbf16, #tpu.memory_space<vmem>>, %arg2: memref<1x512xf32, #tpu.memory_space<vmem>>, %arg3: memref<1x512xf32, #tpu.memory_space<vmem>>, %arg4: memref<1x512xf32, #tpu.memory_space<vmem>>, %arg5: memref<512x256xbf16, #tpu.memory_space<vmem>>, %arg6: memref<1x256xf32, #tpu.memory_space<vmem>>, %arg7: memref<1x256xf32, #tpu.memory_space<vmem>>, %arg8: memref<1x256xf32, #tpu.memory_space<vmem>>, %arg9: memref<256x128xbf16, #tpu.memory_space<vmem>>, %arg10: memref<1x128xf32, #tpu.memory_space<vmem>>, %arg11: memref<2x128xf32, #tpu.memory_space<vmem>>) attributes {dimension_semantics = [], scalar_prefetch = 0 : i64, scratch_operands = 0 : i64, tpu.core_type = #tpu.core_type<tc>} {
    %c0 = arith.constant 0 : index
    %c0_0 = arith.constant 0 : index
    %0 = vector.load %arg0[%c0, %c0_0] : memref<2x1024xf32, #tpu.memory_space<vmem>>, vector<2x1024xf32>
    %1 = arith.truncf %0 : vector<2x1024xf32> to vector<2x1024xbf16>
    %c0_1 = arith.constant 0 : index
    %c0_2 = arith.constant 0 : index
    %2 = vector.load %arg1[%c0_1, %c0_2] : memref<1024x512xbf16, #tpu.memory_space<vmem>>, vector<1024x512xbf16>
    %cst = arith.constant dense<0.000000e+00> : vector<2x512xf32>
    %3 = tpu.matmul %1, %2, %cst {dimension_numbers = #tpu.dot_dimension_numbers<[1], [0], [0], [1], [0, 0, 1, 1], [], []>} : vector<2x1024xbf16>, vector<1024x512xbf16>, vector<2x512xf32> -> vector<2x512xf32>
    %c0_3 = arith.constant 0 : index
    %c0_4 = arith.constant 0 : index
    %4 = vector.load %arg2[%c0_3, %c0_4] : memref<1x512xf32, #tpu.memory_space<vmem>>, vector<1x512xf32>
    %5 = vector.broadcast %4 : vector<1x512xf32> to vector<2x512xf32>
    %6 = arith.addf %3, %5 : vector<2x512xf32>
    %c0_5 = arith.constant 0 : index
    %c0_6 = arith.constant 0 : index
    %7 = vector.load %arg3[%c0_5, %c0_6] : memref<1x512xf32, #tpu.memory_space<vmem>>, vector<1x512xf32>
    %c0_7 = arith.constant 0 : index
    %c0_8 = arith.constant 0 : index
    %8 = vector.load %arg4[%c0_7, %c0_8] : memref<1x512xf32, #tpu.memory_space<vmem>>, vector<1x512xf32>
    %cst_9 = arith.constant dense<0.000000e+00> : vector<512xf32>
    %9 = vector.multi_reduction <add>, %6, %cst_9 [0] : vector<2x512xf32> to vector<512xf32>
    %10 = vector.shape_cast %9 : vector<512xf32> to vector<1x512xf32>
    %cst_10 = arith.constant 2.000000e+00 : f32
    %11 = vector.broadcast %cst_10 : f32 to vector<1x512xf32>
    %12 = arith.divf %10, %11 : vector<1x512xf32>
    %13 = vector.broadcast %12 : vector<1x512xf32> to vector<2x512xf32>
    %14 = arith.subf %6, %13 : vector<2x512xf32>
    %15 = arith.mulf %14, %14 : vector<2x512xf32>
    %cst_11 = arith.constant dense<0.000000e+00> : vector<512xf32>
    %16 = vector.multi_reduction <add>, %15, %cst_11 [0] : vector<2x512xf32> to vector<512xf32>
    %17 = vector.shape_cast %16 : vector<512xf32> to vector<1x512xf32>
    %cst_12 = arith.constant 2.000000e+00 : f32
    %18 = vector.broadcast %cst_12 : f32 to vector<1x512xf32>
    %19 = arith.divf %17, %18 : vector<1x512xf32>
    %20 = vector.broadcast %12 : vector<1x512xf32> to vector<2x512xf32>
    %21 = arith.subf %6, %20 : vector<2x512xf32>
    %cst_13 = arith.constant 9.99999974E-6 : f32
    %22 = vector.broadcast %cst_13 : f32 to vector<1x512xf32>
    %23 = arith.addf %19, %22 : vector<1x512xf32>
    %24 = math.rsqrt %23 : vector<1x512xf32>
    %25 = vector.broadcast %24 : vector<1x512xf32> to vector<2x512xf32>
    %26 = arith.mulf %21, %25 : vector<2x512xf32>
    %27 = vector.broadcast %7 : vector<1x512xf32> to vector<2x512xf32>
    %28 = arith.mulf %26, %27 : vector<2x512xf32>
    %29 = vector.broadcast %8 : vector<1x512xf32> to vector<2x512xf32>
    %30 = arith.addf %28, %29 : vector<2x512xf32>
    %cst_14 = arith.constant 0.000000e+00 : f32
    %31 = vector.broadcast %cst_14 : f32 to vector<2x512xf32>
    %32 = arith.cmpf ogt, %30, %31 : vector<2x512xf32>
    %cst_15 = arith.constant 0.00999999977 : f32
    %33 = vector.broadcast %cst_15 : f32 to vector<2x512xf32>
    %34 = arith.mulf %33, %30 : vector<2x512xf32>
    %35 = arith.select %32, %30, %34 : vector<2x512xi1>, vector<2x512xf32>
    %36 = arith.truncf %35 : vector<2x512xf32> to vector<2x512xbf16>
    %c0_16 = arith.constant 0 : index
    %c0_17 = arith.constant 0 : index
    %37 = vector.load %arg5[%c0_16, %c0_17] : memref<512x256xbf16, #tpu.memory_space<vmem>>, vector<512x256xbf16>
    %cst_18 = arith.constant dense<0.000000e+00> : vector<2x256xf32>
    %38 = tpu.matmul %36, %37, %cst_18 {dimension_numbers = #tpu.dot_dimension_numbers<[1], [0], [0], [1], [0, 0, 1, 1], [], []>} : vector<2x512xbf16>, vector<512x256xbf16>, vector<2x256xf32> -> vector<2x256xf32>
    %c0_19 = arith.constant 0 : index
    %c0_20 = arith.constant 0 : index
    %39 = vector.load %arg6[%c0_19, %c0_20] : memref<1x256xf32, #tpu.memory_space<vmem>>, vector<1x256xf32>
    %40 = vector.broadcast %39 : vector<1x256xf32> to vector<2x256xf32>
    %41 = arith.addf %38, %40 : vector<2x256xf32>
    %c0_21 = arith.constant 0 : index
    %c0_22 = arith.constant 0 : index
    %42 = vector.load %arg7[%c0_21, %c0_22] : memref<1x256xf32, #tpu.memory_space<vmem>>, vector<1x256xf32>
    %c0_23 = arith.constant 0 : index
    %c0_24 = arith.constant 0 : index
    %43 = vector.load %arg8[%c0_23, %c0_24] : memref<1x256xf32, #tpu.memory_space<vmem>>, vector<1x256xf32>
    %cst_25 = arith.constant dense<0.000000e+00> : vector<256xf32>
    %44 = vector.multi_reduction <add>, %41, %cst_25 [0] : vector<2x256xf32> to vector<256xf32>
    %45 = vector.shape_cast %44 : vector<256xf32> to vector<1x256xf32>
    %cst_26 = arith.constant 2.000000e+00 : f32
    %46 = vector.broadcast %cst_26 : f32 to vector<1x256xf32>
    %47 = arith.divf %45, %46 : vector<1x256xf32>
    %48 = vector.broadcast %47 : vector<1x256xf32> to vector<2x256xf32>
    %49 = arith.subf %41, %48 : vector<2x256xf32>
    %50 = arith.mulf %49, %49 : vector<2x256xf32>
    %cst_27 = arith.constant dense<0.000000e+00> : vector<256xf32>
    %51 = vector.multi_reduction <add>, %50, %cst_27 [0] : vector<2x256xf32> to vector<256xf32>
    %52 = vector.shape_cast %51 : vector<256xf32> to vector<1x256xf32>
    %cst_28 = arith.constant 2.000000e+00 : f32
    %53 = vector.broadcast %cst_28 : f32 to vector<1x256xf32>
    %54 = arith.divf %52, %53 : vector<1x256xf32>
    %55 = vector.broadcast %47 : vector<1x256xf32> to vector<2x256xf32>
    %56 = arith.subf %41, %55 : vector<2x256xf32>
    %cst_29 = arith.constant 9.99999974E-6 : f32
    %57 = vector.broadcast %cst_29 : f32 to vector<1x256xf32>
    %58 = arith.addf %54, %57 : vector<1x256xf32>
    %59 = math.rsqrt %58 : vector<1x256xf32>
    %60 = vector.broadcast %59 : vector<1x256xf32> to vector<2x256xf32>
    %61 = arith.mulf %56, %60 : vector<2x256xf32>
    %62 = vector.broadcast %42 : vector<1x256xf32> to vector<2x256xf32>
    %63 = arith.mulf %61, %62 : vector<2x256xf32>
    %64 = vector.broadcast %43 : vector<1x256xf32> to vector<2x256xf32>
    %65 = arith.addf %63, %64 : vector<2x256xf32>
    %cst_30 = arith.constant 0.000000e+00 : f32
    %66 = vector.broadcast %cst_30 : f32 to vector<2x256xf32>
    %67 = arith.cmpf ogt, %65, %66 : vector<2x256xf32>
    %cst_31 = arith.constant 0.00999999977 : f32
    %68 = vector.broadcast %cst_31 : f32 to vector<2x256xf32>
    %69 = arith.mulf %68, %65 : vector<2x256xf32>
    %70 = arith.select %67, %65, %69 : vector<2x256xi1>, vector<2x256xf32>
    %71 = arith.truncf %70 : vector<2x256xf32> to vector<2x256xbf16>
    %c0_32 = arith.constant 0 : index
    %c0_33 = arith.constant 0 : index
    %72 = vector.load %arg9[%c0_32, %c0_33] : memref<256x128xbf16, #tpu.memory_space<vmem>>, vector<256x128xbf16>
    %cst_34 = arith.constant dense<0.000000e+00> : vector<2x128xf32>
    %73 = tpu.matmul %71, %72, %cst_34 {dimension_numbers = #tpu.dot_dimension_numbers<[1], [0], [0], [1], [0, 0, 1, 1], [], []>} : vector<2x256xbf16>, vector<256x128xbf16>, vector<2x128xf32> -> vector<2x128xf32>
    %c0_35 = arith.constant 0 : index
    %c0_36 = arith.constant 0 : index
    %74 = vector.load %arg10[%c0_35, %c0_36] : memref<1x128xf32, #tpu.memory_space<vmem>>, vector<1x128xf32>
    %75 = vector.broadcast %74 : vector<1x128xf32> to vector<2x128xf32>
    %76 = arith.addf %73, %75 : vector<2x128xf32>
    %c0_37 = arith.constant 0 : index
    %c0_38 = arith.constant 0 : index
    %77 = vector.load %arg11[%c0_37, %c0_38] : memref<2x128xf32, #tpu.memory_space<vmem>>, vector<2x128xf32>
    tpu.vector_store %arg11[%c0_37, %c0_38], %76 {strides = array<i32>} : memref<2x128xf32, #tpu.memory_space<vmem>>, vector<2x128xf32>,
    return
  }
}

</mosaic_0001>

<llo_original>
// kernel: transform_net_forward.5
$region0: #{transform_net_forward.5}
  #allocation0 [shape = 'u32[]', space=smem, size = 0x4, offset = 0x4, fixed_abs, tag = 'smem constant byte address 0x4 - core index']
  #allocation1 [shape = 'u32[144,128]{1,0:T(1,128)}', space=vmem, size = 0x12000, scoped, tag = 'internal scratch']
  #allocation2 [shape = 'f32[2,64]{1,0:T(2,128)}', space=vmem, size = 0x400, scoped, tag = 'scratch operand']
  %s0 = inlined_call_operand.vmem [shape: f32[32,4], index: 0, kind: input, shape index: {}]
  %s1 = inlined_call_operand.hbm [shape: f32[4,64], index: 1, kind: input, shape index: {}]
  %s2 = inlined_call_operand.hbm [shape: f32[1,64], index: 2, kind: input, shape index: {}]
  %s3 = inlined_call_operand.hbm [shape: f32[1,64], index: 3, kind: input, shape index: {}]
  %s4 = inlined_call_operand.vmem [shape: f32[2,64], index: 4, kind: output, shape index: {}]
  %s5 = sld [smem:[#allocation0]]
  $region69: #{transform_net_forward.5} parent=0
    _
  %s7 = ssub.s32 1, %s5
  %s8 = scalar_select 0, %s7, %s5
  $region1: #{transform_net_forward.5} parent=0
    #allocation3 [shape = 'u8[2048]{0}', space=vmem, size = 0x800, scoped, tag = 'input window, operand 1, single buffered']
    #allocation4 [shape = 's32[2]{0}', space=sflag, size = 0x8, scoped, tag = 'scoped memory for transform_net_forward.5']
    #allocation5 [shape = 'u8[512]{0}', space=vmem, size = 0x400, scoped, tag = 'input window, operand 2, single buffered']
    #allocation6 [shape = 's32[1]{0}', space=sflag, size = 0x4, scoped, tag = 'scoped memory for transform_net_forward.5']
    #allocation7 [shape = 'u8[512]{0}', space=vmem, size = 0x400, scoped, tag = 'input window, operand 3, single buffered']
    %9 = vsyncpa [#allocation4], 0
    %10 = vsyncpa [#allocation6], 0
    loop: start=0, step=1, limit=4
    $region2: #{transform_net_forward.5} parent=1 // loop_pre_header
      _
    $region3: #{transform_net_forward.5} parent=1 // loop_header
      %s12 = sphi 0, %s16
      %p13 = scmp.ge.s32.totalorder %s12, 4
      %s22 = sphi 0, %s24
      %s25 = sphi 0, %s22
      %s26 = sphi 0, %s25
      %s42 = sphi 0, %s26
      %s46 = sphi 0, %s46
      %s48 = sphi 0, %s46
      %s49 = sphi 0, %s48
      %s63 = sphi 0, %s49
      %s67 = sphi 0, %s67
      %s69 = sphi 0, %s67
      %s70 = sphi 0, %s69
      %s84 = sphi 0, %s70
      %s88 = sphi 0, %s88
      %s90 = sphi 0, %s88
      %s91 = sphi 0, %s90
      %s105 = sphi 0, %s91
      %s109 = sphi 0, %s109
      %s111 = sphi 0, %s109
      %s112 = sphi 0, %s111
      %s126 = sphi 0, %s112
    $region4: #{transform_net_forward.5} parent=1 // loop_header_branch
      %15 = sbr.rel (%p13) target = $region8
    $region5: #{transform_net_forward.5} parent=1 // loop_body
      %s17 = ssub.s32 %s12, 1
      %s18 = ssub.s32 %s12, 2
      %s19 = sadd.s32 %s12, 1
      %s20 = ssub.s32 %s12, %s19
      %p21 = scmp.eq.s32.totalorder %s20, 0
      %s23 = sadd.s32 %s22, 1
      %s24 = scalar_select %p21, %s22, %s23
      %p27 = pneg %p21
      %p28 = scmp.eq.s32.totalorder %s12, 1
      %p29 = por %p27, %p28
      %p30 = scmp.ne.s32.totalorder %s22, %s25
      %p31 = scmp.eq.s32.totalorder %s12, 0
      %p32 = por %p30, %p31
      %p33 = scmp.ne.s32.totalorder %s22, %s25
      %p34 = scmp.eq.s32.totalorder %s17, 1
      %p35 = por %p33, %p34
      %p36 = scmp.ne.s32.totalorder %s25, %s26
      %p37 = scmp.eq.s32.totalorder %s17, 0
      %p38 = por %p36, %p37
      %p39 = scmp.ne.s32.totalorder %s25, %s26
      %p40 = scmp.eq.s32.totalorder %s18, 1
      %p41 = por %p39, %p40
      %p43 = scmp.ne.s32.totalorder %s26, %s42
      %p44 = scmp.eq.s32.totalorder %s18, 0
      %p45 = por %p43, %p44
      %s47 = sadd.s32 %s46, 1
      %p50 = scmp.eq.s32.totalorder %s12, 1
      %p51 = scmp.ne.s32.totalorder %s46, %s48
      %p52 = scmp.eq.s32.totalorder %s12, 0
      %p53 = por %p51, %p52
      %p54 = scmp.ne.s32.totalorder %s46, %s48
      %p55 = scmp.eq.s32.totalorder %s17, 1
      %p56 = por %p54, %p55
      %p57 = scmp.ne.s32.totalorder %s48, %s49
      %p58 = scmp.eq.s32.totalorder %s17, 0
      %p59 = por %p57, %p58
      %p60 = scmp.ne.s32.totalorder %s48, %s49
      %p61 = scmp.eq.s32.totalorder %s18, 1
      %p62 = por %p60, %p61
      %p64 = scmp.ne.s32.totalorder %s49, %s63
      %p65 = scmp.eq.s32.totalorder %s18, 0
      %p66 = por %p64, %p65
      %s68 = sadd.s32 %s67, 1
      %p71 = scmp.eq.s32.totalorder %s12, 1
      %p72 = scmp.ne.s32.totalorder %s67, %s69
      %p73 = scmp.eq.s32.totalorder %s12, 0
      %p74 = por %p72, %p73
      %p75 = scmp.ne.s32.totalorder %s67, %s69
      %p76 = scmp.eq.s32.totalorder %s17, 1
      %p77 = por %p75, %p76
      %p78 = scmp.ne.s32.totalorder %s69, %s70
      %p79 = scmp.eq.s32.totalorder %s17, 0
      %p80 = por %p78, %p79
      %p81 = scmp.ne.s32.totalorder %s69, %s70
      %p82 = scmp.eq.s32.totalorder %s18, 1
      %p83 = por %p81, %p82
      %p85 = scmp.ne.s32.totalorder %s70, %s84
      %p86 = scmp.eq.s32.totalorder %s18, 0
      %p87 = por %p85, %p86
      %s89 = sadd.s32 %s88, 1
      %p92 = scmp.eq.s32.totalorder %s12, 1
      %p93 = scmp.ne.s32.totalorder %s88, %s90
      %p94 = scmp.eq.s32.totalorder %s12, 0
      %p95 = por %p93, %p94
      %p96 = scmp.ne.s32.totalorder %s88, %s90
      %p97 = scmp.eq.s32.totalorder %s17, 1
      %p98 = por %p96, %p97
      %p99 = scmp.ne.s32.totalorder %s90, %s91
      %p100 = scmp.eq.s32.totalorder %s17, 0
      %p101 = por %p99, %p100
      %p102 = scmp.ne.s32.totalorder %s90, %s91
      %p103 = scmp.eq.s32.totalorder %s18, 1
      %p104 = por %p102, %p103
      %p106 = scmp.ne.s32.totalorder %s91, %s105
      %p107 = scmp.eq.s32.totalorder %s18, 0
      %p108 = por %p106, %p107
      %s110 = sadd.s32 %s109, 1
      %p113 = scmp.eq.s32.totalorder %s12, 1
      %p114 = scmp.ne.s32.totalorder %s109, %s111
      %p115 = scmp.eq.s32.totalorder %s12, 0
      %p116 = por %p114, %p115
      %p117 = scmp.ne.s32.totalorder %s109, %s111
      %p118 = scmp.eq.s32.totalorder %s17, 1
      %p119 = por %p117, %p118
      %p120 = scmp.ne.s32.totalorder %s111, %s112
      %p121 = scmp.eq.s32.totalorder %s17, 0
      %p122 = por %p120, %p121
      %p123 = scmp.ne.s32.totalorder %s111, %s112
      %p124 = scmp.eq.s32.totalorder %s18, 1
      %p125 = por %p123, %p124
      %p127 = scmp.ne.s32.totalorder %s112, %s126
      %p128 = scmp.eq.s32.totalorder %s18, 0
      %p129 = por %p127, %p128
      %p130 = scmp.le.s32.totalorder 1, %s12
      %p131 = scmp.lt.s32.totalorder %s12, 3
      %p132 = pnand %p130, %p131
      %p133 = pneg %p132
      // Predicated region
      $region9: #{transform_net_forward.5} parent=5 // pred_check
        _
      $region10: #{transform_net_forward.5} parent=5 // pred_check_branch
        %135 = sbr.rel (%p132) target = $region12
      $region11: #{transform_net_forward.5} parent=5 // pred_region
        %s136 = ssub.s32 %s12, 1
        // Predicated region
        $region13: #{transform_net_forward.5} parent=11 // pred_check
          %p137 = pneg %p59
        $region14: #{transform_net_forward.5} parent=11 // pred_check_branch
          %139 = sbr.rel (%p137) target = $region16
        $region15: #{transform_net_forward.5} parent=11 // pred_region
          %s141 = ssub.s32 64, 64
          %142 = vsyncadd [#allocation4], %s141
          %s144 = sshll.u32 [#allocation3], 4
          %s145 = int_to_ptr.vmem [resolvable:$true] %s144
          %147 = dma.hbm_to_vmem [thread:$0]  %s1, 64, %s145, [#allocation4]
        $region16: #{transform_net_forward.5} parent=11 // pred_fallthru
          _
        // Predicated region
        $region17: #{transform_net_forward.5} parent=11 // pred_check
          %p148 = pneg %p80
        $region18: #{transform_net_forward.5} parent=11 // pred_check_branch
          %150 = sbr.rel (%p148) target = $region20
        $region19: #{transform_net_forward.5} parent=11 // pred_region
          %s152 = ssub.s32 16, 16
          %153 = vsyncadd [#allocation6], %s152
          %s155 = sshll.u32 [#allocation5], 4
          %s156 = int_to_ptr.vmem [resolvable:$true] %s155
          %158 = dma.hbm_to_vmem [thread:$0]  %s2, 16, %s156, [#allocation6]
        $region20: #{transform_net_forward.5} parent=11 // pred_fallthru
          _
        // Predicated region
        $region21: #{transform_net_forward.5} parent=11 // pred_check
          %p159 = pneg %p101
        $region22: #{transform_net_forward.5} parent=11 // pred_check_branch
          %161 = sbr.rel (%p159) target = $region24
        $region23: #{transform_net_forward.5} parent=11 // pred_region
          %s163 = ssub.s32 16, 16
          %164 = vsyncadd [#allocation6], %s163
          %s166 = sshll.u32 [#allocation7], 4
          %s167 = int_to_ptr.vmem [resolvable:$true] %s166
          %169 = dma.hbm_to_vmem [thread:$0]  %s3, 16, %s167, [#allocation6]
        $region24: #{transform_net_forward.5} parent=11 // pred_fallthru
          _
      $region12: #{transform_net_forward.5} parent=5 // pred_fallthru
        _
      %p170 = scmp.lt.s32.totalorder %s12, 2
      // Predicated region
      $region25: #{transform_net_forward.5} parent=5 // pred_check
        %p171 = pneg %p170
      $region26: #{transform_net_forward.5} parent=5 // pred_check_branch
        %173 = sbr.rel (%p171) target = $region28
      $region27: #{transform_net_forward.5} parent=5 // pred_region
        // Predicated region
        $region29: #{transform_net_forward.5} parent=27 // pred_check
          %p174 = pneg %p32
        $region30: #{transform_net_forward.5} parent=27 // pred_check_branch
          %176 = sbr.rel (%p174) target = $region32
        $region31: #{transform_net_forward.5} parent=27 // pred_region
          %s177 = smul.u32 2, %s12
          %p178 = scmp.lt.s32.totalorder %s177, 3
          %s179 = scalar_select %p178, %s177, 3
          %s180 = smul.addr %s179, 8
          %s181 = scalar_lea.vmem %s0, %s180
          %s182 = smul.u32 2, %s12
        $region32: #{transform_net_forward.5} parent=27 // pred_fallthru
          _
      $region28: #{transform_net_forward.5} parent=5 // pred_fallthru
        _
      %p183 = scmp.le.s32.totalorder 1, %s12
      %p184 = scmp.lt.s32.totalorder %s12, 3
      %p185 = pnand %p183, %p184
      %p186 = pneg %p185
      // Predicated region
      $region33: #{transform_net_forward.5} parent=5 // pred_check
        _
      $region34: #{transform_net_forward.5} parent=5 // pred_check_branch
        %188 = sbr.rel (%p185) target = $region36
      $region35: #{transform_net_forward.5} parent=5 // pred_region
        %s189 = ssub.s32 %s12, 1
        // Predicated region
        $region37: #{transform_net_forward.5} parent=35 // pred_check
          %p190 = pneg %p59
        $region38: #{transform_net_forward.5} parent=35 // pred_check_branch
          %192 = sbr.rel (%p190) target = $region40
        $region39: #{transform_net_forward.5} parent=35 // pred_region
          %193 = dma.done [#allocation4], 64
        $region40: #{transform_net_forward.5} parent=35 // pred_fallthru
          _
        // Predicated region
        $region41: #{transform_net_forward.5} parent=35 // pred_check
          %p194 = pneg %p80
        $region42: #{transform_net_forward.5} parent=35 // pred_check_branch
          %196 = sbr.rel (%p194) target = $region44
        $region43: #{transform_net_forward.5} parent=35 // pred_region
          %197 = dma.done [#allocation6], 16
        $region44: #{transform_net_forward.5} parent=35 // pred_fallthru
          _
        // Predicated region
        $region45: #{transform_net_forward.5} parent=35 // pred_check
          %p198 = pneg %p101
        $region46: #{transform_net_forward.5} parent=35 // pred_check_branch
          %200 = sbr.rel (%p198) target = $region48
        $region47: #{transform_net_forward.5} parent=35 // pred_region
          %201 = dma.done [#allocation6], 16
        $region48: #{transform_net_forward.5} parent=35 // pred_fallthru
          _
        %s202 = smul.u32 2, %s17
        %p203 = scmp.lt.s32.totalorder %s202, 3
        %s204 = scalar_select %p203, %s202, 3
        %s205 = smul.addr %s204, 8
        %s206 = scalar_lea.vmem %s0, %s205
        %p207 = pneg %p38
        %p208 = pneg %p35
        %p209 = pneg %p59
        %p210 = pneg %p56
        %p211 = pneg %p80
        %p212 = pneg %p77
        %p213 = pneg %p101
        %p214 = pneg %p98
        %p215 = pneg %p122
        %p216 = pneg %p119
        %s217 = smul.u32 2, %s17
        %p218 = scmp.lt.s32.totalorder %s217, 3
        %s219 = scalar_select %p218, %s217, 3
        %s220 = smul.addr %s219, 8
        %s221 = scalar_lea.vmem %s0, %s220
        %s222 = smul.u32 2, %s17
        %p223 = scmp.eq.s32.totalorder %s17, 0
        // Predicated region
        $region49: #{transform_net_forward.5} parent=35 // pred_check
          %p224 = pneg %p223
        $region50: #{transform_net_forward.5} parent=35 // pred_check_branch
          %226 = sbr.rel (%p224) target = $region52
        $region51: #{transform_net_forward.5} parent=35 // pred_region
          %vm227 = vcmask 517120
          %228 = vst.msk [vmem:[#allocation2] sm:$0x3] %vm227, 0.0
        $region52: #{transform_net_forward.5} parent=35 // pred_fallthru
          _
        %v229 = vld [vmem:[%s221] sm:$0xff]
        %v230 = vld [vmem:[%s221 + $0x8] sm:$0xff]
        %v231 = vld [vmem:[#allocation3] sm:$0xf]
        %233 = vset.pattern.permute.xlu0 0
        %234 = vperm.xlu0 %233, %v229
        %v235 = vpop.permute.xlu0 %234
        %238 = vset.pattern.permute.xlu0 0
        %239 = vperm.xlu0 %238, %v230
        %v240 = vpop.permute.xlu0 %239
        %v242 = vlaneseq
        %v243 = vshrl.u32 %v242, 7
        %v244 = vsub.s32 0, %v243
        %v245 = vrot.slane %v231, %v244
        %v246 = vmul.f32 %v235, %v245
        %v247 = vmul.f32 %v240, %v245
        %248 = vset.pattern.permute.xlu0 1
        %249 = vperm.xlu0 %248, %v229
        %v250 = vpop.permute.xlu0 %249
        %252 = vset.pattern.permute.xlu0 1
        %253 = vperm.xlu0 %252, %v230
        %v254 = vpop.permute.xlu0 %253
        %v256 = vlaneseq
        %v257 = vshrl.u32 %v256, 7
        %v258 = vsub.s32 1, %v257
        %v259 = vrot.slane %v231, %v258
        %v260 = vmul.f32 %v250, %v259
        %v261 = vmul.f32 %v254, %v259
        %v262 = vadd.f32 %v246, %v260
        %v263 = vadd.f32 %v247, %v261
        %264 = vset.pattern.permute.xlu0 2
        %265 = vperm.xlu0 %264, %v229
        %v266 = vpop.permute.xlu0 %265
        %268 = vset.pattern.permute.xlu0 2
        %269 = vperm.xlu0 %268, %v230
        %v270 = vpop.permute.xlu0 %269
        %v272 = vlaneseq
        %v273 = vshrl.u32 %v272, 7
        %v274 = vsub.s32 2, %v273
        %v275 = vrot.slane %v231, %v274
        %v276 = vmul.f32 %v266, %v275
        %v277 = vmul.f32 %v270, %v275
        %v278 = vadd.f32 %v262, %v276
        %v279 = vadd.f32 %v263, %v277
        %280 = vset.pattern.permute.xlu0 3
        %281 = vperm.xlu0 %280, %v229
        %v282 = vpop.permute.xlu0 %281
        %284 = vset.pattern.permute.xlu0 3
        %285 = vperm.xlu0 %284, %v230
        %v286 = vpop.permute.xlu0 %285
        %v288 = vlaneseq
        %v289 = vshrl.u32 %v288, 7
        %v290 = vsub.s32 3, %v289
        %v291 = vrot.slane %v231, %v290
        %v292 = vmul.f32 %v282, %v291
        %v293 = vmul.f32 %v286, %v291
        %v294 = vadd.f32 %v278, %v292
        %v295 = vadd.f32 %v279, %v293
        %v296 = vld [vmem:[#allocation2] sm:$0x1]
        %vm297 = vcmask 523264
        %v298 = vsel %vm297, %v294, 0.0
        %v299 = vsel %vm297, %v295, 0.0
        %v300 = vadd.f32 %v298, %v299
        %v301 = vrot.slane %v300, 4
        %v302 = vadd.f32 %v300, %v301
        %v303 = vrot.slane %v302, 2
        %v304 = vadd.f32 %v302, %v303
        %v305 = vrot.slane %v304, 1
        %v306 = vadd.f32 %v304, %v305
        %v307 = vadd.f32 %v296, %v306
        %vm308 = vcmask 516096
        %309 = vst.msk [vmem:[#allocation2] sm:$0x1] %vm308, %v307
        %v310 = vld [vmem:[#allocation2 + $0x1] sm:$0x1]
        %v311 = vmul.f32 %v294, %v294
        %v312 = vmul.f32 %v295, %v295
        %v313 = vsel %vm297, %v311, 0.0
        %v314 = vsel %vm297, %v312, 0.0
        %v315 = vadd.f32 %v313, %v314
        %v316 = vrot.slane %v315, 4
        %v317 = vadd.f32 %v315, %v316
        %v318 = vrot.slane %v317, 2
        %v319 = vadd.f32 %v317, %v318
        %v320 = vrot.slane %v319, 1
        %v321 = vadd.f32 %v319, %v320
        %v322 = vadd.f32 %v310, %v321
        %323 = vst.msk [vmem:[#allocation2 + $0x1] sm:$0x1] %vm308, %v322
        %p324 = scmp.eq.s32.totalorder %s17, 1
        // Predicated region
        $region53: #{transform_net_forward.5} parent=35 // pred_check
          %p325 = pneg %p324
        $region54: #{transform_net_forward.5} parent=35 // pred_check_branch
          %327 = sbr.rel (%p325) target = $region56
        $region55: #{transform_net_forward.5} parent=35 // pred_region
          %v328 = vld [vmem:[#allocation2] sm:$0x3]
          %v329 = vld [vmem:[#allocation5] sm:$0x1]
          %v330 = vld [vmem:[#allocation7] sm:$0x1]
          %v331 = vmul.f32 %v328, 0.03125
          %v332 = vmul.f32 %v331, %v331
          %v334 = vrot.slane %v332, 7
          %v336 = vsub.f32 %v331, %v334
          %v337 = vmax.f32 %v336, 0.0
          %v338 = vadd.f32 %v337, 1e-05
          %v339 = vrsqrt.pop %v338
          %v342 = vunpack.c.l.s4 1966171168
          %v343 = vunpack.c.0.s8 %v342
          %v344 = vlaneseq
          %v345 = vshrl.u32 %v344, 7
          %v346 = vsub.s32 %v343, %v345
          %v347 = vrot.slane %v339, %v346
          %v348 = vcombine.high %v347, %v347
          %v350 = vunpack.c.l.s4 1966171168
          %v351 = vunpack.c.0.s8 %v350
          %v352 = vlaneseq
          %v353 = vshrl.u32 %v352, 7
          %v354 = vsub.s32 %v351, %v353
          %v355 = vrot.slane %v348, %v354
          %v357 = vmul.f32 %v329, %v355
          %v358 = vmul.f32 %v331, %v357
          %v359 = vsub.f32 %v330, %v358
          %360 = vst.msk [vmem:[%s4] sm:$0x1] %vm308, %v357
          %361 = vst.msk [vmem:[%s4 + $0x1] sm:$0x1] %vm308, %v359
        $region56: #{transform_net_forward.5} parent=35 // pred_fallthru
          _
        // Predicated region
        $region57: #{transform_net_forward.5} parent=35 // pred_check
          %p362 = pneg %p119
        $region58: #{transform_net_forward.5} parent=35 // pred_check_branch
          %364 = sbr.rel (%p362) target = $region60
        $region59: #{transform_net_forward.5} parent=35 // pred_region
          _
        $region60: #{transform_net_forward.5} parent=35 // pred_fallthru
          _
        // Predicated region
        $region61: #{transform_net_forward.5} parent=35 // pred_check
          %p365 = pneg %p119
        $region62: #{transform_net_forward.5} parent=35 // pred_check_branch
          %367 = sbr.rel (%p365) target = $region64
        $region63: #{transform_net_forward.5} parent=35 // pred_region
          _
        $region64: #{transform_net_forward.5} parent=35 // pred_fallthru
          _
      $region36: #{transform_net_forward.5} parent=5 // pred_fallthru
        _
      %p368 = scmp.le.s32.totalorder 2, %s12
      // Predicated region
      $region65: #{transform_net_forward.5} parent=5 // pred_check
        %p369 = pneg %p368
      $region66: #{transform_net_forward.5} parent=5 // pred_check_branch
        %371 = sbr.rel (%p369) target = $region68
      $region67: #{transform_net_forward.5} parent=5 // pred_region
        %s372 = ssub.s32 %s12, 2
      $region68: #{transform_net_forward.5} parent=5 // pred_fallthru
        _
    $region6: #{transform_net_forward.5} parent=1 // loop_footer
      %s16 = sadd.s32 1, %s12
    $region7: #{transform_net_forward.5} parent=1 // loop_footer_branch
      %11 = sbr.rel target = $region3
    $region8: #{transform_net_forward.5} parent=1 // loop_exit
      _
    %373 = vsyncpa [#allocation4], 1
    %s374 = scalar_lea.sflag [#allocation4], 1
    %375 = vsyncpa %s374, 1
    %376 = vsyncpa [#allocation6], 1

// kernel: transform_net_forward.6
$region0: #{transform_net_forward.6}
  #allocation0 [shape = 'u32[]', space=smem, size = 0x4, offset = 0x4, fixed_abs, tag = 'smem constant byte address 0x4 - core index']
  #allocation1 [shape = 'u32[144,128]{1,0:T(1,128)}', space=vmem, size = 0x12000, scoped, tag = 'internal scratch']
  #allocation2 [shape = 'f32[2,128]{1,0:T(2,128)}', space=vmem, size = 0x400, scoped, tag = 'scratch operand']
  %s0 = inlined_call_operand.vmem [shape: f32[32,4], index: 0, kind: input, shape index: {}]
  %s1 = inlined_call_operand.hbm [shape: f32[4,64], index: 1, kind: input, shape index: {}]
  %s2 = inlined_call_operand.vmem [shape: f32[2,64], index: 2, kind: input, shape index: {}]
  %s3 = inlined_call_operand.vmem [shape: bf16[64,128], index: 3, kind: input, shape index: {}]
  %s4 = inlined_call_operand.hbm [shape: f32[1,128], index: 4, kind: input, shape index: {}]
  %s5 = inlined_call_operand.hbm [shape: f32[1,128], index: 5, kind: input, shape index: {}]
  %s6 = inlined_call_operand.vmem [shape: f32[2,128], index: 6, kind: output, shape index: {}]
  %s7 = sld [smem:[#allocation0]]
  $region77: #{transform_net_forward.6} parent=0
    _
  %s9 = ssub.s32 1, %s7
  %s10 = scalar_select 0, %s9, %s7
  $region1: #{transform_net_forward.6} parent=0
    #allocation3 [shape = 'u8[2048]{0}', space=vmem, size = 0x800, scoped, tag = 'input window, operand 1, single buffered']
    #allocation4 [shape = 's32[2]{0}', space=sflag, size = 0x8, scoped, tag = 'scoped memory for transform_net_forward.6']
    #allocation5 [shape = 'u8[512]{0}', space=vmem, size = 0x400, scoped, tag = 'input window, operand 4, single buffered']
    #allocation6 [shape = 's32[1]{0}', space=sflag, size = 0x4, scoped, tag = 'scoped memory for transform_net_forward.6']
    #allocation7 [shape = 'u8[512]{0}', space=vmem, size = 0x400, scoped, tag = 'input window, operand 5, single buffered']
    %11 = vsyncpa [#allocation4], 0
    %12 = vsyncpa [#allocation6], 0
    loop: start=0, step=1, limit=4
    $region2: #{transform_net_forward.6} parent=1 // loop_pre_header
      _
    $region3: #{transform_net_forward.6} parent=1 // loop_header
      %s14 = sphi 0, %s18
      %p15 = scmp.ge.s32.totalorder %s14, 4
      %s24 = sphi 0, %s26
      %s27 = sphi 0, %s24
      %s28 = sphi 0, %s27
      %s44 = sphi 0, %s28
      %s48 = sphi 0, %s48
      %s50 = sphi 0, %s48
      %s51 = sphi 0, %s50
      %s65 = sphi 0, %s51
      %s69 = sphi 0, %s69
      %s71 = sphi 0, %s69
      %s72 = sphi 0, %s71
      %s86 = sphi 0, %s72
      %s90 = sphi 0, %s90
      %s92 = sphi 0, %s90
      %s93 = sphi 0, %s92
      %s107 = sphi 0, %s93
      %s111 = sphi 0, %s111
      %s113 = sphi 0, %s111
      %s114 = sphi 0, %s113
      %s128 = sphi 0, %s114
      %s132 = sphi 0, %s132
      %s134 = sphi 0, %s132
      %s135 = sphi 0, %s134
      %s149 = sphi 0, %s135
      %s153 = sphi 0, %s153
      %s155 = sphi 0, %s153
      %s156 = sphi 0, %s155
      %s170 = sphi 0, %s156
    $region4: #{transform_net_forward.6} parent=1 // loop_header_branch
      %17 = sbr.rel (%p15) target = $region8
    $region5: #{transform_net_forward.6} parent=1 // loop_body
      %s19 = ssub.s32 %s14, 1
      %s20 = ssub.s32 %s14, 2
      %s21 = sadd.s32 %s14, 1
      %s22 = ssub.s32 %s14, %s21
      %p23 = scmp.eq.s32.totalorder %s22, 0
      %s25 = sadd.s32 %s24, 1
      %s26 = scalar_select %p23, %s24, %s25
      %p29 = pneg %p23
      %p30 = scmp.eq.s32.totalorder %s14, 1
      %p31 = por %p29, %p30
      %p32 = scmp.ne.s32.totalorder %s24, %s27
      %p33 = scmp.eq.s32.totalorder %s14, 0
      %p34 = por %p32, %p33
      %p35 = scmp.ne.s32.totalorder %s24, %s27
      %p36 = scmp.eq.s32.totalorder %s19, 1
      %p37 = por %p35, %p36
      %p38 = scmp.ne.s32.totalorder %s27, %s28
      %p39 = scmp.eq.s32.totalorder %s19, 0
      %p40 = por %p38, %p39
      %p41 = scmp.ne.s32.totalorder %s27, %s28
      %p42 = scmp.eq.s32.totalorder %s20, 1
      %p43 = por %p41, %p42
      %p45 = scmp.ne.s32.totalorder %s28, %s44
      %p46 = scmp.eq.s32.totalorder %s20, 0
      %p47 = por %p45, %p46
      %s49 = sadd.s32 %s48, 1
      %p52 = scmp.eq.s32.totalorder %s14, 1
      %p53 = scmp.ne.s32.totalorder %s48, %s50
      %p54 = scmp.eq.s32.totalorder %s14, 0
      %p55 = por %p53, %p54
      %p56 = scmp.ne.s32.totalorder %s48, %s50
      %p57 = scmp.eq.s32.totalorder %s19, 1
      %p58 = por %p56, %p57
      %p59 = scmp.ne.s32.totalorder %s50, %s51
      %p60 = scmp.eq.s32.totalorder %s19, 0
      %p61 = por %p59, %p60
      %p62 = scmp.ne.s32.totalorder %s50, %s51
      %p63 = scmp.eq.s32.totalorder %s20, 1
      %p64 = por %p62, %p63
      %p66 = scmp.ne.s32.totalorder %s51, %s65
      %p67 = scmp.eq.s32.totalorder %s20, 0
      %p68 = por %p66, %p67
      %s70 = sadd.s32 %s69, 1
      %p73 = scmp.eq.s32.totalorder %s14, 1
      %p74 = scmp.ne.s32.totalorder %s69, %s71
      %p75 = scmp.eq.s32.totalorder %s14, 0
      %p76 = por %p74, %p75
      %p77 = scmp.ne.s32.totalorder %s69, %s71
      %p78 = scmp.eq.s32.totalorder %s19, 1
      %p79 = por %p77, %p78
      %p80 = scmp.ne.s32.totalorder %s71, %s72
      %p81 = scmp.eq.s32.totalorder %s19, 0
      %p82 = por %p80, %p81
      %p83 = scmp.ne.s32.totalorder %s71, %s72
      %p84 = scmp.eq.s32.totalorder %s20, 1
      %p85 = por %p83, %p84
      %p87 = scmp.ne.s32.totalorder %s72, %s86
      %p88 = scmp.eq.s32.totalorder %s20, 0
      %p89 = por %p87, %p88
      %s91 = sadd.s32 %s90, 1
      %p94 = scmp.eq.s32.totalorder %s14, 1
      %p95 = scmp.ne.s32.totalorder %s90, %s92
      %p96 = scmp.eq.s32.totalorder %s14, 0
      %p97 = por %p95, %p96
      %p98 = scmp.ne.s32.totalorder %s90, %s92
      %p99 = scmp.eq.s32.totalorder %s19, 1
      %p100 = por %p98, %p99
      %p101 = scmp.ne.s32.totalorder %s92, %s93
      %p102 = scmp.eq.s32.totalorder %s19, 0
      %p103 = por %p101, %p102
      %p104 = scmp.ne.s32.totalorder %s92, %s93
      %p105 = scmp.eq.s32.totalorder %s20, 1
      %p106 = por %p104, %p105
      %p108 = scmp.ne.s32.totalorder %s93, %s107
      %p109 = scmp.eq.s32.totalorder %s20, 0
      %p110 = por %p108, %p109
      %s112 = sadd.s32 %s111, 1
      %p115 = scmp.eq.s32.totalorder %s14, 1
      %p116 = scmp.ne.s32.totalorder %s111, %s113
      %p117 = scmp.eq.s32.totalorder %s14, 0
      %p118 = por %p116, %p117
      %p119 = scmp.ne.s32.totalorder %s111, %s113
      %p120 = scmp.eq.s32.totalorder %s19, 1
      %p121 = por %p119, %p120
      %p122 = scmp.ne.s32.totalorder %s113, %s114
      %p123 = scmp.eq.s32.totalorder %s19, 0
      %p124 = por %p122, %p123
      %p125 = scmp.ne.s32.totalorder %s113, %s114
      %p126 = scmp.eq.s32.totalorder %s20, 1
      %p127 = por %p125, %p126
      %p129 = scmp.ne.s32.totalorder %s114, %s128
      %p130 = scmp.eq.s32.totalorder %s20, 0
      %p131 = por %p129, %p130
      %s133 = sadd.s32 %s132, 1
      %p136 = scmp.eq.s32.totalorder %s14, 1
      %p137 = scmp.ne.s32.totalorder %s132, %s134
      %p138 = scmp.eq.s32.totalorder %s14, 0
      %p139 = por %p137, %p138
      %p140 = scmp.ne.s32.totalorder %s132, %s134
      %p141 = scmp.eq.s32.totalorder %s19, 1
      %p142 = por %p140, %p141
      %p143 = scmp.ne.s32.totalorder %s134, %s135
      %p144 = scmp.eq.s32.totalorder %s19, 0
      %p145 = por %p143, %p144
      %p146 = scmp.ne.s32.totalorder %s134, %s135
      %p147 = scmp.eq.s32.totalorder %s20, 1
      %p148 = por %p146, %p147
      %p150 = scmp.ne.s32.totalorder %s135, %s149
      %p151 = scmp.eq.s32.totalorder %s20, 0
      %p152 = por %p150, %p151
      %s154 = sadd.s32 %s153, 1
      %p157 = scmp.eq.s32.totalorder %s14, 1
      %p158 = scmp.ne.s32.totalorder %s153, %s155
      %p159 = scmp.eq.s32.totalorder %s14, 0
      %p160 = por %p158, %p159
      %p161 = scmp.ne.s32.totalorder %s153, %s155
      %p162 = scmp.eq.s32.totalorder %s19, 1
      %p163 = por %p161, %p162
      %p164 = scmp.ne.s32.totalorder %s155, %s156
      %p165 = scmp.eq.s32.totalorder %s19, 0
      %p166 = por %p164, %p165
      %p167 = scmp.ne.s32.totalorder %s155, %s156
      %p168 = scmp.eq.s32.totalorder %s20, 1
      %p169 = por %p167, %p168
      %p171 = scmp.ne.s32.totalorder %s156, %s170
      %p172 = scmp.eq.s32.totalorder %s20, 0
      %p173 = por %p171, %p172
      %p174 = scmp.le.s32.totalorder 1, %s14
      %p175 = scmp.lt.s32.totalorder %s14, 3
      %p176 = pnand %p174, %p175
      %p177 = pneg %p176
      // Predicated region
      $region9: #{transform_net_forward.6} parent=5 // pred_check
        _
      $region10: #{transform_net_forward.6} parent=5 // pred_check_branch
        %179 = sbr.rel (%p176) target = $region12
      $region11: #{transform_net_forward.6} parent=5 // pred_region
        %s180 = ssub.s32 %s14, 1
        // Predicated region
        $region13: #{transform_net_forward.6} parent=11 // pred_check
          %p181 = pneg %p61
        $region14: #{transform_net_forward.6} parent=11 // pred_check_branch
          %183 = sbr.rel (%p181) target = $region16
        $region15: #{transform_net_forward.6} parent=11 // pred_region
          %s185 = ssub.s32 64, 64
          %186 = vsyncadd [#allocation4], %s185
          %s188 = sshll.u32 [#allocation3], 4
          %s189 = int_to_ptr.vmem [resolvable:$true] %s188
          %191 = dma.hbm_to_vmem [thread:$0]  %s1, 64, %s189, [#allocation4]
        $region16: #{transform_net_forward.6} parent=11 // pred_fallthru
          _
        // Predicated region
        $region17: #{transform_net_forward.6} parent=11 // pred_check
          %p192 = pneg %p82
        $region18: #{transform_net_forward.6} parent=11 // pred_check_branch
          %194 = sbr.rel (%p192) target = $region20
        $region19: #{transform_net_forward.6} parent=11 // pred_region
          _
        $region20: #{transform_net_forward.6} parent=11 // pred_fallthru
          _
        // Predicated region
        $region21: #{transform_net_forward.6} parent=11 // pred_check
          %p195 = pneg %p103
        $region22: #{transform_net_forward.6} parent=11 // pred_check_branch
          %197 = sbr.rel (%p195) target = $region24
        $region23: #{transform_net_forward.6} parent=11 // pred_region
          _
        $region24: #{transform_net_forward.6} parent=11 // pred_fallthru
          _
        // Predicated region
        $region25: #{transform_net_forward.6} parent=11 // pred_check
          %p198 = pneg %p124
        $region26: #{transform_net_forward.6} parent=11 // pred_check_branch
          %200 = sbr.rel (%p198) target = $region28
        $region27: #{transform_net_forward.6} parent=11 // pred_region
          %s202 = ssub.s32 16, 16
          %203 = vsyncadd [#allocation6], %s202
          %s205 = sshll.u32 [#allocation5], 4
          %s206 = int_to_ptr.vmem [resolvable:$true] %s205
          %208 = dma.hbm_to_vmem [thread:$0]  %s4, 16, %s206, [#allocation6]
        $region28: #{transform_net_forward.6} parent=11 // pred_fallthru
          _
        // Predicated region
        $region29: #{transform_net_forward.6} parent=11 // pred_check
          %p209 = pneg %p145
        $region30: #{transform_net_forward.6} parent=11 // pred_check_branch
          %211 = sbr.rel (%p209) target = $region32
        $region31: #{transform_net_forward.6} parent=11 // pred_region
          %s213 = ssub.s32 16, 16
          %214 = vsyncadd [#allocation6], %s213
          %s216 = sshll.u32 [#allocation7], 4
          %s217 = int_to_ptr.vmem [resolvable:$true] %s216
          %219 = dma.hbm_to_vmem [thread:$0]  %s5, 16, %s217, [#allocation6]
        $region32: #{transform_net_forward.6} parent=11 // pred_fallthru
          _
      $region12: #{transform_net_forward.6} parent=5 // pred_fallthru
        _
      %p220 = scmp.lt.s32.totalorder %s14, 2
      // Predicated region
      $region33: #{transform_net_forward.6} parent=5 // pred_check
        %p221 = pneg %p220
      $region34: #{transform_net_forward.6} parent=5 // pred_check_branch
        %223 = sbr.rel (%p221) target = $region36
      $region35: #{transform_net_forward.6} parent=5 // pred_region
        // Predicated region
        $region37: #{transform_net_forward.6} parent=35 // pred_check
          %p224 = pneg %p34
        $region38: #{transform_net_forward.6} parent=35 // pred_check_branch
          %226 = sbr.rel (%p224) target = $region40
        $region39: #{transform_net_forward.6} parent=35 // pred_region
          %s227 = smul.u32 2, %s14
          %p228 = scmp.lt.s32.totalorder %s227, 3
          %s229 = scalar_select %p228, %s227, 3
          %s230 = smul.addr %s229, 8
          %s231 = scalar_lea.vmem %s0, %s230
          %s232 = smul.u32 2, %s14
        $region40: #{transform_net_forward.6} parent=35 // pred_fallthru
          _
      $region36: #{transform_net_forward.6} parent=5 // pred_fallthru
        _
      %p233 = scmp.le.s32.totalorder 1, %s14
      %p234 = scmp.lt.s32.totalorder %s14, 3
      %p235 = pnand %p233, %p234
      %p236 = pneg %p235
      // Predicated region
      $region41: #{transform_net_forward.6} parent=5 // pred_check
        _
      $region42: #{transform_net_forward.6} parent=5 // pred_check_branch
        %238 = sbr.rel (%p235) target = $region44
      $region43: #{transform_net_forward.6} parent=5 // pred_region
        %s239 = ssub.s32 %s14, 1
        // Predicated region
        $region45: #{transform_net_forward.6} parent=43 // pred_check
          %p240 = pneg %p61
        $region46: #{transform_net_forward.6} parent=43 // pred_check_branch
          %242 = sbr.rel (%p240) target = $region48
        $region47: #{transform_net_forward.6} parent=43 // pred_region
          %243 = dma.done [#allocation4], 64
        $region48: #{transform_net_forward.6} parent=43 // pred_fallthru
          _
        // Predicated region
        $region49: #{transform_net_forward.6} parent=43 // pred_check
          %p244 = pneg %p124
        $region50: #{transform_net_forward.6} parent=43 // pred_check_branch
          %246 = sbr.rel (%p244) target = $region52
        $region51: #{transform_net_forward.6} parent=43 // pred_region
          %247 = dma.done [#allocation6], 16
        $region52: #{transform_net_forward.6} parent=43 // pred_fallthru
          _
        // Predicated region
        $region53: #{transform_net_forward.6} parent=43 // pred_check
          %p248 = pneg %p145
        $region54: #{transform_net_forward.6} parent=43 // pred_check_branch
          %250 = sbr.rel (%p248) target = $region56
        $region55: #{transform_net_forward.6} parent=43 // pred_region
          %251 = dma.done [#allocation6], 16
        $region56: #{transform_net_forward.6} parent=43 // pred_fallthru
          _
        %s252 = smul.u32 2, %s19
        %p253 = scmp.lt.s32.totalorder %s252, 3
        %s254 = scalar_select %p253, %s252, 3
        %s255 = smul.addr %s254, 8
        %s256 = scalar_lea.vmem %s0, %s255
        %p257 = pneg %p40
        %p258 = pneg %p37
        %p259 = pneg %p61
        %p260 = pneg %p58
        %p261 = pneg %p82
        %p262 = pneg %p79
        %p263 = pneg %p103
        %p264 = pneg %p100
        %p265 = pneg %p124
        %p266 = pneg %p121
        %p267 = pneg %p145
        %p268 = pneg %p142
        %p269 = pneg %p166
        %p270 = pneg %p163
        %s271 = smul.u32 2, %s19
        %p272 = scmp.lt.s32.totalorder %s271, 3
        %s273 = scalar_select %p272, %s271, 3
        %s274 = smul.addr %s273, 8
        %s275 = scalar_lea.vmem %s0, %s274
        %s276 = smul.u32 2, %s19
        %p278 = scmp.eq.s32.totalorder %s19, 0
        // Predicated region
        $region57: #{transform_net_forward.6} parent=43 // pred_check
          %p279 = pneg %p278
        $region58: #{transform_net_forward.6} parent=43 // pred_check_branch
          %281 = sbr.rel (%p279) target = $region60
        $region59: #{transform_net_forward.6} parent=43 // pred_region
          %282 = vst [vmem:[#allocation2] sm:$0x3] 0.0
        $region60: #{transform_net_forward.6} parent=43 // pred_fallthru
          _
        %v283 = vld [vmem:[%s275] sm:$0xff]
        %v284 = vld [vmem:[%s275 + $0x8] sm:$0xff]
        %v285 = vld [vmem:[#allocation3] sm:$0xf]
        %287 = vset.pattern.permute.xlu0 0
        %288 = vperm.xlu0 %287, %v283
        %v289 = vpop.permute.xlu0 %288
        %292 = vset.pattern.permute.xlu0 0
        %293 = vperm.xlu0 %292, %v284
        %v294 = vpop.permute.xlu0 %293
        %v296 = vlaneseq
        %v297 = vshrl.u32 %v296, 7
        %v298 = vsub.s32 0, %v297
        %v299 = vrot.slane %v285, %v298
        %v300 = vmul.f32 %v289, %v299
        %v301 = vmul.f32 %v294, %v299
        %302 = vset.pattern.permute.xlu0 1
        %303 = vperm.xlu0 %302, %v283
        %v304 = vpop.permute.xlu0 %303
        %306 = vset.pattern.permute.xlu0 1
        %307 = vperm.xlu0 %306, %v284
        %v308 = vpop.permute.xlu0 %307
        %v310 = vlaneseq
        %v311 = vshrl.u32 %v310, 7
        %v312 = vsub.s32 1, %v311
        %v313 = vrot.slane %v285, %v312
        %v314 = vmul.f32 %v304, %v313
        %v315 = vmul.f32 %v308, %v313
        %v316 = vadd.f32 %v300, %v314
        %v317 = vadd.f32 %v301, %v315
        %318 = vset.pattern.permute.xlu0 2
        %319 = vperm.xlu0 %318, %v283
        %v320 = vpop.permute.xlu0 %319
        %322 = vset.pattern.permute.xlu0 2
        %323 = vperm.xlu0 %322, %v284
        %v324 = vpop.permute.xlu0 %323
        %v326 = vlaneseq
        %v327 = vshrl.u32 %v326, 7
        %v328 = vsub.s32 2, %v327
        %v329 = vrot.slane %v285, %v328
        %v330 = vmul.f32 %v320, %v329
        %v331 = vmul.f32 %v324, %v329
        %v332 = vadd.f32 %v316, %v330
        %v333 = vadd.f32 %v317, %v331
        %334 = vset.pattern.permute.xlu0 3
        %335 = vperm.xlu0 %334, %v283
        %v336 = vpop.permute.xlu0 %335
        %338 = vset.pattern.permute.xlu0 3
        %339 = vperm.xlu0 %338, %v284
        %v340 = vpop.permute.xlu0 %339
        %v342 = vlaneseq
        %v343 = vshrl.u32 %v342, 7
        %v344 = vsub.s32 3, %v343
        %v345 = vrot.slane %v285, %v344
        %v346 = vmul.f32 %v336, %v345
        %v347 = vmul.f32 %v340, %v345
        %v348 = vadd.f32 %v332, %v346
        %v349 = vadd.f32 %v333, %v347
        %v350 = vld [vmem:[%s2] sm:$0x3]
        %v351 = vlaneseq
        %v352 = vshrl.u32 %v351, 7
        %v353 = vsub.s32 0, %v352
        %v354 = vrot.slane %v350, %v353
        %v355 = vmul.f32 %v348, %v354
        %v356 = vmul.f32 %v349, %v354
        %v357 = vlaneseq
        %v358 = vshrl.u32 %v357, 7
        %v359 = vsub.s32 1, %v358
        %v360 = vrot.slane %v350, %v359
        %v361 = vadd.f32 %v355, %v360
        %v362 = vadd.f32 %v356, %v360
        %v363 = vmax.f32 %v361, 0.0
        %v364 = vmax.f32 %v362, 0.0
        %v365 = vpack.c.bf16 %v364, %v363
        %v366 = vld [vmem:[%s3] sm:$0xf]
        %v367 = vld [vmem:[%s3 + $0x4] sm:$0xf]
        %v368 = vld [vmem:[%s3 + $0x8] sm:$0xf]
        %v369 = vld [vmem:[%s3 + $0xc] sm:$0xf]
        %v370 = vld [vmem:[%s3 + $0x10] sm:$0xf]
        %v371 = vld [vmem:[%s3 + $0x14] sm:$0xf]
        %v372 = vld [vmem:[%s3 + $0x18] sm:$0xf]
        %v373 = vld [vmem:[%s3 + $0x1c] sm:$0xf]
        %v382 = vunpack.c.l.b16 %v366
        %v383 = vunpack.c.l.b16 %v367
        %v384 = vunpack.c.l.b16 %v368
        %v385 = vunpack.c.l.b16 %v369
        %v386 = vunpack.c.l.b16 %v370
        %v387 = vunpack.c.l.b16 %v371
        %v388 = vunpack.c.l.b16 %v372
        %v389 = vunpack.c.l.b16 %v373
        %v390 = vpack.c.b16 %v383, %v382
        %v391 = vpack.c.b16 %v385, %v384
        %v392 = vpack.c.b16 %v387, %v386
        %v393 = vpack.c.b16 %v389, %v388
        %vm398 = vcmask 523264
        %v400 = vsel %vm398, %v365, 0
        %402 = vmatprep.subr.bf16.mxu0 0
        %403 = vmatpush1.bf16.msra.mxu0 0
        %404 = vmatprep.subr.bf16.mxu0 0
        %405 = vmatpush1.bf16.msra.mxu0 0
        %406 = vmatprep.subr.bf16.mxu0 0
        %407 = vmatpush1.bf16.msra.mxu0 0
        %408 = vmatprep.subr.bf16.mxu0 0
        %409 = vmatpush1.bf16.msra.mxu0 0
        %410 = vmatprep.subr.bf16.mxu0 0
        %411 = vmatpush1.bf16.msra.mxu0 %v393
        %412 = vmatprep.subr.bf16.mxu0 0
        %413 = vmatpush1.bf16.msra.mxu0 %v392
        %414 = vmatprep.subr.bf16.mxu0 0
        %415 = vmatpush1.bf16.msra.mxu0 %v391
        %416 = vmatprep.subr.bf16.mxu0 0
        %417 = vmatpush1.bf16.msra.mxu0 %v390
        %418 = vmatprep.subr.bf16.mxu0 0
        %419 = vmatpush2.bf16.msra.mxu0 0
        %420 = vmatprep.subr.bf16.mxu0 0
        %421 = vmatpush2.bf16.msra.mxu0 0
        %422 = vmatprep.subr.bf16.mxu0 0
        %423 = vmatpush2.bf16.msra.mxu0 0
        %424 = vmatprep.subr.bf16.mxu0 0
        %425 = vmatpush2.bf16.msra.mxu0 0
        %426 = vmatprep.subr.bf16.mxu0 0
        %427 = vmatpush2.bf16.msra.mxu0 0
        %428 = vmatprep.subr.bf16.mxu0 0
        %429 = vmatpush2.bf16.msra.mxu0 0
        %430 = vmatprep.subr.bf16.mxu0 0
        %431 = vmatpush2.bf16.msra.mxu0 0
        %432 = vmatprep.subr.bf16.mxu0 0
        %433 = vmatpush2.bf16.msra.mxu0 0
        %434 = vmatprep.mubr.bf16.mxu0 0
        %435 = vmatmul.mubr.bf16.gmra.mxu0 %v400
        %v436 = vpop.f32.mrf.mxu0
        %v437 = vadd.f32 0.0, %v436
        %v438 = vpop.f32.mrf.mxu0
        %v439 = vpop.f32.mrf.mxu0
        %v440 = vadd.f32 0.0, %v439
        %v441 = vpop.f32.mrf.mxu0
        %442 = vdwg.mxu0
        %v443 = vld [vmem:[#allocation2] sm:$0x1]
        %v444 = vadd.f32 %v437, %v440
        %v445 = vrot.slane %v444, 4
        %v446 = vadd.f32 %v444, %v445
        %v447 = vrot.slane %v446, 2
        %v448 = vadd.f32 %v446, %v447
        %v449 = vrot.slane %v448, 1
        %v450 = vadd.f32 %v448, %v449
        %v451 = vadd.f32 %v443, %v450
        %452 = vst [vmem:[#allocation2] sm:$0x1] %v451
        %v453 = vld [vmem:[#allocation2 + $0x1] sm:$0x1]
        %v454 = vmul.f32 %v437, %v437
        %v455 = vmul.f32 %v440, %v440
        %v456 = vadd.f32 %v454, %v455
        %v457 = vrot.slane %v456, 4
        %v458 = vadd.f32 %v456, %v457
        %v459 = vrot.slane %v458, 2
        %v460 = vadd.f32 %v458, %v459
        %v461 = vrot.slane %v460, 1
        %v462 = vadd.f32 %v460, %v461
        %v463 = vadd.f32 %v453, %v462
        %464 = vst [vmem:[#allocation2 + $0x1] sm:$0x1] %v463
        %p465 = scmp.eq.s32.totalorder %s19, 1
        // Predicated region
        $region61: #{transform_net_forward.6} parent=43 // pred_check
          %p466 = pneg %p465
        $region62: #{transform_net_forward.6} parent=43 // pred_check_branch
          %468 = sbr.rel (%p466) target = $region64
        $region63: #{transform_net_forward.6} parent=43 // pred_region
          %v469 = vld [vmem:[#allocation2] sm:$0x3]
          %v470 = vld [vmem:[#allocation5] sm:$0x1]
          %v471 = vld [vmem:[#allocation7] sm:$0x1]
          %v472 = vmul.f32 %v469, 0.03125
          %v473 = vmul.f32 %v472, %v472
          %v475 = vrot.slane %v473, 7
          %v477 = vsub.f32 %v472, %v475
          %v478 = vmax.f32 %v477, 0.0
          %v479 = vadd.f32 %v478, 1e-05
          %v480 = vrsqrt.pop %v479
          %v483 = vunpack.c.l.s4 1966171168
          %v484 = vunpack.c.0.s8 %v483
          %v485 = vlaneseq
          %v486 = vshrl.u32 %v485, 7
          %v487 = vsub.s32 %v484, %v486
          %v488 = vrot.slane %v480, %v487
          %v489 = vcombine.high %v488, %v488
          %v491 = vunpack.c.l.s4 1966171168
          %v492 = vunpack.c.0.s8 %v491
          %v493 = vlaneseq
          %v494 = vshrl.u32 %v493, 7
          %v495 = vsub.s32 %v492, %v494
          %v496 = vrot.slane %v489, %v495
          %v498 = vmul.f32 %v470, %v496
          %v499 = vmul.f32 %v472, %v498
          %v500 = vsub.f32 %v471, %v499
          %501 = vst [vmem:[%s6] sm:$0x1] %v498
          %502 = vst [vmem:[%s6 + $0x1] sm:$0x1] %v500
        $region64: #{transform_net_forward.6} parent=43 // pred_fallthru
          _
        // Predicated region
        $region65: #{transform_net_forward.6} parent=43 // pred_check
          %p503 = pneg %p163
        $region66: #{transform_net_forward.6} parent=43 // pred_check_branch
          %505 = sbr.rel (%p503) target = $region68
        $region67: #{transform_net_forward.6} parent=43 // pred_region
          _
        $region68: #{transform_net_forward.6} parent=43 // pred_fallthru
          _
        // Predicated region
        $region69: #{transform_net_forward.6} parent=43 // pred_check
          %p506 = pneg %p163
        $region70: #{transform_net_forward.6} parent=43 // pred_check_branch
          %508 = sbr.rel (%p506) target = $region72
        $region71: #{transform_net_forward.6} parent=43 // pred_region
          _
        $region72: #{transform_net_forward.6} parent=43 // pred_fallthru
          _
      $region44: #{transform_net_forward.6} parent=5 // pred_fallthru
        _
      %p509 = scmp.le.s32.totalorder 2, %s14
      // Predicated region
      $region73: #{transform_net_forward.6} parent=5 // pred_check
        %p510 = pneg %p509
      $region74: #{transform_net_forward.6} parent=5 // pred_check_branch
        %512 = sbr.rel (%p510) target = $region76
      $region75: #{transform_net_forward.6} parent=5 // pred_region
        %s513 = ssub.s32 %s14, 2
      $region76: #{transform_net_forward.6} parent=5 // pred_fallthru
        _
    $region6: #{transform_net_forward.6} parent=1 // loop_footer
      %s18 = sadd.s32 1, %s14
    $region7: #{transform_net_forward.6} parent=1 // loop_footer_branch
      %13 = sbr.rel target = $region3
    $region8: #{transform_net_forward.6} parent=1 // loop_exit
      _
    %514 = vsyncpa [#allocation4], 1
    %s515 = scalar_lea.sflag [#allocation4], 1
    %516 = vsyncpa %s515, 1
    %517 = vsyncpa [#allocation6], 1

// kernel: transform_net_forward.8
$region0: #{transform_net_forward.8}
  #allocation0 [shape = 'u32[]', space=smem, size = 0x4, offset = 0x4, fixed_abs, tag = 'smem constant byte address 0x4 - core index']
  #allocation1 [shape = 'u32[144,128]{1,0:T(1,128)}', space=vmem, size = 0x12000, scoped, tag = 'internal scratch']
  #allocation2 [shape = 'f32[1,1024]{1,0:T(1,128)}', space=vmem, size = 0x1000, scoped, tag = 'scratch operand']
  %s0 = inlined_call_operand.vmem [shape: f32[32,4], index: 0, kind: input, shape index: {}]
  %s1 = inlined_call_operand.hbm [shape: f32[4,64], index: 1, kind: input, shape index: {}]
  %s2 = inlined_call_operand.vmem [shape: f32[2,64], index: 2, kind: input, shape index: {}]
  %s3 = inlined_call_operand.vmem [shape: bf16[64,128], index: 3, kind: input, shape index: {}]
  %s4 = inlined_call_operand.vmem [shape: f32[2,128], index: 4, kind: input, shape index: {}]
  %s5 = inlined_call_operand.vmem [shape: bf16[128,1024], index: 5, kind: input, shape index: {}]
  %s6 = inlined_call_operand.vmem [shape: f32[2,1024], index: 6, kind: input, shape index: {}]
  %s7 = inlined_call_operand.vmem [shape: f32[2,1,1024], index: 7, kind: output, shape index: {}]
  %s8 = sld [smem:[#allocation0]]
  $region73: #{transform_net_forward.8} parent=0
    _
  %s10 = ssub.s32 1, %s8
  %s11 = scalar_select 0, %s10, %s8
  $region1: #{transform_net_forward.8} parent=0
    #allocation3 [shape = 'u8[2048]{0}', space=vmem, size = 0x800, scoped, tag = 'input window, operand 1, single buffered']
    #allocation4 [shape = 's32[2]{0}', space=sflag, size = 0x8, scoped, tag = 'scoped memory for transform_net_forward.8']
    %12 = vsyncpa [#allocation4], 0
    loop: start=0, step=1, limit=4
    $region2: #{transform_net_forward.8} parent=1 // loop_pre_header
      _
    $region3: #{transform_net_forward.8} parent=1 // loop_header
      %s14 = sphi 0, %s18
      %p15 = scmp.ge.s32.totalorder %s14, 4
      %s21 = sphi 0, %s33
      %s22 = sphi 0, %s29
      %s23 = sphi 0, %s21
      %s24 = sphi 0, %s22
      %s25 = sphi 0, %s23
      %s26 = sphi 0, %s24
      %s38 = sphi 0, %s40
      %s41 = sphi 0, %s38
      %s42 = sphi 0, %s41
      %s58 = sphi 0, %s42
      %s62 = sphi 0, %s62
      %s64 = sphi 0, %s62
      %s65 = sphi 0, %s64
      %s79 = sphi 0, %s65
      %s83 = sphi 0, %s83
      %s85 = sphi 0, %s83
      %s86 = sphi 0, %s85
      %s100 = sphi 0, %s86
      %s104 = sphi 0, %s104
      %s106 = sphi 0, %s104
      %s107 = sphi 0, %s106
      %s121 = sphi 0, %s107
      %s125 = sphi 0, %s125
      %s127 = sphi 0, %s125
      %s128 = sphi 0, %s127
      %s142 = sphi 0, %s128
      %s146 = sphi 0, %s146
      %s148 = sphi 0, %s146
      %s149 = sphi 0, %s148
      %s163 = sphi 0, %s149
      %s167 = sphi 0, %s167
      %s169 = sphi 0, %s167
      %s170 = sphi 0, %s169
      %s184 = sphi 0, %s170
      %s190 = sphi 0, %s192
      %s193 = sphi 0, %s190
      %s194 = sphi 0, %s193
      %s210 = sphi 0, %s194
    $region4: #{transform_net_forward.8} parent=1 // loop_header_branch
      %17 = sbr.rel (%p15) target = $region8
    $region5: #{transform_net_forward.8} parent=1 // loop_body
      %s19 = ssub.s32 %s14, 1
      %s20 = ssub.s32 %s14, 2
      %s27 = sadd.s32 1, %s22
      %p28 = scmp.ge.s32.totalorder %s27, 1
      %s29 = scalar_select %p28, 0, %s27
      %s30 = sadd.s32 1, %s21
      %s31 = scalar_select %p28, %s30, %s21
      %p32 = scmp.ge.s32.totalorder %s31, 2
      %s33 = scalar_select %p32, 0, %s31
      %s34 = sadd.s32 %s21, %s22
      %s35 = sadd.s32 %s33, %s29
      %s36 = ssub.s32 %s34, %s35
      %p37 = scmp.eq.s32.totalorder %s36, 0
      %s39 = sadd.s32 %s38, 1
      %s40 = scalar_select %p37, %s38, %s39
      %p43 = pneg %p37
      %p44 = scmp.eq.s32.totalorder %s14, 1
      %p45 = por %p43, %p44
      %p46 = scmp.ne.s32.totalorder %s38, %s41
      %p47 = scmp.eq.s32.totalorder %s14, 0
      %p48 = por %p46, %p47
      %p49 = scmp.ne.s32.totalorder %s38, %s41
      %p50 = scmp.eq.s32.totalorder %s19, 1
      %p51 = por %p49, %p50
      %p52 = scmp.ne.s32.totalorder %s41, %s42
      %p53 = scmp.eq.s32.totalorder %s19, 0
      %p54 = por %p52, %p53
      %p55 = scmp.ne.s32.totalorder %s41, %s42
      %p56 = scmp.eq.s32.totalorder %s20, 1
      %p57 = por %p55, %p56
      %p59 = scmp.ne.s32.totalorder %s42, %s58
      %p60 = scmp.eq.s32.totalorder %s20, 0
      %p61 = por %p59, %p60
      %s63 = sadd.s32 %s62, 1
      %p66 = scmp.eq.s32.totalorder %s14, 1
      %p67 = scmp.ne.s32.totalorder %s62, %s64
      %p68 = scmp.eq.s32.totalorder %s14, 0
      %p69 = por %p67, %p68
      %p70 = scmp.ne.s32.totalorder %s62, %s64
      %p71 = scmp.eq.s32.totalorder %s19, 1
      %p72 = por %p70, %p71
      %p73 = scmp.ne.s32.totalorder %s64, %s65
      %p74 = scmp.eq.s32.totalorder %s19, 0
      %p75 = por %p73, %p74
      %p76 = scmp.ne.s32.totalorder %s64, %s65
      %p77 = scmp.eq.s32.totalorder %s20, 1
      %p78 = por %p76, %p77
      %p80 = scmp.ne.s32.totalorder %s65, %s79
      %p81 = scmp.eq.s32.totalorder %s20, 0
      %p82 = por %p80, %p81
      %s84 = sadd.s32 %s83, 1
      %p87 = scmp.eq.s32.totalorder %s14, 1
      %p88 = scmp.ne.s32.totalorder %s83, %s85
      %p89 = scmp.eq.s32.totalorder %s14, 0
      %p90 = por %p88, %p89
      %p91 = scmp.ne.s32.totalorder %s83, %s85
      %p92 = scmp.eq.s32.totalorder %s19, 1
      %p93 = por %p91, %p92
      %p94 = scmp.ne.s32.totalorder %s85, %s86
      %p95 = scmp.eq.s32.totalorder %s19, 0
      %p96 = por %p94, %p95
      %p97 = scmp.ne.s32.totalorder %s85, %s86
      %p98 = scmp.eq.s32.totalorder %s20, 1
      %p99 = por %p97, %p98
      %p101 = scmp.ne.s32.totalorder %s86, %s100
      %p102 = scmp.eq.s32.totalorder %s20, 0
      %p103 = por %p101, %p102
      %s105 = sadd.s32 %s104, 1
      %p108 = scmp.eq.s32.totalorder %s14, 1
      %p109 = scmp.ne.s32.totalorder %s104, %s106
      %p110 = scmp.eq.s32.totalorder %s14, 0
      %p111 = por %p109, %p110
      %p112 = scmp.ne.s32.totalorder %s104, %s106
      %p113 = scmp.eq.s32.totalorder %s19, 1
      %p114 = por %p112, %p113
      %p115 = scmp.ne.s32.totalorder %s106, %s107
      %p116 = scmp.eq.s32.totalorder %s19, 0
      %p117 = por %p115, %p116
      %p118 = scmp.ne.s32.totalorder %s106, %s107
      %p119 = scmp.eq.s32.totalorder %s20, 1
      %p120 = por %p118, %p119
      %p122 = scmp.ne.s32.totalorder %s107, %s121
      %p123 = scmp.eq.s32.totalorder %s20, 0
      %p124 = por %p122, %p123
      %s126 = sadd.s32 %s125, 1
      %p129 = scmp.eq.s32.totalorder %s14, 1
      %p130 = scmp.ne.s32.totalorder %s125, %s127
      %p131 = scmp.eq.s32.totalorder %s14, 0
      %p132 = por %p130, %p131
      %p133 = scmp.ne.s32.totalorder %s125, %s127
      %p134 = scmp.eq.s32.totalorder %s19, 1
      %p135 = por %p133, %p134
      %p136 = scmp.ne.s32.totalorder %s127, %s128
      %p137 = scmp.eq.s32.totalorder %s19, 0
      %p138 = por %p136, %p137
      %p139 = scmp.ne.s32.totalorder %s127, %s128
      %p140 = scmp.eq.s32.totalorder %s20, 1
      %p141 = por %p139, %p140
      %p143 = scmp.ne.s32.totalorder %s128, %s142
      %p144 = scmp.eq.s32.totalorder %s20, 0
      %p145 = por %p143, %p144
      %s147 = sadd.s32 %s146, 1
      %p150 = scmp.eq.s32.totalorder %s14, 1
      %p151 = scmp.ne.s32.totalorder %s146, %s148
      %p152 = scmp.eq.s32.totalorder %s14, 0
      %p153 = por %p151, %p152
      %p154 = scmp.ne.s32.totalorder %s146, %s148
      %p155 = scmp.eq.s32.totalorder %s19, 1
      %p156 = por %p154, %p155
      %p157 = scmp.ne.s32.totalorder %s148, %s149
      %p158 = scmp.eq.s32.totalorder %s19, 0
      %p159 = por %p157, %p158
      %p160 = scmp.ne.s32.totalorder %s148, %s149
      %p161 = scmp.eq.s32.totalorder %s20, 1
      %p162 = por %p160, %p161
      %p164 = scmp.ne.s32.totalorder %s149, %s163
      %p165 = scmp.eq.s32.totalorder %s20, 0
      %p166 = por %p164, %p165
      %s168 = sadd.s32 %s167, 1
      %p171 = scmp.eq.s32.totalorder %s14, 1
      %p172 = scmp.ne.s32.totalorder %s167, %s169
      %p173 = scmp.eq.s32.totalorder %s14, 0
      %p174 = por %p172, %p173
      %p175 = scmp.ne.s32.totalorder %s167, %s169
      %p176 = scmp.eq.s32.totalorder %s19, 1
      %p177 = por %p175, %p176
      %p178 = scmp.ne.s32.totalorder %s169, %s170
      %p179 = scmp.eq.s32.totalorder %s19, 0
      %p180 = por %p178, %p179
      %p181 = scmp.ne.s32.totalorder %s169, %s170
      %p182 = scmp.eq.s32.totalorder %s20, 1
      %p183 = por %p181, %p182
      %p185 = scmp.ne.s32.totalorder %s170, %s184
      %p186 = scmp.eq.s32.totalorder %s20, 0
      %p187 = por %p185, %p186
      %s188 = ssub.s32 %s21, %s33
      %p189 = scmp.eq.s32.totalorder %s188, 0
      %s191 = sadd.s32 %s190, 1
      %s192 = scalar_select %p189, %s190, %s191
      %p195 = pneg %p189
      %p196 = scmp.eq.s32.totalorder %s14, 1
      %p197 = por %p195, %p196
      %p198 = scmp.ne.s32.totalorder %s190, %s193
      %p199 = scmp.eq.s32.totalorder %s14, 0
      %p200 = por %p198, %p199
      %p201 = scmp.ne.s32.totalorder %s190, %s193
      %p202 = scmp.eq.s32.totalorder %s19, 1
      %p203 = por %p201, %p202
      %p204 = scmp.ne.s32.totalorder %s193, %s194
      %p205 = scmp.eq.s32.totalorder %s19, 0
      %p206 = por %p204, %p205
      %p207 = scmp.ne.s32.totalorder %s193, %s194
      %p208 = scmp.eq.s32.totalorder %s20, 1
      %p209 = por %p207, %p208
      %p211 = scmp.ne.s32.totalorder %s194, %s210
      %p212 = scmp.eq.s32.totalorder %s20, 0
      %p213 = por %p211, %p212
      %p214 = scmp.le.s32.totalorder 1, %s14
      %p215 = scmp.lt.s32.totalorder %s14, 3
      %p216 = pnand %p214, %p215
      %p217 = pneg %p216
      // Predicated region
      $region9: #{transform_net_forward.8} parent=5 // pred_check
        _
      $region10: #{transform_net_forward.8} parent=5 // pred_check_branch
        %219 = sbr.rel (%p216) target = $region12
      $region11: #{transform_net_forward.8} parent=5 // pred_region
        %s220 = ssub.s32 %s14, 1
        // Predicated region
        $region13: #{transform_net_forward.8} parent=11 // pred_check
          %p221 = pneg %p75
        $region14: #{transform_net_forward.8} parent=11 // pred_check_branch
          %223 = sbr.rel (%p221) target = $region16
        $region15: #{transform_net_forward.8} parent=11 // pred_region
          %s225 = ssub.s32 64, 64
          %226 = vsyncadd [#allocation4], %s225
          %s228 = sshll.u32 [#allocation3], 4
          %s229 = int_to_ptr.vmem [resolvable:$true] %s228
          %231 = dma.hbm_to_vmem [thread:$0]  %s1, 64, %s229, [#allocation4]
        $region16: #{transform_net_forward.8} parent=11 // pred_fallthru
          _
        // Predicated region
        $region17: #{transform_net_forward.8} parent=11 // pred_check
          %p232 = pneg %p96
        $region18: #{transform_net_forward.8} parent=11 // pred_check_branch
          %234 = sbr.rel (%p232) target = $region20
        $region19: #{transform_net_forward.8} parent=11 // pred_region
          _
        $region20: #{transform_net_forward.8} parent=11 // pred_fallthru
          _
        // Predicated region
        $region21: #{transform_net_forward.8} parent=11 // pred_check
          %p235 = pneg %p117
        $region22: #{transform_net_forward.8} parent=11 // pred_check_branch
          %237 = sbr.rel (%p235) target = $region24
        $region23: #{transform_net_forward.8} parent=11 // pred_region
          _
        $region24: #{transform_net_forward.8} parent=11 // pred_fallthru
          _
        // Predicated region
        $region25: #{transform_net_forward.8} parent=11 // pred_check
          %p238 = pneg %p138
        $region26: #{transform_net_forward.8} parent=11 // pred_check_branch
          %240 = sbr.rel (%p238) target = $region28
        $region27: #{transform_net_forward.8} parent=11 // pred_region
          _
        $region28: #{transform_net_forward.8} parent=11 // pred_fallthru
          _
        // Predicated region
        $region29: #{transform_net_forward.8} parent=11 // pred_check
          %p241 = pneg %p159
        $region30: #{transform_net_forward.8} parent=11 // pred_check_branch
          %243 = sbr.rel (%p241) target = $region32
        $region31: #{transform_net_forward.8} parent=11 // pred_region
          _
        $region32: #{transform_net_forward.8} parent=11 // pred_fallthru
          _
        // Predicated region
        $region33: #{transform_net_forward.8} parent=11 // pred_check
          %p244 = pneg %p180
        $region34: #{transform_net_forward.8} parent=11 // pred_check_branch
          %246 = sbr.rel (%p244) target = $region36
        $region35: #{transform_net_forward.8} parent=11 // pred_region
          _
        $region36: #{transform_net_forward.8} parent=11 // pred_fallthru
          _
      $region12: #{transform_net_forward.8} parent=5 // pred_fallthru
        _
      %p247 = scmp.lt.s32.totalorder %s14, 2
      // Predicated region
      $region37: #{transform_net_forward.8} parent=5 // pred_check
        %p248 = pneg %p247
      $region38: #{transform_net_forward.8} parent=5 // pred_check_branch
        %250 = sbr.rel (%p248) target = $region40
      $region39: #{transform_net_forward.8} parent=5 // pred_region
        // Predicated region
        $region41: #{transform_net_forward.8} parent=39 // pred_check
          %p251 = pneg %p48
        $region42: #{transform_net_forward.8} parent=39 // pred_check_branch
          %253 = sbr.rel (%p251) target = $region44
        $region43: #{transform_net_forward.8} parent=39 // pred_region
          %s254 = sadd.s32 %s21, %s22
          %s255 = smul.u32 2, %s254
          %p256 = scmp.lt.s32.totalorder %s255, 3
          %s257 = scalar_select %p256, %s255, 3
          %s258 = smul.addr %s257, 8
          %s259 = scalar_lea.vmem %s0, %s258
          %s260 = sadd.s32 %s21, %s22
          %s261 = smul.u32 2, %s260
        $region44: #{transform_net_forward.8} parent=39 // pred_fallthru
          _
      $region40: #{transform_net_forward.8} parent=5 // pred_fallthru
        _
      %p262 = scmp.le.s32.totalorder 1, %s14
      %p263 = scmp.lt.s32.totalorder %s14, 3
      %p264 = pnand %p262, %p263
      %p265 = pneg %p264
      // Predicated region
      $region45: #{transform_net_forward.8} parent=5 // pred_check
        _
      $region46: #{transform_net_forward.8} parent=5 // pred_check_branch
        %267 = sbr.rel (%p264) target = $region48
      $region47: #{transform_net_forward.8} parent=5 // pred_region
        %s268 = ssub.s32 %s14, 1
        // Predicated region
        $region49: #{transform_net_forward.8} parent=47 // pred_check
          %p269 = pneg %p75
        $region50: #{transform_net_forward.8} parent=47 // pred_check_branch
          %271 = sbr.rel (%p269) target = $region52
        $region51: #{transform_net_forward.8} parent=47 // pred_region
          %272 = dma.done [#allocation4], 64
        $region52: #{transform_net_forward.8} parent=47 // pred_fallthru
          _
        %s273 = sadd.s32 %s23, %s24
        %s274 = smul.u32 2, %s273
        %p275 = scmp.lt.s32.totalorder %s274, 3
        %s276 = scalar_select %p275, %s274, 3
        %s277 = smul.addr %s276, 8
        %s278 = scalar_lea.vmem %s0, %s277
        %p279 = pneg %p54
        %p280 = pneg %p51
        %p281 = pneg %p75
        %p282 = pneg %p72
        %p283 = pneg %p96
        %p284 = pneg %p93
        %p285 = pneg %p117
        %p286 = pneg %p114
        %p287 = pneg %p138
        %p288 = pneg %p135
        %p289 = pneg %p159
        %p290 = pneg %p156
        %p291 = pneg %p180
        %p292 = pneg %p177
        %p293 = pneg %p206
        %p294 = pneg %p203
        %p295 = scmp.lt.s32.totalorder %s23, 1
        %s296 = scalar_select %p295, %s23, 1
        %s297 = smul.addr %s296, 8
        %s298 = scalar_lea.vmem %s7, %s297
        %s299 = sadd.s32 %s23, %s24
        %s300 = smul.u32 2, %s299
        %p301 = scmp.lt.s32.totalorder %s300, 3
        %s302 = scalar_select %p301, %s300, 3
        %s303 = smul.addr %s302, 8
        %s304 = scalar_lea.vmem %s0, %s303
        %s305 = sadd.s32 %s23, %s24
        %s306 = smul.u32 2, %s305
        %p307 = scmp.lt.s32.totalorder %s23, 1
        %s308 = scalar_select %p307, %s23, 1
        %s309 = smul.addr %s308, 8
        %s310 = scalar_lea.vmem %s7, %s309
        %v312 = vld [vmem:[%s304] sm:$0xff]
        %v313 = vld [vmem:[%s304 + $0x8] sm:$0xff]
        %v314 = vld [vmem:[#allocation3] sm:$0xf]
        %316 = vset.pattern.permute.xlu0 0
        %317 = vperm.xlu0 %316, %v312
        %v318 = vpop.permute.xlu0 %317
        %321 = vset.pattern.permute.xlu0 0
        %322 = vperm.xlu0 %321, %v313
        %v323 = vpop.permute.xlu0 %322
        %v325 = vlaneseq
        %v326 = vshrl.u32 %v325, 7
        %v327 = vsub.s32 0, %v326
        %v328 = vrot.slane %v314, %v327
        %v329 = vmul.f32 %v318, %v328
        %v330 = vmul.f32 %v323, %v328
        %331 = vset.pattern.permute.xlu0 1
        %332 = vperm.xlu0 %331, %v312
        %v333 = vpop.permute.xlu0 %332
        %335 = vset.pattern.permute.xlu0 1
        %336 = vperm.xlu0 %335, %v313
        %v337 = vpop.permute.xlu0 %336
        %v339 = vlaneseq
        %v340 = vshrl.u32 %v339, 7
        %v341 = vsub.s32 1, %v340
        %v342 = vrot.slane %v314, %v341
        %v343 = vmul.f32 %v333, %v342
        %v344 = vmul.f32 %v337, %v342
        %v345 = vadd.f32 %v329, %v343
        %v346 = vadd.f32 %v330, %v344
        %347 = vset.pattern.permute.xlu0 2
        %348 = vperm.xlu0 %347, %v312
        %v349 = vpop.permute.xlu0 %348
        %351 = vset.pattern.permute.xlu0 2
        %352 = vperm.xlu0 %351, %v313
        %v353 = vpop.permute.xlu0 %352
        %v355 = vlaneseq
        %v356 = vshrl.u32 %v355, 7
        %v357 = vsub.s32 2, %v356
        %v358 = vrot.slane %v314, %v357
        %v359 = vmul.f32 %v349, %v358
        %v360 = vmul.f32 %v353, %v358
        %v361 = vadd.f32 %v345, %v359
        %v362 = vadd.f32 %v346, %v360
        %363 = vset.pattern.permute.xlu0 3
        %364 = vperm.xlu0 %363, %v312
        %v365 = vpop.permute.xlu0 %364
        %367 = vset.pattern.permute.xlu0 3
        %368 = vperm.xlu0 %367, %v313
        %v369 = vpop.permute.xlu0 %368
        %v371 = vlaneseq
        %v372 = vshrl.u32 %v371, 7
        %v373 = vsub.s32 3, %v372
        %v374 = vrot.slane %v314, %v373
        %v375 = vmul.f32 %v365, %v374
        %v376 = vmul.f32 %v369, %v374
        %v377 = vadd.f32 %v361, %v375
        %v378 = vadd.f32 %v362, %v376
        %v379 = vld [vmem:[%s2] sm:$0x3]
        %v380 = vlaneseq
        %v381 = vshrl.u32 %v380, 7
        %v382 = vsub.s32 0, %v381
        %v383 = vrot.slane %v379, %v382
        %v384 = vmul.f32 %v377, %v383
        %v385 = vmul.f32 %v378, %v383
        %v386 = vlaneseq
        %v387 = vshrl.u32 %v386, 7
        %v388 = vsub.s32 1, %v387
        %v389 = vrot.slane %v379, %v388
        %v390 = vadd.f32 %v384, %v389
        %v391 = vadd.f32 %v385, %v389
        %v392 = vmax.f32 %v390, 0.0
        %v393 = vmax.f32 %v391, 0.0
        %v394 = vpack.c.bf16 %v393, %v392
        %v395 = vld [vmem:[%s3] sm:$0xf]
        %v396 = vld [vmem:[%s3 + $0x4] sm:$0xf]
        %v397 = vld [vmem:[%s3 + $0x8] sm:$0xf]
        %v398 = vld [vmem:[%s3 + $0xc] sm:$0xf]
        %v399 = vld [vmem:[%s3 + $0x10] sm:$0xf]
        %v400 = vld [vmem:[%s3 + $0x14] sm:$0xf]
        %v401 = vld [vmem:[%s3 + $0x18] sm:$0xf]
        %v402 = vld [vmem:[%s3 + $0x1c] sm:$0xf]
        %v411 = vunpack.c.l.b16 %v395
        %v412 = vunpack.c.l.b16 %v396
        %v413 = vunpack.c.l.b16 %v397
        %v414 = vunpack.c.l.b16 %v398
        %v415 = vunpack.c.l.b16 %v399
        %v416 = vunpack.c.l.b16 %v400
        %v417 = vunpack.c.l.b16 %v401
        %v418 = vunpack.c.l.b16 %v402
        %v419 = vpack.c.b16 %v412, %v411
        %v420 = vpack.c.b16 %v414, %v413
        %v421 = vpack.c.b16 %v416, %v415
        %v422 = vpack.c.b16 %v418, %v417
        %vm427 = vcmask 523264
        %v429 = vsel %vm427, %v394, 0
        %431 = vmatprep.subr.bf16.mxu0 0
        %432 = vmatpush1.bf16.msra.mxu0 0
        %433 = vmatprep.subr.bf16.mxu0 0
        %434 = vmatpush1.bf16.msra.mxu0 0
        %435 = vmatprep.subr.bf16.mxu0 0
        %436 = vmatpush1.bf16.msra.mxu0 0
        %437 = vmatprep.subr.bf16.mxu0 0
        %438 = vmatpush1.bf16.msra.mxu0 0
        %439 = vmatprep.subr.bf16.mxu0 0
        %440 = vmatpush1.bf16.msra.mxu0 %v422
        %441 = vmatprep.subr.bf16.mxu0 0
        %442 = vmatpush1.bf16.msra.mxu0 %v421
        %443 = vmatprep.subr.bf16.mxu0 0
        %444 = vmatpush1.bf16.msra.mxu0 %v420
        %445 = vmatprep.subr.bf16.mxu0 0
        %446 = vmatpush1.bf16.msra.mxu0 %v419
        %447 = vmatprep.subr.bf16.mxu0 0
        %448 = vmatpush2.bf16.msra.mxu0 0
        %449 = vmatprep.subr.bf16.mxu0 0
        %450 = vmatpush2.bf16.msra.mxu0 0
        %451 = vmatprep.subr.bf16.mxu0 0
        %452 = vmatpush2.bf16.msra.mxu0 0
        %453 = vmatprep.subr.bf16.mxu0 0
        %454 = vmatpush2.bf16.msra.mxu0 0
        %455 = vmatprep.subr.bf16.mxu0 0
        %456 = vmatpush2.bf16.msra.mxu0 0
        %457 = vmatprep.subr.bf16.mxu0 0
        %458 = vmatpush2.bf16.msra.mxu0 0
        %459 = vmatprep.subr.bf16.mxu0 0
        %460 = vmatpush2.bf16.msra.mxu0 0
        %461 = vmatprep.subr.bf16.mxu0 0
        %462 = vmatpush2.bf16.msra.mxu0 0
        %463 = vmatprep.mubr.bf16.mxu0 0
        %464 = vmatmul.mubr.bf16.gmra.mxu0 %v429
        %v465 = vpop.f32.mrf.mxu0
        %v466 = vadd.f32 0.0, %v465
        %v467 = vpop.f32.mrf.mxu0
        %v468 = vpop.f32.mrf.mxu0
        %v469 = vadd.f32 0.0, %v468
        %v470 = vpop.f32.mrf.mxu0
        %471 = vdwg.mxu0
        %v472 = vld [vmem:[%s4] sm:$0x3]
        %v473 = vlaneseq
        %v474 = vshrl.u32 %v473, 7
        %v475 = vsub.s32 0, %v474
        %v476 = vrot.slane %v472, %v475
        %v477 = vmul.f32 %v466, %v476
        %v478 = vmul.f32 %v469, %v476
        %v479 = vlaneseq
        %v480 = vshrl.u32 %v479, 7
        %v481 = vsub.s32 1, %v480
        %v482 = vrot.slane %v472, %v481
        %v483 = vadd.f32 %v477, %v482
        %v484 = vadd.f32 %v478, %v482
        %v485 = vmax.f32 %v483, 0.0
        %v486 = vmax.f32 %v484, 0.0
        %v487 = vpack.c.bf16 %v486, %v485
        %v488 = vld [vmem:[%s5] sm:$0xff]
        %v489 = vld [vmem:[%s5 + $0x8] sm:$0xff]
        %v490 = vld [vmem:[%s5 + $0x10] sm:$0xff]
        %v491 = vld [vmem:[%s5 + $0x18] sm:$0xff]
        %v492 = vld [vmem:[%s5 + $0x20] sm:$0xff]
        %v493 = vld [vmem:[%s5 + $0x28] sm:$0xff]
        %v494 = vld [vmem:[%s5 + $0x30] sm:$0xff]
        %v495 = vld [vmem:[%s5 + $0x38] sm:$0xff]
        %v496 = vld [vmem:[%s5 + $0x40] sm:$0xff]
        %v497 = vld [vmem:[%s5 + $0x48] sm:$0xff]
        %v498 = vld [vmem:[%s5 + $0x50] sm:$0xff]
        %v499 = vld [vmem:[%s5 + $0x58] sm:$0xff]
        %v500 = vld [vmem:[%s5 + $0x60] sm:$0xff]
        %v501 = vld [vmem:[%s5 + $0x68] sm:$0xff]
        %v502 = vld [vmem:[%s5 + $0x70] sm:$0xff]
        %v503 = vld [vmem:[%s5 + $0x78] sm:$0xff]
        %v504 = vld [vmem:[%s5 + $0x80] sm:$0xff]
        %v505 = vld [vmem:[%s5 + $0x88] sm:$0xff]
        %v506 = vld [vmem:[%s5 + $0x90] sm:$0xff]
        %v507 = vld [vmem:[%s5 + $0x98] sm:$0xff]
        %v508 = vld [vmem:[%s5 + $0xa0] sm:$0xff]
        %v509 = vld [vmem:[%s5 + $0xa8] sm:$0xff]
        %v510 = vld [vmem:[%s5 + $0xb0] sm:$0xff]
        %v511 = vld [vmem:[%s5 + $0xb8] sm:$0xff]
        %v512 = vld [vmem:[%s5 + $0xc0] sm:$0xff]
        %v513 = vld [vmem:[%s5 + $0xc8] sm:$0xff]
        %v514 = vld [vmem:[%s5 + $0xd0] sm:$0xff]
        %v515 = vld [vmem:[%s5 + $0xd8] sm:$0xff]
        %v516 = vld [vmem:[%s5 + $0xe0] sm:$0xff]
        %v517 = vld [vmem:[%s5 + $0xe8] sm:$0xff]
        %v518 = vld [vmem:[%s5 + $0xf0] sm:$0xff]
        %v519 = vld [vmem:[%s5 + $0xf8] sm:$0xff]
        %v520 = vld [vmem:[%s5 + $0x100] sm:$0xff]
        %v521 = vld [vmem:[%s5 + $0x108] sm:$0xff]
        %v522 = vld [vmem:[%s5 + $0x110] sm:$0xff]
        %v523 = vld [vmem:[%s5 + $0x118] sm:$0xff]
        %v524 = vld [vmem:[%s5 + $0x120] sm:$0xff]
        %v525 = vld [vmem:[%s5 + $0x128] sm:$0xff]
        %v526 = vld [vmem:[%s5 + $0x130] sm:$0xff]
        %v527 = vld [vmem:[%s5 + $0x138] sm:$0xff]
        %v528 = vld [vmem:[%s5 + $0x140] sm:$0xff]
        %v529 = vld [vmem:[%s5 + $0x148] sm:$0xff]
        %v530 = vld [vmem:[%s5 + $0x150] sm:$0xff]
        %v531 = vld [vmem:[%s5 + $0x158] sm:$0xff]
        %v532 = vld [vmem:[%s5 + $0x160] sm:$0xff]
        %v533 = vld [vmem:[%s5 + $0x168] sm:$0xff]
        %v534 = vld [vmem:[%s5 + $0x170] sm:$0xff]
        %v535 = vld [vmem:[%s5 + $0x178] sm:$0xff]
        %v536 = vld [vmem:[%s5 + $0x180] sm:$0xff]
        %v537 = vld [vmem:[%s5 + $0x188] sm:$0xff]
        %v538 = vld [vmem:[%s5 + $0x190] sm:$0xff]
        %v539 = vld [vmem:[%s5 + $0x198] sm:$0xff]
        %v540 = vld [vmem:[%s5 + $0x1a0] sm:$0xff]
        %v541 = vld [vmem:[%s5 + $0x1a8] sm:$0xff]
        %v542 = vld [vmem:[%s5 + $0x1b0] sm:$0xff]
        %v543 = vld [vmem:[%s5 + $0x1b8] sm:$0xff]
        %v544 = vld [vmem:[%s5 + $0x1c0] sm:$0xff]
        %v545 = vld [vmem:[%s5 + $0x1c8] sm:$0xff]
        %v546 = vld [vmem:[%s5 + $0x1d0] sm:$0xff]
        %v547 = vld [vmem:[%s5 + $0x1d8] sm:$0xff]
        %v548 = vld [vmem:[%s5 + $0x1e0] sm:$0xff]
        %v549 = vld [vmem:[%s5 + $0x1e8] sm:$0xff]
        %v550 = vld [vmem:[%s5 + $0x1f0] sm:$0xff]
        %v551 = vld [vmem:[%s5 + $0x1f8] sm:$0xff]
        %v616 = vunpack.c.l.b16 %v488
        %v617 = vunpack.c.h.b16 %v488
        %v618 = vunpack.c.l.b16 %v489
        %v619 = vunpack.c.h.b16 %v489
        %v620 = vunpack.c.l.b16 %v490
        %v621 = vunpack.c.h.b16 %v490
        %v622 = vunpack.c.l.b16 %v491
        %v623 = vunpack.c.h.b16 %v491
        %v624 = vunpack.c.l.b16 %v492
        %v625 = vunpack.c.h.b16 %v492
        %v626 = vunpack.c.l.b16 %v493
        %v627 = vunpack.c.h.b16 %v493
        %v628 = vunpack.c.l.b16 %v494
        %v629 = vunpack.c.h.b16 %v494
        %v630 = vunpack.c.l.b16 %v495
        %v631 = vunpack.c.h.b16 %v495
        %v632 = vunpack.c.l.b16 %v496
        %v633 = vunpack.c.h.b16 %v496
        %v634 = vunpack.c.l.b16 %v497
        %v635 = vunpack.c.h.b16 %v497
        %v636 = vunpack.c.l.b16 %v498
        %v637 = vunpack.c.h.b16 %v498
        %v638 = vunpack.c.l.b16 %v499
        %v639 = vunpack.c.h.b16 %v499
        %v640 = vunpack.c.l.b16 %v500
        %v641 = vunpack.c.h.b16 %v500
        %v642 = vunpack.c.l.b16 %v501
        %v643 = vunpack.c.h.b16 %v501
        %v644 = vunpack.c.l.b16 %v502
        %v645 = vunpack.c.h.b16 %v502
        %v646 = vunpack.c.l.b16 %v503
        %v647 = vunpack.c.h.b16 %v503
        %v648 = vunpack.c.l.b16 %v504
        %v649 = vunpack.c.h.b16 %v504
        %v650 = vunpack.c.l.b16 %v505
        %v651 = vunpack.c.h.b16 %v505
        %v652 = vunpack.c.l.b16 %v506
        %v653 = vunpack.c.h.b16 %v506
        %v654 = vunpack.c.l.b16 %v507
        %v655 = vunpack.c.h.b16 %v507
        %v656 = vunpack.c.l.b16 %v508
        %v657 = vunpack.c.h.b16 %v508
        %v658 = vunpack.c.l.b16 %v509
        %v659 = vunpack.c.h.b16 %v509
        %v660 = vunpack.c.l.b16 %v510
        %v661 = vunpack.c.h.b16 %v510
        %v662 = vunpack.c.l.b16 %v511
        %v663 = vunpack.c.h.b16 %v511
        %v664 = vunpack.c.l.b16 %v512
        %v665 = vunpack.c.h.b16 %v512
        %v666 = vunpack.c.l.b16 %v513
        %v667 = vunpack.c.h.b16 %v513
        %v668 = vunpack.c.l.b16 %v514
        %v669 = vunpack.c.h.b16 %v514
        %v670 = vunpack.c.l.b16 %v515
        %v671 = vunpack.c.h.b16 %v515
        %v672 = vunpack.c.l.b16 %v516
        %v673 = vunpack.c.h.b16 %v516
        %v674 = vunpack.c.l.b16 %v517
        %v675 = vunpack.c.h.b16 %v517
        %v676 = vunpack.c.l.b16 %v518
        %v677 = vunpack.c.h.b16 %v518
        %v678 = vunpack.c.l.b16 %v519
        %v679 = vunpack.c.h.b16 %v519
        %v680 = vunpack.c.l.b16 %v520
        %v681 = vunpack.c.h.b16 %v520
        %v682 = vunpack.c.l.b16 %v521
        %v683 = vunpack.c.h.b16 %v521
        %v684 = vunpack.c.l.b16 %v522
        %v685 = vunpack.c.h.b16 %v522
        %v686 = vunpack.c.l.b16 %v523
        %v687 = vunpack.c.h.b16 %v523
        %v688 = vunpack.c.l.b16 %v524
        %v689 = vunpack.c.h.b16 %v524
        %v690 = vunpack.c.l.b16 %v525
        %v691 = vunpack.c.h.b16 %v525
        %v692 = vunpack.c.l.b16 %v526
        %v693 = vunpack.c.h.b16 %v526
        %v694 = vunpack.c.l.b16 %v527
        %v695 = vunpack.c.h.b16 %v527
        %v696 = vunpack.c.l.b16 %v528
        %v697 = vunpack.c.h.b16 %v528
        %v698 = vunpack.c.l.b16 %v529
        %v699 = vunpack.c.h.b16 %v529
        %v700 = vunpack.c.l.b16 %v530
        %v701 = vunpack.c.h.b16 %v530
        %v702 = vunpack.c.l.b16 %v531
        %v703 = vunpack.c.h.b16 %v531
        %v704 = vunpack.c.l.b16 %v532
        %v705 = vunpack.c.h.b16 %v532
        %v706 = vunpack.c.l.b16 %v533
        %v707 = vunpack.c.h.b16 %v533
        %v708 = vunpack.c.l.b16 %v534
        %v709 = vunpack.c.h.b16 %v534
        %v710 = vunpack.c.l.b16 %v535
        %v711 = vunpack.c.h.b16 %v535
        %v712 = vunpack.c.l.b16 %v536
        %v713 = vunpack.c.h.b16 %v536
        %v714 = vunpack.c.l.b16 %v537
        %v715 = vunpack.c.h.b16 %v537
        %v716 = vunpack.c.l.b16 %v538
        %v717 = vunpack.c.h.b16 %v538
        %v718 = vunpack.c.l.b16 %v539
        %v719 = vunpack.c.h.b16 %v539
        %v720 = vunpack.c.l.b16 %v540
        %v721 = vunpack.c.h.b16 %v540
        %v722 = vunpack.c.l.b16 %v541
        %v723 = vunpack.c.h.b16 %v541
        %v724 = vunpack.c.l.b16 %v542
        %v725 = vunpack.c.h.b16 %v542
        %v726 = vunpack.c.l.b16 %v543
        %v727 = vunpack.c.h.b16 %v543
        %v728 = vunpack.c.l.b16 %v544
        %v729 = vunpack.c.h.b16 %v544
        %v730 = vunpack.c.l.b16 %v545
        %v731 = vunpack.c.h.b16 %v545
        %v732 = vunpack.c.l.b16 %v546
        %v733 = vunpack.c.h.b16 %v546
        %v734 = vunpack.c.l.b16 %v547
        %v735 = vunpack.c.h.b16 %v547
        %v736 = vunpack.c.l.b16 %v548
        %v737 = vunpack.c.h.b16 %v548
        %v738 = vunpack.c.l.b16 %v549
        %v739 = vunpack.c.h.b16 %v549
        %v740 = vunpack.c.l.b16 %v550
        %v741 = vunpack.c.h.b16 %v550
        %v742 = vunpack.c.l.b16 %v551
        %v743 = vunpack.c.h.b16 %v551
        %v744 = vpack.c.b16 %v624, %v616
        %v745 = vpack.c.b16 %v625, %v617
        %v746 = vpack.c.b16 %v626, %v618
        %v747 = vpack.c.b16 %v627, %v619
        %v748 = vpack.c.b16 %v628, %v620
        %v749 = vpack.c.b16 %v629, %v621
        %v750 = vpack.c.b16 %v630, %v622
        %v751 = vpack.c.b16 %v631, %v623
        %v752 = vpack.c.b16 %v640, %v632
        %v753 = vpack.c.b16 %v641, %v633
        %v754 = vpack.c.b16 %v642, %v634
        %v755 = vpack.c.b16 %v643, %v635
        %v756 = vpack.c.b16 %v644, %v636
        %v757 = vpack.c.b16 %v645, %v637
        %v758 = vpack.c.b16 %v646, %v638
        %v759 = vpack.c.b16 %v647, %v639
        %v760 = vpack.c.b16 %v656, %v648
        %v761 = vpack.c.b16 %v657, %v649
        %v762 = vpack.c.b16 %v658, %v650
        %v763 = vpack.c.b16 %v659, %v651
        %v764 = vpack.c.b16 %v660, %v652
        %v765 = vpack.c.b16 %v661, %v653
        %v766 = vpack.c.b16 %v662, %v654
        %v767 = vpack.c.b16 %v663, %v655
        %v768 = vpack.c.b16 %v672, %v664
        %v769 = vpack.c.b16 %v673, %v665
        %v770 = vpack.c.b16 %v674, %v666
        %v771 = vpack.c.b16 %v675, %v667
        %v772 = vpack.c.b16 %v676, %v668
        %v773 = vpack.c.b16 %v677, %v669
        %v774 = vpack.c.b16 %v678, %v670
        %v775 = vpack.c.b16 %v679, %v671
        %v776 = vpack.c.b16 %v688, %v680
        %v777 = vpack.c.b16 %v689, %v681
        %v778 = vpack.c.b16 %v690, %v682
        %v779 = vpack.c.b16 %v691, %v683
        %v780 = vpack.c.b16 %v692, %v684
        %v781 = vpack.c.b16 %v693, %v685
        %v782 = vpack.c.b16 %v694, %v686
        %v783 = vpack.c.b16 %v695, %v687
        %v784 = vpack.c.b16 %v704, %v696
        %v785 = vpack.c.b16 %v705, %v697
        %v786 = vpack.c.b16 %v706, %v698
        %v787 = vpack.c.b16 %v707, %v699
        %v788 = vpack.c.b16 %v708, %v700
        %v789 = vpack.c.b16 %v709, %v701
        %v790 = vpack.c.b16 %v710, %v702
        %v791 = vpack.c.b16 %v711, %v703
        %v792 = vpack.c.b16 %v720, %v712
        %v793 = vpack.c.b16 %v721, %v713
        %v794 = vpack.c.b16 %v722, %v714
        %v795 = vpack.c.b16 %v723, %v715
        %v796 = vpack.c.b16 %v724, %v716
        %v797 = vpack.c.b16 %v725, %v717
        %v798 = vpack.c.b16 %v726, %v718
        %v799 = vpack.c.b16 %v727, %v719
        %v800 = vpack.c.b16 %v736, %v728
        %v801 = vpack.c.b16 %v737, %v729
        %v802 = vpack.c.b16 %v738, %v730
        %v803 = vpack.c.b16 %v739, %v731
        %v804 = vpack.c.b16 %v740, %v732
        %v805 = vpack.c.b16 %v741, %v733
        %v806 = vpack.c.b16 %v742, %v734
        %v807 = vpack.c.b16 %v743, %v735
        %872 = vmatprep.subr.bf16.mxu0 %v801
        %873 = vmatpush1.bf16.msra.mxu0 %v800
        %874 = vmatprep.subr.bf16.mxu0 %v793
        %875 = vmatpush1.bf16.msra.mxu0 %v792
        %876 = vmatprep.subr.bf16.mxu0 %v785
        %877 = vmatpush1.bf16.msra.mxu0 %v784
        %878 = vmatprep.subr.bf16.mxu0 %v777
        %879 = vmatpush1.bf16.msra.mxu0 %v776
        %880 = vmatprep.subr.bf16.mxu0 %v769
        %881 = vmatpush1.bf16.msra.mxu0 %v768
        %882 = vmatprep.subr.bf16.mxu0 %v761
        %883 = vmatpush1.bf16.msra.mxu0 %v760
        %884 = vmatprep.subr.bf16.mxu0 %v753
        %885 = vmatpush1.bf16.msra.mxu0 %v752
        %886 = vmatprep.subr.bf16.mxu0 %v745
        %887 = vmatpush1.bf16.msra.mxu0 %v744
        %888 = vmatprep.subr.bf16.mxu0 0
        %889 = vmatpush2.bf16.msra.mxu0 0
        %890 = vmatprep.subr.bf16.mxu0 0
        %891 = vmatpush2.bf16.msra.mxu0 0
        %892 = vmatprep.subr.bf16.mxu0 0
        %893 = vmatpush2.bf16.msra.mxu0 0
        %894 = vmatprep.subr.bf16.mxu0 0
        %895 = vmatpush2.bf16.msra.mxu0 0
        %896 = vmatprep.subr.bf16.mxu0 0
        %897 = vmatpush2.bf16.msra.mxu0 0
        %898 = vmatprep.subr.bf16.mxu0 0
        %899 = vmatpush2.bf16.msra.mxu0 0
        %900 = vmatprep.subr.bf16.mxu0 0
        %901 = vmatpush2.bf16.msra.mxu0 0
        %902 = vmatprep.subr.bf16.mxu0 0
        %903 = vmatpush2.bf16.msra.mxu0 0
        %904 = vmatprep.mubr.bf16.mxu0 0
        %905 = vmatmul.mubr.bf16.gmra.mxu0 %v487
        %v906 = vpop.f32.mrf.mxu0
        %v907 = vadd.f32 0.0, %v906
        %v908 = vpop.f32.mrf.mxu0
        %v909 = vadd.f32 0.0, %v908
        %v910 = vpop.f32.mrf.mxu0
        %v911 = vadd.f32 0.0, %v910
        %v912 = vpop.f32.mrf.mxu0
        %v913 = vadd.f32 0.0, %v912
        %914 = vdwg.mxu0
        %915 = vmatprep.subr.bf16.mxu0 %v803
        %916 = vmatpush1.bf16.msra.mxu0 %v802
        %917 = vmatprep.subr.bf16.mxu0 %v795
        %918 = vmatpush1.bf16.msra.mxu0 %v794
        %919 = vmatprep.subr.bf16.mxu0 %v787
        %920 = vmatpush1.bf16.msra.mxu0 %v786
        %921 = vmatprep.subr.bf16.mxu0 %v779
        %922 = vmatpush1.bf16.msra.mxu0 %v778
        %923 = vmatprep.subr.bf16.mxu0 %v771
        %924 = vmatpush1.bf16.msra.mxu0 %v770
        %925 = vmatprep.subr.bf16.mxu0 %v763
        %926 = vmatpush1.bf16.msra.mxu0 %v762
        %927 = vmatprep.subr.bf16.mxu0 %v755
        %928 = vmatpush1.bf16.msra.mxu0 %v754
        %929 = vmatprep.subr.bf16.mxu0 %v747
        %930 = vmatpush1.bf16.msra.mxu0 %v746
        %931 = vmatprep.subr.bf16.mxu0 0
        %932 = vmatpush2.bf16.msra.mxu0 0
        %933 = vmatprep.subr.bf16.mxu0 0
        %934 = vmatpush2.bf16.msra.mxu0 0
        %935 = vmatprep.subr.bf16.mxu0 0
        %936 = vmatpush2.bf16.msra.mxu0 0
        %937 = vmatprep.subr.bf16.mxu0 0
        %938 = vmatpush2.bf16.msra.mxu0 0
        %939 = vmatprep.subr.bf16.mxu0 0
        %940 = vmatpush2.bf16.msra.mxu0 0
        %941 = vmatprep.subr.bf16.mxu0 0
        %942 = vmatpush2.bf16.msra.mxu0 0
        %943 = vmatprep.subr.bf16.mxu0 0
        %944 = vmatpush2.bf16.msra.mxu0 0
        %945 = vmatprep.subr.bf16.mxu0 0
        %946 = vmatpush2.bf16.msra.mxu0 0
        %947 = vmatprep.mubr.bf16.mxu0 0
        %948 = vmatmul.mubr.bf16.gmra.mxu0 %v487
        %v949 = vpop.f32.mrf.mxu0
        %v950 = vadd.f32 0.0, %v949
        %v951 = vpop.f32.mrf.mxu0
        %v952 = vadd.f32 0.0, %v951
        %v953 = vpop.f32.mrf.mxu0
        %v954 = vadd.f32 0.0, %v953
        %v955 = vpop.f32.mrf.mxu0
        %v956 = vadd.f32 0.0, %v955
        %957 = vdwg.mxu0
        %958 = vmatprep.subr.bf16.mxu0 %v805
        %959 = vmatpush1.bf16.msra.mxu0 %v804
        %960 = vmatprep.subr.bf16.mxu0 %v797
        %961 = vmatpush1.bf16.msra.mxu0 %v796
        %962 = vmatprep.subr.bf16.mxu0 %v789
        %963 = vmatpush1.bf16.msra.mxu0 %v788
        %964 = vmatprep.subr.bf16.mxu0 %v781
        %965 = vmatpush1.bf16.msra.mxu0 %v780
        %966 = vmatprep.subr.bf16.mxu0 %v773
        %967 = vmatpush1.bf16.msra.mxu0 %v772
        %968 = vmatprep.subr.bf16.mxu0 %v765
        %969 = vmatpush1.bf16.msra.mxu0 %v764
        %970 = vmatprep.subr.bf16.mxu0 %v757
        %971 = vmatpush1.bf16.msra.mxu0 %v756
        %972 = vmatprep.subr.bf16.mxu0 %v749
        %973 = vmatpush1.bf16.msra.mxu0 %v748
        %974 = vmatprep.subr.bf16.mxu0 0
        %975 = vmatpush2.bf16.msra.mxu0 0
        %976 = vmatprep.subr.bf16.mxu0 0
        %977 = vmatpush2.bf16.msra.mxu0 0
        %978 = vmatprep.subr.bf16.mxu0 0
        %979 = vmatpush2.bf16.msra.mxu0 0
        %980 = vmatprep.subr.bf16.mxu0 0
        %981 = vmatpush2.bf16.msra.mxu0 0
        %982 = vmatprep.subr.bf16.mxu0 0
        %983 = vmatpush2.bf16.msra.mxu0 0
        %984 = vmatprep.subr.bf16.mxu0 0
        %985 = vmatpush2.bf16.msra.mxu0 0
        %986 = vmatprep.subr.bf16.mxu0 0
        %987 = vmatpush2.bf16.msra.mxu0 0
        %988 = vmatprep.subr.bf16.mxu0 0
        %989 = vmatpush2.bf16.msra.mxu0 0
        %990 = vmatprep.mubr.bf16.mxu0 0
        %991 = vmatmul.mubr.bf16.gmra.mxu0 %v487
        %v992 = vpop.f32.mrf.mxu0
        %v993 = vadd.f32 0.0, %v992
        %v994 = vpop.f32.mrf.mxu0
        %v995 = vadd.f32 0.0, %v994
        %v996 = vpop.f32.mrf.mxu0
        %v997 = vadd.f32 0.0, %v996
        %v998 = vpop.f32.mrf.mxu0
        %v999 = vadd.f32 0.0, %v998
        %1000 = vdwg.mxu0
        %1001 = vmatprep.subr.bf16.mxu0 %v807
        %1002 = vmatpush1.bf16.msra.mxu0 %v806
        %1003 = vmatprep.subr.bf16.mxu0 %v799
        %1004 = vmatpush1.bf16.msra.mxu0 %v798
        %1005 = vmatprep.subr.bf16.mxu0 %v791
        %1006 = vmatpush1.bf16.msra.mxu0 %v790
        %1007 = vmatprep.subr.bf16.mxu0 %v783
        %1008 = vmatpush1.bf16.msra.mxu0 %v782
        %1009 = vmatprep.subr.bf16.mxu0 %v775
        %1010 = vmatpush1.bf16.msra.mxu0 %v774
        %1011 = vmatprep.subr.bf16.mxu0 %v767
        %1012 = vmatpush1.bf16.msra.mxu0 %v766
        %1013 = vmatprep.subr.bf16.mxu0 %v759
        %1014 = vmatpush1.bf16.msra.mxu0 %v758
        %1015 = vmatprep.subr.bf16.mxu0 %v751
        %1016 = vmatpush1.bf16.msra.mxu0 %v750
        %1017 = vmatprep.subr.bf16.mxu0 0
        %1018 = vmatpush2.bf16.msra.mxu0 0
        %1019 = vmatprep.subr.bf16.mxu0 0
        %1020 = vmatpush2.bf16.msra.mxu0 0
        %1021 = vmatprep.subr.bf16.mxu0 0
        %1022 = vmatpush2.bf16.msra.mxu0 0
        %1023 = vmatprep.subr.bf16.mxu0 0
        %1024 = vmatpush2.bf16.msra.mxu0 0
        %1025 = vmatprep.subr.bf16.mxu0 0
        %1026 = vmatpush2.bf16.msra.mxu0 0
        %1027 = vmatprep.subr.bf16.mxu0 0
        %1028 = vmatpush2.bf16.msra.mxu0 0
        %1029 = vmatprep.subr.bf16.mxu0 0
        %1030 = vmatpush2.bf16.msra.mxu0 0
        %1031 = vmatprep.subr.bf16.mxu0 0
        %1032 = vmatpush2.bf16.msra.mxu0 0
        %1033 = vmatprep.mubr.bf16.mxu0 0
        %1034 = vmatmul.mubr.bf16.gmra.mxu0 %v487
        %v1035 = vpop.f32.mrf.mxu0
        %v1036 = vadd.f32 0.0, %v1035
        %v1037 = vpop.f32.mrf.mxu0
        %v1038 = vadd.f32 0.0, %v1037
        %v1039 = vpop.f32.mrf.mxu0
        %v1040 = vadd.f32 0.0, %v1039
        %v1041 = vpop.f32.mrf.mxu0
        %v1042 = vadd.f32 0.0, %v1041
        %1043 = vdwg.mxu0
        %v1044 = vld [vmem:[%s6] sm:$0xff]
        %v1045 = vld [vmem:[%s6 + $0x8] sm:$0xff]
        %v1048 = vlaneseq
        %v1049 = vshrl.u32 %v1048, 7
        %v1050 = vsub.s32 0, %v1049
        %v1051 = vrot.slane %v1044, %v1050
        %v1052 = vlaneseq
        %v1053 = vshrl.u32 %v1052, 7
        %v1054 = vsub.s32 2, %v1053
        %v1055 = vrot.slane %v1044, %v1054
        %v1056 = vlaneseq
        %v1057 = vshrl.u32 %v1056, 7
        %v1058 = vsub.s32 4, %v1057
        %v1059 = vrot.slane %v1044, %v1058
        %v1060 = vlaneseq
        %v1061 = vshrl.u32 %v1060, 7
        %v1062 = vsub.s32 6, %v1061
        %v1063 = vrot.slane %v1044, %v1062
        %v1064 = vlaneseq
        %v1065 = vshrl.u32 %v1064, 7
        %v1066 = vsub.s32 0, %v1065
        %v1067 = vrot.slane %v1045, %v1066
        %v1068 = vlaneseq
        %v1069 = vshrl.u32 %v1068, 7
        %v1070 = vsub.s32 2, %v1069
        %v1071 = vrot.slane %v1045, %v1070
        %v1072 = vlaneseq
        %v1073 = vshrl.u32 %v1072, 7
        %v1074 = vsub.s32 4, %v1073
        %v1075 = vrot.slane %v1045, %v1074
        %v1076 = vlaneseq
        %v1077 = vshrl.u32 %v1076, 7
        %v1078 = vsub.s32 6, %v1077
        %v1079 = vrot.slane %v1045, %v1078
        %v1088 = vlaneseq
        %v1089 = vshrl.u32 %v1088, 7
        %v1090 = vsub.s32 0, %v1089
        %v1091 = vrot.slane %v1051, %v1090
        %v1092 = vlaneseq
        %v1093 = vshrl.u32 %v1092, 7
        %v1094 = vsub.s32 0, %v1093
        %v1095 = vrot.slane %v1055, %v1094
        %v1096 = vlaneseq
        %v1097 = vshrl.u32 %v1096, 7
        %v1098 = vsub.s32 0, %v1097
        %v1099 = vrot.slane %v1059, %v1098
        %v1100 = vlaneseq
        %v1101 = vshrl.u32 %v1100, 7
        %v1102 = vsub.s32 0, %v1101
        %v1103 = vrot.slane %v1063, %v1102
        %v1104 = vlaneseq
        %v1105 = vshrl.u32 %v1104, 7
        %v1106 = vsub.s32 0, %v1105
        %v1107 = vrot.slane %v1067, %v1106
        %v1108 = vlaneseq
        %v1109 = vshrl.u32 %v1108, 7
        %v1110 = vsub.s32 0, %v1109
        %v1111 = vrot.slane %v1071, %v1110
        %v1112 = vlaneseq
        %v1113 = vshrl.u32 %v1112, 7
        %v1114 = vsub.s32 0, %v1113
        %v1115 = vrot.slane %v1075, %v1114
        %v1116 = vlaneseq
        %v1117 = vshrl.u32 %v1116, 7
        %v1118 = vsub.s32 0, %v1117
        %v1119 = vrot.slane %v1079, %v1118
        %v1120 = vmul.f32 %v907, %v1091
        %v1121 = vmul.f32 %v909, %v1095
        %v1122 = vmul.f32 %v950, %v1099
        %v1123 = vmul.f32 %v952, %v1103
        %v1124 = vmul.f32 %v993, %v1107
        %v1125 = vmul.f32 %v995, %v1111
        %v1126 = vmul.f32 %v1036, %v1115
        %v1127 = vmul.f32 %v1038, %v1119
        %v1128 = vmul.f32 %v911, %v1091
        %v1129 = vmul.f32 %v913, %v1095
        %v1130 = vmul.f32 %v954, %v1099
        %v1131 = vmul.f32 %v956, %v1103
        %v1132 = vmul.f32 %v997, %v1107
        %v1133 = vmul.f32 %v999, %v1111
        %v1134 = vmul.f32 %v1040, %v1115
        %v1135 = vmul.f32 %v1042, %v1119
        %v1136 = vlaneseq
        %v1137 = vshrl.u32 %v1136, 7
        %v1138 = vsub.s32 1, %v1137
        %v1139 = vrot.slane %v1044, %v1138
        %v1140 = vlaneseq
        %v1141 = vshrl.u32 %v1140, 7
        %v1142 = vsub.s32 3, %v1141
        %v1143 = vrot.slane %v1044, %v1142
        %v1144 = vlaneseq
        %v1145 = vshrl.u32 %v1144, 7
        %v1146 = vsub.s32 5, %v1145
        %v1147 = vrot.slane %v1044, %v1146
        %v1148 = vlaneseq
        %v1149 = vshrl.u32 %v1148, 7
        %v1150 = vsub.s32 7, %v1149
        %v1151 = vrot.slane %v1044, %v1150
        %v1152 = vlaneseq
        %v1153 = vshrl.u32 %v1152, 7
        %v1154 = vsub.s32 1, %v1153
        %v1155 = vrot.slane %v1045, %v1154
        %v1156 = vlaneseq
        %v1157 = vshrl.u32 %v1156, 7
        %v1158 = vsub.s32 3, %v1157
        %v1159 = vrot.slane %v1045, %v1158
        %v1160 = vlaneseq
        %v1161 = vshrl.u32 %v1160, 7
        %v1162 = vsub.s32 5, %v1161
        %v1163 = vrot.slane %v1045, %v1162
        %v1164 = vlaneseq
        %v1165 = vshrl.u32 %v1164, 7
        %v1166 = vsub.s32 7, %v1165
        %v1167 = vrot.slane %v1045, %v1166
        %v1176 = vlaneseq
        %v1177 = vshrl.u32 %v1176, 7
        %v1178 = vsub.s32 1, %v1177
        %v1179 = vrot.slane %v1139, %v1178
        %v1180 = vlaneseq
        %v1181 = vshrl.u32 %v1180, 7
        %v1182 = vsub.s32 1, %v1181
        %v1183 = vrot.slane %v1143, %v1182
        %v1184 = vlaneseq
        %v1185 = vshrl.u32 %v1184, 7
        %v1186 = vsub.s32 1, %v1185
        %v1187 = vrot.slane %v1147, %v1186
        %v1188 = vlaneseq
        %v1189 = vshrl.u32 %v1188, 7
        %v1190 = vsub.s32 1, %v1189
        %v1191 = vrot.slane %v1151, %v1190
        %v1192 = vlaneseq
        %v1193 = vshrl.u32 %v1192, 7
        %v1194 = vsub.s32 1, %v1193
        %v1195 = vrot.slane %v1155, %v1194
        %v1196 = vlaneseq
        %v1197 = vshrl.u32 %v1196, 7
        %v1198 = vsub.s32 1, %v1197
        %v1199 = vrot.slane %v1159, %v1198
        %v1200 = vlaneseq
        %v1201 = vshrl.u32 %v1200, 7
        %v1202 = vsub.s32 1, %v1201
        %v1203 = vrot.slane %v1163, %v1202
        %v1204 = vlaneseq
        %v1205 = vshrl.u32 %v1204, 7
        %v1206 = vsub.s32 1, %v1205
        %v1207 = vrot.slane %v1167, %v1206
        %v1208 = vadd.f32 %v1120, %v1179
        %v1209 = vadd.f32 %v1121, %v1183
        %v1210 = vadd.f32 %v1122, %v1187
        %v1211 = vadd.f32 %v1123, %v1191
        %v1212 = vadd.f32 %v1124, %v1195
        %v1213 = vadd.f32 %v1125, %v1199
        %v1214 = vadd.f32 %v1126, %v1203
        %v1215 = vadd.f32 %v1127, %v1207
        %v1216 = vadd.f32 %v1128, %v1179
        %v1217 = vadd.f32 %v1129, %v1183
        %v1218 = vadd.f32 %v1130, %v1187
        %v1219 = vadd.f32 %v1131, %v1191
        %v1220 = vadd.f32 %v1132, %v1195
        %v1221 = vadd.f32 %v1133, %v1199
        %v1222 = vadd.f32 %v1134, %v1203
        %v1223 = vadd.f32 %v1135, %v1207
        %v1224 = vmax.f32 %v1208, 0.0
        %v1225 = vmax.f32 %v1209, 0.0
        %v1226 = vmax.f32 %v1210, 0.0
        %v1227 = vmax.f32 %v1211, 0.0
        %v1228 = vmax.f32 %v1212, 0.0
        %v1229 = vmax.f32 %v1213, 0.0
        %v1230 = vmax.f32 %v1214, 0.0
        %v1231 = vmax.f32 %v1215, 0.0
        %v1232 = vmax.f32 %v1216, 0.0
        %v1233 = vmax.f32 %v1217, 0.0
        %v1234 = vmax.f32 %v1218, 0.0
        %v1235 = vmax.f32 %v1219, 0.0
        %v1236 = vmax.f32 %v1220, 0.0
        %v1237 = vmax.f32 %v1221, 0.0
        %v1238 = vmax.f32 %v1222, 0.0
        %v1239 = vmax.f32 %v1223, 0.0
        %v1240 = vmax.f32 %v1224, %v1232
        %v1241 = vrot.slane %v1240, 4
        %v1242 = vmax.f32 %v1240, %v1241
        %v1243 = vrot.slane %v1242, 2
        %v1244 = vmax.f32 %v1242, %v1243
        %v1245 = vrot.slane %v1244, 1
        %v1246 = vmax.f32 %v1244, %v1245
        %v1247 = vmax.f32 %v1225, %v1233
        %v1248 = vrot.slane %v1247, 4
        %v1249 = vmax.f32 %v1247, %v1248
        %v1250 = vrot.slane %v1249, 2
        %v1251 = vmax.f32 %v1249, %v1250
        %v1252 = vrot.slane %v1251, 1
        %v1253 = vmax.f32 %v1251, %v1252
        %v1254 = vmax.f32 %v1226, %v1234
        %v1255 = vrot.slane %v1254, 4
        %v1256 = vmax.f32 %v1254, %v1255
        %v1257 = vrot.slane %v1256, 2
        %v1258 = vmax.f32 %v1256, %v1257
        %v1259 = vrot.slane %v1258, 1
        %v1260 = vmax.f32 %v1258, %v1259
        %v1261 = vmax.f32 %v1227, %v1235
        %v1262 = vrot.slane %v1261, 4
        %v1263 = vmax.f32 %v1261, %v1262
        %v1264 = vrot.slane %v1263, 2
        %v1265 = vmax.f32 %v1263, %v1264
        %v1266 = vrot.slane %v1265, 1
        %v1267 = vmax.f32 %v1265, %v1266
        %v1268 = vmax.f32 %v1228, %v1236
        %v1269 = vrot.slane %v1268, 4
        %v1270 = vmax.f32 %v1268, %v1269
        %v1271 = vrot.slane %v1270, 2
        %v1272 = vmax.f32 %v1270, %v1271
        %v1273 = vrot.slane %v1272, 1
        %v1274 = vmax.f32 %v1272, %v1273
        %v1275 = vmax.f32 %v1229, %v1237
        %v1276 = vrot.slane %v1275, 4
        %v1277 = vmax.f32 %v1275, %v1276
        %v1278 = vrot.slane %v1277, 2
        %v1279 = vmax.f32 %v1277, %v1278
        %v1280 = vrot.slane %v1279, 1
        %v1281 = vmax.f32 %v1279, %v1280
        %v1282 = vmax.f32 %v1230, %v1238
        %v1283 = vrot.slane %v1282, 4
        %v1284 = vmax.f32 %v1282, %v1283
        %v1285 = vrot.slane %v1284, 2
        %v1286 = vmax.f32 %v1284, %v1285
        %v1287 = vrot.slane %v1286, 1
        %v1288 = vmax.f32 %v1286, %v1287
        %v1289 = vmax.f32 %v1231, %v1239
        %v1290 = vrot.slane %v1289, 4
        %v1291 = vmax.f32 %v1289, %v1290
        %v1292 = vrot.slane %v1291, 2
        %v1293 = vmax.f32 %v1291, %v1292
        %v1294 = vrot.slane %v1293, 1
        %v1295 = vmax.f32 %v1293, %v1294
        %p1296 = scmp.eq.s32.totalorder %s24, 0
        // Predicated region
        $region53: #{transform_net_forward.8} parent=47 // pred_check
          %p1297 = pneg %p1296
        $region54: #{transform_net_forward.8} parent=47 // pred_check_branch
          %1299 = sbr.rel (%p1297) target = $region56
        $region55: #{transform_net_forward.8} parent=47 // pred_region
          %1300 = vst [vmem:[#allocation2] sm:$0xff] -inf
        $region56: #{transform_net_forward.8} parent=47 // pred_fallthru
          _
        %v1301 = vld [vmem:[#allocation2] sm:$0xff]
        %v1310 = vcombine.low %v1246, %v1253
        %v1311 = vcombine.low %v1260, %v1267
        %v1312 = vcombine.low %v1274, %v1281
        %v1313 = vcombine.low %v1288, %v1295
        %v1315 = vunpack.c.l.s4 1966171168
        %v1316 = vunpack.c.0.s8 %v1315
        %v1317 = vlaneseq
        %v1318 = vshrl.u32 %v1317, 7
        %v1319 = vsub.s32 %v1316, %v1318
        %v1320 = vrot.slane %v1310, %v1319
        %v1322 = vunpack.c.l.s4 1966171168
        %v1323 = vunpack.c.0.s8 %v1322
        %v1324 = vlaneseq
        %v1325 = vshrl.u32 %v1324, 7
        %v1326 = vsub.s32 %v1323, %v1325
        %v1327 = vrot.slane %v1311, %v1326
        %v1329 = vunpack.c.l.s4 1966171168
        %v1330 = vunpack.c.0.s8 %v1329
        %v1331 = vlaneseq
        %v1332 = vshrl.u32 %v1331, 7
        %v1333 = vsub.s32 %v1330, %v1332
        %v1334 = vrot.slane %v1312, %v1333
        %v1336 = vunpack.c.l.s4 1966171168
        %v1337 = vunpack.c.0.s8 %v1336
        %v1338 = vlaneseq
        %v1339 = vshrl.u32 %v1338, 7
        %v1340 = vsub.s32 %v1337, %v1339
        %v1341 = vrot.slane %v1313, %v1340
        %v1342 = vcombine.low %v1320, %v1327
        %v1343 = vcombine.low %v1334, %v1341
        %v1345 = vunpack.c.l.s4 1966171168
        %v1346 = vunpack.c.0.s8 %v1345
        %v1347 = vlaneseq
        %v1348 = vshrl.u32 %v1347, 7
        %v1349 = vsub.s32 %v1346, %v1348
        %v1350 = vrot.slane %v1342, %v1349
        %v1352 = vunpack.c.l.s4 1966171168
        %v1353 = vunpack.c.0.s8 %v1352
        %v1354 = vlaneseq
        %v1355 = vshrl.u32 %v1354, 7
        %v1356 = vsub.s32 %v1353, %v1355
        %v1357 = vrot.slane %v1343, %v1356
        %v1358 = vcombine.low %v1350, %v1357
        %v1360 = vmax.f32 %v1301, %v1358
        %1361 = vst [vmem:[#allocation2] sm:$0xff] %v1360
        // Predicated region
        $region57: #{transform_net_forward.8} parent=47 // pred_check
          %p1362 = pneg %p1296
        $region58: #{transform_net_forward.8} parent=47 // pred_check_branch
          %1364 = sbr.rel (%p1362) target = $region60
        $region59: #{transform_net_forward.8} parent=47 // pred_region
          %v1365 = vld [vmem:[#allocation2] sm:$0xff]
          %1366 = vst [vmem:[%s310] sm:$0xff] %v1365
        $region60: #{transform_net_forward.8} parent=47 // pred_fallthru
          _
        %p1367 = scmp.lt.s32.totalorder %s23, 1
        %s1368 = scalar_select %p1367, %s23, 1
        %s1369 = smul.addr %s1368, 8
        %s1370 = scalar_lea.vmem %s7, %s1369
        // Predicated region
        $region61: #{transform_net_forward.8} parent=47 // pred_check
          %p1371 = pneg %p203
        $region62: #{transform_net_forward.8} parent=47 // pred_check_branch
          %1373 = sbr.rel (%p1371) target = $region64
        $region63: #{transform_net_forward.8} parent=47 // pred_region
          _
        $region64: #{transform_net_forward.8} parent=47 // pred_fallthru
          _
      $region48: #{transform_net_forward.8} parent=5 // pred_fallthru
        _
      %p1374 = scmp.le.s32.totalorder 2, %s14
      // Predicated region
      $region65: #{transform_net_forward.8} parent=5 // pred_check
        %p1375 = pneg %p1374
      $region66: #{transform_net_forward.8} parent=5 // pred_check_branch
        %1377 = sbr.rel (%p1375) target = $region68
      $region67: #{transform_net_forward.8} parent=5 // pred_region
        %s1378 = ssub.s32 %s14, 2
        // Predicated region
        $region69: #{transform_net_forward.8} parent=67 // pred_check
          %p1379 = pneg %p209
        $region70: #{transform_net_forward.8} parent=67 // pred_check_branch
          %1381 = sbr.rel (%p1379) target = $region72
        $region71: #{transform_net_forward.8} parent=67 // pred_region
          %p1382 = scmp.lt.s32.totalorder %s25, 1
          %s1383 = scalar_select %p1382, %s25, 1
          %s1384 = smul.addr %s1383, 8
          %s1385 = scalar_lea.vmem %s7, %s1384
        $region72: #{transform_net_forward.8} parent=67 // pred_fallthru
          _
      $region68: #{transform_net_forward.8} parent=5 // pred_fallthru
        _
    $region6: #{transform_net_forward.8} parent=1 // loop_footer
      %s18 = sadd.s32 1, %s14
    $region7: #{transform_net_forward.8} parent=1 // loop_footer_branch
      %13 = sbr.rel target = $region3
    $region8: #{transform_net_forward.8} parent=1 // loop_exit
      _
    %1386 = vsyncpa [#allocation4], 1
    %s1387 = scalar_lea.sflag [#allocation4], 1
    %1388 = vsyncpa %s1387, 1

// kernel: transform_net_forward.7
$region0: #{transform_net_forward.7}
  #allocation0 [shape = 'u32[]', space=smem, size = 0x4, offset = 0x4, fixed_abs, tag = 'smem constant byte address 0x4 - core index']
  #allocation1 [shape = 'u32[144,128]{1,0:T(1,128)}', space=vmem, size = 0x12000, scoped, tag = 'internal scratch']
  #allocation2 [shape = 'f32[128,128]{1,0:T(8,128)}', space=vmem, size = 0x10000, scoped, tag = 'scratch operand']
  #allocation3 [shape = 'f32[1,128]{1,0:T(1,128)}', space=vmem, size = 0x200, scoped, tag = 'scratch operand']
  %s0 = inlined_call_operand.vmem [shape: f32[32,4], index: 0, kind: input, shape index: {}]
  %s1 = inlined_call_operand.hbm [shape: f32[4,64], index: 1, kind: input, shape index: {}]
  %s2 = inlined_call_operand.vmem [shape: f32[2,64], index: 2, kind: input, shape index: {}]
  %s3 = inlined_call_operand.vmem [shape: bf16[64,128], index: 3, kind: input, shape index: {}]
  %s4 = inlined_call_operand.vmem [shape: f32[2,128], index: 4, kind: input, shape index: {}]
  %s5 = inlined_call_operand.vmem [shape: bf16[128,1024], index: 5, kind: input, shape index: {}]
  %s6 = inlined_call_operand.hbm [shape: f32[1,1024], index: 6, kind: input, shape index: {}]
  %s7 = inlined_call_operand.hbm [shape: f32[1,1024], index: 7, kind: input, shape index: {}]
  %s8 = inlined_call_operand.vmem [shape: f32[2,1024], index: 8, kind: output, shape index: {}]
  %s9 = sld [smem:[#allocation0]]
  $region85: #{transform_net_forward.7} parent=0
    _
  %s11 = ssub.s32 1, %s9
  %s12 = scalar_select 0, %s11, %s9
  $region1: #{transform_net_forward.7} parent=0
    #allocation4 [shape = 'u8[2048]{0}', space=vmem, size = 0x800, scoped, tag = 'input window, operand 1, single buffered']
    #allocation5 [shape = 's32[2]{0}', space=sflag, size = 0x8, scoped, tag = 'scoped memory for transform_net_forward.7']
    #allocation6 [shape = 'u8[4096]{0}', space=vmem, size = 0x1000, scoped, tag = 'input window, operand 6, single buffered']
    #allocation7 [shape = 's32[1]{0}', space=sflag, size = 0x4, scoped, tag = 'scoped memory for transform_net_forward.7']
    #allocation8 [shape = 'u8[4096]{0}', space=vmem, size = 0x1000, scoped, tag = 'input window, operand 7, single buffered']
    %13 = vsyncpa [#allocation5], 0
    %14 = vsyncpa [#allocation7], 0
    loop: start=0, step=1, limit=4
    $region2: #{transform_net_forward.7} parent=1 // loop_pre_header
      _
    $region3: #{transform_net_forward.7} parent=1 // loop_header
      %s16 = sphi 0, %s20
      %p17 = scmp.ge.s32.totalorder %s16, 4
      %s26 = sphi 0, %s28
      %s29 = sphi 0, %s26
      %s30 = sphi 0, %s29
      %s46 = sphi 0, %s30
      %s50 = sphi 0, %s50
      %s52 = sphi 0, %s50
      %s53 = sphi 0, %s52
      %s67 = sphi 0, %s53
      %s71 = sphi 0, %s71
      %s73 = sphi 0, %s71
      %s74 = sphi 0, %s73
      %s88 = sphi 0, %s74
      %s92 = sphi 0, %s92
      %s94 = sphi 0, %s92
      %s95 = sphi 0, %s94
      %s109 = sphi 0, %s95
      %s113 = sphi 0, %s113
      %s115 = sphi 0, %s113
      %s116 = sphi 0, %s115
      %s130 = sphi 0, %s116
      %s134 = sphi 0, %s134
      %s136 = sphi 0, %s134
      %s137 = sphi 0, %s136
      %s151 = sphi 0, %s137
      %s155 = sphi 0, %s155
      %s157 = sphi 0, %s155
      %s158 = sphi 0, %s157
      %s172 = sphi 0, %s158
      %s176 = sphi 0, %s176
      %s178 = sphi 0, %s176
      %s179 = sphi 0, %s178
      %s193 = sphi 0, %s179
      %s197 = sphi 0, %s197
      %s199 = sphi 0, %s197
      %s200 = sphi 0, %s199
      %s214 = sphi 0, %s200
    $region4: #{transform_net_forward.7} parent=1 // loop_header_branch
      %19 = sbr.rel (%p17) target = $region8
    $region5: #{transform_net_forward.7} parent=1 // loop_body
      %s21 = ssub.s32 %s16, 1
      %s22 = ssub.s32 %s16, 2
      %s23 = sadd.s32 %s16, 1
      %s24 = ssub.s32 %s16, %s23
      %p25 = scmp.eq.s32.totalorder %s24, 0
      %s27 = sadd.s32 %s26, 1
      %s28 = scalar_select %p25, %s26, %s27
      %p31 = pneg %p25
      %p32 = scmp.eq.s32.totalorder %s16, 1
      %p33 = por %p31, %p32
      %p34 = scmp.ne.s32.totalorder %s26, %s29
      %p35 = scmp.eq.s32.totalorder %s16, 0
      %p36 = por %p34, %p35
      %p37 = scmp.ne.s32.totalorder %s26, %s29
      %p38 = scmp.eq.s32.totalorder %s21, 1
      %p39 = por %p37, %p38
      %p40 = scmp.ne.s32.totalorder %s29, %s30
      %p41 = scmp.eq.s32.totalorder %s21, 0
      %p42 = por %p40, %p41
      %p43 = scmp.ne.s32.totalorder %s29, %s30
      %p44 = scmp.eq.s32.totalorder %s22, 1
      %p45 = por %p43, %p44
      %p47 = scmp.ne.s32.totalorder %s30, %s46
      %p48 = scmp.eq.s32.totalorder %s22, 0
      %p49 = por %p47, %p48
      %s51 = sadd.s32 %s50, 1
      %p54 = scmp.eq.s32.totalorder %s16, 1
      %p55 = scmp.ne.s32.totalorder %s50, %s52
      %p56 = scmp.eq.s32.totalorder %s16, 0
      %p57 = por %p55, %p56
      %p58 = scmp.ne.s32.totalorder %s50, %s52
      %p59 = scmp.eq.s32.totalorder %s21, 1
      %p60 = por %p58, %p59
      %p61 = scmp.ne.s32.totalorder %s52, %s53
      %p62 = scmp.eq.s32.totalorder %s21, 0
      %p63 = por %p61, %p62
      %p64 = scmp.ne.s32.totalorder %s52, %s53
      %p65 = scmp.eq.s32.totalorder %s22, 1
      %p66 = por %p64, %p65
      %p68 = scmp.ne.s32.totalorder %s53, %s67
      %p69 = scmp.eq.s32.totalorder %s22, 0
      %p70 = por %p68, %p69
      %s72 = sadd.s32 %s71, 1
      %p75 = scmp.eq.s32.totalorder %s16, 1
      %p76 = scmp.ne.s32.totalorder %s71, %s73
      %p77 = scmp.eq.s32.totalorder %s16, 0
      %p78 = por %p76, %p77
      %p79 = scmp.ne.s32.totalorder %s71, %s73
      %p80 = scmp.eq.s32.totalorder %s21, 1
      %p81 = por %p79, %p80
      %p82 = scmp.ne.s32.totalorder %s73, %s74
      %p83 = scmp.eq.s32.totalorder %s21, 0
      %p84 = por %p82, %p83
      %p85 = scmp.ne.s32.totalorder %s73, %s74
      %p86 = scmp.eq.s32.totalorder %s22, 1
      %p87 = por %p85, %p86
      %p89 = scmp.ne.s32.totalorder %s74, %s88
      %p90 = scmp.eq.s32.totalorder %s22, 0
      %p91 = por %p89, %p90
      %s93 = sadd.s32 %s92, 1
      %p96 = scmp.eq.s32.totalorder %s16, 1
      %p97 = scmp.ne.s32.totalorder %s92, %s94
      %p98 = scmp.eq.s32.totalorder %s16, 0
      %p99 = por %p97, %p98
      %p100 = scmp.ne.s32.totalorder %s92, %s94
      %p101 = scmp.eq.s32.totalorder %s21, 1
      %p102 = por %p100, %p101
      %p103 = scmp.ne.s32.totalorder %s94, %s95
      %p104 = scmp.eq.s32.totalorder %s21, 0
      %p105 = por %p103, %p104
      %p106 = scmp.ne.s32.totalorder %s94, %s95
      %p107 = scmp.eq.s32.totalorder %s22, 1
      %p108 = por %p106, %p107
      %p110 = scmp.ne.s32.totalorder %s95, %s109
      %p111 = scmp.eq.s32.totalorder %s22, 0
      %p112 = por %p110, %p111
      %s114 = sadd.s32 %s113, 1
      %p117 = scmp.eq.s32.totalorder %s16, 1
      %p118 = scmp.ne.s32.totalorder %s113, %s115
      %p119 = scmp.eq.s32.totalorder %s16, 0
      %p120 = por %p118, %p119
      %p121 = scmp.ne.s32.totalorder %s113, %s115
      %p122 = scmp.eq.s32.totalorder %s21, 1
      %p123 = por %p121, %p122
      %p124 = scmp.ne.s32.totalorder %s115, %s116
      %p125 = scmp.eq.s32.totalorder %s21, 0
      %p126 = por %p124, %p125
      %p127 = scmp.ne.s32.totalorder %s115, %s116
      %p128 = scmp.eq.s32.totalorder %s22, 1
      %p129 = por %p127, %p128
      %p131 = scmp.ne.s32.totalorder %s116, %s130
      %p132 = scmp.eq.s32.totalorder %s22, 0
      %p133 = por %p131, %p132
      %s135 = sadd.s32 %s134, 1
      %p138 = scmp.eq.s32.totalorder %s16, 1
      %p139 = scmp.ne.s32.totalorder %s134, %s136
      %p140 = scmp.eq.s32.totalorder %s16, 0
      %p141 = por %p139, %p140
      %p142 = scmp.ne.s32.totalorder %s134, %s136
      %p143 = scmp.eq.s32.totalorder %s21, 1
      %p144 = por %p142, %p143
      %p145 = scmp.ne.s32.totalorder %s136, %s137
      %p146 = scmp.eq.s32.totalorder %s21, 0
      %p147 = por %p145, %p146
      %p148 = scmp.ne.s32.totalorder %s136, %s137
      %p149 = scmp.eq.s32.totalorder %s22, 1
      %p150 = por %p148, %p149
      %p152 = scmp.ne.s32.totalorder %s137, %s151
      %p153 = scmp.eq.s32.totalorder %s22, 0
      %p154 = por %p152, %p153
      %s156 = sadd.s32 %s155, 1
      %p159 = scmp.eq.s32.totalorder %s16, 1
      %p160 = scmp.ne.s32.totalorder %s155, %s157
      %p161 = scmp.eq.s32.totalorder %s16, 0
      %p162 = por %p160, %p161
      %p163 = scmp.ne.s32.totalorder %s155, %s157
      %p164 = scmp.eq.s32.totalorder %s21, 1
      %p165 = por %p163, %p164
      %p166 = scmp.ne.s32.totalorder %s157, %s158
      %p167 = scmp.eq.s32.totalorder %s21, 0
      %p168 = por %p166, %p167
      %p169 = scmp.ne.s32.totalorder %s157, %s158
      %p170 = scmp.eq.s32.totalorder %s22, 1
      %p171 = por %p169, %p170
      %p173 = scmp.ne.s32.totalorder %s158, %s172
      %p174 = scmp.eq.s32.totalorder %s22, 0
      %p175 = por %p173, %p174
      %s177 = sadd.s32 %s176, 1
      %p180 = scmp.eq.s32.totalorder %s16, 1
      %p181 = scmp.ne.s32.totalorder %s176, %s178
      %p182 = scmp.eq.s32.totalorder %s16, 0
      %p183 = por %p181, %p182
      %p184 = scmp.ne.s32.totalorder %s176, %s178
      %p185 = scmp.eq.s32.totalorder %s21, 1
      %p186 = por %p184, %p185
      %p187 = scmp.ne.s32.totalorder %s178, %s179
      %p188 = scmp.eq.s32.totalorder %s21, 0
      %p189 = por %p187, %p188
      %p190 = scmp.ne.s32.totalorder %s178, %s179
      %p191 = scmp.eq.s32.totalorder %s22, 1
      %p192 = por %p190, %p191
      %p194 = scmp.ne.s32.totalorder %s179, %s193
      %p195 = scmp.eq.s32.totalorder %s22, 0
      %p196 = por %p194, %p195
      %s198 = sadd.s32 %s197, 1
      %p201 = scmp.eq.s32.totalorder %s16, 1
      %p202 = scmp.ne.s32.totalorder %s197, %s199
      %p203 = scmp.eq.s32.totalorder %s16, 0
      %p204 = por %p202, %p203
      %p205 = scmp.ne.s32.totalorder %s197, %s199
      %p206 = scmp.eq.s32.totalorder %s21, 1
      %p207 = por %p205, %p206
      %p208 = scmp.ne.s32.totalorder %s199, %s200
      %p209 = scmp.eq.s32.totalorder %s21, 0
      %p210 = por %p208, %p209
      %p211 = scmp.ne.s32.totalorder %s199, %s200
      %p212 = scmp.eq.s32.totalorder %s22, 1
      %p213 = por %p211, %p212
      %p215 = scmp.ne.s32.totalorder %s200, %s214
      %p216 = scmp.eq.s32.totalorder %s22, 0
      %p217 = por %p215, %p216
      %p218 = scmp.le.s32.totalorder 1, %s16
      %p219 = scmp.lt.s32.totalorder %s16, 3
      %p220 = pnand %p218, %p219
      %p221 = pneg %p220
      // Predicated region
      $region9: #{transform_net_forward.7} parent=5 // pred_check
        _
      $region10: #{transform_net_forward.7} parent=5 // pred_check_branch
        %223 = sbr.rel (%p220) target = $region12
      $region11: #{transform_net_forward.7} parent=5 // pred_region
        %s224 = ssub.s32 %s16, 1
        // Predicated region
        $region13: #{transform_net_forward.7} parent=11 // pred_check
          %p225 = pneg %p63
        $region14: #{transform_net_forward.7} parent=11 // pred_check_branch
          %227 = sbr.rel (%p225) target = $region16
        $region15: #{transform_net_forward.7} parent=11 // pred_region
          %s229 = ssub.s32 64, 64
          %230 = vsyncadd [#allocation5], %s229
          %s232 = sshll.u32 [#allocation4], 4
          %s233 = int_to_ptr.vmem [resolvable:$true] %s232
          %235 = dma.hbm_to_vmem [thread:$0]  %s1, 64, %s233, [#allocation5]
        $region16: #{transform_net_forward.7} parent=11 // pred_fallthru
          _
        // Predicated region
        $region17: #{transform_net_forward.7} parent=11 // pred_check
          %p236 = pneg %p84
        $region18: #{transform_net_forward.7} parent=11 // pred_check_branch
          %238 = sbr.rel (%p236) target = $region20
        $region19: #{transform_net_forward.7} parent=11 // pred_region
          _
        $region20: #{transform_net_forward.7} parent=11 // pred_fallthru
          _
        // Predicated region
        $region21: #{transform_net_forward.7} parent=11 // pred_check
          %p239 = pneg %p105
        $region22: #{transform_net_forward.7} parent=11 // pred_check_branch
          %241 = sbr.rel (%p239) target = $region24
        $region23: #{transform_net_forward.7} parent=11 // pred_region
          _
        $region24: #{transform_net_forward.7} parent=11 // pred_fallthru
          _
        // Predicated region
        $region25: #{transform_net_forward.7} parent=11 // pred_check
          %p242 = pneg %p126
        $region26: #{transform_net_forward.7} parent=11 // pred_check_branch
          %244 = sbr.rel (%p242) target = $region28
        $region27: #{transform_net_forward.7} parent=11 // pred_region
          _
        $region28: #{transform_net_forward.7} parent=11 // pred_fallthru
          _
        // Predicated region
        $region29: #{transform_net_forward.7} parent=11 // pred_check
          %p245 = pneg %p147
        $region30: #{transform_net_forward.7} parent=11 // pred_check_branch
          %247 = sbr.rel (%p245) target = $region32
        $region31: #{transform_net_forward.7} parent=11 // pred_region
          _
        $region32: #{transform_net_forward.7} parent=11 // pred_fallthru
          _
        // Predicated region
        $region33: #{transform_net_forward.7} parent=11 // pred_check
          %p248 = pneg %p168
        $region34: #{transform_net_forward.7} parent=11 // pred_check_branch
          %250 = sbr.rel (%p248) target = $region36
        $region35: #{transform_net_forward.7} parent=11 // pred_region
          %s252 = ssub.s32 128, 128
          %253 = vsyncadd [#allocation7], %s252
          %s255 = sshll.u32 [#allocation6], 4
          %s256 = int_to_ptr.vmem [resolvable:$true] %s255
          %258 = dma.hbm_to_vmem [thread:$0]  %s6, 128, %s256, [#allocation7]
        $region36: #{transform_net_forward.7} parent=11 // pred_fallthru
          _
        // Predicated region
        $region37: #{transform_net_forward.7} parent=11 // pred_check
          %p259 = pneg %p189
        $region38: #{transform_net_forward.7} parent=11 // pred_check_branch
          %261 = sbr.rel (%p259) target = $region40
        $region39: #{transform_net_forward.7} parent=11 // pred_region
          %s263 = ssub.s32 128, 128
          %264 = vsyncadd [#allocation7], %s263
          %s266 = sshll.u32 [#allocation8], 4
          %s267 = int_to_ptr.vmem [resolvable:$true] %s266
          %269 = dma.hbm_to_vmem [thread:$0]  %s7, 128, %s267, [#allocation7]
        $region40: #{transform_net_forward.7} parent=11 // pred_fallthru
          _
      $region12: #{transform_net_forward.7} parent=5 // pred_fallthru
        _
      %p270 = scmp.lt.s32.totalorder %s16, 2
      // Predicated region
      $region41: #{transform_net_forward.7} parent=5 // pred_check
        %p271 = pneg %p270
      $region42: #{transform_net_forward.7} parent=5 // pred_check_branch
        %273 = sbr.rel (%p271) target = $region44
      $region43: #{transform_net_forward.7} parent=5 // pred_region
        // Predicated region
        $region45: #{transform_net_forward.7} parent=43 // pred_check
          %p274 = pneg %p36
        $region46: #{transform_net_forward.7} parent=43 // pred_check_branch
          %276 = sbr.rel (%p274) target = $region48
        $region47: #{transform_net_forward.7} parent=43 // pred_region
          %s277 = smul.u32 2, %s16
          %p278 = scmp.lt.s32.totalorder %s277, 3
          %s279 = scalar_select %p278, %s277, 3
          %s280 = smul.addr %s279, 8
          %s281 = scalar_lea.vmem %s0, %s280
          %s282 = smul.u32 2, %s16
        $region48: #{transform_net_forward.7} parent=43 // pred_fallthru
          _
      $region44: #{transform_net_forward.7} parent=5 // pred_fallthru
        _
      %p283 = scmp.le.s32.totalorder 1, %s16
      %p284 = scmp.lt.s32.totalorder %s16, 3
      %p285 = pnand %p283, %p284
      %p286 = pneg %p285
      // Predicated region
      $region49: #{transform_net_forward.7} parent=5 // pred_check
        _
      $region50: #{transform_net_forward.7} parent=5 // pred_check_branch
        %288 = sbr.rel (%p285) target = $region52
      $region51: #{transform_net_forward.7} parent=5 // pred_region
        %s289 = ssub.s32 %s16, 1
        // Predicated region
        $region53: #{transform_net_forward.7} parent=51 // pred_check
          %p290 = pneg %p63
        $region54: #{transform_net_forward.7} parent=51 // pred_check_branch
          %292 = sbr.rel (%p290) target = $region56
        $region55: #{transform_net_forward.7} parent=51 // pred_region
          %293 = dma.done [#allocation5], 64
        $region56: #{transform_net_forward.7} parent=51 // pred_fallthru
          _
        // Predicated region
        $region57: #{transform_net_forward.7} parent=51 // pred_check
          %p294 = pneg %p168
        $region58: #{transform_net_forward.7} parent=51 // pred_check_branch
          %296 = sbr.rel (%p294) target = $region60
        $region59: #{transform_net_forward.7} parent=51 // pred_region
          %297 = dma.done [#allocation7], 128
        $region60: #{transform_net_forward.7} parent=51 // pred_fallthru
          _
        // Predicated region
        $region61: #{transform_net_forward.7} parent=51 // pred_check
          %p298 = pneg %p189
        $region62: #{transform_net_forward.7} parent=51 // pred_check_branch
          %300 = sbr.rel (%p298) target = $region64
        $region63: #{transform_net_forward.7} parent=51 // pred_region
          %301 = dma.done [#allocation7], 128
        $region64: #{transform_net_forward.7} parent=51 // pred_fallthru
          _
        %s302 = smul.u32 2, %s21
        %p303 = scmp.lt.s32.totalorder %s302, 3
        %s304 = scalar_select %p303, %s302, 3
        %s305 = smul.addr %s304, 8
        %s306 = scalar_lea.vmem %s0, %s305
        %p307 = pneg %p42
        %p308 = pneg %p39
        %p309 = pneg %p63
        %p310 = pneg %p60
        %p311 = pneg %p84
        %p312 = pneg %p81
        %p313 = pneg %p105
        %p314 = pneg %p102
        %p315 = pneg %p126
        %p316 = pneg %p123
        %p317 = pneg %p147
        %p318 = pneg %p144
        %p319 = pneg %p168
        %p320 = pneg %p165
        %p321 = pneg %p189
        %p322 = pneg %p186
        %p323 = pneg %p210
        %p324 = pneg %p207
        %s325 = smul.u32 2, %s21
        %p326 = scmp.lt.s32.totalorder %s325, 3
        %s327 = scalar_select %p326, %s325, 3
        %s328 = smul.addr %s327, 8
        %s329 = scalar_lea.vmem %s0, %s328
        %s330 = smul.u32 2, %s21
        %p332 = scmp.eq.s32.totalorder %s21, 0
        // Predicated region
        $region65: #{transform_net_forward.7} parent=51 // pred_check
          %p333 = pneg %p332
        $region66: #{transform_net_forward.7} parent=51 // pred_check_branch
          %335 = sbr.rel (%p333) target = $region68
        $region67: #{transform_net_forward.7} parent=51 // pred_region
          %336 = vst [vmem:[#allocation2] sm:$0xff] 0.0
          %337 = vst [vmem:[#allocation2 + $0x8] sm:$0xff] 0.0
          %338 = vst [vmem:[#allocation2 + $0x10] sm:$0xff] 0.0
          %339 = vst [vmem:[#allocation2 + $0x18] sm:$0xff] 0.0
          %340 = vst [vmem:[#allocation2 + $0x20] sm:$0xff] 0.0
          %341 = vst [vmem:[#allocation2 + $0x28] sm:$0xff] 0.0
          %342 = vst [vmem:[#allocation2 + $0x30] sm:$0xff] 0.0
          %343 = vst [vmem:[#allocation2 + $0x38] sm:$0xff] 0.0
          %344 = vst [vmem:[#allocation2 + $0x40] sm:$0xff] 0.0
          %345 = vst [vmem:[#allocation2 + $0x48] sm:$0xff] 0.0
          %346 = vst [vmem:[#allocation2 + $0x50] sm:$0xff] 0.0
          %347 = vst [vmem:[#allocation2 + $0x58] sm:$0xff] 0.0
          %348 = vst [vmem:[#allocation2 + $0x60] sm:$0xff] 0.0
          %349 = vst [vmem:[#allocation2 + $0x68] sm:$0xff] 0.0
          %350 = vst [vmem:[#allocation2 + $0x70] sm:$0xff] 0.0
          %351 = vst [vmem:[#allocation2 + $0x78] sm:$0xff] 0.0
          %352 = vst [vmem:[#allocation3] sm:$0x1] 0.0
        $region68: #{transform_net_forward.7} parent=51 // pred_fallthru
          _
        %v353 = vld [vmem:[%s329] sm:$0xff]
        %v354 = vld [vmem:[%s329 + $0x8] sm:$0xff]
        %v355 = vld [vmem:[#allocation4] sm:$0xf]
        %357 = vset.pattern.permute.xlu0 0
        %358 = vperm.xlu0 %357, %v353
        %v359 = vpop.permute.xlu0 %358
        %362 = vset.pattern.permute.xlu0 0
        %363 = vperm.xlu0 %362, %v354
        %v364 = vpop.permute.xlu0 %363
        %v366 = vlaneseq
        %v367 = vshrl.u32 %v366, 7
        %v368 = vsub.s32 0, %v367
        %v369 = vrot.slane %v355, %v368
        %v370 = vmul.f32 %v359, %v369
        %v371 = vmul.f32 %v364, %v369
        %372 = vset.pattern.permute.xlu0 1
        %373 = vperm.xlu0 %372, %v353
        %v374 = vpop.permute.xlu0 %373
        %376 = vset.pattern.permute.xlu0 1
        %377 = vperm.xlu0 %376, %v354
        %v378 = vpop.permute.xlu0 %377
        %v380 = vlaneseq
        %v381 = vshrl.u32 %v380, 7
        %v382 = vsub.s32 1, %v381
        %v383 = vrot.slane %v355, %v382
        %v384 = vmul.f32 %v374, %v383
        %v385 = vmul.f32 %v378, %v383
        %v386 = vadd.f32 %v370, %v384
        %v387 = vadd.f32 %v371, %v385
        %388 = vset.pattern.permute.xlu0 2
        %389 = vperm.xlu0 %388, %v353
        %v390 = vpop.permute.xlu0 %389
        %392 = vset.pattern.permute.xlu0 2
        %393 = vperm.xlu0 %392, %v354
        %v394 = vpop.permute.xlu0 %393
        %v396 = vlaneseq
        %v397 = vshrl.u32 %v396, 7
        %v398 = vsub.s32 2, %v397
        %v399 = vrot.slane %v355, %v398
        %v400 = vmul.f32 %v390, %v399
        %v401 = vmul.f32 %v394, %v399
        %v402 = vadd.f32 %v386, %v400
        %v403 = vadd.f32 %v387, %v401
        %404 = vset.pattern.permute.xlu0 3
        %405 = vperm.xlu0 %404, %v353
        %v406 = vpop.permute.xlu0 %405
        %408 = vset.pattern.permute.xlu0 3
        %409 = vperm.xlu0 %408, %v354
        %v410 = vpop.permute.xlu0 %409
        %v412 = vlaneseq
        %v413 = vshrl.u32 %v412, 7
        %v414 = vsub.s32 3, %v413
        %v415 = vrot.slane %v355, %v414
        %v416 = vmul.f32 %v406, %v415
        %v417 = vmul.f32 %v410, %v415
        %v418 = vadd.f32 %v402, %v416
        %v419 = vadd.f32 %v403, %v417
        %v420 = vld [vmem:[%s2] sm:$0x3]
        %v421 = vlaneseq
        %v422 = vshrl.u32 %v421, 7
        %v423 = vsub.s32 0, %v422
        %v424 = vrot.slane %v420, %v423
        %v425 = vmul.f32 %v418, %v424
        %v426 = vmul.f32 %v419, %v424
        %v427 = vlaneseq
        %v428 = vshrl.u32 %v427, 7
        %v429 = vsub.s32 1, %v428
        %v430 = vrot.slane %v420, %v429
        %v431 = vadd.f32 %v425, %v430
        %v432 = vadd.f32 %v426, %v430
        %v433 = vmax.f32 %v431, 0.0
        %v434 = vmax.f32 %v432, 0.0
        %v435 = vpack.c.bf16 %v434, %v433
        %v436 = vld [vmem:[%s3] sm:$0xf]
        %v437 = vld [vmem:[%s3 + $0x4] sm:$0xf]
        %v438 = vld [vmem:[%s3 + $0x8] sm:$0xf]
        %v439 = vld [vmem:[%s3 + $0xc] sm:$0xf]
        %v440 = vld [vmem:[%s3 + $0x10] sm:$0xf]
        %v441 = vld [vmem:[%s3 + $0x14] sm:$0xf]
        %v442 = vld [vmem:[%s3 + $0x18] sm:$0xf]
        %v443 = vld [vmem:[%s3 + $0x1c] sm:$0xf]
        %v452 = vunpack.c.l.b16 %v436
        %v453 = vunpack.c.l.b16 %v437
        %v454 = vunpack.c.l.b16 %v438
        %v455 = vunpack.c.l.b16 %v439
        %v456 = vunpack.c.l.b16 %v440
        %v457 = vunpack.c.l.b16 %v441
        %v458 = vunpack.c.l.b16 %v442
        %v459 = vunpack.c.l.b16 %v443
        %v460 = vpack.c.b16 %v453, %v452
        %v461 = vpack.c.b16 %v455, %v454
        %v462 = vpack.c.b16 %v457, %v456
        %v463 = vpack.c.b16 %v459, %v458
        %vm468 = vcmask 523264
        %v470 = vsel %vm468, %v435, 0
        %472 = vmatprep.subr.bf16.mxu0 0
        %473 = vmatpush1.bf16.msra.mxu0 0
        %474 = vmatprep.subr.bf16.mxu0 0
        %475 = vmatpush1.bf16.msra.mxu0 0
        %476 = vmatprep.subr.bf16.mxu0 0
        %477 = vmatpush1.bf16.msra.mxu0 0
        %478 = vmatprep.subr.bf16.mxu0 0
        %479 = vmatpush1.bf16.msra.mxu0 0
        %480 = vmatprep.subr.bf16.mxu0 0
        %481 = vmatpush1.bf16.msra.mxu0 %v463
        %482 = vmatprep.subr.bf16.mxu0 0
        %483 = vmatpush1.bf16.msra.mxu0 %v462
        %484 = vmatprep.subr.bf16.mxu0 0
        %485 = vmatpush1.bf16.msra.mxu0 %v461
        %486 = vmatprep.subr.bf16.mxu0 0
        %487 = vmatpush1.bf16.msra.mxu0 %v460
        %488 = vmatprep.subr.bf16.mxu0 0
        %489 = vmatpush2.bf16.msra.mxu0 0
        %490 = vmatprep.subr.bf16.mxu0 0
        %491 = vmatpush2.bf16.msra.mxu0 0
        %492 = vmatprep.subr.bf16.mxu0 0
        %493 = vmatpush2.bf16.msra.mxu0 0
        %494 = vmatprep.subr.bf16.mxu0 0
        %495 = vmatpush2.bf16.msra.mxu0 0
        %496 = vmatprep.subr.bf16.mxu0 0
        %497 = vmatpush2.bf16.msra.mxu0 0
        %498 = vmatprep.subr.bf16.mxu0 0
        %499 = vmatpush2.bf16.msra.mxu0 0
        %500 = vmatprep.subr.bf16.mxu0 0
        %501 = vmatpush2.bf16.msra.mxu0 0
        %502 = vmatprep.subr.bf16.mxu0 0
        %503 = vmatpush2.bf16.msra.mxu0 0
        %504 = vmatprep.mubr.bf16.mxu0 0
        %505 = vmatmul.mubr.bf16.gmra.mxu0 %v470
        %v506 = vpop.f32.mrf.mxu0
        %v507 = vadd.f32 0.0, %v506
        %v508 = vpop.f32.mrf.mxu0
        %v509 = vpop.f32.mrf.mxu0
        %v510 = vadd.f32 0.0, %v509
        %v511 = vpop.f32.mrf.mxu0
        %512 = vdwg.mxu0
        %v513 = vld [vmem:[%s4] sm:$0x3]
        %v514 = vlaneseq
        %v515 = vshrl.u32 %v514, 7
        %v516 = vsub.s32 0, %v515
        %v517 = vrot.slane %v513, %v516
        %v518 = vmul.f32 %v507, %v517
        %v519 = vmul.f32 %v510, %v517
        %v520 = vlaneseq
        %v521 = vshrl.u32 %v520, 7
        %v522 = vsub.s32 1, %v521
        %v523 = vrot.slane %v513, %v522
        %v524 = vadd.f32 %v518, %v523
        %v525 = vadd.f32 %v519, %v523
        %v526 = vmax.f32 %v524, 0.0
        %v527 = vmax.f32 %v525, 0.0
        %v528 = vpack.c.bf16 %v527, %v526
        %v529 = vld [vmem:[#allocation2] sm:$0xff]
        %v530 = vld [vmem:[#allocation2 + $0x8] sm:$0xff]
        %v531 = vld [vmem:[#allocation2 + $0x10] sm:$0xff]
        %v532 = vld [vmem:[#allocation2 + $0x18] sm:$0xff]
        %v533 = vld [vmem:[#allocation2 + $0x20] sm:$0xff]
        %v534 = vld [vmem:[#allocation2 + $0x28] sm:$0xff]
        %v535 = vld [vmem:[#allocation2 + $0x30] sm:$0xff]
        %v536 = vld [vmem:[#allocation2 + $0x38] sm:$0xff]
        %v537 = vld [vmem:[#allocation2 + $0x40] sm:$0xff]
        %v538 = vld [vmem:[#allocation2 + $0x48] sm:$0xff]
        %v539 = vld [vmem:[#allocation2 + $0x50] sm:$0xff]
        %v540 = vld [vmem:[#allocation2 + $0x58] sm:$0xff]
        %v541 = vld [vmem:[#allocation2 + $0x60] sm:$0xff]
        %v542 = vld [vmem:[#allocation2 + $0x68] sm:$0xff]
        %v543 = vld [vmem:[#allocation2 + $0x70] sm:$0xff]
        %v544 = vld [vmem:[#allocation2 + $0x78] sm:$0xff]
        %545 = vxpose.xlu0.c.b16.start [1/8] %v528, 128
        %546 = vxpose.xlu0.c.b16.cont [2/8] 0, 128
        %547 = vxpose.xlu0.c.b16.cont [3/8] 0, 128
        %548 = vxpose.xlu0.c.b16.cont [4/8] 0, 128
        %549 = vxpose.xlu0.c.b16.cont [5/8] 0, 128
        %550 = vxpose.xlu0.c.b16.cont [6/8] 0, 128
        %551 = vxpose.xlu0.c.b16.cont [7/8] 0, 128
        %552 = vxpose.xlu0.c.b16.end [8/8] 0, 128
        %v553 = vpop.trf.xlu0
        %v554 = vpop.trf.xlu0
        %v555 = vpop.trf.xlu0
        %v556 = vpop.trf.xlu0
        %v557 = vpop.trf.xlu0
        %v558 = vpop.trf.xlu0
        %v559 = vpop.trf.xlu0
        %v560 = vpop.trf.xlu0
        %vm561 = vcmask 130048
        %v563 = vsel %vm561, %v553, 0
        %v566 = vsel %vm561, %v554, 0
        %v569 = vsel %vm561, %v555, 0
        %v572 = vsel %vm561, %v556, 0
        %v575 = vsel %vm561, %v557, 0
        %v578 = vsel %vm561, %v558, 0
        %v581 = vsel %vm561, %v559, 0
        %v584 = vsel %vm561, %v560, 0
        %586 = vmatprep.subr.bf16.mxu0 0
        %587 = vmatpush1.bf16.msra.mxu0 0
        %588 = vmatprep.subr.bf16.mxu0 0
        %589 = vmatpush1.bf16.msra.mxu0 0
        %590 = vmatprep.subr.bf16.mxu0 0
        %591 = vmatpush1.bf16.msra.mxu0 0
        %592 = vmatprep.subr.bf16.mxu0 0
        %593 = vmatpush1.bf16.msra.mxu0 0
        %594 = vmatprep.subr.bf16.mxu0 0
        %595 = vmatpush1.bf16.msra.mxu0 0
        %596 = vmatprep.subr.bf16.mxu0 0
        %597 = vmatpush1.bf16.msra.mxu0 0
        %598 = vmatprep.subr.bf16.mxu0 0
        %599 = vmatpush1.bf16.msra.mxu0 0
        %600 = vmatprep.subr.bf16.mxu0 0
        %601 = vmatpush1.bf16.msra.mxu0 %v528
        %602 = vmatprep.subr.bf16.mxu0 0
        %603 = vmatpush2.bf16.msra.mxu0 0
        %604 = vmatprep.subr.bf16.mxu0 0
        %605 = vmatpush2.bf16.msra.mxu0 0
        %606 = vmatprep.subr.bf16.mxu0 0
        %607 = vmatpush2.bf16.msra.mxu0 0
        %608 = vmatprep.subr.bf16.mxu0 0
        %609 = vmatpush2.bf16.msra.mxu0 0
        %610 = vmatprep.subr.bf16.mxu0 0
        %611 = vmatpush2.bf16.msra.mxu0 0
        %612 = vmatprep.subr.bf16.mxu0 0
        %613 = vmatpush2.bf16.msra.mxu0 0
        %614 = vmatprep.subr.bf16.mxu0 0
        %615 = vmatpush2.bf16.msra.mxu0 0
        %616 = vmatprep.subr.bf16.mxu0 0
        %617 = vmatpush2.bf16.msra.mxu0 0
        %618 = vmatprep.mubr.bf16.mxu0 0
        %619 = vmatmul.mubr.bf16.gmra.mxu0 %v563
        %v620 = vpop.f32.mrf.mxu0
        %v621 = vadd.f32 0.0, %v620
        %v622 = vpop.f32.mrf.mxu0
        %v623 = vpop.f32.mrf.mxu0
        %v624 = vadd.f32 0.0, %v623
        %v625 = vpop.f32.mrf.mxu0
        %626 = vmatprep.mubr.bf16.mxu0 0
        %627 = vmatmul.mubr.bf16.gmra.mxu0 %v566
        %v628 = vpop.f32.mrf.mxu0
        %v629 = vadd.f32 0.0, %v628
        %v630 = vpop.f32.mrf.mxu0
        %v631 = vpop.f32.mrf.mxu0
        %v632 = vadd.f32 0.0, %v631
        %v633 = vpop.f32.mrf.mxu0
        %634 = vmatprep.mubr.bf16.mxu0 0
        %635 = vmatmul.mubr.bf16.gmra.mxu0 %v569
        %v636 = vpop.f32.mrf.mxu0
        %v637 = vadd.f32 0.0, %v636
        %v638 = vpop.f32.mrf.mxu0
        %v639 = vpop.f32.mrf.mxu0
        %v640 = vadd.f32 0.0, %v639
        %v641 = vpop.f32.mrf.mxu0
        %642 = vmatprep.mubr.bf16.mxu0 0
        %643 = vmatmul.mubr.bf16.gmra.mxu0 %v572
        %v644 = vpop.f32.mrf.mxu0
        %v645 = vadd.f32 0.0, %v644
        %v646 = vpop.f32.mrf.mxu0
        %v647 = vpop.f32.mrf.mxu0
        %v648 = vadd.f32 0.0, %v647
        %v649 = vpop.f32.mrf.mxu0
        %650 = vmatprep.mubr.bf16.mxu0 0
        %651 = vmatmul.mubr.bf16.gmra.mxu0 %v575
        %v652 = vpop.f32.mrf.mxu0
        %v653 = vadd.f32 0.0, %v652
        %v654 = vpop.f32.mrf.mxu0
        %v655 = vpop.f32.mrf.mxu0
        %v656 = vadd.f32 0.0, %v655
        %v657 = vpop.f32.mrf.mxu0
        %658 = vmatprep.mubr.bf16.mxu0 0
        %659 = vmatmul.mubr.bf16.gmra.mxu0 %v578
        %v660 = vpop.f32.mrf.mxu0
        %v661 = vadd.f32 0.0, %v660
        %v662 = vpop.f32.mrf.mxu0
        %v663 = vpop.f32.mrf.mxu0
        %v664 = vadd.f32 0.0, %v663
        %v665 = vpop.f32.mrf.mxu0
        %666 = vmatprep.mubr.bf16.mxu0 0
        %667 = vmatmul.mubr.bf16.gmra.mxu0 %v581
        %v668 = vpop.f32.mrf.mxu0
        %v669 = vadd.f32 0.0, %v668
        %v670 = vpop.f32.mrf.mxu0
        %v671 = vpop.f32.mrf.mxu0
        %v672 = vadd.f32 0.0, %v671
        %v673 = vpop.f32.mrf.mxu0
        %674 = vmatprep.mubr.bf16.mxu0 0
        %675 = vmatmul.mubr.bf16.gmra.mxu0 %v584
        %v676 = vpop.f32.mrf.mxu0
        %v677 = vadd.f32 0.0, %v676
        %v678 = vpop.f32.mrf.mxu0
        %v679 = vpop.f32.mrf.mxu0
        %v680 = vadd.f32 0.0, %v679
        %v681 = vpop.f32.mrf.mxu0
        %682 = vdwg.mxu0
        %v683 = vadd.f32 %v529, %v621
        %v684 = vadd.f32 %v530, %v624
        %v685 = vadd.f32 %v531, %v629
        %v686 = vadd.f32 %v532, %v632
        %v687 = vadd.f32 %v533, %v637
        %v688 = vadd.f32 %v534, %v640
        %v689 = vadd.f32 %v535, %v645
        %v690 = vadd.f32 %v536, %v648
        %v691 = vadd.f32 %v537, %v653
        %v692 = vadd.f32 %v538, %v656
        %v693 = vadd.f32 %v539, %v661
        %v694 = vadd.f32 %v540, %v664
        %v695 = vadd.f32 %v541, %v669
        %v696 = vadd.f32 %v542, %v672
        %v697 = vadd.f32 %v543, %v677
        %v698 = vadd.f32 %v544, %v680
        %699 = vst [vmem:[#allocation2] sm:$0xff] %v683
        %700 = vst [vmem:[#allocation2 + $0x8] sm:$0xff] %v684
        %701 = vst [vmem:[#allocation2 + $0x10] sm:$0xff] %v685
        %702 = vst [vmem:[#allocation2 + $0x18] sm:$0xff] %v686
        %703 = vst [vmem:[#allocation2 + $0x20] sm:$0xff] %v687
        %704 = vst [vmem:[#allocation2 + $0x28] sm:$0xff] %v688
        %705 = vst [vmem:[#allocation2 + $0x30] sm:$0xff] %v689
        %706 = vst [vmem:[#allocation2 + $0x38] sm:$0xff] %v690
        %707 = vst [vmem:[#allocation2 + $0x40] sm:$0xff] %v691
        %708 = vst [vmem:[#allocation2 + $0x48] sm:$0xff] %v692
        %709 = vst [vmem:[#allocation2 + $0x50] sm:$0xff] %v693
        %710 = vst [vmem:[#allocation2 + $0x58] sm:$0xff] %v694
        %711 = vst [vmem:[#allocation2 + $0x60] sm:$0xff] %v695
        %712 = vst [vmem:[#allocation2 + $0x68] sm:$0xff] %v696
        %713 = vst [vmem:[#allocation2 + $0x70] sm:$0xff] %v697
        %714 = vst [vmem:[#allocation2 + $0x78] sm:$0xff] %v698
        %v715 = vld [vmem:[#allocation3] sm:$0x1]
        %v716 = vadd.f32 %v526, %v527
        %v717 = vrot.slane %v716, 4
        %v718 = vadd.f32 %v716, %v717
        %v719 = vrot.slane %v718, 2
        %v720 = vadd.f32 %v718, %v719
        %v721 = vrot.slane %v720, 1
        %v722 = vadd.f32 %v720, %v721
        %v723 = vadd.f32 %v715, %v722
        %724 = vst [vmem:[#allocation3] sm:$0x1] %v723
        %p725 = scmp.eq.s32.totalorder %s21, 1
        // Predicated region
        $region69: #{transform_net_forward.7} parent=51 // pred_check
          %p726 = pneg %p725
        $region70: #{transform_net_forward.7} parent=51 // pred_check_branch
          %728 = sbr.rel (%p726) target = $region72
        $region71: #{transform_net_forward.7} parent=51 // pred_region
          %v729 = vld [vmem:[%s5] sm:$0xff]
          %v730 = vld [vmem:[%s5 + $0x8] sm:$0xff]
          %v731 = vld [vmem:[%s5 + $0x10] sm:$0xff]
          %v732 = vld [vmem:[%s5 + $0x18] sm:$0xff]
          %v733 = vld [vmem:[%s5 + $0x20] sm:$0xff]
          %v734 = vld [vmem:[%s5 + $0x28] sm:$0xff]
          %v735 = vld [vmem:[%s5 + $0x30] sm:$0xff]
          %v736 = vld [vmem:[%s5 + $0x38] sm:$0xff]
          %v737 = vld [vmem:[%s5 + $0x40] sm:$0xff]
          %v738 = vld [vmem:[%s5 + $0x48] sm:$0xff]
          %v739 = vld [vmem:[%s5 + $0x50] sm:$0xff]
          %v740 = vld [vmem:[%s5 + $0x58] sm:$0xff]
          %v741 = vld [vmem:[%s5 + $0x60] sm:$0xff]
          %v742 = vld [vmem:[%s5 + $0x68] sm:$0xff]
          %v743 = vld [vmem:[%s5 + $0x70] sm:$0xff]
          %v744 = vld [vmem:[%s5 + $0x78] sm:$0xff]
          %v745 = vld [vmem:[%s5 + $0x80] sm:$0xff]
          %v746 = vld [vmem:[%s5 + $0x88] sm:$0xff]
          %v747 = vld [vmem:[%s5 + $0x90] sm:$0xff]
          %v748 = vld [vmem:[%s5 + $0x98] sm:$0xff]
          %v749 = vld [vmem:[%s5 + $0xa0] sm:$0xff]
          %v750 = vld [vmem:[%s5 + $0xa8] sm:$0xff]
          %v751 = vld [vmem:[%s5 + $0xb0] sm:$0xff]
          %v752 = vld [vmem:[%s5 + $0xb8] sm:$0xff]
          %v753 = vld [vmem:[%s5 + $0xc0] sm:$0xff]
          %v754 = vld [vmem:[%s5 + $0xc8] sm:$0xff]
          %v755 = vld [vmem:[%s5 + $0xd0] sm:$0xff]
          %v756 = vld [vmem:[%s5 + $0xd8] sm:$0xff]
          %v757 = vld [vmem:[%s5 + $0xe0] sm:$0xff]
          %v758 = vld [vmem:[%s5 + $0xe8] sm:$0xff]
          %v759 = vld [vmem:[%s5 + $0xf0] sm:$0xff]
          %v760 = vld [vmem:[%s5 + $0xf8] sm:$0xff]
          %v761 = vld [vmem:[%s5 + $0x100] sm:$0xff]
          %v762 = vld [vmem:[%s5 + $0x108] sm:$0xff]
          %v763 = vld [vmem:[%s5 + $0x110] sm:$0xff]
          %v764 = vld [vmem:[%s5 + $0x118] sm:$0xff]
          %v765 = vld [vmem:[%s5 + $0x120] sm:$0xff]
          %v766 = vld [vmem:[%s5 + $0x128] sm:$0xff]
          %v767 = vld [vmem:[%s5 + $0x130] sm:$0xff]
          %v768 = vld [vmem:[%s5 + $0x138] sm:$0xff]
          %v769 = vld [vmem:[%s5 + $0x140] sm:$0xff]
          %v770 = vld [vmem:[%s5 + $0x148] sm:$0xff]
          %v771 = vld [vmem:[%s5 + $0x150] sm:$0xff]
          %v772 = vld [vmem:[%s5 + $0x158] sm:$0xff]
          %v773 = vld [vmem:[%s5 + $0x160] sm:$0xff]
          %v774 = vld [vmem:[%s5 + $0x168] sm:$0xff]
          %v775 = vld [vmem:[%s5 + $0x170] sm:$0xff]
          %v776 = vld [vmem:[%s5 + $0x178] sm:$0xff]
          %v777 = vld [vmem:[%s5 + $0x180] sm:$0xff]
          %v778 = vld [vmem:[%s5 + $0x188] sm:$0xff]
          %v779 = vld [vmem:[%s5 + $0x190] sm:$0xff]
          %v780 = vld [vmem:[%s5 + $0x198] sm:$0xff]
          %v781 = vld [vmem:[%s5 + $0x1a0] sm:$0xff]
          %v782 = vld [vmem:[%s5 + $0x1a8] sm:$0xff]
          %v783 = vld [vmem:[%s5 + $0x1b0] sm:$0xff]
          %v784 = vld [vmem:[%s5 + $0x1b8] sm:$0xff]
          %v785 = vld [vmem:[%s5 + $0x1c0] sm:$0xff]
          %v786 = vld [vmem:[%s5 + $0x1c8] sm:$0xff]
          %v787 = vld [vmem:[%s5 + $0x1d0] sm:$0xff]
          %v788 = vld [vmem:[%s5 + $0x1d8] sm:$0xff]
          %v789 = vld [vmem:[%s5 + $0x1e0] sm:$0xff]
          %v790 = vld [vmem:[%s5 + $0x1e8] sm:$0xff]
          %v791 = vld [vmem:[%s5 + $0x1f0] sm:$0xff]
          %v792 = vld [vmem:[%s5 + $0x1f8] sm:$0xff]
          %v793 = vunpack.c.l.bf16 %v729
          %v794 = vunpack.c.h.bf16 %v729
          %v795 = vunpack.c.l.bf16 %v730
          %v796 = vunpack.c.h.bf16 %v730
          %v797 = vunpack.c.l.bf16 %v731
          %v798 = vunpack.c.h.bf16 %v731
          %v799 = vunpack.c.l.bf16 %v732
          %v800 = vunpack.c.h.bf16 %v732
          %v801 = vunpack.c.l.bf16 %v733
          %v802 = vunpack.c.h.bf16 %v733
          %v803 = vunpack.c.l.bf16 %v734
          %v804 = vunpack.c.h.bf16 %v734
          %v805 = vunpack.c.l.bf16 %v735
          %v806 = vunpack.c.h.bf16 %v735
          %v807 = vunpack.c.l.bf16 %v736
          %v808 = vunpack.c.h.bf16 %v736
          %v809 = vunpack.c.l.bf16 %v737
          %v810 = vunpack.c.h.bf16 %v737
          %v811 = vunpack.c.l.bf16 %v738
          %v812 = vunpack.c.h.bf16 %v738
          %v813 = vunpack.c.l.bf16 %v739
          %v814 = vunpack.c.h.bf16 %v739
          %v815 = vunpack.c.l.bf16 %v740
          %v816 = vunpack.c.h.bf16 %v740
          %v817 = vunpack.c.l.bf16 %v741
          %v818 = vunpack.c.h.bf16 %v741
          %v819 = vunpack.c.l.bf16 %v742
          %v820 = vunpack.c.h.bf16 %v742
          %v821 = vunpack.c.l.bf16 %v743
          %v822 = vunpack.c.h.bf16 %v743
          %v823 = vunpack.c.l.bf16 %v744
          %v824 = vunpack.c.h.bf16 %v744
          %v825 = vunpack.c.l.bf16 %v745
          %v826 = vunpack.c.h.bf16 %v745
          %v827 = vunpack.c.l.bf16 %v746
          %v828 = vunpack.c.h.bf16 %v746
          %v829 = vunpack.c.l.bf16 %v747
          %v830 = vunpack.c.h.bf16 %v747
          %v831 = vunpack.c.l.bf16 %v748
          %v832 = vunpack.c.h.bf16 %v748
          %v833 = vunpack.c.l.bf16 %v749
          %v834 = vunpack.c.h.bf16 %v749
          %v835 = vunpack.c.l.bf16 %v750
          %v836 = vunpack.c.h.bf16 %v750
          %v837 = vunpack.c.l.bf16 %v751
          %v838 = vunpack.c.h.bf16 %v751
          %v839 = vunpack.c.l.bf16 %v752
          %v840 = vunpack.c.h.bf16 %v752
          %v841 = vunpack.c.l.bf16 %v753
          %v842 = vunpack.c.h.bf16 %v753
          %v843 = vunpack.c.l.bf16 %v754
          %v844 = vunpack.c.h.bf16 %v754
          %v845 = vunpack.c.l.bf16 %v755
          %v846 = vunpack.c.h.bf16 %v755
          %v847 = vunpack.c.l.bf16 %v756
          %v848 = vunpack.c.h.bf16 %v756
          %v849 = vunpack.c.l.bf16 %v757
          %v850 = vunpack.c.h.bf16 %v757
          %v851 = vunpack.c.l.bf16 %v758
          %v852 = vunpack.c.h.bf16 %v758
          %v853 = vunpack.c.l.bf16 %v759
          %v854 = vunpack.c.h.bf16 %v759
          %v855 = vunpack.c.l.bf16 %v760
          %v856 = vunpack.c.h.bf16 %v760
          %v857 = vunpack.c.l.bf16 %v761
          %v858 = vunpack.c.h.bf16 %v761
          %v859 = vunpack.c.l.bf16 %v762
          %v860 = vunpack.c.h.bf16 %v762
          %v861 = vunpack.c.l.bf16 %v763
          %v862 = vunpack.c.h.bf16 %v763
          %v863 = vunpack.c.l.bf16 %v764
          %v864 = vunpack.c.h.bf16 %v764
          %v865 = vunpack.c.l.bf16 %v765
          %v866 = vunpack.c.h.bf16 %v765
          %v867 = vunpack.c.l.bf16 %v766
          %v868 = vunpack.c.h.bf16 %v766
          %v869 = vunpack.c.l.bf16 %v767
          %v870 = vunpack.c.h.bf16 %v767
          %v871 = vunpack.c.l.bf16 %v768
          %v872 = vunpack.c.h.bf16 %v768
          %v873 = vunpack.c.l.bf16 %v769
          %v874 = vunpack.c.h.bf16 %v769
          %v875 = vunpack.c.l.bf16 %v770
          %v876 = vunpack.c.h.bf16 %v770
          %v877 = vunpack.c.l.bf16 %v771
          %v878 = vunpack.c.h.bf16 %v771
          %v879 = vunpack.c.l.bf16 %v772
          %v880 = vunpack.c.h.bf16 %v772
          %v881 = vunpack.c.l.bf16 %v773
          %v882 = vunpack.c.h.bf16 %v773
          %v883 = vunpack.c.l.bf16 %v774
          %v884 = vunpack.c.h.bf16 %v774
          %v885 = vunpack.c.l.bf16 %v775
          %v886 = vunpack.c.h.bf16 %v775
          %v887 = vunpack.c.l.bf16 %v776
          %v888 = vunpack.c.h.bf16 %v776
          %v889 = vunpack.c.l.bf16 %v777
          %v890 = vunpack.c.h.bf16 %v777
          %v891 = vunpack.c.l.bf16 %v778
          %v892 = vunpack.c.h.bf16 %v778
          %v893 = vunpack.c.l.bf16 %v779
          %v894 = vunpack.c.h.bf16 %v779
          %v895 = vunpack.c.l.bf16 %v780
          %v896 = vunpack.c.h.bf16 %v780
          %v897 = vunpack.c.l.bf16 %v781
          %v898 = vunpack.c.h.bf16 %v781
          %v899 = vunpack.c.l.bf16 %v782
          %v900 = vunpack.c.h.bf16 %v782
          %v901 = vunpack.c.l.bf16 %v783
          %v902 = vunpack.c.h.bf16 %v783
          %v903 = vunpack.c.l.bf16 %v784
          %v904 = vunpack.c.h.bf16 %v784
          %v905 = vunpack.c.l.bf16 %v785
          %v906 = vunpack.c.h.bf16 %v785
          %v907 = vunpack.c.l.bf16 %v786
          %v908 = vunpack.c.h.bf16 %v786
          %v909 = vunpack.c.l.bf16 %v787
          %v910 = vunpack.c.h.bf16 %v787
          %v911 = vunpack.c.l.bf16 %v788
          %v912 = vunpack.c.h.bf16 %v788
          %v913 = vunpack.c.l.bf16 %v789
          %v914 = vunpack.c.h.bf16 %v789
          %v915 = vunpack.c.l.bf16 %v790
          %v916 = vunpack.c.h.bf16 %v790
          %v917 = vunpack.c.l.bf16 %v791
          %v918 = vunpack.c.h.bf16 %v791
          %v919 = vunpack.c.l.bf16 %v792
          %v920 = vunpack.c.h.bf16 %v792
          %v921 = vld [vmem:[#allocation3] sm:$0x1]
          %922 = vmatprep.subr.mxu0 %v914
          %923 = vmatpush1.msra.mxu0 %v913
          %924 = vmatprep.subr.mxu0 %v906
          %925 = vmatpush1.msra.mxu0 %v905
          %926 = vmatprep.subr.mxu0 %v898
          %927 = vmatpush1.msra.mxu0 %v897
          %928 = vmatprep.subr.mxu0 %v890
          %929 = vmatpush1.msra.mxu0 %v889
          %930 = vmatprep.subr.mxu0 %v882
          %931 = vmatpush1.msra.mxu0 %v881
          %932 = vmatprep.subr.mxu0 %v874
          %933 = vmatpush1.msra.mxu0 %v873
          %934 = vmatprep.subr.mxu0 %v866
          %935 = vmatpush1.msra.mxu0 %v865
          %936 = vmatprep.subr.mxu0 %v858
          %937 = vmatpush1.msra.mxu0 %v857
          %938 = vmatprep.subr.mxu0 %v850
          %939 = vmatpush1.msra.mxu0 %v849
          %940 = vmatprep.subr.mxu0 %v842
          %941 = vmatpush1.msra.mxu0 %v841
          %942 = vmatprep.subr.mxu0 %v834
          %943 = vmatpush1.msra.mxu0 %v833
          %944 = vmatprep.subr.mxu0 %v826
          %945 = vmatpush1.msra.mxu0 %v825
          %946 = vmatprep.subr.mxu0 %v818
          %947 = vmatpush1.msra.mxu0 %v817
          %948 = vmatprep.subr.mxu0 %v810
          %949 = vmatpush1.msra.mxu0 %v809
          %950 = vmatprep.subr.mxu0 %v802
          %951 = vmatpush1.msra.mxu0 %v801
          %952 = vmatprep.subr.mxu0 %v794
          %953 = vmatpush1.msra.mxu0 %v793
          %954 = vmatprep.subr.mxu0 0.0
          %955 = vmatpush2.msra.mxu0 0.0
          %956 = vmatprep.subr.mxu0 0.0
          %957 = vmatpush2.msra.mxu0 0.0
          %958 = vmatprep.subr.mxu0 0.0
          %959 = vmatpush2.msra.mxu0 0.0
          %960 = vmatprep.subr.mxu0 0.0
          %961 = vmatpush2.msra.mxu0 0.0
          %962 = vmatprep.subr.mxu0 0.0
          %963 = vmatpush2.msra.mxu0 0.0
          %964 = vmatprep.subr.mxu0 0.0
          %965 = vmatpush2.msra.mxu0 0.0
          %966 = vmatprep.subr.mxu0 0.0
          %967 = vmatpush2.msra.mxu0 0.0
          %968 = vmatprep.subr.mxu0 0.0
          %969 = vmatpush2.msra.mxu0 0.0
          %970 = vmatprep.subr.mxu0 0.0
          %971 = vmatpush2.msra.mxu0 0.0
          %972 = vmatprep.subr.mxu0 0.0
          %973 = vmatpush2.msra.mxu0 0.0
          %974 = vmatprep.subr.mxu0 0.0
          %975 = vmatpush2.msra.mxu0 0.0
          %976 = vmatprep.subr.mxu0 0.0
          %977 = vmatpush2.msra.mxu0 0.0
          %978 = vmatprep.subr.mxu0 0.0
          %979 = vmatpush2.msra.mxu0 0.0
          %980 = vmatprep.subr.mxu0 0.0
          %981 = vmatpush2.msra.mxu0 0.0
          %982 = vmatprep.subr.mxu0 0.0
          %983 = vmatpush2.msra.mxu0 0.0
          %984 = vmatprep.subr.mxu0 0.0
          %985 = vmatpush2.msra.mxu0 0.0
          %986 = vmatprep.mubr.f32.mxu0 0.0
          %987 = vmatmul.mubr.f32.gmra.mxu0 %v921
          %v988 = vpop.f32.mrf.mxu0
          %v989 = vadd.f32 0.0, %v988
          %v990 = vpop.f32.mrf.mxu0
          %v991 = vadd.f32 0.0, %v990
          %992 = vdwg.mxu0
          %993 = vmatprep.subr.mxu0 %v916
          %994 = vmatpush1.msra.mxu0 %v915
          %995 = vmatprep.subr.mxu0 %v908
          %996 = vmatpush1.msra.mxu0 %v907
          %997 = vmatprep.subr.mxu0 %v900
          %998 = vmatpush1.msra.mxu0 %v899
          %999 = vmatprep.subr.mxu0 %v892
          %1000 = vmatpush1.msra.mxu0 %v891
          %1001 = vmatprep.subr.mxu0 %v884
          %1002 = vmatpush1.msra.mxu0 %v883
          %1003 = vmatprep.subr.mxu0 %v876
          %1004 = vmatpush1.msra.mxu0 %v875
          %1005 = vmatprep.subr.mxu0 %v868
          %1006 = vmatpush1.msra.mxu0 %v867
          %1007 = vmatprep.subr.mxu0 %v860
          %1008 = vmatpush1.msra.mxu0 %v859
          %1009 = vmatprep.subr.mxu0 %v852
          %1010 = vmatpush1.msra.mxu0 %v851
          %1011 = vmatprep.subr.mxu0 %v844
          %1012 = vmatpush1.msra.mxu0 %v843
          %1013 = vmatprep.subr.mxu0 %v836
          %1014 = vmatpush1.msra.mxu0 %v835
          %1015 = vmatprep.subr.mxu0 %v828
          %1016 = vmatpush1.msra.mxu0 %v827
          %1017 = vmatprep.subr.mxu0 %v820
          %1018 = vmatpush1.msra.mxu0 %v819
          %1019 = vmatprep.subr.mxu0 %v812
          %1020 = vmatpush1.msra.mxu0 %v811
          %1021 = vmatprep.subr.mxu0 %v804
          %1022 = vmatpush1.msra.mxu0 %v803
          %1023 = vmatprep.subr.mxu0 %v796
          %1024 = vmatpush1.msra.mxu0 %v795
          %1025 = vmatprep.subr.mxu0 0.0
          %1026 = vmatpush2.msra.mxu0 0.0
          %1027 = vmatprep.subr.mxu0 0.0
          %1028 = vmatpush2.msra.mxu0 0.0
          %1029 = vmatprep.subr.mxu0 0.0
          %1030 = vmatpush2.msra.mxu0 0.0
          %1031 = vmatprep.subr.mxu0 0.0
          %1032 = vmatpush2.msra.mxu0 0.0
          %1033 = vmatprep.subr.mxu0 0.0
          %1034 = vmatpush2.msra.mxu0 0.0
          %1035 = vmatprep.subr.mxu0 0.0
          %1036 = vmatpush2.msra.mxu0 0.0
          %1037 = vmatprep.subr.mxu0 0.0
          %1038 = vmatpush2.msra.mxu0 0.0
          %1039 = vmatprep.subr.mxu0 0.0
          %1040 = vmatpush2.msra.mxu0 0.0
          %1041 = vmatprep.subr.mxu0 0.0
          %1042 = vmatpush2.msra.mxu0 0.0
          %1043 = vmatprep.subr.mxu0 0.0
          %1044 = vmatpush2.msra.mxu0 0.0
          %1045 = vmatprep.subr.mxu0 0.0
          %1046 = vmatpush2.msra.mxu0 0.0
          %1047 = vmatprep.subr.mxu0 0.0
          %1048 = vmatpush2.msra.mxu0 0.0
          %1049 = vmatprep.subr.mxu0 0.0
          %1050 = vmatpush2.msra.mxu0 0.0
          %1051 = vmatprep.subr.mxu0 0.0
          %1052 = vmatpush2.msra.mxu0 0.0
          %1053 = vmatprep.subr.mxu0 0.0
          %1054 = vmatpush2.msra.mxu0 0.0
          %1055 = vmatprep.subr.mxu0 0.0
          %1056 = vmatpush2.msra.mxu0 0.0
          %1057 = vmatprep.mubr.f32.mxu0 0.0
          %1058 = vmatmul.mubr.f32.gmra.mxu0 %v921
          %v1059 = vpop.f32.mrf.mxu0
          %v1060 = vadd.f32 0.0, %v1059
          %v1061 = vpop.f32.mrf.mxu0
          %v1062 = vadd.f32 0.0, %v1061
          %1063 = vdwg.mxu0
          %1064 = vmatprep.subr.mxu0 %v918
          %1065 = vmatpush1.msra.mxu0 %v917
          %1066 = vmatprep.subr.mxu0 %v910
          %1067 = vmatpush1.msra.mxu0 %v909
          %1068 = vmatprep.subr.mxu0 %v902
          %1069 = vmatpush1.msra.mxu0 %v901
          %1070 = vmatprep.subr.mxu0 %v894
          %1071 = vmatpush1.msra.mxu0 %v893
          %1072 = vmatprep.subr.mxu0 %v886
          %1073 = vmatpush1.msra.mxu0 %v885
          %1074 = vmatprep.subr.mxu0 %v878
          %1075 = vmatpush1.msra.mxu0 %v877
          %1076 = vmatprep.subr.mxu0 %v870
          %1077 = vmatpush1.msra.mxu0 %v869
          %1078 = vmatprep.subr.mxu0 %v862
          %1079 = vmatpush1.msra.mxu0 %v861
          %1080 = vmatprep.subr.mxu0 %v854
          %1081 = vmatpush1.msra.mxu0 %v853
          %1082 = vmatprep.subr.mxu0 %v846
          %1083 = vmatpush1.msra.mxu0 %v845
          %1084 = vmatprep.subr.mxu0 %v838
          %1085 = vmatpush1.msra.mxu0 %v837
          %1086 = vmatprep.subr.mxu0 %v830
          %1087 = vmatpush1.msra.mxu0 %v829
          %1088 = vmatprep.subr.mxu0 %v822
          %1089 = vmatpush1.msra.mxu0 %v821
          %1090 = vmatprep.subr.mxu0 %v814
          %1091 = vmatpush1.msra.mxu0 %v813
          %1092 = vmatprep.subr.mxu0 %v806
          %1093 = vmatpush1.msra.mxu0 %v805
          %1094 = vmatprep.subr.mxu0 %v798
          %1095 = vmatpush1.msra.mxu0 %v797
          %1096 = vmatprep.subr.mxu0 0.0
          %1097 = vmatpush2.msra.mxu0 0.0
          %1098 = vmatprep.subr.mxu0 0.0
          %1099 = vmatpush2.msra.mxu0 0.0
          %1100 = vmatprep.subr.mxu0 0.0
          %1101 = vmatpush2.msra.mxu0 0.0
          %1102 = vmatprep.subr.mxu0 0.0
          %1103 = vmatpush2.msra.mxu0 0.0
          %1104 = vmatprep.subr.mxu0 0.0
          %1105 = vmatpush2.msra.mxu0 0.0
          %1106 = vmatprep.subr.mxu0 0.0
          %1107 = vmatpush2.msra.mxu0 0.0
          %1108 = vmatprep.subr.mxu0 0.0
          %1109 = vmatpush2.msra.mxu0 0.0
          %1110 = vmatprep.subr.mxu0 0.0
          %1111 = vmatpush2.msra.mxu0 0.0
          %1112 = vmatprep.subr.mxu0 0.0
          %1113 = vmatpush2.msra.mxu0 0.0
          %1114 = vmatprep.subr.mxu0 0.0
          %1115 = vmatpush2.msra.mxu0 0.0
          %1116 = vmatprep.subr.mxu0 0.0
          %1117 = vmatpush2.msra.mxu0 0.0
          %1118 = vmatprep.subr.mxu0 0.0
          %1119 = vmatpush2.msra.mxu0 0.0
          %1120 = vmatprep.subr.mxu0 0.0
          %1121 = vmatpush2.msra.mxu0 0.0
          %1122 = vmatprep.subr.mxu0 0.0
          %1123 = vmatpush2.msra.mxu0 0.0
          %1124 = vmatprep.subr.mxu0 0.0
          %1125 = vmatpush2.msra.mxu0 0.0
          %1126 = vmatprep.subr.mxu0 0.0
          %1127 = vmatpush2.msra.mxu0 0.0
          %1128 = vmatprep.mubr.f32.mxu0 0.0
          %1129 = vmatmul.mubr.f32.gmra.mxu0 %v921
          %v1130 = vpop.f32.mrf.mxu0
          %v1131 = vadd.f32 0.0, %v1130
          %v1132 = vpop.f32.mrf.mxu0
          %v1133 = vadd.f32 0.0, %v1132
          %1134 = vdwg.mxu0
          %1135 = vmatprep.subr.mxu0 %v920
          %1136 = vmatpush1.msra.mxu0 %v919
          %1137 = vmatprep.subr.mxu0 %v912
          %1138 = vmatpush1.msra.mxu0 %v911
          %1139 = vmatprep.subr.mxu0 %v904
          %1140 = vmatpush1.msra.mxu0 %v903
          %1141 = vmatprep.subr.mxu0 %v896
          %1142 = vmatpush1.msra.mxu0 %v895
          %1143 = vmatprep.subr.mxu0 %v888
          %1144 = vmatpush1.msra.mxu0 %v887
          %1145 = vmatprep.subr.mxu0 %v880
          %1146 = vmatpush1.msra.mxu0 %v879
          %1147 = vmatprep.subr.mxu0 %v872
          %1148 = vmatpush1.msra.mxu0 %v871
          %1149 = vmatprep.subr.mxu0 %v864
          %1150 = vmatpush1.msra.mxu0 %v863
          %1151 = vmatprep.subr.mxu0 %v856
          %1152 = vmatpush1.msra.mxu0 %v855
          %1153 = vmatprep.subr.mxu0 %v848
          %1154 = vmatpush1.msra.mxu0 %v847
          %1155 = vmatprep.subr.mxu0 %v840
          %1156 = vmatpush1.msra.mxu0 %v839
          %1157 = vmatprep.subr.mxu0 %v832
          %1158 = vmatpush1.msra.mxu0 %v831
          %1159 = vmatprep.subr.mxu0 %v824
          %1160 = vmatpush1.msra.mxu0 %v823
          %1161 = vmatprep.subr.mxu0 %v816
          %1162 = vmatpush1.msra.mxu0 %v815
          %1163 = vmatprep.subr.mxu0 %v808
          %1164 = vmatpush1.msra.mxu0 %v807
          %1165 = vmatprep.subr.mxu0 %v800
          %1166 = vmatpush1.msra.mxu0 %v799
          %1167 = vmatprep.subr.mxu0 0.0
          %1168 = vmatpush2.msra.mxu0 0.0
          %1169 = vmatprep.subr.mxu0 0.0
          %1170 = vmatpush2.msra.mxu0 0.0
          %1171 = vmatprep.subr.mxu0 0.0
          %1172 = vmatpush2.msra.mxu0 0.0
          %1173 = vmatprep.subr.mxu0 0.0
          %1174 = vmatpush2.msra.mxu0 0.0
          %1175 = vmatprep.subr.mxu0 0.0
          %1176 = vmatpush2.msra.mxu0 0.0
          %1177 = vmatprep.subr.mxu0 0.0
          %1178 = vmatpush2.msra.mxu0 0.0
          %1179 = vmatprep.subr.mxu0 0.0
          %1180 = vmatpush2.msra.mxu0 0.0
          %1181 = vmatprep.subr.mxu0 0.0
          %1182 = vmatpush2.msra.mxu0 0.0
          %1183 = vmatprep.subr.mxu0 0.0
          %1184 = vmatpush2.msra.mxu0 0.0
          %1185 = vmatprep.subr.mxu0 0.0
          %1186 = vmatpush2.msra.mxu0 0.0
          %1187 = vmatprep.subr.mxu0 0.0
          %1188 = vmatpush2.msra.mxu0 0.0
          %1189 = vmatprep.subr.mxu0 0.0
          %1190 = vmatpush2.msra.mxu0 0.0
          %1191 = vmatprep.subr.mxu0 0.0
          %1192 = vmatpush2.msra.mxu0 0.0
          %1193 = vmatprep.subr.mxu0 0.0
          %1194 = vmatpush2.msra.mxu0 0.0
          %1195 = vmatprep.subr.mxu0 0.0
          %1196 = vmatpush2.msra.mxu0 0.0
          %1197 = vmatprep.subr.mxu0 0.0
          %1198 = vmatpush2.msra.mxu0 0.0
          %1199 = vmatprep.mubr.f32.mxu0 0.0
          %1200 = vmatmul.mubr.f32.gmra.mxu0 %v921
          %v1201 = vpop.f32.mrf.mxu0
          %v1202 = vadd.f32 0.0, %v1201
          %v1203 = vpop.f32.mrf.mxu0
          %v1204 = vadd.f32 0.0, %v1203
          %1205 = vdwg.mxu0
          %v1206 = vmul.f32 %v989, 0.03125
          %v1207 = vmul.f32 %v991, 0.03125
          %v1208 = vmul.f32 %v1060, 0.03125
          %v1209 = vmul.f32 %v1062, 0.03125
          %v1210 = vmul.f32 %v1131, 0.03125
          %v1211 = vmul.f32 %v1133, 0.03125
          %v1212 = vmul.f32 %v1202, 0.03125
          %v1213 = vmul.f32 %v1204, 0.03125
          %v1214 = vld [vmem:[#allocation2] sm:$0xff]
          %v1215 = vld [vmem:[#allocation2 + $0x8] sm:$0xff]
          %v1216 = vld [vmem:[#allocation2 + $0x10] sm:$0xff]
          %v1217 = vld [vmem:[#allocation2 + $0x18] sm:$0xff]
          %v1218 = vld [vmem:[#allocation2 + $0x20] sm:$0xff]
          %v1219 = vld [vmem:[#allocation2 + $0x28] sm:$0xff]
          %v1220 = vld [vmem:[#allocation2 + $0x30] sm:$0xff]
          %v1221 = vld [vmem:[#allocation2 + $0x38] sm:$0xff]
          %v1222 = vld [vmem:[#allocation2 + $0x40] sm:$0xff]
          %v1223 = vld [vmem:[#allocation2 + $0x48] sm:$0xff]
          %v1224 = vld [vmem:[#allocation2 + $0x50] sm:$0xff]
          %v1225 = vld [vmem:[#allocation2 + $0x58] sm:$0xff]
          %v1226 = vld [vmem:[#allocation2 + $0x60] sm:$0xff]
          %v1227 = vld [vmem:[#allocation2 + $0x68] sm:$0xff]
          %v1228 = vld [vmem:[#allocation2 + $0x70] sm:$0xff]
          %v1229 = vld [vmem:[#allocation2 + $0x78] sm:$0xff]
          %1230 = vmatprep.subr.mxu0 %v914
          %1231 = vmatpush1.msra.mxu0 %v913
          %1232 = vmatprep.subr.mxu0 %v906
          %1233 = vmatpush1.msra.mxu0 %v905
          %1234 = vmatprep.subr.mxu0 %v898
          %1235 = vmatpush1.msra.mxu0 %v897
          %1236 = vmatprep.subr.mxu0 %v890
          %1237 = vmatpush1.msra.mxu0 %v889
          %1238 = vmatprep.subr.mxu0 %v882
          %1239 = vmatpush1.msra.mxu0 %v881
          %1240 = vmatprep.subr.mxu0 %v874
          %1241 = vmatpush1.msra.mxu0 %v873
          %1242 = vmatprep.subr.mxu0 %v866
          %1243 = vmatpush1.msra.mxu0 %v865
          %1244 = vmatprep.subr.mxu0 %v858
          %1245 = vmatpush1.msra.mxu0 %v857
          %1246 = vmatprep.subr.mxu0 %v850
          %1247 = vmatpush1.msra.mxu0 %v849
          %1248 = vmatprep.subr.mxu0 %v842
          %1249 = vmatpush1.msra.mxu0 %v841
          %1250 = vmatprep.subr.mxu0 %v834
          %1251 = vmatpush1.msra.mxu0 %v833
          %1252 = vmatprep.subr.mxu0 %v826
          %1253 = vmatpush1.msra.mxu0 %v825
          %1254 = vmatprep.subr.mxu0 %v818
          %1255 = vmatpush1.msra.mxu0 %v817
          %1256 = vmatprep.subr.mxu0 %v810
          %1257 = vmatpush1.msra.mxu0 %v809
          %1258 = vmatprep.subr.mxu0 %v802
          %1259 = vmatpush1.msra.mxu0 %v801
          %1260 = vmatprep.subr.mxu0 %v794
          %1261 = vmatpush1.msra.mxu0 %v793
          %1262 = vmatprep.subr.mxu0 0.0
          %1263 = vmatpush2.msra.mxu0 0.0
          %1264 = vmatprep.subr.mxu0 0.0
          %1265 = vmatpush2.msra.mxu0 0.0
          %1266 = vmatprep.subr.mxu0 0.0
          %1267 = vmatpush2.msra.mxu0 0.0
          %1268 = vmatprep.subr.mxu0 0.0
          %1269 = vmatpush2.msra.mxu0 0.0
          %1270 = vmatprep.subr.mxu0 0.0
          %1271 = vmatpush2.msra.mxu0 0.0
          %1272 = vmatprep.subr.mxu0 0.0
          %1273 = vmatpush2.msra.mxu0 0.0
          %1274 = vmatprep.subr.mxu0 0.0
          %1275 = vmatpush2.msra.mxu0 0.0
          %1276 = vmatprep.subr.mxu0 0.0
          %1277 = vmatpush2.msra.mxu0 0.0
          %1278 = vmatprep.subr.mxu0 0.0
          %1279 = vmatpush2.msra.mxu0 0.0
          %1280 = vmatprep.subr.mxu0 0.0
          %1281 = vmatpush2.msra.mxu0 0.0
          %1282 = vmatprep.subr.mxu0 0.0
          %1283 = vmatpush2.msra.mxu0 0.0
          %1284 = vmatprep.subr.mxu0 0.0
          %1285 = vmatpush2.msra.mxu0 0.0
          %1286 = vmatprep.subr.mxu0 0.0
          %1287 = vmatpush2.msra.mxu0 0.0
          %1288 = vmatprep.subr.mxu0 0.0
          %1289 = vmatpush2.msra.mxu0 0.0
          %1290 = vmatprep.subr.mxu0 0.0
          %1291 = vmatpush2.msra.mxu0 0.0
          %1292 = vmatprep.subr.mxu0 0.0
          %1293 = vmatpush2.msra.mxu0 0.0
          %1294 = vmatprep.mubr.f32.mxu0 0.0
          %1295 = vmatmul.mubr.f32.gmra.mxu0 %v1214
          %v1296 = vpop.f32.mrf.mxu0
          %v1297 = vadd.f32 0.0, %v1296
          %v1298 = vpop.f32.mrf.mxu0
          %v1299 = vadd.f32 0.0, %v1298
          %1300 = vmatprep.mubr.f32.mxu0 0.0
          %1301 = vmatmul.mubr.f32.gmra.mxu0 %v1215
          %v1302 = vpop.f32.mrf.mxu0
          %v1303 = vadd.f32 0.0, %v1302
          %v1304 = vpop.f32.mrf.mxu0
          %v1305 = vadd.f32 0.0, %v1304
          %1306 = vmatprep.mubr.f32.mxu0 0.0
          %1307 = vmatmul.mubr.f32.gmra.mxu0 %v1216
          %v1308 = vpop.f32.mrf.mxu0
          %v1309 = vadd.f32 0.0, %v1308
          %v1310 = vpop.f32.mrf.mxu0
          %v1311 = vadd.f32 0.0, %v1310
          %1312 = vmatprep.mubr.f32.mxu0 0.0
          %1313 = vmatmul.mubr.f32.gmra.mxu0 %v1217
          %v1314 = vpop.f32.mrf.mxu0
          %v1315 = vadd.f32 0.0, %v1314
          %v1316 = vpop.f32.mrf.mxu0
          %v1317 = vadd.f32 0.0, %v1316
          %1318 = vmatprep.mubr.f32.mxu0 0.0
          %1319 = vmatmul.mubr.f32.gmra.mxu0 %v1218
          %v1320 = vpop.f32.mrf.mxu0
          %v1321 = vadd.f32 0.0, %v1320
          %v1322 = vpop.f32.mrf.mxu0
          %v1323 = vadd.f32 0.0, %v1322
          %1324 = vmatprep.mubr.f32.mxu0 0.0
          %1325 = vmatmul.mubr.f32.gmra.mxu0 %v1219
          %v1326 = vpop.f32.mrf.mxu0
          %v1327 = vadd.f32 0.0, %v1326
          %v1328 = vpop.f32.mrf.mxu0
          %v1329 = vadd.f32 0.0, %v1328
          %1330 = vmatprep.mubr.f32.mxu0 0.0
          %1331 = vmatmul.mubr.f32.gmra.mxu0 %v1220
          %v1332 = vpop.f32.mrf.mxu0
          %v1333 = vadd.f32 0.0, %v1332
          %v1334 = vpop.f32.mrf.mxu0
          %v1335 = vadd.f32 0.0, %v1334
          %1336 = vmatprep.mubr.f32.mxu0 0.0
          %1337 = vmatmul.mubr.f32.gmra.mxu0 %v1221
          %v1338 = vpop.f32.mrf.mxu0
          %v1339 = vadd.f32 0.0, %v1338
          %v1340 = vpop.f32.mrf.mxu0
          %v1341 = vadd.f32 0.0, %v1340
          %1342 = vmatprep.mubr.f32.mxu0 0.0
          %1343 = vmatmul.mubr.f32.gmra.mxu0 %v1222
          %v1344 = vpop.f32.mrf.mxu0
          %v1345 = vadd.f32 0.0, %v1344
          %v1346 = vpop.f32.mrf.mxu0
          %v1347 = vadd.f32 0.0, %v1346
          %1348 = vmatprep.mubr.f32.mxu0 0.0
          %1349 = vmatmul.mubr.f32.gmra.mxu0 %v1223
          %v1350 = vpop.f32.mrf.mxu0
          %v1351 = vadd.f32 0.0, %v1350
          %v1352 = vpop.f32.mrf.mxu0
          %v1353 = vadd.f32 0.0, %v1352
          %1354 = vmatprep.mubr.f32.mxu0 0.0
          %1355 = vmatmul.mubr.f32.gmra.mxu0 %v1224
          %v1356 = vpop.f32.mrf.mxu0
          %v1357 = vadd.f32 0.0, %v1356
          %v1358 = vpop.f32.mrf.mxu0
          %v1359 = vadd.f32 0.0, %v1358
          %1360 = vmatprep.mubr.f32.mxu0 0.0
          %1361 = vmatmul.mubr.f32.gmra.mxu0 %v1225
          %v1362 = vpop.f32.mrf.mxu0
          %v1363 = vadd.f32 0.0, %v1362
          %v1364 = vpop.f32.mrf.mxu0
          %v1365 = vadd.f32 0.0, %v1364
          %1366 = vmatprep.mubr.f32.mxu0 0.0
          %1367 = vmatmul.mubr.f32.gmra.mxu0 %v1226
          %v1368 = vpop.f32.mrf.mxu0
          %v1369 = vadd.f32 0.0, %v1368
          %v1370 = vpop.f32.mrf.mxu0
          %v1371 = vadd.f32 0.0, %v1370
          %1372 = vmatprep.mubr.f32.mxu0 0.0
          %1373 = vmatmul.mubr.f32.gmra.mxu0 %v1227
          %v1374 = vpop.f32.mrf.mxu0
          %v1375 = vadd.f32 0.0, %v1374
          %v1376 = vpop.f32.mrf.mxu0
          %v1377 = vadd.f32 0.0, %v1376
          %1378 = vmatprep.mubr.f32.mxu0 0.0
          %1379 = vmatmul.mubr.f32.gmra.mxu0 %v1228
          %v1380 = vpop.f32.mrf.mxu0
          %v1381 = vadd.f32 0.0, %v1380
          %v1382 = vpop.f32.mrf.mxu0
          %v1383 = vadd.f32 0.0, %v1382
          %1384 = vmatprep.mubr.f32.mxu0 0.0
          %1385 = vmatmul.mubr.f32.gmra.mxu0 %v1229
          %v1386 = vpop.f32.mrf.mxu0
          %v1387 = vadd.f32 0.0, %v1386
          %v1388 = vpop.f32.mrf.mxu0
          %v1389 = vadd.f32 0.0, %v1388
          %1390 = vdwg.mxu0
          %1391 = vmatprep.subr.mxu0 %v916
          %1392 = vmatpush1.msra.mxu0 %v915
          %1393 = vmatprep.subr.mxu0 %v908
          %1394 = vmatpush1.msra.mxu0 %v907
          %1395 = vmatprep.subr.mxu0 %v900
          %1396 = vmatpush1.msra.mxu0 %v899
          %1397 = vmatprep.subr.mxu0 %v892
          %1398 = vmatpush1.msra.mxu0 %v891
          %1399 = vmatprep.subr.mxu0 %v884
          %1400 = vmatpush1.msra.mxu0 %v883
          %1401 = vmatprep.subr.mxu0 %v876
          %1402 = vmatpush1.msra.mxu0 %v875
          %1403 = vmatprep.subr.mxu0 %v868
          %1404 = vmatpush1.msra.mxu0 %v867
          %1405 = vmatprep.subr.mxu0 %v860
          %1406 = vmatpush1.msra.mxu0 %v859
          %1407 = vmatprep.subr.mxu0 %v852
          %1408 = vmatpush1.msra.mxu0 %v851
          %1409 = vmatprep.subr.mxu0 %v844
          %1410 = vmatpush1.msra.mxu0 %v843
          %1411 = vmatprep.subr.mxu0 %v836
          %1412 = vmatpush1.msra.mxu0 %v835
          %1413 = vmatprep.subr.mxu0 %v828
          %1414 = vmatpush1.msra.mxu0 %v827
          %1415 = vmatprep.subr.mxu0 %v820
          %1416 = vmatpush1.msra.mxu0 %v819
          %1417 = vmatprep.subr.mxu0 %v812
          %1418 = vmatpush1.msra.mxu0 %v811
          %1419 = vmatprep.subr.mxu0 %v804
          %1420 = vmatpush1.msra.mxu0 %v803
          %1421 = vmatprep.subr.mxu0 %v796
          %1422 = vmatpush1.msra.mxu0 %v795
          %1423 = vmatprep.subr.mxu0 0.0
          %1424 = vmatpush2.msra.mxu0 0.0
          %1425 = vmatprep.subr.mxu0 0.0
          %1426 = vmatpush2.msra.mxu0 0.0
          %1427 = vmatprep.subr.mxu0 0.0
          %1428 = vmatpush2.msra.mxu0 0.0
          %1429 = vmatprep.subr.mxu0 0.0
          %1430 = vmatpush2.msra.mxu0 0.0
          %1431 = vmatprep.subr.mxu0 0.0
          %1432 = vmatpush2.msra.mxu0 0.0
          %1433 = vmatprep.subr.mxu0 0.0
          %1434 = vmatpush2.msra.mxu0 0.0
          %1435 = vmatprep.subr.mxu0 0.0
          %1436 = vmatpush2.msra.mxu0 0.0
          %1437 = vmatprep.subr.mxu0 0.0
          %1438 = vmatpush2.msra.mxu0 0.0
          %1439 = vmatprep.subr.mxu0 0.0
          %1440 = vmatpush2.msra.mxu0 0.0
          %1441 = vmatprep.subr.mxu0 0.0
          %1442 = vmatpush2.msra.mxu0 0.0
          %1443 = vmatprep.subr.mxu0 0.0
          %1444 = vmatpush2.msra.mxu0 0.0
          %1445 = vmatprep.subr.mxu0 0.0
          %1446 = vmatpush2.msra.mxu0 0.0
          %1447 = vmatprep.subr.mxu0 0.0
          %1448 = vmatpush2.msra.mxu0 0.0
          %1449 = vmatprep.subr.mxu0 0.0
          %1450 = vmatpush2.msra.mxu0 0.0
          %1451 = vmatprep.subr.mxu0 0.0
          %1452 = vmatpush2.msra.mxu0 0.0
          %1453 = vmatprep.subr.mxu0 0.0
          %1454 = vmatpush2.msra.mxu0 0.0
          %1455 = vmatprep.mubr.f32.mxu0 0.0
          %1456 = vmatmul.mubr.f32.gmra.mxu0 %v1214
          %v1457 = vpop.f32.mrf.mxu0
          %v1458 = vadd.f32 0.0, %v1457
          %v1459 = vpop.f32.mrf.mxu0
          %v1460 = vadd.f32 0.0, %v1459
          %1461 = vmatprep.mubr.f32.mxu0 0.0
          %1462 = vmatmul.mubr.f32.gmra.mxu0 %v1215
          %v1463 = vpop.f32.mrf.mxu0
          %v1464 = vadd.f32 0.0, %v1463
          %v1465 = vpop.f32.mrf.mxu0
          %v1466 = vadd.f32 0.0, %v1465
          %1467 = vmatprep.mubr.f32.mxu0 0.0
          %1468 = vmatmul.mubr.f32.gmra.mxu0 %v1216
          %v1469 = vpop.f32.mrf.mxu0
          %v1470 = vadd.f32 0.0, %v1469
          %v1471 = vpop.f32.mrf.mxu0
          %v1472 = vadd.f32 0.0, %v1471
          %1473 = vmatprep.mubr.f32.mxu0 0.0
          %1474 = vmatmul.mubr.f32.gmra.mxu0 %v1217
          %v1475 = vpop.f32.mrf.mxu0
          %v1476 = vadd.f32 0.0, %v1475
          %v1477 = vpop.f32.mrf.mxu0
          %v1478 = vadd.f32 0.0, %v1477
          %1479 = vmatprep.mubr.f32.mxu0 0.0
          %1480 = vmatmul.mubr.f32.gmra.mxu0 %v1218
          %v1481 = vpop.f32.mrf.mxu0
          %v1482 = vadd.f32 0.0, %v1481
          %v1483 = vpop.f32.mrf.mxu0
          %v1484 = vadd.f32 0.0, %v1483
          %1485 = vmatprep.mubr.f32.mxu0 0.0
          %1486 = vmatmul.mubr.f32.gmra.mxu0 %v1219
          %v1487 = vpop.f32.mrf.mxu0
          %v1488 = vadd.f32 0.0, %v1487
          %v1489 = vpop.f32.mrf.mxu0
          %v1490 = vadd.f32 0.0, %v1489
          %1491 = vmatprep.mubr.f32.mxu0 0.0
          %1492 = vmatmul.mubr.f32.gmra.mxu0 %v1220
          %v1493 = vpop.f32.mrf.mxu0
          %v1494 = vadd.f32 0.0, %v1493
          %v1495 = vpop.f32.mrf.mxu0
          %v1496 = vadd.f32 0.0, %v1495
          %1497 = vmatprep.mubr.f32.mxu0 0.0
          %1498 = vmatmul.mubr.f32.gmra.mxu0 %v1221
          %v1499 = vpop.f32.mrf.mxu0
          %v1500 = vadd.f32 0.0, %v1499
          %v1501 = vpop.f32.mrf.mxu0
          %v1502 = vadd.f32 0.0, %v1501
          %1503 = vmatprep.mubr.f32.mxu0 0.0
          %1504 = vmatmul.mubr.f32.gmra.mxu0 %v1222
          %v1505 = vpop.f32.mrf.mxu0
          %v1506 = vadd.f32 0.0, %v1505
          %v1507 = vpop.f32.mrf.mxu0
          %v1508 = vadd.f32 0.0, %v1507
          %1509 = vmatprep.mubr.f32.mxu0 0.0
          %1510 = vmatmul.mubr.f32.gmra.mxu0 %v1223
          %v1511 = vpop.f32.mrf.mxu0
          %v1512 = vadd.f32 0.0, %v1511
          %v1513 = vpop.f32.mrf.mxu0
          %v1514 = vadd.f32 0.0, %v1513
          %1515 = vmatprep.mubr.f32.mxu0 0.0
          %1516 = vmatmul.mubr.f32.gmra.mxu0 %v1224
          %v1517 = vpop.f32.mrf.mxu0
          %v1518 = vadd.f32 0.0, %v1517
          %v1519 = vpop.f32.mrf.mxu0
          %v1520 = vadd.f32 0.0, %v1519
          %1521 = vmatprep.mubr.f32.mxu0 0.0
          %1522 = vmatmul.mubr.f32.gmra.mxu0 %v1225
          %v1523 = vpop.f32.mrf.mxu0
          %v1524 = vadd.f32 0.0, %v1523
          %v1525 = vpop.f32.mrf.mxu0
          %v1526 = vadd.f32 0.0, %v1525
          %1527 = vmatprep.mubr.f32.mxu0 0.0
          %1528 = vmatmul.mubr.f32.gmra.mxu0 %v1226
          %v1529 = vpop.f32.mrf.mxu0
          %v1530 = vadd.f32 0.0, %v1529
          %v1531 = vpop.f32.mrf.mxu0
          %v1532 = vadd.f32 0.0, %v1531
          %1533 = vmatprep.mubr.f32.mxu0 0.0
          %1534 = vmatmul.mubr.f32.gmra.mxu0 %v1227
          %v1535 = vpop.f32.mrf.mxu0
          %v1536 = vadd.f32 0.0, %v1535
          %v1537 = vpop.f32.mrf.mxu0
          %v1538 = vadd.f32 0.0, %v1537
          %1539 = vmatprep.mubr.f32.mxu0 0.0
          %1540 = vmatmul.mubr.f32.gmra.mxu0 %v1228
          %v1541 = vpop.f32.mrf.mxu0
          %v1542 = vadd.f32 0.0, %v1541
          %v1543 = vpop.f32.mrf.mxu0
          %v1544 = vadd.f32 0.0, %v1543
          %1545 = vmatprep.mubr.f32.mxu0 0.0
          %1546 = vmatmul.mubr.f32.gmra.mxu0 %v1229
          %v1547 = vpop.f32.mrf.mxu0
          %v1548 = vadd.f32 0.0, %v1547
          %v1549 = vpop.f32.mrf.mxu0
          %v1550 = vadd.f32 0.0, %v1549
          %1551 = vdwg.mxu0
          %1552 = vmatprep.subr.mxu0 %v918
          %1553 = vmatpush1.msra.mxu0 %v917
          %1554 = vmatprep.subr.mxu0 %v910
          %1555 = vmatpush1.msra.mxu0 %v909
          %1556 = vmatprep.subr.mxu0 %v902
          %1557 = vmatpush1.msra.mxu0 %v901
          %1558 = vmatprep.subr.mxu0 %v894
          %1559 = vmatpush1.msra.mxu0 %v893
          %1560 = vmatprep.subr.mxu0 %v886
          %1561 = vmatpush1.msra.mxu0 %v885
          %1562 = vmatprep.subr.mxu0 %v878
          %1563 = vmatpush1.msra.mxu0 %v877
          %1564 = vmatprep.subr.mxu0 %v870
          %1565 = vmatpush1.msra.mxu0 %v869
          %1566 = vmatprep.subr.mxu0 %v862
          %1567 = vmatpush1.msra.mxu0 %v861
          %1568 = vmatprep.subr.mxu0 %v854
          %1569 = vmatpush1.msra.mxu0 %v853
          %1570 = vmatprep.subr.mxu0 %v846
          %1571 = vmatpush1.msra.mxu0 %v845
          %1572 = vmatprep.subr.mxu0 %v838
          %1573 = vmatpush1.msra.mxu0 %v837
          %1574 = vmatprep.subr.mxu0 %v830
          %1575 = vmatpush1.msra.mxu0 %v829
          %1576 = vmatprep.subr.mxu0 %v822
          %1577 = vmatpush1.msra.mxu0 %v821
          %1578 = vmatprep.subr.mxu0 %v814
          %1579 = vmatpush1.msra.mxu0 %v813
          %1580 = vmatprep.subr.mxu0 %v806
          %1581 = vmatpush1.msra.mxu0 %v805
          %1582 = vmatprep.subr.mxu0 %v798
          %1583 = vmatpush1.msra.mxu0 %v797
          %1584 = vmatprep.subr.mxu0 0.0
          %1585 = vmatpush2.msra.mxu0 0.0
          %1586 = vmatprep.subr.mxu0 0.0
          %1587 = vmatpush2.msra.mxu0 0.0
          %1588 = vmatprep.subr.mxu0 0.0
          %1589 = vmatpush2.msra.mxu0 0.0
          %1590 = vmatprep.subr.mxu0 0.0
          %1591 = vmatpush2.msra.mxu0 0.0
          %1592 = vmatprep.subr.mxu0 0.0
          %1593 = vmatpush2.msra.mxu0 0.0
          %1594 = vmatprep.subr.mxu0 0.0
          %1595 = vmatpush2.msra.mxu0 0.0
          %1596 = vmatprep.subr.mxu0 0.0
          %1597 = vmatpush2.msra.mxu0 0.0
          %1598 = vmatprep.subr.mxu0 0.0
          %1599 = vmatpush2.msra.mxu0 0.0
          %1600 = vmatprep.subr.mxu0 0.0
          %1601 = vmatpush2.msra.mxu0 0.0
          %1602 = vmatprep.subr.mxu0 0.0
          %1603 = vmatpush2.msra.mxu0 0.0
          %1604 = vmatprep.subr.mxu0 0.0
          %1605 = vmatpush2.msra.mxu0 0.0
          %1606 = vmatprep.subr.mxu0 0.0
          %1607 = vmatpush2.msra.mxu0 0.0
          %1608 = vmatprep.subr.mxu0 0.0
          %1609 = vmatpush2.msra.mxu0 0.0
          %1610 = vmatprep.subr.mxu0 0.0
          %1611 = vmatpush2.msra.mxu0 0.0
          %1612 = vmatprep.subr.mxu0 0.0
          %1613 = vmatpush2.msra.mxu0 0.0
          %1614 = vmatprep.subr.mxu0 0.0
          %1615 = vmatpush2.msra.mxu0 0.0
          %1616 = vmatprep.mubr.f32.mxu0 0.0
          %1617 = vmatmul.mubr.f32.gmra.mxu0 %v1214
          %v1618 = vpop.f32.mrf.mxu0
          %v1619 = vadd.f32 0.0, %v1618
          %v1620 = vpop.f32.mrf.mxu0
          %v1621 = vadd.f32 0.0, %v1620
          %1622 = vmatprep.mubr.f32.mxu0 0.0
          %1623 = vmatmul.mubr.f32.gmra.mxu0 %v1215
          %v1624 = vpop.f32.mrf.mxu0
          %v1625 = vadd.f32 0.0, %v1624
          %v1626 = vpop.f32.mrf.mxu0
          %v1627 = vadd.f32 0.0, %v1626
          %1628 = vmatprep.mubr.f32.mxu0 0.0
          %1629 = vmatmul.mubr.f32.gmra.mxu0 %v1216
          %v1630 = vpop.f32.mrf.mxu0
          %v1631 = vadd.f32 0.0, %v1630
          %v1632 = vpop.f32.mrf.mxu0
          %v1633 = vadd.f32 0.0, %v1632
          %1634 = vmatprep.mubr.f32.mxu0 0.0
          %1635 = vmatmul.mubr.f32.gmra.mxu0 %v1217
          %v1636 = vpop.f32.mrf.mxu0
          %v1637 = vadd.f32 0.0, %v1636
          %v1638 = vpop.f32.mrf.mxu0
          %v1639 = vadd.f32 0.0, %v1638
          %1640 = vmatprep.mubr.f32.mxu0 0.0
          %1641 = vmatmul.mubr.f32.gmra.mxu0 %v1218
          %v1642 = vpop.f32.mrf.mxu0
          %v1643 = vadd.f32 0.0, %v1642
          %v1644 = vpop.f32.mrf.mxu0
          %v1645 = vadd.f32 0.0, %v1644
          %1646 = vmatprep.mubr.f32.mxu0 0.0
          %1647 = vmatmul.mubr.f32.gmra.mxu0 %v1219
          %v1648 = vpop.f32.mrf.mxu0
          %v1649 = vadd.f32 0.0, %v1648
          %v1650 = vpop.f32.mrf.mxu0
          %v1651 = vadd.f32 0.0, %v1650
          %1652 = vmatprep.mubr.f32.mxu0 0.0
          %1653 = vmatmul.mubr.f32.gmra.mxu0 %v1220
          %v1654 = vpop.f32.mrf.mxu0
          %v1655 = vadd.f32 0.0, %v1654
          %v1656 = vpop.f32.mrf.mxu0
          %v1657 = vadd.f32 0.0, %v1656
          %1658 = vmatprep.mubr.f32.mxu0 0.0
          %1659 = vmatmul.mubr.f32.gmra.mxu0 %v1221
          %v1660 = vpop.f32.mrf.mxu0
          %v1661 = vadd.f32 0.0, %v1660
          %v1662 = vpop.f32.mrf.mxu0
          %v1663 = vadd.f32 0.0, %v1662
          %1664 = vmatprep.mubr.f32.mxu0 0.0
          %1665 = vmatmul.mubr.f32.gmra.mxu0 %v1222
          %v1666 = vpop.f32.mrf.mxu0
          %v1667 = vadd.f32 0.0, %v1666
          %v1668 = vpop.f32.mrf.mxu0
          %v1669 = vadd.f32 0.0, %v1668
          %1670 = vmatprep.mubr.f32.mxu0 0.0
          %1671 = vmatmul.mubr.f32.gmra.mxu0 %v1223
          %v1672 = vpop.f32.mrf.mxu0
          %v1673 = vadd.f32 0.0, %v1672
          %v1674 = vpop.f32.mrf.mxu0
          %v1675 = vadd.f32 0.0, %v1674
          %1676 = vmatprep.mubr.f32.mxu0 0.0
          %1677 = vmatmul.mubr.f32.gmra.mxu0 %v1224
          %v1678 = vpop.f32.mrf.mxu0
          %v1679 = vadd.f32 0.0, %v1678
          %v1680 = vpop.f32.mrf.mxu0
          %v1681 = vadd.f32 0.0, %v1680
          %1682 = vmatprep.mubr.f32.mxu0 0.0
          %1683 = vmatmul.mubr.f32.gmra.mxu0 %v1225
          %v1684 = vpop.f32.mrf.mxu0
          %v1685 = vadd.f32 0.0, %v1684
          %v1686 = vpop.f32.mrf.mxu0
          %v1687 = vadd.f32 0.0, %v1686
          %1688 = vmatprep.mubr.f32.mxu0 0.0
          %1689 = vmatmul.mubr.f32.gmra.mxu0 %v1226
          %v1690 = vpop.f32.mrf.mxu0
          %v1691 = vadd.f32 0.0, %v1690
          %v1692 = vpop.f32.mrf.mxu0
          %v1693 = vadd.f32 0.0, %v1692
          %1694 = vmatprep.mubr.f32.mxu0 0.0
          %1695 = vmatmul.mubr.f32.gmra.mxu0 %v1227
          %v1696 = vpop.f32.mrf.mxu0
          %v1697 = vadd.f32 0.0, %v1696
          %v1698 = vpop.f32.mrf.mxu0
          %v1699 = vadd.f32 0.0, %v1698
          %1700 = vmatprep.mubr.f32.mxu0 0.0
          %1701 = vmatmul.mubr.f32.gmra.mxu0 %v1228
          %v1702 = vpop.f32.mrf.mxu0
          %v1703 = vadd.f32 0.0, %v1702
          %v1704 = vpop.f32.mrf.mxu0
          %v1705 = vadd.f32 0.0, %v1704
          %1706 = vmatprep.mubr.f32.mxu0 0.0
          %1707 = vmatmul.mubr.f32.gmra.mxu0 %v1229
          %v1708 = vpop.f32.mrf.mxu0
          %v1709 = vadd.f32 0.0, %v1708
          %v1710 = vpop.f32.mrf.mxu0
          %v1711 = vadd.f32 0.0, %v1710
          %1712 = vdwg.mxu0
          %1713 = vmatprep.subr.mxu0 %v920
          %1714 = vmatpush1.msra.mxu0 %v919
          %1715 = vmatprep.subr.mxu0 %v912
          %1716 = vmatpush1.msra.mxu0 %v911
          %1717 = vmatprep.subr.mxu0 %v904
          %1718 = vmatpush1.msra.mxu0 %v903
          %1719 = vmatprep.subr.mxu0 %v896
          %1720 = vmatpush1.msra.mxu0 %v895
          %1721 = vmatprep.subr.mxu0 %v888
          %1722 = vmatpush1.msra.mxu0 %v887
          %1723 = vmatprep.subr.mxu0 %v880
          %1724 = vmatpush1.msra.mxu0 %v879
          %1725 = vmatprep.subr.mxu0 %v872
          %1726 = vmatpush1.msra.mxu0 %v871
          %1727 = vmatprep.subr.mxu0 %v864
          %1728 = vmatpush1.msra.mxu0 %v863
          %1729 = vmatprep.subr.mxu0 %v856
          %1730 = vmatpush1.msra.mxu0 %v855
          %1731 = vmatprep.subr.mxu0 %v848
          %1732 = vmatpush1.msra.mxu0 %v847
          %1733 = vmatprep.subr.mxu0 %v840
          %1734 = vmatpush1.msra.mxu0 %v839
          %1735 = vmatprep.subr.mxu0 %v832
          %1736 = vmatpush1.msra.mxu0 %v831
          %1737 = vmatprep.subr.mxu0 %v824
          %1738 = vmatpush1.msra.mxu0 %v823
          %1739 = vmatprep.subr.mxu0 %v816
          %1740 = vmatpush1.msra.mxu0 %v815
          %1741 = vmatprep.subr.mxu0 %v808
          %1742 = vmatpush1.msra.mxu0 %v807
          %1743 = vmatprep.subr.mxu0 %v800
          %1744 = vmatpush1.msra.mxu0 %v799
          %1745 = vmatprep.subr.mxu0 0.0
          %1746 = vmatpush2.msra.mxu0 0.0
          %1747 = vmatprep.subr.mxu0 0.0
          %1748 = vmatpush2.msra.mxu0 0.0
          %1749 = vmatprep.subr.mxu0 0.0
          %1750 = vmatpush2.msra.mxu0 0.0
          %1751 = vmatprep.subr.mxu0 0.0
          %1752 = vmatpush2.msra.mxu0 0.0
          %1753 = vmatprep.subr.mxu0 0.0
          %1754 = vmatpush2.msra.mxu0 0.0
          %1755 = vmatprep.subr.mxu0 0.0
          %1756 = vmatpush2.msra.mxu0 0.0
          %1757 = vmatprep.subr.mxu0 0.0
          %1758 = vmatpush2.msra.mxu0 0.0
          %1759 = vmatprep.subr.mxu0 0.0
          %1760 = vmatpush2.msra.mxu0 0.0
          %1761 = vmatprep.subr.mxu0 0.0
          %1762 = vmatpush2.msra.mxu0 0.0
          %1763 = vmatprep.subr.mxu0 0.0
          %1764 = vmatpush2.msra.mxu0 0.0
          %1765 = vmatprep.subr.mxu0 0.0
          %1766 = vmatpush2.msra.mxu0 0.0
          %1767 = vmatprep.subr.mxu0 0.0
          %1768 = vmatpush2.msra.mxu0 0.0
          %1769 = vmatprep.subr.mxu0 0.0
          %1770 = vmatpush2.msra.mxu0 0.0
          %1771 = vmatprep.subr.mxu0 0.0
          %1772 = vmatpush2.msra.mxu0 0.0
          %1773 = vmatprep.subr.mxu0 0.0
          %1774 = vmatpush2.msra.mxu0 0.0
          %1775 = vmatprep.subr.mxu0 0.0
          %1776 = vmatpush2.msra.mxu0 0.0
          %1777 = vmatprep.mubr.f32.mxu0 0.0
          %1778 = vmatmul.mubr.f32.gmra.mxu0 %v1214
          %v1779 = vpop.f32.mrf.mxu0
          %v1780 = vadd.f32 0.0, %v1779
          %v1781 = vpop.f32.mrf.mxu0
          %v1782 = vadd.f32 0.0, %v1781
          %1783 = vmatprep.mubr.f32.mxu0 0.0
          %1784 = vmatmul.mubr.f32.gmra.mxu0 %v1215
          %v1785 = vpop.f32.mrf.mxu0
          %v1786 = vadd.f32 0.0, %v1785
          %v1787 = vpop.f32.mrf.mxu0
          %v1788 = vadd.f32 0.0, %v1787
          %1789 = vmatprep.mubr.f32.mxu0 0.0
          %1790 = vmatmul.mubr.f32.gmra.mxu0 %v1216
          %v1791 = vpop.f32.mrf.mxu0
          %v1792 = vadd.f32 0.0, %v1791
          %v1793 = vpop.f32.mrf.mxu0
          %v1794 = vadd.f32 0.0, %v1793
          %1795 = vmatprep.mubr.f32.mxu0 0.0
          %1796 = vmatmul.mubr.f32.gmra.mxu0 %v1217
          %v1797 = vpop.f32.mrf.mxu0
          %v1798 = vadd.f32 0.0, %v1797
          %v1799 = vpop.f32.mrf.mxu0
          %v1800 = vadd.f32 0.0, %v1799
          %1801 = vmatprep.mubr.f32.mxu0 0.0
          %1802 = vmatmul.mubr.f32.gmra.mxu0 %v1218
          %v1803 = vpop.f32.mrf.mxu0
          %v1804 = vadd.f32 0.0, %v1803
          %v1805 = vpop.f32.mrf.mxu0
          %v1806 = vadd.f32 0.0, %v1805
          %1807 = vmatprep.mubr.f32.mxu0 0.0
          %1808 = vmatmul.mubr.f32.gmra.mxu0 %v1219
          %v1809 = vpop.f32.mrf.mxu0
          %v1810 = vadd.f32 0.0, %v1809
          %v1811 = vpop.f32.mrf.mxu0
          %v1812 = vadd.f32 0.0, %v1811
          %1813 = vmatprep.mubr.f32.mxu0 0.0
          %1814 = vmatmul.mubr.f32.gmra.mxu0 %v1220
          %v1815 = vpop.f32.mrf.mxu0
          %v1816 = vadd.f32 0.0, %v1815
          %v1817 = vpop.f32.mrf.mxu0
          %v1818 = vadd.f32 0.0, %v1817
          %1819 = vmatprep.mubr.f32.mxu0 0.0
          %1820 = vmatmul.mubr.f32.gmra.mxu0 %v1221
          %v1821 = vpop.f32.mrf.mxu0
          %v1822 = vadd.f32 0.0, %v1821
          %v1823 = vpop.f32.mrf.mxu0
          %v1824 = vadd.f32 0.0, %v1823
          %1825 = vmatprep.mubr.f32.mxu0 0.0
          %1826 = vmatmul.mubr.f32.gmra.mxu0 %v1222
          %v1827 = vpop.f32.mrf.mxu0
          %v1828 = vadd.f32 0.0, %v1827
          %v1829 = vpop.f32.mrf.mxu0
          %v1830 = vadd.f32 0.0, %v1829
          %1831 = vmatprep.mubr.f32.mxu0 0.0
          %1832 = vmatmul.mubr.f32.gmra.mxu0 %v1223
          %v1833 = vpop.f32.mrf.mxu0
          %v1834 = vadd.f32 0.0, %v1833
          %v1835 = vpop.f32.mrf.mxu0
          %v1836 = vadd.f32 0.0, %v1835
          %1837 = vmatprep.mubr.f32.mxu0 0.0
          %1838 = vmatmul.mubr.f32.gmra.mxu0 %v1224
          %v1839 = vpop.f32.mrf.mxu0
          %v1840 = vadd.f32 0.0, %v1839
          %v1841 = vpop.f32.mrf.mxu0
          %v1842 = vadd.f32 0.0, %v1841
          %1843 = vmatprep.mubr.f32.mxu0 0.0
          %1844 = vmatmul.mubr.f32.gmra.mxu0 %v1225
          %v1845 = vpop.f32.mrf.mxu0
          %v1846 = vadd.f32 0.0, %v1845
          %v1847 = vpop.f32.mrf.mxu0
          %v1848 = vadd.f32 0.0, %v1847
          %1849 = vmatprep.mubr.f32.mxu0 0.0
          %1850 = vmatmul.mubr.f32.gmra.mxu0 %v1226
          %v1851 = vpop.f32.mrf.mxu0
          %v1852 = vadd.f32 0.0, %v1851
          %v1853 = vpop.f32.mrf.mxu0
          %v1854 = vadd.f32 0.0, %v1853
          %1855 = vmatprep.mubr.f32.mxu0 0.0
          %1856 = vmatmul.mubr.f32.gmra.mxu0 %v1227
          %v1857 = vpop.f32.mrf.mxu0
          %v1858 = vadd.f32 0.0, %v1857
          %v1859 = vpop.f32.mrf.mxu0
          %v1860 = vadd.f32 0.0, %v1859
          %1861 = vmatprep.mubr.f32.mxu0 0.0
          %1862 = vmatmul.mubr.f32.gmra.mxu0 %v1228
          %v1863 = vpop.f32.mrf.mxu0
          %v1864 = vadd.f32 0.0, %v1863
          %v1865 = vpop.f32.mrf.mxu0
          %v1866 = vadd.f32 0.0, %v1865
          %1867 = vmatprep.mubr.f32.mxu0 0.0
          %1868 = vmatmul.mubr.f32.gmra.mxu0 %v1229
          %v1869 = vpop.f32.mrf.mxu0
          %v1870 = vadd.f32 0.0, %v1869
          %v1871 = vpop.f32.mrf.mxu0
          %v1872 = vadd.f32 0.0, %v1871
          %1873 = vdwg.mxu0
          %v1874 = vmul.f32 %v793, %v1297
          %v1875 = vmul.f32 %v794, %v1299
          %v1876 = vmul.f32 %v795, %v1458
          %v1877 = vmul.f32 %v796, %v1460
          %v1878 = vmul.f32 %v797, %v1619
          %v1879 = vmul.f32 %v798, %v1621
          %v1880 = vmul.f32 %v799, %v1780
          %v1881 = vmul.f32 %v800, %v1782
          %v1882 = vmul.f32 %v801, %v1303
          %v1883 = vmul.f32 %v802, %v1305
          %v1884 = vmul.f32 %v803, %v1464
          %v1885 = vmul.f32 %v804, %v1466
          %v1886 = vmul.f32 %v805, %v1625
          %v1887 = vmul.f32 %v806, %v1627
          %v1888 = vmul.f32 %v807, %v1786
          %v1889 = vmul.f32 %v808, %v1788
          %v1890 = vmul.f32 %v809, %v1309
          %v1891 = vmul.f32 %v810, %v1311
          %v1892 = vmul.f32 %v811, %v1470
          %v1893 = vmul.f32 %v812, %v1472
          %v1894 = vmul.f32 %v813, %v1631
          %v1895 = vmul.f32 %v814, %v1633
          %v1896 = vmul.f32 %v815, %v1792
          %v1897 = vmul.f32 %v816, %v1794
          %v1898 = vmul.f32 %v817, %v1315
          %v1899 = vmul.f32 %v818, %v1317
          %v1900 = vmul.f32 %v819, %v1476
          %v1901 = vmul.f32 %v820, %v1478
          %v1902 = vmul.f32 %v821, %v1637
          %v1903 = vmul.f32 %v822, %v1639
          %v1904 = vmul.f32 %v823, %v1798
          %v1905 = vmul.f32 %v824, %v1800
          %v1906 = vmul.f32 %v825, %v1321
          %v1907 = vmul.f32 %v826, %v1323
          %v1908 = vmul.f32 %v827, %v1482
          %v1909 = vmul.f32 %v828, %v1484
          %v1910 = vmul.f32 %v829, %v1643
          %v1911 = vmul.f32 %v830, %v1645
          %v1912 = vmul.f32 %v831, %v1804
          %v1913 = vmul.f32 %v832, %v1806
          %v1914 = vmul.f32 %v833, %v1327
          %v1915 = vmul.f32 %v834, %v1329
          %v1916 = vmul.f32 %v835, %v1488
          %v1917 = vmul.f32 %v836, %v1490
          %v1918 = vmul.f32 %v837, %v1649
          %v1919 = vmul.f32 %v838, %v1651
          %v1920 = vmul.f32 %v839, %v1810
          %v1921 = vmul.f32 %v840, %v1812
          %v1922 = vmul.f32 %v841, %v1333
          %v1923 = vmul.f32 %v842, %v1335
          %v1924 = vmul.f32 %v843, %v1494
          %v1925 = vmul.f32 %v844, %v1496
          %v1926 = vmul.f32 %v845, %v1655
          %v1927 = vmul.f32 %v846, %v1657
          %v1928 = vmul.f32 %v847, %v1816
          %v1929 = vmul.f32 %v848, %v1818
          %v1930 = vmul.f32 %v849, %v1339
          %v1931 = vmul.f32 %v850, %v1341
          %v1932 = vmul.f32 %v851, %v1500
          %v1933 = vmul.f32 %v852, %v1502
          %v1934 = vmul.f32 %v853, %v1661
          %v1935 = vmul.f32 %v854, %v1663
          %v1936 = vmul.f32 %v855, %v1822
          %v1937 = vmul.f32 %v856, %v1824
          %v1938 = vmul.f32 %v857, %v1345
          %v1939 = vmul.f32 %v858, %v1347
          %v1940 = vmul.f32 %v859, %v1506
          %v1941 = vmul.f32 %v860, %v1508
          %v1942 = vmul.f32 %v861, %v1667
          %v1943 = vmul.f32 %v862, %v1669
          %v1944 = vmul.f32 %v863, %v1828
          %v1945 = vmul.f32 %v864, %v1830
          %v1946 = vmul.f32 %v865, %v1351
          %v1947 = vmul.f32 %v866, %v1353
          %v1948 = vmul.f32 %v867, %v1512
          %v1949 = vmul.f32 %v868, %v1514
          %v1950 = vmul.f32 %v869, %v1673
          %v1951 = vmul.f32 %v870, %v1675
          %v1952 = vmul.f32 %v871, %v1834
          %v1953 = vmul.f32 %v872, %v1836
          %v1954 = vmul.f32 %v873, %v1357
          %v1955 = vmul.f32 %v874, %v1359
          %v1956 = vmul.f32 %v875, %v1518
          %v1957 = vmul.f32 %v876, %v1520
          %v1958 = vmul.f32 %v877, %v1679
          %v1959 = vmul.f32 %v878, %v1681
          %v1960 = vmul.f32 %v879, %v1840
          %v1961 = vmul.f32 %v880, %v1842
          %v1962 = vmul.f32 %v881, %v1363
          %v1963 = vmul.f32 %v882, %v1365
          %v1964 = vmul.f32 %v883, %v1524
          %v1965 = vmul.f32 %v884, %v1526
          %v1966 = vmul.f32 %v885, %v1685
          %v1967 = vmul.f32 %v886, %v1687
          %v1968 = vmul.f32 %v887, %v1846
          %v1969 = vmul.f32 %v888, %v1848
          %v1970 = vmul.f32 %v889, %v1369
          %v1971 = vmul.f32 %v890, %v1371
          %v1972 = vmul.f32 %v891, %v1530
          %v1973 = vmul.f32 %v892, %v1532
          %v1974 = vmul.f32 %v893, %v1691
          %v1975 = vmul.f32 %v894, %v1693
          %v1976 = vmul.f32 %v895, %v1852
          %v1977 = vmul.f32 %v896, %v1854
          %v1978 = vmul.f32 %v897, %v1375
          %v1979 = vmul.f32 %v898, %v1377
          %v1980 = vmul.f32 %v899, %v1536
          %v1981 = vmul.f32 %v900, %v1538
          %v1982 = vmul.f32 %v901, %v1697
          %v1983 = vmul.f32 %v902, %v1699
          %v1984 = vmul.f32 %v903, %v1858
          %v1985 = vmul.f32 %v904, %v1860
          %v1986 = vmul.f32 %v905, %v1381
          %v1987 = vmul.f32 %v906, %v1383
          %v1988 = vmul.f32 %v907, %v1542
          %v1989 = vmul.f32 %v908, %v1544
          %v1990 = vmul.f32 %v909, %v1703
          %v1991 = vmul.f32 %v910, %v1705
          %v1992 = vmul.f32 %v911, %v1864
          %v1993 = vmul.f32 %v912, %v1866
          %v1994 = vmul.f32 %v913, %v1387
          %v1995 = vmul.f32 %v914, %v1389
          %v1996 = vmul.f32 %v915, %v1548
          %v1997 = vmul.f32 %v916, %v1550
          %v1998 = vmul.f32 %v917, %v1709
          %v1999 = vmul.f32 %v918, %v1711
          %v2000 = vmul.f32 %v919, %v1870
          %v2001 = vmul.f32 %v920, %v1872
          %v2002 = vadd.f32 %v1874, %v1882
          %v2003 = vadd.f32 %v2002, %v1890
          %v2004 = vadd.f32 %v2003, %v1898
          %v2005 = vadd.f32 %v2004, %v1906
          %v2006 = vadd.f32 %v2005, %v1914
          %v2007 = vadd.f32 %v2006, %v1922
          %v2008 = vadd.f32 %v2007, %v1930
          %v2009 = vadd.f32 %v2008, %v1938
          %v2010 = vadd.f32 %v2009, %v1946
          %v2011 = vadd.f32 %v2010, %v1954
          %v2012 = vadd.f32 %v2011, %v1962
          %v2013 = vadd.f32 %v2012, %v1970
          %v2014 = vadd.f32 %v2013, %v1978
          %v2015 = vadd.f32 %v2014, %v1986
          %v2016 = vadd.f32 %v2015, %v1994
          %v2017 = vrot.slane %v2016, 4
          %v2018 = vadd.f32 %v2016, %v2017
          %v2019 = vrot.slane %v2018, 2
          %v2020 = vadd.f32 %v2018, %v2019
          %v2021 = vrot.slane %v2020, 1
          %v2022 = vadd.f32 %v2020, %v2021
          %v2023 = vadd.f32 %v1875, %v1883
          %v2024 = vadd.f32 %v2023, %v1891
          %v2025 = vadd.f32 %v2024, %v1899
          %v2026 = vadd.f32 %v2025, %v1907
          %v2027 = vadd.f32 %v2026, %v1915
          %v2028 = vadd.f32 %v2027, %v1923
          %v2029 = vadd.f32 %v2028, %v1931
          %v2030 = vadd.f32 %v2029, %v1939
          %v2031 = vadd.f32 %v2030, %v1947
          %v2032 = vadd.f32 %v2031, %v1955
          %v2033 = vadd.f32 %v2032, %v1963
          %v2034 = vadd.f32 %v2033, %v1971
          %v2035 = vadd.f32 %v2034, %v1979
          %v2036 = vadd.f32 %v2035, %v1987
          %v2037 = vadd.f32 %v2036, %v1995
          %v2038 = vrot.slane %v2037, 4
          %v2039 = vadd.f32 %v2037, %v2038
          %v2040 = vrot.slane %v2039, 2
          %v2041 = vadd.f32 %v2039, %v2040
          %v2042 = vrot.slane %v2041, 1
          %v2043 = vadd.f32 %v2041, %v2042
          %v2044 = vadd.f32 %v1876, %v1884
          %v2045 = vadd.f32 %v2044, %v1892
          %v2046 = vadd.f32 %v2045, %v1900
          %v2047 = vadd.f32 %v2046, %v1908
          %v2048 = vadd.f32 %v2047, %v1916
          %v2049 = vadd.f32 %v2048, %v1924
          %v2050 = vadd.f32 %v2049, %v1932
          %v2051 = vadd.f32 %v2050, %v1940
          %v2052 = vadd.f32 %v2051, %v1948
          %v2053 = vadd.f32 %v2052, %v1956
          %v2054 = vadd.f32 %v2053, %v1964
          %v2055 = vadd.f32 %v2054, %v1972
          %v2056 = vadd.f32 %v2055, %v1980
          %v2057 = vadd.f32 %v2056, %v1988
          %v2058 = vadd.f32 %v2057, %v1996
          %v2059 = vrot.slane %v2058, 4
          %v2060 = vadd.f32 %v2058, %v2059
          %v2061 = vrot.slane %v2060, 2
          %v2062 = vadd.f32 %v2060, %v2061
          %v2063 = vrot.slane %v2062, 1
          %v2064 = vadd.f32 %v2062, %v2063
          %v2065 = vadd.f32 %v1877, %v1885
          %v2066 = vadd.f32 %v2065, %v1893
          %v2067 = vadd.f32 %v2066, %v1901
          %v2068 = vadd.f32 %v2067, %v1909
          %v2069 = vadd.f32 %v2068, %v1917
          %v2070 = vadd.f32 %v2069, %v1925
          %v2071 = vadd.f32 %v2070, %v1933
          %v2072 = vadd.f32 %v2071, %v1941
          %v2073 = vadd.f32 %v2072, %v1949
          %v2074 = vadd.f32 %v2073, %v1957
          %v2075 = vadd.f32 %v2074, %v1965
          %v2076 = vadd.f32 %v2075, %v1973
          %v2077 = vadd.f32 %v2076, %v1981
          %v2078 = vadd.f32 %v2077, %v1989
          %v2079 = vadd.f32 %v2078, %v1997
          %v2080 = vrot.slane %v2079, 4
          %v2081 = vadd.f32 %v2079, %v2080
          %v2082 = vrot.slane %v2081, 2
          %v2083 = vadd.f32 %v2081, %v2082
          %v2084 = vrot.slane %v2083, 1
          %v2085 = vadd.f32 %v2083, %v2084
          %v2086 = vadd.f32 %v1878, %v1886
          %v2087 = vadd.f32 %v2086, %v1894
          %v2088 = vadd.f32 %v2087, %v1902
          %v2089 = vadd.f32 %v2088, %v1910
          %v2090 = vadd.f32 %v2089, %v1918
          %v2091 = vadd.f32 %v2090, %v1926
          %v2092 = vadd.f32 %v2091, %v1934
          %v2093 = vadd.f32 %v2092, %v1942
          %v2094 = vadd.f32 %v2093, %v1950
          %v2095 = vadd.f32 %v2094, %v1958
          %v2096 = vadd.f32 %v2095, %v1966
          %v2097 = vadd.f32 %v2096, %v1974
          %v2098 = vadd.f32 %v2097, %v1982
          %v2099 = vadd.f32 %v2098, %v1990
          %v2100 = vadd.f32 %v2099, %v1998
          %v2101 = vrot.slane %v2100, 4
          %v2102 = vadd.f32 %v2100, %v2101
          %v2103 = vrot.slane %v2102, 2
          %v2104 = vadd.f32 %v2102, %v2103
          %v2105 = vrot.slane %v2104, 1
          %v2106 = vadd.f32 %v2104, %v2105
          %v2107 = vadd.f32 %v1879, %v1887
          %v2108 = vadd.f32 %v2107, %v1895
          %v2109 = vadd.f32 %v2108, %v1903
          %v2110 = vadd.f32 %v2109, %v1911
          %v2111 = vadd.f32 %v2110, %v1919
          %v2112 = vadd.f32 %v2111, %v1927
          %v2113 = vadd.f32 %v2112, %v1935
          %v2114 = vadd.f32 %v2113, %v1943
          %v2115 = vadd.f32 %v2114, %v1951
          %v2116 = vadd.f32 %v2115, %v1959
          %v2117 = vadd.f32 %v2116, %v1967
          %v2118 = vadd.f32 %v2117, %v1975
          %v2119 = vadd.f32 %v2118, %v1983
          %v2120 = vadd.f32 %v2119, %v1991
          %v2121 = vadd.f32 %v2120, %v1999
          %v2122 = vrot.slane %v2121, 4
          %v2123 = vadd.f32 %v2121, %v2122
          %v2124 = vrot.slane %v2123, 2
          %v2125 = vadd.f32 %v2123, %v2124
          %v2126 = vrot.slane %v2125, 1
          %v2127 = vadd.f32 %v2125, %v2126
          %v2128 = vadd.f32 %v1880, %v1888
          %v2129 = vadd.f32 %v2128, %v1896
          %v2130 = vadd.f32 %v2129, %v1904
          %v2131 = vadd.f32 %v2130, %v1912
          %v2132 = vadd.f32 %v2131, %v1920
          %v2133 = vadd.f32 %v2132, %v1928
          %v2134 = vadd.f32 %v2133, %v1936
          %v2135 = vadd.f32 %v2134, %v1944
          %v2136 = vadd.f32 %v2135, %v1952
          %v2137 = vadd.f32 %v2136, %v1960
          %v2138 = vadd.f32 %v2137, %v1968
          %v2139 = vadd.f32 %v2138, %v1976
          %v2140 = vadd.f32 %v2139, %v1984
          %v2141 = vadd.f32 %v2140, %v1992
          %v2142 = vadd.f32 %v2141, %v2000
          %v2143 = vrot.slane %v2142, 4
          %v2144 = vadd.f32 %v2142, %v2143
          %v2145 = vrot.slane %v2144, 2
          %v2146 = vadd.f32 %v2144, %v2145
          %v2147 = vrot.slane %v2146, 1
          %v2148 = vadd.f32 %v2146, %v2147
          %v2149 = vadd.f32 %v1881, %v1889
          %v2150 = vadd.f32 %v2149, %v1897
          %v2151 = vadd.f32 %v2150, %v1905
          %v2152 = vadd.f32 %v2151, %v1913
          %v2153 = vadd.f32 %v2152, %v1921
          %v2154 = vadd.f32 %v2153, %v1929
          %v2155 = vadd.f32 %v2154, %v1937
          %v2156 = vadd.f32 %v2155, %v1945
          %v2157 = vadd.f32 %v2156, %v1953
          %v2158 = vadd.f32 %v2157, %v1961
          %v2159 = vadd.f32 %v2158, %v1969
          %v2160 = vadd.f32 %v2159, %v1977
          %v2161 = vadd.f32 %v2160, %v1985
          %v2162 = vadd.f32 %v2161, %v1993
          %v2163 = vadd.f32 %v2162, %v2001
          %v2164 = vrot.slane %v2163, 4
          %v2165 = vadd.f32 %v2163, %v2164
          %v2166 = vrot.slane %v2165, 2
          %v2167 = vadd.f32 %v2165, %v2166
          %v2168 = vrot.slane %v2167, 1
          %v2169 = vadd.f32 %v2167, %v2168
          %v2170 = vmul.f32 %v2022, 0.03125
          %v2171 = vmul.f32 %v2043, 0.03125
          %v2172 = vmul.f32 %v2064, 0.03125
          %v2173 = vmul.f32 %v2085, 0.03125
          %v2174 = vmul.f32 %v2106, 0.03125
          %v2175 = vmul.f32 %v2127, 0.03125
          %v2176 = vmul.f32 %v2148, 0.03125
          %v2177 = vmul.f32 %v2169, 0.03125
          %v2178 = vmul.f32 %v1206, %v1206
          %v2179 = vmul.f32 %v1207, %v1207
          %v2180 = vmul.f32 %v1208, %v1208
          %v2181 = vmul.f32 %v1209, %v1209
          %v2182 = vmul.f32 %v1210, %v1210
          %v2183 = vmul.f32 %v1211, %v1211
          %v2184 = vmul.f32 %v1212, %v1212
          %v2185 = vmul.f32 %v1213, %v1213
          %v2186 = vsub.f32 %v2170, %v2178
          %v2187 = vsub.f32 %v2171, %v2179
          %v2188 = vsub.f32 %v2172, %v2180
          %v2189 = vsub.f32 %v2173, %v2181
          %v2190 = vsub.f32 %v2174, %v2182
          %v2191 = vsub.f32 %v2175, %v2183
          %v2192 = vsub.f32 %v2176, %v2184
          %v2193 = vsub.f32 %v2177, %v2185
          %v2194 = vmax.f32 %v2186, 0.0
          %v2195 = vmax.f32 %v2187, 0.0
          %v2196 = vmax.f32 %v2188, 0.0
          %v2197 = vmax.f32 %v2189, 0.0
          %v2198 = vmax.f32 %v2190, 0.0
          %v2199 = vmax.f32 %v2191, 0.0
          %v2200 = vmax.f32 %v2192, 0.0
          %v2201 = vmax.f32 %v2193, 0.0
          %v2202 = vld [vmem:[#allocation6] sm:$0xff]
          %v2203 = vadd.f32 %v2194, 1e-05
          %v2204 = vadd.f32 %v2195, 1e-05
          %v2205 = vadd.f32 %v2196, 1e-05
          %v2206 = vadd.f32 %v2197, 1e-05
          %v2207 = vadd.f32 %v2198, 1e-05
          %v2208 = vadd.f32 %v2199, 1e-05
          %v2209 = vadd.f32 %v2200, 1e-05
          %v2210 = vadd.f32 %v2201, 1e-05
          %v2211 = vrsqrt.pop %v2203
          %v2212 = vrsqrt.pop %v2204
          %v2213 = vrsqrt.pop %v2205
          %v2214 = vrsqrt.pop %v2206
          %v2215 = vrsqrt.pop %v2207
          %v2216 = vrsqrt.pop %v2208
          %v2217 = vrsqrt.pop %v2209
          %v2218 = vrsqrt.pop %v2210
          %v2227 = vcombine.low %v2211, %v2212
          %v2228 = vcombine.low %v2213, %v2214
          %v2229 = vcombine.low %v2215, %v2216
          %v2230 = vcombine.low %v2217, %v2218
          %v2232 = vunpack.c.l.s4 1966171168
          %v2233 = vunpack.c.0.s8 %v2232
          %v2234 = vlaneseq
          %v2235 = vshrl.u32 %v2234, 7
          %v2236 = vsub.s32 %v2233, %v2235
          %v2237 = vrot.slane %v2227, %v2236
          %v2239 = vunpack.c.l.s4 1966171168
          %v2240 = vunpack.c.0.s8 %v2239
          %v2241 = vlaneseq
          %v2242 = vshrl.u32 %v2241, 7
          %v2243 = vsub.s32 %v2240, %v2242
          %v2244 = vrot.slane %v2228, %v2243
          %v2246 = vunpack.c.l.s4 1966171168
          %v2247 = vunpack.c.0.s8 %v2246
          %v2248 = vlaneseq
          %v2249 = vshrl.u32 %v2248, 7
          %v2250 = vsub.s32 %v2247, %v2249
          %v2251 = vrot.slane %v2229, %v2250
          %v2253 = vunpack.c.l.s4 1966171168
          %v2254 = vunpack.c.0.s8 %v2253
          %v2255 = vlaneseq
          %v2256 = vshrl.u32 %v2255, 7
          %v2257 = vsub.s32 %v2254, %v2256
          %v2258 = vrot.slane %v2230, %v2257
          %v2259 = vcombine.low %v2237, %v2244
          %v2260 = vcombine.low %v2251, %v2258
          %v2262 = vunpack.c.l.s4 1966171168
          %v2263 = vunpack.c.0.s8 %v2262
          %v2264 = vlaneseq
          %v2265 = vshrl.u32 %v2264, 7
          %v2266 = vsub.s32 %v2263, %v2265
          %v2267 = vrot.slane %v2259, %v2266
          %v2269 = vunpack.c.l.s4 1966171168
          %v2270 = vunpack.c.0.s8 %v2269
          %v2271 = vlaneseq
          %v2272 = vshrl.u32 %v2271, 7
          %v2273 = vsub.s32 %v2270, %v2272
          %v2274 = vrot.slane %v2260, %v2273
          %v2275 = vcombine.low %v2267, %v2274
          %v2277 = vmul.f32 %v2202, %v2275
          %2278 = vst [vmem:[%s8] ss:$2 sm:$0xff] %v2277
          %v2279 = vld [vmem:[#allocation8] sm:$0xff]
          %v2281 = vlaneseq
          %v2282 = vshrl.u32 %v2281, 7
          %v2283 = vsub.s32 0, %v2282
          %v2284 = vrot.slane %v2277, %v2283
          %v2285 = vlaneseq
          %v2286 = vshrl.u32 %v2285, 7
          %v2287 = vsub.s32 1, %v2286
          %v2288 = vrot.slane %v2277, %v2287
          %v2289 = vlaneseq
          %v2290 = vshrl.u32 %v2289, 7
          %v2291 = vsub.s32 2, %v2290
          %v2292 = vrot.slane %v2277, %v2291
          %v2293 = vlaneseq
          %v2294 = vshrl.u32 %v2293, 7
          %v2295 = vsub.s32 3, %v2294
          %v2296 = vrot.slane %v2277, %v2295
          %v2297 = vlaneseq
          %v2298 = vshrl.u32 %v2297, 7
          %v2299 = vsub.s32 4, %v2298
          %v2300 = vrot.slane %v2277, %v2299
          %v2301 = vlaneseq
          %v2302 = vshrl.u32 %v2301, 7
          %v2303 = vsub.s32 5, %v2302
          %v2304 = vrot.slane %v2277, %v2303
          %v2305 = vlaneseq
          %v2306 = vshrl.u32 %v2305, 7
          %v2307 = vsub.s32 6, %v2306
          %v2308 = vrot.slane %v2277, %v2307
          %v2309 = vlaneseq
          %v2310 = vshrl.u32 %v2309, 7
          %v2311 = vsub.s32 7, %v2310
          %v2312 = vrot.slane %v2277, %v2311
          %v2321 = vmul.f32 %v1206, %v2284
          %v2322 = vmul.f32 %v1207, %v2288
          %v2323 = vmul.f32 %v1208, %v2292
          %v2324 = vmul.f32 %v1209, %v2296
          %v2325 = vmul.f32 %v1210, %v2300
          %v2326 = vmul.f32 %v1211, %v2304
          %v2327 = vmul.f32 %v1212, %v2308
          %v2328 = vmul.f32 %v1213, %v2312
          %v2337 = vcombine.low %v2321, %v2322
          %v2338 = vcombine.low %v2323, %v2324
          %v2339 = vcombine.low %v2325, %v2326
          %v2340 = vcombine.low %v2327, %v2328
          %v2342 = vunpack.c.l.s4 1966171168
          %v2343 = vunpack.c.0.s8 %v2342
          %v2344 = vlaneseq
          %v2345 = vshrl.u32 %v2344, 7
          %v2346 = vsub.s32 %v2343, %v2345
          %v2347 = vrot.slane %v2337, %v2346
          %v2349 = vunpack.c.l.s4 1966171168
          %v2350 = vunpack.c.0.s8 %v2349
          %v2351 = vlaneseq
          %v2352 = vshrl.u32 %v2351, 7
          %v2353 = vsub.s32 %v2350, %v2352
          %v2354 = vrot.slane %v2338, %v2353
          %v2356 = vunpack.c.l.s4 1966171168
          %v2357 = vunpack.c.0.s8 %v2356
          %v2358 = vlaneseq
          %v2359 = vshrl.u32 %v2358, 7
          %v2360 = vsub.s32 %v2357, %v2359
          %v2361 = vrot.slane %v2339, %v2360
          %v2363 = vunpack.c.l.s4 1966171168
          %v2364 = vunpack.c.0.s8 %v2363
          %v2365 = vlaneseq
          %v2366 = vshrl.u32 %v2365, 7
          %v2367 = vsub.s32 %v2364, %v2366
          %v2368 = vrot.slane %v2340, %v2367
          %v2369 = vcombine.low %v2347, %v2354
          %v2370 = vcombine.low %v2361, %v2368
          %v2372 = vunpack.c.l.s4 1966171168
          %v2373 = vunpack.c.0.s8 %v2372
          %v2374 = vlaneseq
          %v2375 = vshrl.u32 %v2374, 7
          %v2376 = vsub.s32 %v2373, %v2375
          %v2377 = vrot.slane %v2369, %v2376
          %v2379 = vunpack.c.l.s4 1966171168
          %v2380 = vunpack.c.0.s8 %v2379
          %v2381 = vlaneseq
          %v2382 = vshrl.u32 %v2381, 7
          %v2383 = vsub.s32 %v2380, %v2382
          %v2384 = vrot.slane %v2370, %v2383
          %v2385 = vcombine.low %v2377, %v2384
          %v2387 = vsub.f32 %v2279, %v2385
          %s2388 = scalar_lea.vmem %s8, 1
          %2389 = vst [vmem:[%s2388] ss:$2 sm:$0xff] %v2387
        $region72: #{transform_net_forward.7} parent=51 // pred_fallthru
          _
        // Predicated region
        $region73: #{transform_net_forward.7} parent=51 // pred_check
          %p2390 = pneg %p207
        $region74: #{transform_net_forward.7} parent=51 // pred_check_branch
          %2392 = sbr.rel (%p2390) target = $region76
        $region75: #{transform_net_forward.7} parent=51 // pred_region
          _
        $region76: #{transform_net_forward.7} parent=51 // pred_fallthru
          _
        // Predicated region
        $region77: #{transform_net_forward.7} parent=51 // pred_check
          %p2393 = pneg %p207
        $region78: #{transform_net_forward.7} parent=51 // pred_check_branch
          %2395 = sbr.rel (%p2393) target = $region80
        $region79: #{transform_net_forward.7} parent=51 // pred_region
          _
        $region80: #{transform_net_forward.7} parent=51 // pred_fallthru
          _
      $region52: #{transform_net_forward.7} parent=5 // pred_fallthru
        _
      %p2396 = scmp.le.s32.totalorder 2, %s16
      // Predicated region
      $region81: #{transform_net_forward.7} parent=5 // pred_check
        %p2397 = pneg %p2396
      $region82: #{transform_net_forward.7} parent=5 // pred_check_branch
        %2399 = sbr.rel (%p2397) target = $region84
      $region83: #{transform_net_forward.7} parent=5 // pred_region
        %s2400 = ssub.s32 %s16, 2
      $region84: #{transform_net_forward.7} parent=5 // pred_fallthru
        _
    $region6: #{transform_net_forward.7} parent=1 // loop_footer
      %s20 = sadd.s32 1, %s16
    $region7: #{transform_net_forward.7} parent=1 // loop_footer_branch
      %15 = sbr.rel target = $region3
    $region8: #{transform_net_forward.7} parent=1 // loop_exit
      _
    %2401 = vsyncpa [#allocation5], 1
    %s2402 = scalar_lea.sflag [#allocation5], 1
    %2403 = vsyncpa %s2402, 1
    %2404 = vsyncpa [#allocation7], 1

// kernel: transform_net_forward.9
$region0: #{transform_net_forward.9}
  #allocation0 [shape = 'u32[]', space=smem, size = 0x4, offset = 0x4, fixed_abs, tag = 'smem constant byte address 0x4 - core index']
  #allocation1 [shape = 'u32[144,128]{1,0:T(1,128)}', space=vmem, size = 0x12000, scoped, tag = 'internal scratch']
  %s0 = inlined_call_operand.vmem [shape: f32[2,1024], index: 0, kind: input, shape index: {}]
  %s1 = inlined_call_operand.vmem [shape: bf16[1024,512], index: 1, kind: input, shape index: {}]
  %s2 = inlined_call_operand.vmem [shape: f32[1,512], index: 2, kind: input, shape index: {}]
  %s3 = inlined_call_operand.vmem [shape: f32[1,512], index: 3, kind: input, shape index: {}]
  %s4 = inlined_call_operand.vmem [shape: f32[1,512], index: 4, kind: input, shape index: {}]
  %s5 = inlined_call_operand.vmem [shape: bf16[512,256], index: 5, kind: input, shape index: {}]
  %s6 = inlined_call_operand.vmem [shape: f32[1,256], index: 6, kind: input, shape index: {}]
  %s7 = inlined_call_operand.vmem [shape: f32[1,256], index: 7, kind: input, shape index: {}]
  %s8 = inlined_call_operand.vmem [shape: f32[1,256], index: 8, kind: input, shape index: {}]
  %s9 = inlined_call_operand.vmem [shape: bf16[256,128], index: 9, kind: input, shape index: {}]
  %s10 = inlined_call_operand.vmem [shape: f32[1,128], index: 10, kind: input, shape index: {}]
  %s11 = inlined_call_operand.vmem [shape: f32[2,128], index: 11, kind: output, shape index: {}]
  %s12 = sld [smem:[#allocation0]]
  $region54: #{transform_net_forward.9} parent=0
    _
  %s14 = ssub.s32 1, %s12
  %s15 = scalar_select 0, %s14, %s12
  // Predicated region
  $region2: #{transform_net_forward.9} parent=0 // pred_check
    _
  $region3: #{transform_net_forward.9} parent=0 // pred_check_branch
    %17 = sbr.rel (0) target = $region5
  $region4: #{transform_net_forward.9} parent=0 // pred_region
    _
  $region5: #{transform_net_forward.9} parent=0 // pred_fallthru
    _
  // Predicated region
  $region6: #{transform_net_forward.9} parent=0 // pred_check
    _
  $region7: #{transform_net_forward.9} parent=0 // pred_check_branch
    %19 = sbr.rel (0) target = $region9
  $region8: #{transform_net_forward.9} parent=0 // pred_region
    _
  $region9: #{transform_net_forward.9} parent=0 // pred_fallthru
    _
  // Predicated region
  $region10: #{transform_net_forward.9} parent=0 // pred_check
    _
  $region11: #{transform_net_forward.9} parent=0 // pred_check_branch
    %21 = sbr.rel (0) target = $region13
  $region12: #{transform_net_forward.9} parent=0 // pred_region
    _
  $region13: #{transform_net_forward.9} parent=0 // pred_fallthru
    _
  // Predicated region
  $region14: #{transform_net_forward.9} parent=0 // pred_check
    _
  $region15: #{transform_net_forward.9} parent=0 // pred_check_branch
    %23 = sbr.rel (0) target = $region17
  $region16: #{transform_net_forward.9} parent=0 // pred_region
    _
  $region17: #{transform_net_forward.9} parent=0 // pred_fallthru
    _
  // Predicated region
  $region18: #{transform_net_forward.9} parent=0 // pred_check
    _
  $region19: #{transform_net_forward.9} parent=0 // pred_check_branch
    %25 = sbr.rel (0) target = $region21
  $region20: #{transform_net_forward.9} parent=0 // pred_region
    _
  $region21: #{transform_net_forward.9} parent=0 // pred_fallthru
    _
  // Predicated region
  $region22: #{transform_net_forward.9} parent=0 // pred_check
    _
  $region23: #{transform_net_forward.9} parent=0 // pred_check_branch
    %27 = sbr.rel (0) target = $region25
  $region24: #{transform_net_forward.9} parent=0 // pred_region
    _
  $region25: #{transform_net_forward.9} parent=0 // pred_fallthru
    _
  // Predicated region
  $region26: #{transform_net_forward.9} parent=0 // pred_check
    _
  $region27: #{transform_net_forward.9} parent=0 // pred_check_branch
    %29 = sbr.rel (0) target = $region29
  $region28: #{transform_net_forward.9} parent=0 // pred_region
    _
  $region29: #{transform_net_forward.9} parent=0 // pred_fallthru
    _
  // Predicated region
  $region30: #{transform_net_forward.9} parent=0 // pred_check
    _
  $region31: #{transform_net_forward.9} parent=0 // pred_check_branch
    %31 = sbr.rel (0) target = $region33
  $region32: #{transform_net_forward.9} parent=0 // pred_region
    _
  $region33: #{transform_net_forward.9} parent=0 // pred_fallthru
    _
  // Predicated region
  $region34: #{transform_net_forward.9} parent=0 // pred_check
    _
  $region35: #{transform_net_forward.9} parent=0 // pred_check_branch
    %33 = sbr.rel (0) target = $region37
  $region36: #{transform_net_forward.9} parent=0 // pred_region
    _
  $region37: #{transform_net_forward.9} parent=0 // pred_fallthru
    _
  // Predicated region
  $region38: #{transform_net_forward.9} parent=0 // pred_check
    _
  $region39: #{transform_net_forward.9} parent=0 // pred_check_branch
    %35 = sbr.rel (0) target = $region41
  $region40: #{transform_net_forward.9} parent=0 // pred_region
    _
  $region41: #{transform_net_forward.9} parent=0 // pred_fallthru
    _
  // Predicated region
  $region42: #{transform_net_forward.9} parent=0 // pred_check
    _
  $region43: #{transform_net_forward.9} parent=0 // pred_check_branch
    %37 = sbr.rel (0) target = $region45
  $region44: #{transform_net_forward.9} parent=0 // pred_region
    _
  $region45: #{transform_net_forward.9} parent=0 // pred_fallthru
    _
  %v39 = vld [vmem:[%s0] sm:$0xff]
  %v40 = vld [vmem:[%s0 + $0x8] sm:$0xff]
  %v43 = vcombine.high %v39, %v39
  %v45 = vunpack.c.l.s4 1983009808
  %v46 = vunpack.c.0.s8 %v45
  %v47 = vlaneseq
  %v48 = vshrl.u32 %v47, 7
  %v49 = vsub.s32 %v46, %v48
  %v50 = vrot.slane %v39, %v49
  %v52 = vunpack.c.l.s4 1983009808
  %v53 = vunpack.c.0.s8 %v52
  %v54 = vlaneseq
  %v55 = vshrl.u32 %v54, 7
  %v56 = vsub.s32 %v53, %v55
  %v57 = vrot.slane %v43, %v56
  %v58 = vcombine.high %v50, %v50
  %v59 = vcombine.high %v57, %v57
  %v60 = vcombine.high %v40, %v40
  %v62 = vunpack.c.l.s4 1983009808
  %v63 = vunpack.c.0.s8 %v62
  %v64 = vlaneseq
  %v65 = vshrl.u32 %v64, 7
  %v66 = vsub.s32 %v63, %v65
  %v67 = vrot.slane %v40, %v66
  %v69 = vunpack.c.l.s4 1983009808
  %v70 = vunpack.c.0.s8 %v69
  %v71 = vlaneseq
  %v72 = vshrl.u32 %v71, 7
  %v73 = vsub.s32 %v70, %v72
  %v74 = vrot.slane %v60, %v73
  %v75 = vcombine.high %v67, %v67
  %v76 = vcombine.high %v74, %v74
  %v85 = vpack.c.bf16 %v50, %v50
  %v86 = vpack.c.bf16 %v58, %v58
  %v87 = vpack.c.bf16 %v57, %v57
  %v88 = vpack.c.bf16 %v59, %v59
  %v89 = vpack.c.bf16 %v67, %v67
  %v90 = vpack.c.bf16 %v75, %v75
  %v91 = vpack.c.bf16 %v74, %v74
  %v92 = vpack.c.bf16 %v76, %v76
  %v93 = vld [vmem:[%s1] sm:$0xff]
  %v94 = vld [vmem:[%s1 + $0x8] sm:$0xff]
  %v95 = vld [vmem:[%s1 + $0x10] sm:$0xff]
  %v96 = vld [vmem:[%s1 + $0x18] sm:$0xff]
  %v97 = vld [vmem:[%s1 + $0x20] sm:$0xff]
  %v98 = vld [vmem:[%s1 + $0x28] sm:$0xff]
  %v99 = vld [vmem:[%s1 + $0x30] sm:$0xff]
  %v100 = vld [vmem:[%s1 + $0x38] sm:$0xff]
  %v101 = vld [vmem:[%s1 + $0x40] sm:$0xff]
  %v102 = vld [vmem:[%s1 + $0x48] sm:$0xff]
  %v103 = vld [vmem:[%s1 + $0x50] sm:$0xff]
  %v104 = vld [vmem:[%s1 + $0x58] sm:$0xff]
  %v105 = vld [vmem:[%s1 + $0x60] sm:$0xff]
  %v106 = vld [vmem:[%s1 + $0x68] sm:$0xff]
  %v107 = vld [vmem:[%s1 + $0x70] sm:$0xff]
  %v108 = vld [vmem:[%s1 + $0x78] sm:$0xff]
  %v109 = vld [vmem:[%s1 + $0x80] sm:$0xff]
  %v110 = vld [vmem:[%s1 + $0x88] sm:$0xff]
  %v111 = vld [vmem:[%s1 + $0x90] sm:$0xff]
  %v112 = vld [vmem:[%s1 + $0x98] sm:$0xff]
  %v113 = vld [vmem:[%s1 + $0xa0] sm:$0xff]
  %v114 = vld [vmem:[%s1 + $0xa8] sm:$0xff]
  %v115 = vld [vmem:[%s1 + $0xb0] sm:$0xff]
  %v116 = vld [vmem:[%s1 + $0xb8] sm:$0xff]
  %v117 = vld [vmem:[%s1 + $0xc0] sm:$0xff]
  %v118 = vld [vmem:[%s1 + $0xc8] sm:$0xff]
  %v119 = vld [vmem:[%s1 + $0xd0] sm:$0xff]
  %v120 = vld [vmem:[%s1 + $0xd8] sm:$0xff]
  %v121 = vld [vmem:[%s1 + $0xe0] sm:$0xff]
  %v122 = vld [vmem:[%s1 + $0xe8] sm:$0xff]
  %v123 = vld [vmem:[%s1 + $0xf0] sm:$0xff]
  %v124 = vld [vmem:[%s1 + $0xf8] sm:$0xff]
  %v125 = vld [vmem:[%s1 + $0x100] sm:$0xff]
  %v126 = vld [vmem:[%s1 + $0x108] sm:$0xff]
  %v127 = vld [vmem:[%s1 + $0x110] sm:$0xff]
  %v128 = vld [vmem:[%s1 + $0x118] sm:$0xff]
  %v129 = vld [vmem:[%s1 + $0x120] sm:$0xff]
  %v130 = vld [vmem:[%s1 + $0x128] sm:$0xff]
  %v131 = vld [vmem:[%s1 + $0x130] sm:$0xff]
  %v132 = vld [vmem:[%s1 + $0x138] sm:$0xff]
  %v133 = vld [vmem:[%s1 + $0x140] sm:$0xff]
  %v134 = vld [vmem:[%s1 + $0x148] sm:$0xff]
  %v135 = vld [vmem:[%s1 + $0x150] sm:$0xff]
  %v136 = vld [vmem:[%s1 + $0x158] sm:$0xff]
  %v137 = vld [vmem:[%s1 + $0x160] sm:$0xff]
  %v138 = vld [vmem:[%s1 + $0x168] sm:$0xff]
  %v139 = vld [vmem:[%s1 + $0x170] sm:$0xff]
  %v140 = vld [vmem:[%s1 + $0x178] sm:$0xff]
  %v141 = vld [vmem:[%s1 + $0x180] sm:$0xff]
  %v142 = vld [vmem:[%s1 + $0x188] sm:$0xff]
  %v143 = vld [vmem:[%s1 + $0x190] sm:$0xff]
  %v144 = vld [vmem:[%s1 + $0x198] sm:$0xff]
  %v145 = vld [vmem:[%s1 + $0x1a0] sm:$0xff]
  %v146 = vld [vmem:[%s1 + $0x1a8] sm:$0xff]
  %v147 = vld [vmem:[%s1 + $0x1b0] sm:$0xff]
  %v148 = vld [vmem:[%s1 + $0x1b8] sm:$0xff]
  %v149 = vld [vmem:[%s1 + $0x1c0] sm:$0xff]
  %v150 = vld [vmem:[%s1 + $0x1c8] sm:$0xff]
  %v151 = vld [vmem:[%s1 + $0x1d0] sm:$0xff]
  %v152 = vld [vmem:[%s1 + $0x1d8] sm:$0xff]
  %v153 = vld [vmem:[%s1 + $0x1e0] sm:$0xff]
  %v154 = vld [vmem:[%s1 + $0x1e8] sm:$0xff]
  %v155 = vld [vmem:[%s1 + $0x1f0] sm:$0xff]
  %v156 = vld [vmem:[%s1 + $0x1f8] sm:$0xff]
  %v157 = vld [vmem:[%s1 + $0x200] sm:$0xff]
  %v158 = vld [vmem:[%s1 + $0x208] sm:$0xff]
  %v159 = vld [vmem:[%s1 + $0x210] sm:$0xff]
  %v160 = vld [vmem:[%s1 + $0x218] sm:$0xff]
  %v161 = vld [vmem:[%s1 + $0x220] sm:$0xff]
  %v162 = vld [vmem:[%s1 + $0x228] sm:$0xff]
  %v163 = vld [vmem:[%s1 + $0x230] sm:$0xff]
  %v164 = vld [vmem:[%s1 + $0x238] sm:$0xff]
  %v165 = vld [vmem:[%s1 + $0x240] sm:$0xff]
  %v166 = vld [vmem:[%s1 + $0x248] sm:$0xff]
  %v167 = vld [vmem:[%s1 + $0x250] sm:$0xff]
  %v168 = vld [vmem:[%s1 + $0x258] sm:$0xff]
  %v169 = vld [vmem:[%s1 + $0x260] sm:$0xff]
  %v170 = vld [vmem:[%s1 + $0x268] sm:$0xff]
  %v171 = vld [vmem:[%s1 + $0x270] sm:$0xff]
  %v172 = vld [vmem:[%s1 + $0x278] sm:$0xff]
  %v173 = vld [vmem:[%s1 + $0x280] sm:$0xff]
  %v174 = vld [vmem:[%s1 + $0x288] sm:$0xff]
  %v175 = vld [vmem:[%s1 + $0x290] sm:$0xff]
  %v176 = vld [vmem:[%s1 + $0x298] sm:$0xff]
  %v177 = vld [vmem:[%s1 + $0x2a0] sm:$0xff]
  %v178 = vld [vmem:[%s1 + $0x2a8] sm:$0xff]
  %v179 = vld [vmem:[%s1 + $0x2b0] sm:$0xff]
  %v180 = vld [vmem:[%s1 + $0x2b8] sm:$0xff]
  %v181 = vld [vmem:[%s1 + $0x2c0] sm:$0xff]
  %v182 = vld [vmem:[%s1 + $0x2c8] sm:$0xff]
  %v183 = vld [vmem:[%s1 + $0x2d0] sm:$0xff]
  %v184 = vld [vmem:[%s1 + $0x2d8] sm:$0xff]
  %v185 = vld [vmem:[%s1 + $0x2e0] sm:$0xff]
  %v186 = vld [vmem:[%s1 + $0x2e8] sm:$0xff]
  %v187 = vld [vmem:[%s1 + $0x2f0] sm:$0xff]
  %v188 = vld [vmem:[%s1 + $0x2f8] sm:$0xff]
  %v189 = vld [vmem:[%s1 + $0x300] sm:$0xff]
  %v190 = vld [vmem:[%s1 + $0x308] sm:$0xff]
  %v191 = vld [vmem:[%s1 + $0x310] sm:$0xff]
  %v192 = vld [vmem:[%s1 + $0x318] sm:$0xff]
  %v193 = vld [vmem:[%s1 + $0x320] sm:$0xff]
  %v194 = vld [vmem:[%s1 + $0x328] sm:$0xff]
  %v195 = vld [vmem:[%s1 + $0x330] sm:$0xff]
  %v196 = vld [vmem:[%s1 + $0x338] sm:$0xff]
  %v197 = vld [vmem:[%s1 + $0x340] sm:$0xff]
  %v198 = vld [vmem:[%s1 + $0x348] sm:$0xff]
  %v199 = vld [vmem:[%s1 + $0x350] sm:$0xff]
  %v200 = vld [vmem:[%s1 + $0x358] sm:$0xff]
  %v201 = vld [vmem:[%s1 + $0x360] sm:$0xff]
  %v202 = vld [vmem:[%s1 + $0x368] sm:$0xff]
  %v203 = vld [vmem:[%s1 + $0x370] sm:$0xff]
  %v204 = vld [vmem:[%s1 + $0x378] sm:$0xff]
  %v205 = vld [vmem:[%s1 + $0x380] sm:$0xff]
  %v206 = vld [vmem:[%s1 + $0x388] sm:$0xff]
  %v207 = vld [vmem:[%s1 + $0x390] sm:$0xff]
  %v208 = vld [vmem:[%s1 + $0x398] sm:$0xff]
  %v209 = vld [vmem:[%s1 + $0x3a0] sm:$0xff]
  %v210 = vld [vmem:[%s1 + $0x3a8] sm:$0xff]
  %v211 = vld [vmem:[%s1 + $0x3b0] sm:$0xff]
  %v212 = vld [vmem:[%s1 + $0x3b8] sm:$0xff]
  %v213 = vld [vmem:[%s1 + $0x3c0] sm:$0xff]
  %v214 = vld [vmem:[%s1 + $0x3c8] sm:$0xff]
  %v215 = vld [vmem:[%s1 + $0x3d0] sm:$0xff]
  %v216 = vld [vmem:[%s1 + $0x3d8] sm:$0xff]
  %v217 = vld [vmem:[%s1 + $0x3e0] sm:$0xff]
  %v218 = vld [vmem:[%s1 + $0x3e8] sm:$0xff]
  %v219 = vld [vmem:[%s1 + $0x3f0] sm:$0xff]
  %v220 = vld [vmem:[%s1 + $0x3f8] sm:$0xff]
  %v221 = vld [vmem:[%s1 + $0x400] sm:$0xff]
  %v222 = vld [vmem:[%s1 + $0x408] sm:$0xff]
  %v223 = vld [vmem:[%s1 + $0x410] sm:$0xff]
  %v224 = vld [vmem:[%s1 + $0x418] sm:$0xff]
  %v225 = vld [vmem:[%s1 + $0x420] sm:$0xff]
  %v226 = vld [vmem:[%s1 + $0x428] sm:$0xff]
  %v227 = vld [vmem:[%s1 + $0x430] sm:$0xff]
  %v228 = vld [vmem:[%s1 + $0x438] sm:$0xff]
  %v229 = vld [vmem:[%s1 + $0x440] sm:$0xff]
  %v230 = vld [vmem:[%s1 + $0x448] sm:$0xff]
  %v231 = vld [vmem:[%s1 + $0x450] sm:$0xff]
  %v232 = vld [vmem:[%s1 + $0x458] sm:$0xff]
  %v233 = vld [vmem:[%s1 + $0x460] sm:$0xff]
  %v234 = vld [vmem:[%s1 + $0x468] sm:$0xff]
  %v235 = vld [vmem:[%s1 + $0x470] sm:$0xff]
  %v236 = vld [vmem:[%s1 + $0x478] sm:$0xff]
  %v237 = vld [vmem:[%s1 + $0x480] sm:$0xff]
  %v238 = vld [vmem:[%s1 + $0x488] sm:$0xff]
  %v239 = vld [vmem:[%s1 + $0x490] sm:$0xff]
  %v240 = vld [vmem:[%s1 + $0x498] sm:$0xff]
  %v241 = vld [vmem:[%s1 + $0x4a0] sm:$0xff]
  %v242 = vld [vmem:[%s1 + $0x4a8] sm:$0xff]
  %v243 = vld [vmem:[%s1 + $0x4b0] sm:$0xff]
  %v244 = vld [vmem:[%s1 + $0x4b8] sm:$0xff]
  %v245 = vld [vmem:[%s1 + $0x4c0] sm:$0xff]
  %v246 = vld [vmem:[%s1 + $0x4c8] sm:$0xff]
  %v247 = vld [vmem:[%s1 + $0x4d0] sm:$0xff]
  %v248 = vld [vmem:[%s1 + $0x4d8] sm:$0xff]
  %v249 = vld [vmem:[%s1 + $0x4e0] sm:$0xff]
  %v250 = vld [vmem:[%s1 + $0x4e8] sm:$0xff]
  %v251 = vld [vmem:[%s1 + $0x4f0] sm:$0xff]
  %v252 = vld [vmem:[%s1 + $0x4f8] sm:$0xff]
  %v253 = vld [vmem:[%s1 + $0x500] sm:$0xff]
  %v254 = vld [vmem:[%s1 + $0x508] sm:$0xff]
  %v255 = vld [vmem:[%s1 + $0x510] sm:$0xff]
  %v256 = vld [vmem:[%s1 + $0x518] sm:$0xff]
  %v257 = vld [vmem:[%s1 + $0x520] sm:$0xff]
  %v258 = vld [vmem:[%s1 + $0x528] sm:$0xff]
  %v259 = vld [vmem:[%s1 + $0x530] sm:$0xff]
  %v260 = vld [vmem:[%s1 + $0x538] sm:$0xff]
  %v261 = vld [vmem:[%s1 + $0x540] sm:$0xff]
  %v262 = vld [vmem:[%s1 + $0x548] sm:$0xff]
  %v263 = vld [vmem:[%s1 + $0x550] sm:$0xff]
  %v264 = vld [vmem:[%s1 + $0x558] sm:$0xff]
  %v265 = vld [vmem:[%s1 + $0x560] sm:$0xff]
  %v266 = vld [vmem:[%s1 + $0x568] sm:$0xff]
  %v267 = vld [vmem:[%s1 + $0x570] sm:$0xff]
  %v268 = vld [vmem:[%s1 + $0x578] sm:$0xff]
  %v269 = vld [vmem:[%s1 + $0x580] sm:$0xff]
  %v270 = vld [vmem:[%s1 + $0x588] sm:$0xff]
  %v271 = vld [vmem:[%s1 + $0x590] sm:$0xff]
  %v272 = vld [vmem:[%s1 + $0x598] sm:$0xff]
  %v273 = vld [vmem:[%s1 + $0x5a0] sm:$0xff]
  %v274 = vld [vmem:[%s1 + $0x5a8] sm:$0xff]
  %v275 = vld [vmem:[%s1 + $0x5b0] sm:$0xff]
  %v276 = vld [vmem:[%s1 + $0x5b8] sm:$0xff]
  %v277 = vld [vmem:[%s1 + $0x5c0] sm:$0xff]
  %v278 = vld [vmem:[%s1 + $0x5c8] sm:$0xff]
  %v279 = vld [vmem:[%s1 + $0x5d0] sm:$0xff]
  %v280 = vld [vmem:[%s1 + $0x5d8] sm:$0xff]
  %v281 = vld [vmem:[%s1 + $0x5e0] sm:$0xff]
  %v282 = vld [vmem:[%s1 + $0x5e8] sm:$0xff]
  %v283 = vld [vmem:[%s1 + $0x5f0] sm:$0xff]
  %v284 = vld [vmem:[%s1 + $0x5f8] sm:$0xff]
  %v285 = vld [vmem:[%s1 + $0x600] sm:$0xff]
  %v286 = vld [vmem:[%s1 + $0x608] sm:$0xff]
  %v287 = vld [vmem:[%s1 + $0x610] sm:$0xff]
  %v288 = vld [vmem:[%s1 + $0x618] sm:$0xff]
  %v289 = vld [vmem:[%s1 + $0x620] sm:$0xff]
  %v290 = vld [vmem:[%s1 + $0x628] sm:$0xff]
  %v291 = vld [vmem:[%s1 + $0x630] sm:$0xff]
  %v292 = vld [vmem:[%s1 + $0x638] sm:$0xff]
  %v293 = vld [vmem:[%s1 + $0x640] sm:$0xff]
  %v294 = vld [vmem:[%s1 + $0x648] sm:$0xff]
  %v295 = vld [vmem:[%s1 + $0x650] sm:$0xff]
  %v296 = vld [vmem:[%s1 + $0x658] sm:$0xff]
  %v297 = vld [vmem:[%s1 + $0x660] sm:$0xff]
  %v298 = vld [vmem:[%s1 + $0x668] sm:$0xff]
  %v299 = vld [vmem:[%s1 + $0x670] sm:$0xff]
  %v300 = vld [vmem:[%s1 + $0x678] sm:$0xff]
  %v301 = vld [vmem:[%s1 + $0x680] sm:$0xff]
  %v302 = vld [vmem:[%s1 + $0x688] sm:$0xff]
  %v303 = vld [vmem:[%s1 + $0x690] sm:$0xff]
  %v304 = vld [vmem:[%s1 + $0x698] sm:$0xff]
  %v305 = vld [vmem:[%s1 + $0x6a0] sm:$0xff]
  %v306 = vld [vmem:[%s1 + $0x6a8] sm:$0xff]
  %v307 = vld [vmem:[%s1 + $0x6b0] sm:$0xff]
  %v308 = vld [vmem:[%s1 + $0x6b8] sm:$0xff]
  %v309 = vld [vmem:[%s1 + $0x6c0] sm:$0xff]
  %v310 = vld [vmem:[%s1 + $0x6c8] sm:$0xff]
  %v311 = vld [vmem:[%s1 + $0x6d0] sm:$0xff]
  %v312 = vld [vmem:[%s1 + $0x6d8] sm:$0xff]
  %v313 = vld [vmem:[%s1 + $0x6e0] sm:$0xff]
  %v314 = vld [vmem:[%s1 + $0x6e8] sm:$0xff]
  %v315 = vld [vmem:[%s1 + $0x6f0] sm:$0xff]
  %v316 = vld [vmem:[%s1 + $0x6f8] sm:$0xff]
  %v317 = vld [vmem:[%s1 + $0x700] sm:$0xff]
  %v318 = vld [vmem:[%s1 + $0x708] sm:$0xff]
  %v319 = vld [vmem:[%s1 + $0x710] sm:$0xff]
  %v320 = vld [vmem:[%s1 + $0x718] sm:$0xff]
  %v321 = vld [vmem:[%s1 + $0x720] sm:$0xff]
  %v322 = vld [vmem:[%s1 + $0x728] sm:$0xff]
  %v323 = vld [vmem:[%s1 + $0x730] sm:$0xff]
  %v324 = vld [vmem:[%s1 + $0x738] sm:$0xff]
  %v325 = vld [vmem:[%s1 + $0x740] sm:$0xff]
  %v326 = vld [vmem:[%s1 + $0x748] sm:$0xff]
  %v327 = vld [vmem:[%s1 + $0x750] sm:$0xff]
  %v328 = vld [vmem:[%s1 + $0x758] sm:$0xff]
  %v329 = vld [vmem:[%s1 + $0x760] sm:$0xff]
  %v330 = vld [vmem:[%s1 + $0x768] sm:$0xff]
  %v331 = vld [vmem:[%s1 + $0x770] sm:$0xff]
  %v332 = vld [vmem:[%s1 + $0x778] sm:$0xff]
  %v333 = vld [vmem:[%s1 + $0x780] sm:$0xff]
  %v334 = vld [vmem:[%s1 + $0x788] sm:$0xff]
  %v335 = vld [vmem:[%s1 + $0x790] sm:$0xff]
  %v336 = vld [vmem:[%s1 + $0x798] sm:$0xff]
  %v337 = vld [vmem:[%s1 + $0x7a0] sm:$0xff]
  %v338 = vld [vmem:[%s1 + $0x7a8] sm:$0xff]
  %v339 = vld [vmem:[%s1 + $0x7b0] sm:$0xff]
  %v340 = vld [vmem:[%s1 + $0x7b8] sm:$0xff]
  %v341 = vld [vmem:[%s1 + $0x7c0] sm:$0xff]
  %v342 = vld [vmem:[%s1 + $0x7c8] sm:$0xff]
  %v343 = vld [vmem:[%s1 + $0x7d0] sm:$0xff]
  %v344 = vld [vmem:[%s1 + $0x7d8] sm:$0xff]
  %v345 = vld [vmem:[%s1 + $0x7e0] sm:$0xff]
  %v346 = vld [vmem:[%s1 + $0x7e8] sm:$0xff]
  %v347 = vld [vmem:[%s1 + $0x7f0] sm:$0xff]
  %v348 = vld [vmem:[%s1 + $0x7f8] sm:$0xff]
  %v349 = vld [vmem:[%s2] sm:$0xf]
  %v351 = vlaneseq
  %v352 = vshrl.u32 %v351, 7
  %v353 = vsub.s32 0, %v352
  %v354 = vrot.slane %v349, %v353
  %v355 = vlaneseq
  %v356 = vshrl.u32 %v355, 7
  %v357 = vsub.s32 1, %v356
  %v358 = vrot.slane %v349, %v357
  %v359 = vlaneseq
  %v360 = vshrl.u32 %v359, 7
  %v361 = vsub.s32 2, %v360
  %v362 = vrot.slane %v349, %v361
  %v363 = vlaneseq
  %v364 = vshrl.u32 %v363, 7
  %v365 = vsub.s32 3, %v364
  %v366 = vrot.slane %v349, %v365
  %v627 = vunpack.c.l.b16 %v93
  %v628 = vunpack.c.h.b16 %v93
  %v629 = vunpack.c.l.b16 %v94
  %v630 = vunpack.c.h.b16 %v94
  %v631 = vunpack.c.l.b16 %v95
  %v632 = vunpack.c.h.b16 %v95
  %v633 = vunpack.c.l.b16 %v96
  %v634 = vunpack.c.h.b16 %v96
  %v635 = vunpack.c.l.b16 %v97
  %v636 = vunpack.c.h.b16 %v97
  %v637 = vunpack.c.l.b16 %v98
  %v638 = vunpack.c.h.b16 %v98
  %v639 = vunpack.c.l.b16 %v99
  %v640 = vunpack.c.h.b16 %v99
  %v641 = vunpack.c.l.b16 %v100
  %v642 = vunpack.c.h.b16 %v100
  %v643 = vunpack.c.l.b16 %v101
  %v644 = vunpack.c.h.b16 %v101
  %v645 = vunpack.c.l.b16 %v102
  %v646 = vunpack.c.h.b16 %v102
  %v647 = vunpack.c.l.b16 %v103
  %v648 = vunpack.c.h.b16 %v103
  %v649 = vunpack.c.l.b16 %v104
  %v650 = vunpack.c.h.b16 %v104
  %v651 = vunpack.c.l.b16 %v105
  %v652 = vunpack.c.h.b16 %v105
  %v653 = vunpack.c.l.b16 %v106
  %v654 = vunpack.c.h.b16 %v106
  %v655 = vunpack.c.l.b16 %v107
  %v656 = vunpack.c.h.b16 %v107
  %v657 = vunpack.c.l.b16 %v108
  %v658 = vunpack.c.h.b16 %v108
  %v659 = vunpack.c.l.b16 %v109
  %v660 = vunpack.c.h.b16 %v109
  %v661 = vunpack.c.l.b16 %v110
  %v662 = vunpack.c.h.b16 %v110
  %v663 = vunpack.c.l.b16 %v111
  %v664 = vunpack.c.h.b16 %v111
  %v665 = vunpack.c.l.b16 %v112
  %v666 = vunpack.c.h.b16 %v112
  %v667 = vunpack.c.l.b16 %v113
  %v668 = vunpack.c.h.b16 %v113
  %v669 = vunpack.c.l.b16 %v114
  %v670 = vunpack.c.h.b16 %v114
  %v671 = vunpack.c.l.b16 %v115
  %v672 = vunpack.c.h.b16 %v115
  %v673 = vunpack.c.l.b16 %v116
  %v674 = vunpack.c.h.b16 %v116
  %v675 = vunpack.c.l.b16 %v117
  %v676 = vunpack.c.h.b16 %v117
  %v677 = vunpack.c.l.b16 %v118
  %v678 = vunpack.c.h.b16 %v118
  %v679 = vunpack.c.l.b16 %v119
  %v680 = vunpack.c.h.b16 %v119
  %v681 = vunpack.c.l.b16 %v120
  %v682 = vunpack.c.h.b16 %v120
  %v683 = vunpack.c.l.b16 %v121
  %v684 = vunpack.c.h.b16 %v121
  %v685 = vunpack.c.l.b16 %v122
  %v686 = vunpack.c.h.b16 %v122
  %v687 = vunpack.c.l.b16 %v123
  %v688 = vunpack.c.h.b16 %v123
  %v689 = vunpack.c.l.b16 %v124
  %v690 = vunpack.c.h.b16 %v124
  %v691 = vunpack.c.l.b16 %v125
  %v692 = vunpack.c.h.b16 %v125
  %v693 = vunpack.c.l.b16 %v126
  %v694 = vunpack.c.h.b16 %v126
  %v695 = vunpack.c.l.b16 %v127
  %v696 = vunpack.c.h.b16 %v127
  %v697 = vunpack.c.l.b16 %v128
  %v698 = vunpack.c.h.b16 %v128
  %v699 = vunpack.c.l.b16 %v129
  %v700 = vunpack.c.h.b16 %v129
  %v701 = vunpack.c.l.b16 %v130
  %v702 = vunpack.c.h.b16 %v130
  %v703 = vunpack.c.l.b16 %v131
  %v704 = vunpack.c.h.b16 %v131
  %v705 = vunpack.c.l.b16 %v132
  %v706 = vunpack.c.h.b16 %v132
  %v707 = vunpack.c.l.b16 %v133
  %v708 = vunpack.c.h.b16 %v133
  %v709 = vunpack.c.l.b16 %v134
  %v710 = vunpack.c.h.b16 %v134
  %v711 = vunpack.c.l.b16 %v135
  %v712 = vunpack.c.h.b16 %v135
  %v713 = vunpack.c.l.b16 %v136
  %v714 = vunpack.c.h.b16 %v136
  %v715 = vunpack.c.l.b16 %v137
  %v716 = vunpack.c.h.b16 %v137
  %v717 = vunpack.c.l.b16 %v138
  %v718 = vunpack.c.h.b16 %v138
  %v719 = vunpack.c.l.b16 %v139
  %v720 = vunpack.c.h.b16 %v139
  %v721 = vunpack.c.l.b16 %v140
  %v722 = vunpack.c.h.b16 %v140
  %v723 = vunpack.c.l.b16 %v141
  %v724 = vunpack.c.h.b16 %v141
  %v725 = vunpack.c.l.b16 %v142
  %v726 = vunpack.c.h.b16 %v142
  %v727 = vunpack.c.l.b16 %v143
  %v728 = vunpack.c.h.b16 %v143
  %v729 = vunpack.c.l.b16 %v144
  %v730 = vunpack.c.h.b16 %v144
  %v731 = vunpack.c.l.b16 %v145
  %v732 = vunpack.c.h.b16 %v145
  %v733 = vunpack.c.l.b16 %v146
  %v734 = vunpack.c.h.b16 %v146
  %v735 = vunpack.c.l.b16 %v147
  %v736 = vunpack.c.h.b16 %v147
  %v737 = vunpack.c.l.b16 %v148
  %v738 = vunpack.c.h.b16 %v148
  %v739 = vunpack.c.l.b16 %v149
  %v740 = vunpack.c.h.b16 %v149
  %v741 = vunpack.c.l.b16 %v150
  %v742 = vunpack.c.h.b16 %v150
  %v743 = vunpack.c.l.b16 %v151
  %v744 = vunpack.c.h.b16 %v151
  %v745 = vunpack.c.l.b16 %v152
  %v746 = vunpack.c.h.b16 %v152
  %v747 = vunpack.c.l.b16 %v153
  %v748 = vunpack.c.h.b16 %v153
  %v749 = vunpack.c.l.b16 %v154
  %v750 = vunpack.c.h.b16 %v154
  %v751 = vunpack.c.l.b16 %v155
  %v752 = vunpack.c.h.b16 %v155
  %v753 = vunpack.c.l.b16 %v156
  %v754 = vunpack.c.h.b16 %v156
  %v755 = vunpack.c.l.b16 %v157
  %v756 = vunpack.c.h.b16 %v157
  %v757 = vunpack.c.l.b16 %v158
  %v758 = vunpack.c.h.b16 %v158
  %v759 = vunpack.c.l.b16 %v159
  %v760 = vunpack.c.h.b16 %v159
  %v761 = vunpack.c.l.b16 %v160
  %v762 = vunpack.c.h.b16 %v160
  %v763 = vunpack.c.l.b16 %v161
  %v764 = vunpack.c.h.b16 %v161
  %v765 = vunpack.c.l.b16 %v162
  %v766 = vunpack.c.h.b16 %v162
  %v767 = vunpack.c.l.b16 %v163
  %v768 = vunpack.c.h.b16 %v163
  %v769 = vunpack.c.l.b16 %v164
  %v770 = vunpack.c.h.b16 %v164
  %v771 = vunpack.c.l.b16 %v165
  %v772 = vunpack.c.h.b16 %v165
  %v773 = vunpack.c.l.b16 %v166
  %v774 = vunpack.c.h.b16 %v166
  %v775 = vunpack.c.l.b16 %v167
  %v776 = vunpack.c.h.b16 %v167
  %v777 = vunpack.c.l.b16 %v168
  %v778 = vunpack.c.h.b16 %v168
  %v779 = vunpack.c.l.b16 %v169
  %v780 = vunpack.c.h.b16 %v169
  %v781 = vunpack.c.l.b16 %v170
  %v782 = vunpack.c.h.b16 %v170
  %v783 = vunpack.c.l.b16 %v171
  %v784 = vunpack.c.h.b16 %v171
  %v785 = vunpack.c.l.b16 %v172
  %v786 = vunpack.c.h.b16 %v172
  %v787 = vunpack.c.l.b16 %v173
  %v788 = vunpack.c.h.b16 %v173
  %v789 = vunpack.c.l.b16 %v174
  %v790 = vunpack.c.h.b16 %v174
  %v791 = vunpack.c.l.b16 %v175
  %v792 = vunpack.c.h.b16 %v175
  %v793 = vunpack.c.l.b16 %v176
  %v794 = vunpack.c.h.b16 %v176
  %v795 = vunpack.c.l.b16 %v177
  %v796 = vunpack.c.h.b16 %v177
  %v797 = vunpack.c.l.b16 %v178
  %v798 = vunpack.c.h.b16 %v178
  %v799 = vunpack.c.l.b16 %v179
  %v800 = vunpack.c.h.b16 %v179
  %v801 = vunpack.c.l.b16 %v180
  %v802 = vunpack.c.h.b16 %v180
  %v803 = vunpack.c.l.b16 %v181
  %v804 = vunpack.c.h.b16 %v181
  %v805 = vunpack.c.l.b16 %v182
  %v806 = vunpack.c.h.b16 %v182
  %v807 = vunpack.c.l.b16 %v183
  %v808 = vunpack.c.h.b16 %v183
  %v809 = vunpack.c.l.b16 %v184
  %v810 = vunpack.c.h.b16 %v184
  %v811 = vunpack.c.l.b16 %v185
  %v812 = vunpack.c.h.b16 %v185
  %v813 = vunpack.c.l.b16 %v186
  %v814 = vunpack.c.h.b16 %v186
  %v815 = vunpack.c.l.b16 %v187
  %v816 = vunpack.c.h.b16 %v187
  %v817 = vunpack.c.l.b16 %v188
  %v818 = vunpack.c.h.b16 %v188
  %v819 = vunpack.c.l.b16 %v189
  %v820 = vunpack.c.h.b16 %v189
  %v821 = vunpack.c.l.b16 %v190
  %v822 = vunpack.c.h.b16 %v190
  %v823 = vunpack.c.l.b16 %v191
  %v824 = vunpack.c.h.b16 %v191
  %v825 = vunpack.c.l.b16 %v192
  %v826 = vunpack.c.h.b16 %v192
  %v827 = vunpack.c.l.b16 %v193
  %v828 = vunpack.c.h.b16 %v193
  %v829 = vunpack.c.l.b16 %v194
  %v830 = vunpack.c.h.b16 %v194
  %v831 = vunpack.c.l.b16 %v195
  %v832 = vunpack.c.h.b16 %v195
  %v833 = vunpack.c.l.b16 %v196
  %v834 = vunpack.c.h.b16 %v196
  %v835 = vunpack.c.l.b16 %v197
  %v836 = vunpack.c.h.b16 %v197
  %v837 = vunpack.c.l.b16 %v198
  %v838 = vunpack.c.h.b16 %v198
  %v839 = vunpack.c.l.b16 %v199
  %v840 = vunpack.c.h.b16 %v199
  %v841 = vunpack.c.l.b16 %v200
  %v842 = vunpack.c.h.b16 %v200
  %v843 = vunpack.c.l.b16 %v201
  %v844 = vunpack.c.h.b16 %v201
  %v845 = vunpack.c.l.b16 %v202
  %v846 = vunpack.c.h.b16 %v202
  %v847 = vunpack.c.l.b16 %v203
  %v848 = vunpack.c.h.b16 %v203
  %v849 = vunpack.c.l.b16 %v204
  %v850 = vunpack.c.h.b16 %v204
  %v851 = vunpack.c.l.b16 %v205
  %v852 = vunpack.c.h.b16 %v205
  %v853 = vunpack.c.l.b16 %v206
  %v854 = vunpack.c.h.b16 %v206
  %v855 = vunpack.c.l.b16 %v207
  %v856 = vunpack.c.h.b16 %v207
  %v857 = vunpack.c.l.b16 %v208
  %v858 = vunpack.c.h.b16 %v208
  %v859 = vunpack.c.l.b16 %v209
  %v860 = vunpack.c.h.b16 %v209
  %v861 = vunpack.c.l.b16 %v210
  %v862 = vunpack.c.h.b16 %v210
  %v863 = vunpack.c.l.b16 %v211
  %v864 = vunpack.c.h.b16 %v211
  %v865 = vunpack.c.l.b16 %v212
  %v866 = vunpack.c.h.b16 %v212
  %v867 = vunpack.c.l.b16 %v213
  %v868 = vunpack.c.h.b16 %v213
  %v869 = vunpack.c.l.b16 %v214
  %v870 = vunpack.c.h.b16 %v214
  %v871 = vunpack.c.l.b16 %v215
  %v872 = vunpack.c.h.b16 %v215
  %v873 = vunpack.c.l.b16 %v216
  %v874 = vunpack.c.h.b16 %v216
  %v875 = vunpack.c.l.b16 %v217
  %v876 = vunpack.c.h.b16 %v217
  %v877 = vunpack.c.l.b16 %v218
  %v878 = vunpack.c.h.b16 %v218
  %v879 = vunpack.c.l.b16 %v219
  %v880 = vunpack.c.h.b16 %v219
  %v881 = vunpack.c.l.b16 %v220
  %v882 = vunpack.c.h.b16 %v220
  %v883 = vunpack.c.l.b16 %v221
  %v884 = vunpack.c.h.b16 %v221
  %v885 = vunpack.c.l.b16 %v222
  %v886 = vunpack.c.h.b16 %v222
  %v887 = vunpack.c.l.b16 %v223
  %v888 = vunpack.c.h.b16 %v223
  %v889 = vunpack.c.l.b16 %v224
  %v890 = vunpack.c.h.b16 %v224
  %v891 = vunpack.c.l.b16 %v225
  %v892 = vunpack.c.h.b16 %v225
  %v893 = vunpack.c.l.b16 %v226
  %v894 = vunpack.c.h.b16 %v226
  %v895 = vunpack.c.l.b16 %v227
  %v896 = vunpack.c.h.b16 %v227
  %v897 = vunpack.c.l.b16 %v228
  %v898 = vunpack.c.h.b16 %v228
  %v899 = vunpack.c.l.b16 %v229
  %v900 = vunpack.c.h.b16 %v229
  %v901 = vunpack.c.l.b16 %v230
  %v902 = vunpack.c.h.b16 %v230
  %v903 = vunpack.c.l.b16 %v231
  %v904 = vunpack.c.h.b16 %v231
  %v905 = vunpack.c.l.b16 %v232
  %v906 = vunpack.c.h.b16 %v232
  %v907 = vunpack.c.l.b16 %v233
  %v908 = vunpack.c.h.b16 %v233
  %v909 = vunpack.c.l.b16 %v234
  %v910 = vunpack.c.h.b16 %v234
  %v911 = vunpack.c.l.b16 %v235
  %v912 = vunpack.c.h.b16 %v235
  %v913 = vunpack.c.l.b16 %v236
  %v914 = vunpack.c.h.b16 %v236
  %v915 = vunpack.c.l.b16 %v237
  %v916 = vunpack.c.h.b16 %v237
  %v917 = vunpack.c.l.b16 %v238
  %v918 = vunpack.c.h.b16 %v238
  %v919 = vunpack.c.l.b16 %v239
  %v920 = vunpack.c.h.b16 %v239
  %v921 = vunpack.c.l.b16 %v240
  %v922 = vunpack.c.h.b16 %v240
  %v923 = vunpack.c.l.b16 %v241
  %v924 = vunpack.c.h.b16 %v241
  %v925 = vunpack.c.l.b16 %v242
  %v926 = vunpack.c.h.b16 %v242
  %v927 = vunpack.c.l.b16 %v243
  %v928 = vunpack.c.h.b16 %v243
  %v929 = vunpack.c.l.b16 %v244
  %v930 = vunpack.c.h.b16 %v244
  %v931 = vunpack.c.l.b16 %v245
  %v932 = vunpack.c.h.b16 %v245
  %v933 = vunpack.c.l.b16 %v246
  %v934 = vunpack.c.h.b16 %v246
  %v935 = vunpack.c.l.b16 %v247
  %v936 = vunpack.c.h.b16 %v247
  %v937 = vunpack.c.l.b16 %v248
  %v938 = vunpack.c.h.b16 %v248
  %v939 = vunpack.c.l.b16 %v249
  %v940 = vunpack.c.h.b16 %v249
  %v941 = vunpack.c.l.b16 %v250
  %v942 = vunpack.c.h.b16 %v250
  %v943 = vunpack.c.l.b16 %v251
  %v944 = vunpack.c.h.b16 %v251
  %v945 = vunpack.c.l.b16 %v252
  %v946 = vunpack.c.h.b16 %v252
  %v947 = vunpack.c.l.b16 %v253
  %v948 = vunpack.c.h.b16 %v253
  %v949 = vunpack.c.l.b16 %v254
  %v950 = vunpack.c.h.b16 %v254
  %v951 = vunpack.c.l.b16 %v255
  %v952 = vunpack.c.h.b16 %v255
  %v953 = vunpack.c.l.b16 %v256
  %v954 = vunpack.c.h.b16 %v256
  %v955 = vunpack.c.l.b16 %v257
  %v956 = vunpack.c.h.b16 %v257
  %v957 = vunpack.c.l.b16 %v258
  %v958 = vunpack.c.h.b16 %v258
  %v959 = vunpack.c.l.b16 %v259
  %v960 = vunpack.c.h.b16 %v259
  %v961 = vunpack.c.l.b16 %v260
  %v962 = vunpack.c.h.b16 %v260
  %v963 = vunpack.c.l.b16 %v261
  %v964 = vunpack.c.h.b16 %v261
  %v965 = vunpack.c.l.b16 %v262
  %v966 = vunpack.c.h.b16 %v262
  %v967 = vunpack.c.l.b16 %v263
  %v968 = vunpack.c.h.b16 %v263
  %v969 = vunpack.c.l.b16 %v264
  %v970 = vunpack.c.h.b16 %v264
  %v971 = vunpack.c.l.b16 %v265
  %v972 = vunpack.c.h.b16 %v265
  %v973 = vunpack.c.l.b16 %v266
  %v974 = vunpack.c.h.b16 %v266
  %v975 = vunpack.c.l.b16 %v267
  %v976 = vunpack.c.h.b16 %v267
  %v977 = vunpack.c.l.b16 %v268
  %v978 = vunpack.c.h.b16 %v268
  %v979 = vunpack.c.l.b16 %v269
  %v980 = vunpack.c.h.b16 %v269
  %v981 = vunpack.c.l.b16 %v270
  %v982 = vunpack.c.h.b16 %v270
  %v983 = vunpack.c.l.b16 %v271
  %v984 = vunpack.c.h.b16 %v271
  %v985 = vunpack.c.l.b16 %v272
  %v986 = vunpack.c.h.b16 %v272
  %v987 = vunpack.c.l.b16 %v273
  %v988 = vunpack.c.h.b16 %v273
  %v989 = vunpack.c.l.b16 %v274
  %v990 = vunpack.c.h.b16 %v274
  %v991 = vunpack.c.l.b16 %v275
  %v992 = vunpack.c.h.b16 %v275
  %v993 = vunpack.c.l.b16 %v276
  %v994 = vunpack.c.h.b16 %v276
  %v995 = vunpack.c.l.b16 %v277
  %v996 = vunpack.c.h.b16 %v277
  %v997 = vunpack.c.l.b16 %v278
  %v998 = vunpack.c.h.b16 %v278
  %v999 = vunpack.c.l.b16 %v279
  %v1000 = vunpack.c.h.b16 %v279
  %v1001 = vunpack.c.l.b16 %v280
  %v1002 = vunpack.c.h.b16 %v280
  %v1003 = vunpack.c.l.b16 %v281
  %v1004 = vunpack.c.h.b16 %v281
  %v1005 = vunpack.c.l.b16 %v282
  %v1006 = vunpack.c.h.b16 %v282
  %v1007 = vunpack.c.l.b16 %v283
  %v1008 = vunpack.c.h.b16 %v283
  %v1009 = vunpack.c.l.b16 %v284
  %v1010 = vunpack.c.h.b16 %v284
  %v1011 = vunpack.c.l.b16 %v285
  %v1012 = vunpack.c.h.b16 %v285
  %v1013 = vunpack.c.l.b16 %v286
  %v1014 = vunpack.c.h.b16 %v286
  %v1015 = vunpack.c.l.b16 %v287
  %v1016 = vunpack.c.h.b16 %v287
  %v1017 = vunpack.c.l.b16 %v288
  %v1018 = vunpack.c.h.b16 %v288
  %v1019 = vunpack.c.l.b16 %v289
  %v1020 = vunpack.c.h.b16 %v289
  %v1021 = vunpack.c.l.b16 %v290
  %v1022 = vunpack.c.h.b16 %v290
  %v1023 = vunpack.c.l.b16 %v291
  %v1024 = vunpack.c.h.b16 %v291
  %v1025 = vunpack.c.l.b16 %v292
  %v1026 = vunpack.c.h.b16 %v292
  %v1027 = vunpack.c.l.b16 %v293
  %v1028 = vunpack.c.h.b16 %v293
  %v1029 = vunpack.c.l.b16 %v294
  %v1030 = vunpack.c.h.b16 %v294
  %v1031 = vunpack.c.l.b16 %v295
  %v1032 = vunpack.c.h.b16 %v295
  %v1033 = vunpack.c.l.b16 %v296
  %v1034 = vunpack.c.h.b16 %v296
  %v1035 = vunpack.c.l.b16 %v297
  %v1036 = vunpack.c.h.b16 %v297
  %v1037 = vunpack.c.l.b16 %v298
  %v1038 = vunpack.c.h.b16 %v298
  %v1039 = vunpack.c.l.b16 %v299
  %v1040 = vunpack.c.h.b16 %v299
  %v1041 = vunpack.c.l.b16 %v300
  %v1042 = vunpack.c.h.b16 %v300
  %v1043 = vunpack.c.l.b16 %v301
  %v1044 = vunpack.c.h.b16 %v301
  %v1045 = vunpack.c.l.b16 %v302
  %v1046 = vunpack.c.h.b16 %v302
  %v1047 = vunpack.c.l.b16 %v303
  %v1048 = vunpack.c.h.b16 %v303
  %v1049 = vunpack.c.l.b16 %v304
  %v1050 = vunpack.c.h.b16 %v304
  %v1051 = vunpack.c.l.b16 %v305
  %v1052 = vunpack.c.h.b16 %v305
  %v1053 = vunpack.c.l.b16 %v306
  %v1054 = vunpack.c.h.b16 %v306
  %v1055 = vunpack.c.l.b16 %v307
  %v1056 = vunpack.c.h.b16 %v307
  %v1057 = vunpack.c.l.b16 %v308
  %v1058 = vunpack.c.h.b16 %v308
  %v1059 = vunpack.c.l.b16 %v309
  %v1060 = vunpack.c.h.b16 %v309
  %v1061 = vunpack.c.l.b16 %v310
  %v1062 = vunpack.c.h.b16 %v310
  %v1063 = vunpack.c.l.b16 %v311
  %v1064 = vunpack.c.h.b16 %v311
  %v1065 = vunpack.c.l.b16 %v312
  %v1066 = vunpack.c.h.b16 %v312
  %v1067 = vunpack.c.l.b16 %v313
  %v1068 = vunpack.c.h.b16 %v313
  %v1069 = vunpack.c.l.b16 %v314
  %v1070 = vunpack.c.h.b16 %v314
  %v1071 = vunpack.c.l.b16 %v315
  %v1072 = vunpack.c.h.b16 %v315
  %v1073 = vunpack.c.l.b16 %v316
  %v1074 = vunpack.c.h.b16 %v316
  %v1075 = vunpack.c.l.b16 %v317
  %v1076 = vunpack.c.h.b16 %v317
  %v1077 = vunpack.c.l.b16 %v318
  %v1078 = vunpack.c.h.b16 %v318
  %v1079 = vunpack.c.l.b16 %v319
  %v1080 = vunpack.c.h.b16 %v319
  %v1081 = vunpack.c.l.b16 %v320
  %v1082 = vunpack.c.h.b16 %v320
  %v1083 = vunpack.c.l.b16 %v321
  %v1084 = vunpack.c.h.b16 %v321
  %v1085 = vunpack.c.l.b16 %v322
  %v1086 = vunpack.c.h.b16 %v322
  %v1087 = vunpack.c.l.b16 %v323
  %v1088 = vunpack.c.h.b16 %v323
  %v1089 = vunpack.c.l.b16 %v324
  %v1090 = vunpack.c.h.b16 %v324
  %v1091 = vunpack.c.l.b16 %v325
  %v1092 = vunpack.c.h.b16 %v325
  %v1093 = vunpack.c.l.b16 %v326
  %v1094 = vunpack.c.h.b16 %v326
  %v1095 = vunpack.c.l.b16 %v327
  %v1096 = vunpack.c.h.b16 %v327
  %v1097 = vunpack.c.l.b16 %v328
  %v1098 = vunpack.c.h.b16 %v328
  %v1099 = vunpack.c.l.b16 %v329
  %v1100 = vunpack.c.h.b16 %v329
  %v1101 = vunpack.c.l.b16 %v330
  %v1102 = vunpack.c.h.b16 %v330
  %v1103 = vunpack.c.l.b16 %v331
  %v1104 = vunpack.c.h.b16 %v331
  %v1105 = vunpack.c.l.b16 %v332
  %v1106 = vunpack.c.h.b16 %v332
  %v1107 = vunpack.c.l.b16 %v333
  %v1108 = vunpack.c.h.b16 %v333
  %v1109 = vunpack.c.l.b16 %v334
  %v1110 = vunpack.c.h.b16 %v334
  %v1111 = vunpack.c.l.b16 %v335
  %v1112 = vunpack.c.h.b16 %v335
  %v1113 = vunpack.c.l.b16 %v336
  %v1114 = vunpack.c.h.b16 %v336
  %v1115 = vunpack.c.l.b16 %v337
  %v1116 = vunpack.c.h.b16 %v337
  %v1117 = vunpack.c.l.b16 %v338
  %v1118 = vunpack.c.h.b16 %v338
  %v1119 = vunpack.c.l.b16 %v339
  %v1120 = vunpack.c.h.b16 %v339
  %v1121 = vunpack.c.l.b16 %v340
  %v1122 = vunpack.c.h.b16 %v340
  %v1123 = vunpack.c.l.b16 %v341
  %v1124 = vunpack.c.h.b16 %v341
  %v1125 = vunpack.c.l.b16 %v342
  %v1126 = vunpack.c.h.b16 %v342
  %v1127 = vunpack.c.l.b16 %v343
  %v1128 = vunpack.c.h.b16 %v343
  %v1129 = vunpack.c.l.b16 %v344
  %v1130 = vunpack.c.h.b16 %v344
  %v1131 = vunpack.c.l.b16 %v345
  %v1132 = vunpack.c.h.b16 %v345
  %v1133 = vunpack.c.l.b16 %v346
  %v1134 = vunpack.c.h.b16 %v346
  %v1135 = vunpack.c.l.b16 %v347
  %v1136 = vunpack.c.h.b16 %v347
  %v1137 = vunpack.c.l.b16 %v348
  %v1138 = vunpack.c.h.b16 %v348
  %v1139 = vpack.c.b16 %v631, %v627
  %v1140 = vpack.c.b16 %v632, %v628
  %v1141 = vpack.c.b16 %v633, %v629
  %v1142 = vpack.c.b16 %v634, %v630
  %v1143 = vpack.c.b16 %v639, %v635
  %v1144 = vpack.c.b16 %v640, %v636
  %v1145 = vpack.c.b16 %v641, %v637
  %v1146 = vpack.c.b16 %v642, %v638
  %v1147 = vpack.c.b16 %v647, %v643
  %v1148 = vpack.c.b16 %v648, %v644
  %v1149 = vpack.c.b16 %v649, %v645
  %v1150 = vpack.c.b16 %v650, %v646
  %v1151 = vpack.c.b16 %v655, %v651
  %v1152 = vpack.c.b16 %v656, %v652
  %v1153 = vpack.c.b16 %v657, %v653
  %v1154 = vpack.c.b16 %v658, %v654
  %v1155 = vpack.c.b16 %v663, %v659
  %v1156 = vpack.c.b16 %v664, %v660
  %v1157 = vpack.c.b16 %v665, %v661
  %v1158 = vpack.c.b16 %v666, %v662
  %v1159 = vpack.c.b16 %v671, %v667
  %v1160 = vpack.c.b16 %v672, %v668
  %v1161 = vpack.c.b16 %v673, %v669
  %v1162 = vpack.c.b16 %v674, %v670
  %v1163 = vpack.c.b16 %v679, %v675
  %v1164 = vpack.c.b16 %v680, %v676
  %v1165 = vpack.c.b16 %v681, %v677
  %v1166 = vpack.c.b16 %v682, %v678
  %v1167 = vpack.c.b16 %v687, %v683
  %v1168 = vpack.c.b16 %v688, %v684
  %v1169 = vpack.c.b16 %v689, %v685
  %v1170 = vpack.c.b16 %v690, %v686
  %v1171 = vpack.c.b16 %v695, %v691
  %v1172 = vpack.c.b16 %v696, %v692
  %v1173 = vpack.c.b16 %v697, %v693
  %v1174 = vpack.c.b16 %v698, %v694
  %v1175 = vpack.c.b16 %v703, %v699
  %v1176 = vpack.c.b16 %v704, %v700
  %v1177 = vpack.c.b16 %v705, %v701
  %v1178 = vpack.c.b16 %v706, %v702
  %v1179 = vpack.c.b16 %v711, %v707
  %v1180 = vpack.c.b16 %v712, %v708
  %v1181 = vpack.c.b16 %v713, %v709
  %v1182 = vpack.c.b16 %v714, %v710
  %v1183 = vpack.c.b16 %v719, %v715
  %v1184 = vpack.c.b16 %v720, %v716
  %v1185 = vpack.c.b16 %v721, %v717
  %v1186 = vpack.c.b16 %v722, %v718
  %v1187 = vpack.c.b16 %v727, %v723
  %v1188 = vpack.c.b16 %v728, %v724
  %v1189 = vpack.c.b16 %v729, %v725
  %v1190 = vpack.c.b16 %v730, %v726
  %v1191 = vpack.c.b16 %v735, %v731
  %v1192 = vpack.c.b16 %v736, %v732
  %v1193 = vpack.c.b16 %v737, %v733
  %v1194 = vpack.c.b16 %v738, %v734
  %v1195 = vpack.c.b16 %v743, %v739
  %v1196 = vpack.c.b16 %v744, %v740
  %v1197 = vpack.c.b16 %v745, %v741
  %v1198 = vpack.c.b16 %v746, %v742
  %v1199 = vpack.c.b16 %v751, %v747
  %v1200 = vpack.c.b16 %v752, %v748
  %v1201 = vpack.c.b16 %v753, %v749
  %v1202 = vpack.c.b16 %v754, %v750
  %v1203 = vpack.c.b16 %v759, %v755
  %v1204 = vpack.c.b16 %v760, %v756
  %v1205 = vpack.c.b16 %v761, %v757
  %v1206 = vpack.c.b16 %v762, %v758
  %v1207 = vpack.c.b16 %v767, %v763
  %v1208 = vpack.c.b16 %v768, %v764
  %v1209 = vpack.c.b16 %v769, %v765
  %v1210 = vpack.c.b16 %v770, %v766
  %v1211 = vpack.c.b16 %v775, %v771
  %v1212 = vpack.c.b16 %v776, %v772
  %v1213 = vpack.c.b16 %v777, %v773
  %v1214 = vpack.c.b16 %v778, %v774
  %v1215 = vpack.c.b16 %v783, %v779
  %v1216 = vpack.c.b16 %v784, %v780
  %v1217 = vpack.c.b16 %v785, %v781
  %v1218 = vpack.c.b16 %v786, %v782
  %v1219 = vpack.c.b16 %v791, %v787
  %v1220 = vpack.c.b16 %v792, %v788
  %v1221 = vpack.c.b16 %v793, %v789
  %v1222 = vpack.c.b16 %v794, %v790
  %v1223 = vpack.c.b16 %v799, %v795
  %v1224 = vpack.c.b16 %v800, %v796
  %v1225 = vpack.c.b16 %v801, %v797
  %v1226 = vpack.c.b16 %v802, %v798
  %v1227 = vpack.c.b16 %v807, %v803
  %v1228 = vpack.c.b16 %v808, %v804
  %v1229 = vpack.c.b16 %v809, %v805
  %v1230 = vpack.c.b16 %v810, %v806
  %v1231 = vpack.c.b16 %v815, %v811
  %v1232 = vpack.c.b16 %v816, %v812
  %v1233 = vpack.c.b16 %v817, %v813
  %v1234 = vpack.c.b16 %v818, %v814
  %v1235 = vpack.c.b16 %v823, %v819
  %v1236 = vpack.c.b16 %v824, %v820
  %v1237 = vpack.c.b16 %v825, %v821
  %v1238 = vpack.c.b16 %v826, %v822
  %v1239 = vpack.c.b16 %v831, %v827
  %v1240 = vpack.c.b16 %v832, %v828
  %v1241 = vpack.c.b16 %v833, %v829
  %v1242 = vpack.c.b16 %v834, %v830
  %v1243 = vpack.c.b16 %v839, %v835
  %v1244 = vpack.c.b16 %v840, %v836
  %v1245 = vpack.c.b16 %v841, %v837
  %v1246 = vpack.c.b16 %v842, %v838
  %v1247 = vpack.c.b16 %v847, %v843
  %v1248 = vpack.c.b16 %v848, %v844
  %v1249 = vpack.c.b16 %v849, %v845
  %v1250 = vpack.c.b16 %v850, %v846
  %v1251 = vpack.c.b16 %v855, %v851
  %v1252 = vpack.c.b16 %v856, %v852
  %v1253 = vpack.c.b16 %v857, %v853
  %v1254 = vpack.c.b16 %v858, %v854
  %v1255 = vpack.c.b16 %v863, %v859
  %v1256 = vpack.c.b16 %v864, %v860
  %v1257 = vpack.c.b16 %v865, %v861
  %v1258 = vpack.c.b16 %v866, %v862
  %v1259 = vpack.c.b16 %v871, %v867
  %v1260 = vpack.c.b16 %v872, %v868
  %v1261 = vpack.c.b16 %v873, %v869
  %v1262 = vpack.c.b16 %v874, %v870
  %v1263 = vpack.c.b16 %v879, %v875
  %v1264 = vpack.c.b16 %v880, %v876
  %v1265 = vpack.c.b16 %v881, %v877
  %v1266 = vpack.c.b16 %v882, %v878
  %v1267 = vpack.c.b16 %v887, %v883
  %v1268 = vpack.c.b16 %v888, %v884
  %v1269 = vpack.c.b16 %v889, %v885
  %v1270 = vpack.c.b16 %v890, %v886
  %v1271 = vpack.c.b16 %v895, %v891
  %v1272 = vpack.c.b16 %v896, %v892
  %v1273 = vpack.c.b16 %v897, %v893
  %v1274 = vpack.c.b16 %v898, %v894
  %v1275 = vpack.c.b16 %v903, %v899
  %v1276 = vpack.c.b16 %v904, %v900
  %v1277 = vpack.c.b16 %v905, %v901
  %v1278 = vpack.c.b16 %v906, %v902
  %v1279 = vpack.c.b16 %v911, %v907
  %v1280 = vpack.c.b16 %v912, %v908
  %v1281 = vpack.c.b16 %v913, %v909
  %v1282 = vpack.c.b16 %v914, %v910
  %v1283 = vpack.c.b16 %v919, %v915
  %v1284 = vpack.c.b16 %v920, %v916
  %v1285 = vpack.c.b16 %v921, %v917
  %v1286 = vpack.c.b16 %v922, %v918
  %v1287 = vpack.c.b16 %v927, %v923
  %v1288 = vpack.c.b16 %v928, %v924
  %v1289 = vpack.c.b16 %v929, %v925
  %v1290 = vpack.c.b16 %v930, %v926
  %v1291 = vpack.c.b16 %v935, %v931
  %v1292 = vpack.c.b16 %v936, %v932
  %v1293 = vpack.c.b16 %v937, %v933
  %v1294 = vpack.c.b16 %v938, %v934
  %v1295 = vpack.c.b16 %v943, %v939
  %v1296 = vpack.c.b16 %v944, %v940
  %v1297 = vpack.c.b16 %v945, %v941
  %v1298 = vpack.c.b16 %v946, %v942
  %v1299 = vpack.c.b16 %v951, %v947
  %v1300 = vpack.c.b16 %v952, %v948
  %v1301 = vpack.c.b16 %v953, %v949
  %v1302 = vpack.c.b16 %v954, %v950
  %v1303 = vpack.c.b16 %v959, %v955
  %v1304 = vpack.c.b16 %v960, %v956
  %v1305 = vpack.c.b16 %v961, %v957
  %v1306 = vpack.c.b16 %v962, %v958
  %v1307 = vpack.c.b16 %v967, %v963
  %v1308 = vpack.c.b16 %v968, %v964
  %v1309 = vpack.c.b16 %v969, %v965
  %v1310 = vpack.c.b16 %v970, %v966
  %v1311 = vpack.c.b16 %v975, %v971
  %v1312 = vpack.c.b16 %v976, %v972
  %v1313 = vpack.c.b16 %v977, %v973
  %v1314 = vpack.c.b16 %v978, %v974
  %v1315 = vpack.c.b16 %v983, %v979
  %v1316 = vpack.c.b16 %v984, %v980
  %v1317 = vpack.c.b16 %v985, %v981
  %v1318 = vpack.c.b16 %v986, %v982
  %v1319 = vpack.c.b16 %v991, %v987
  %v1320 = vpack.c.b16 %v992, %v988
  %v1321 = vpack.c.b16 %v993, %v989
  %v1322 = vpack.c.b16 %v994, %v990
  %v1323 = vpack.c.b16 %v999, %v995
  %v1324 = vpack.c.b16 %v1000, %v996
  %v1325 = vpack.c.b16 %v1001, %v997
  %v1326 = vpack.c.b16 %v1002, %v998
  %v1327 = vpack.c.b16 %v1007, %v1003
  %v1328 = vpack.c.b16 %v1008, %v1004
  %v1329 = vpack.c.b16 %v1009, %v1005
  %v1330 = vpack.c.b16 %v1010, %v1006
  %v1331 = vpack.c.b16 %v1015, %v1011
  %v1332 = vpack.c.b16 %v1016, %v1012
  %v1333 = vpack.c.b16 %v1017, %v1013
  %v1334 = vpack.c.b16 %v1018, %v1014
  %v1335 = vpack.c.b16 %v1023, %v1019
  %v1336 = vpack.c.b16 %v1024, %v1020
  %v1337 = vpack.c.b16 %v1025, %v1021
  %v1338 = vpack.c.b16 %v1026, %v1022
  %v1339 = vpack.c.b16 %v1031, %v1027
  %v1340 = vpack.c.b16 %v1032, %v1028
  %v1341 = vpack.c.b16 %v1033, %v1029
  %v1342 = vpack.c.b16 %v1034, %v1030
  %v1343 = vpack.c.b16 %v1039, %v1035
  %v1344 = vpack.c.b16 %v1040, %v1036
  %v1345 = vpack.c.b16 %v1041, %v1037
  %v1346 = vpack.c.b16 %v1042, %v1038
  %v1347 = vpack.c.b16 %v1047, %v1043
  %v1348 = vpack.c.b16 %v1048, %v1044
  %v1349 = vpack.c.b16 %v1049, %v1045
  %v1350 = vpack.c.b16 %v1050, %v1046
  %v1351 = vpack.c.b16 %v1055, %v1051
  %v1352 = vpack.c.b16 %v1056, %v1052
  %v1353 = vpack.c.b16 %v1057, %v1053
  %v1354 = vpack.c.b16 %v1058, %v1054
  %v1355 = vpack.c.b16 %v1063, %v1059
  %v1356 = vpack.c.b16 %v1064, %v1060
  %v1357 = vpack.c.b16 %v1065, %v1061
  %v1358 = vpack.c.b16 %v1066, %v1062
  %v1359 = vpack.c.b16 %v1071, %v1067
  %v1360 = vpack.c.b16 %v1072, %v1068
  %v1361 = vpack.c.b16 %v1073, %v1069
  %v1362 = vpack.c.b16 %v1074, %v1070
  %v1363 = vpack.c.b16 %v1079, %v1075
  %v1364 = vpack.c.b16 %v1080, %v1076
  %v1365 = vpack.c.b16 %v1081, %v1077
  %v1366 = vpack.c.b16 %v1082, %v1078
  %v1367 = vpack.c.b16 %v1087, %v1083
  %v1368 = vpack.c.b16 %v1088, %v1084
  %v1369 = vpack.c.b16 %v1089, %v1085
  %v1370 = vpack.c.b16 %v1090, %v1086
  %v1371 = vpack.c.b16 %v1095, %v1091
  %v1372 = vpack.c.b16 %v1096, %v1092
  %v1373 = vpack.c.b16 %v1097, %v1093
  %v1374 = vpack.c.b16 %v1098, %v1094
  %v1375 = vpack.c.b16 %v1103, %v1099
  %v1376 = vpack.c.b16 %v1104, %v1100
  %v1377 = vpack.c.b16 %v1105, %v1101
  %v1378 = vpack.c.b16 %v1106, %v1102
  %v1379 = vpack.c.b16 %v1111, %v1107
  %v1380 = vpack.c.b16 %v1112, %v1108
  %v1381 = vpack.c.b16 %v1113, %v1109
  %v1382 = vpack.c.b16 %v1114, %v1110
  %v1383 = vpack.c.b16 %v1119, %v1115
  %v1384 = vpack.c.b16 %v1120, %v1116
  %v1385 = vpack.c.b16 %v1121, %v1117
  %v1386 = vpack.c.b16 %v1122, %v1118
  %v1387 = vpack.c.b16 %v1127, %v1123
  %v1388 = vpack.c.b16 %v1128, %v1124
  %v1389 = vpack.c.b16 %v1129, %v1125
  %v1390 = vpack.c.b16 %v1130, %v1126
  %v1391 = vpack.c.b16 %v1135, %v1131
  %v1392 = vpack.c.b16 %v1136, %v1132
  %v1393 = vpack.c.b16 %v1137, %v1133
  %v1394 = vpack.c.b16 %v1138, %v1134
  %1651 = vmatprep.subr.bf16.mxu0 %v1168
  %1652 = vmatpush1.bf16.msra.mxu0 %v1167
  %1653 = vmatprep.subr.bf16.mxu0 %v1164
  %1654 = vmatpush1.bf16.msra.mxu0 %v1163
  %1655 = vmatprep.subr.bf16.mxu0 %v1160
  %1656 = vmatpush1.bf16.msra.mxu0 %v1159
  %1657 = vmatprep.subr.bf16.mxu0 %v1156
  %1658 = vmatpush1.bf16.msra.mxu0 %v1155
  %1659 = vmatprep.subr.bf16.mxu0 %v1152
  %1660 = vmatpush1.bf16.msra.mxu0 %v1151
  %1661 = vmatprep.subr.bf16.mxu0 %v1148
  %1662 = vmatpush1.bf16.msra.mxu0 %v1147
  %1663 = vmatprep.subr.bf16.mxu0 %v1144
  %1664 = vmatpush1.bf16.msra.mxu0 %v1143
  %1665 = vmatprep.subr.bf16.mxu0 %v1140
  %1666 = vmatpush1.bf16.msra.mxu0 %v1139
  %1667 = vmatprep.subr.bf16.mxu0 %v1200
  %1668 = vmatpush2.bf16.msra.mxu0 %v1199
  %1669 = vmatprep.subr.bf16.mxu0 %v1196
  %1670 = vmatpush2.bf16.msra.mxu0 %v1195
  %1671 = vmatprep.subr.bf16.mxu0 %v1192
  %1672 = vmatpush2.bf16.msra.mxu0 %v1191
  %1673 = vmatprep.subr.bf16.mxu0 %v1188
  %1674 = vmatpush2.bf16.msra.mxu0 %v1187
  %1675 = vmatprep.subr.bf16.mxu0 %v1184
  %1676 = vmatpush2.bf16.msra.mxu0 %v1183
  %1677 = vmatprep.subr.bf16.mxu0 %v1180
  %1678 = vmatpush2.bf16.msra.mxu0 %v1179
  %1679 = vmatprep.subr.bf16.mxu0 %v1176
  %1680 = vmatpush2.bf16.msra.mxu0 %v1175
  %1681 = vmatprep.subr.bf16.mxu0 %v1172
  %1682 = vmatpush2.bf16.msra.mxu0 %v1171
  %1683 = vmatprep.mubr.bf16.mxu0 %v86
  %1684 = vmatmul.mubr.bf16.gmra.mxu0 %v85
  %v1685 = vpop.f32.mrf.mxu0
  %v1686 = vadd.f32 %v354, %v1685
  %v1687 = vpop.f32.mrf.mxu0
  %v1688 = vadd.f32 %v358, %v1687
  %v1689 = vpop.f32.mrf.mxu0
  %v1690 = vpop.f32.mrf.mxu0
  %1691 = vdwg.mxu0
  %1692 = vmatprep.subr.bf16.mxu0 %v1232
  %1693 = vmatpush1.bf16.msra.mxu0 %v1231
  %1694 = vmatprep.subr.bf16.mxu0 %v1228
  %1695 = vmatpush1.bf16.msra.mxu0 %v1227
  %1696 = vmatprep.subr.bf16.mxu0 %v1224
  %1697 = vmatpush1.bf16.msra.mxu0 %v1223
  %1698 = vmatprep.subr.bf16.mxu0 %v1220
  %1699 = vmatpush1.bf16.msra.mxu0 %v1219
  %1700 = vmatprep.subr.bf16.mxu0 %v1216
  %1701 = vmatpush1.bf16.msra.mxu0 %v1215
  %1702 = vmatprep.subr.bf16.mxu0 %v1212
  %1703 = vmatpush1.bf16.msra.mxu0 %v1211
  %1704 = vmatprep.subr.bf16.mxu0 %v1208
  %1705 = vmatpush1.bf16.msra.mxu0 %v1207
  %1706 = vmatprep.subr.bf16.mxu0 %v1204
  %1707 = vmatpush1.bf16.msra.mxu0 %v1203
  %1708 = vmatprep.subr.bf16.mxu0 %v1264
  %1709 = vmatpush2.bf16.msra.mxu0 %v1263
  %1710 = vmatprep.subr.bf16.mxu0 %v1260
  %1711 = vmatpush2.bf16.msra.mxu0 %v1259
  %1712 = vmatprep.subr.bf16.mxu0 %v1256
  %1713 = vmatpush2.bf16.msra.mxu0 %v1255
  %1714 = vmatprep.subr.bf16.mxu0 %v1252
  %1715 = vmatpush2.bf16.msra.mxu0 %v1251
  %1716 = vmatprep.subr.bf16.mxu0 %v1248
  %1717 = vmatpush2.bf16.msra.mxu0 %v1247
  %1718 = vmatprep.subr.bf16.mxu0 %v1244
  %1719 = vmatpush2.bf16.msra.mxu0 %v1243
  %1720 = vmatprep.subr.bf16.mxu0 %v1240
  %1721 = vmatpush2.bf16.msra.mxu0 %v1239
  %1722 = vmatprep.subr.bf16.mxu0 %v1236
  %1723 = vmatpush2.bf16.msra.mxu0 %v1235
  %1724 = vmatprep.mubr.bf16.mxu0 %v88
  %1725 = vmatmul.mubr.bf16.gmra.mxu0 %v87
  %v1726 = vpop.f32.mrf.mxu0
  %v1727 = vadd.f32 %v1686, %v1726
  %v1728 = vpop.f32.mrf.mxu0
  %v1729 = vadd.f32 %v1688, %v1728
  %v1730 = vpop.f32.mrf.mxu0
  %v1731 = vpop.f32.mrf.mxu0
  %1732 = vdwg.mxu0
  %1733 = vmatprep.subr.bf16.mxu0 %v1296
  %1734 = vmatpush1.bf16.msra.mxu0 %v1295
  %1735 = vmatprep.subr.bf16.mxu0 %v1292
  %1736 = vmatpush1.bf16.msra.mxu0 %v1291
  %1737 = vmatprep.subr.bf16.mxu0 %v1288
  %1738 = vmatpush1.bf16.msra.mxu0 %v1287
  %1739 = vmatprep.subr.bf16.mxu0 %v1284
  %1740 = vmatpush1.bf16.msra.mxu0 %v1283
  %1741 = vmatprep.subr.bf16.mxu0 %v1280
  %1742 = vmatpush1.bf16.msra.mxu0 %v1279
  %1743 = vmatprep.subr.bf16.mxu0 %v1276
  %1744 = vmatpush1.bf16.msra.mxu0 %v1275
  %1745 = vmatprep.subr.bf16.mxu0 %v1272
  %1746 = vmatpush1.bf16.msra.mxu0 %v1271
  %1747 = vmatprep.subr.bf16.mxu0 %v1268
  %1748 = vmatpush1.bf16.msra.mxu0 %v1267
  %1749 = vmatprep.subr.bf16.mxu0 %v1328
  %1750 = vmatpush2.bf16.msra.mxu0 %v1327
  %1751 = vmatprep.subr.bf16.mxu0 %v1324
  %1752 = vmatpush2.bf16.msra.mxu0 %v1323
  %1753 = vmatprep.subr.bf16.mxu0 %v1320
  %1754 = vmatpush2.bf16.msra.mxu0 %v1319
  %1755 = vmatprep.subr.bf16.mxu0 %v1316
  %1756 = vmatpush2.bf16.msra.mxu0 %v1315
  %1757 = vmatprep.subr.bf16.mxu0 %v1312
  %1758 = vmatpush2.bf16.msra.mxu0 %v1311
  %1759 = vmatprep.subr.bf16.mxu0 %v1308
  %1760 = vmatpush2.bf16.msra.mxu0 %v1307
  %1761 = vmatprep.subr.bf16.mxu0 %v1304
  %1762 = vmatpush2.bf16.msra.mxu0 %v1303
  %1763 = vmatprep.subr.bf16.mxu0 %v1300
  %1764 = vmatpush2.bf16.msra.mxu0 %v1299
  %1765 = vmatprep.mubr.bf16.mxu0 %v90
  %1766 = vmatmul.mubr.bf16.gmra.mxu0 %v89
  %v1767 = vpop.f32.mrf.mxu0
  %v1768 = vadd.f32 %v1727, %v1767
  %v1769 = vpop.f32.mrf.mxu0
  %v1770 = vadd.f32 %v1729, %v1769
  %v1771 = vpop.f32.mrf.mxu0
  %v1772 = vpop.f32.mrf.mxu0
  %1773 = vdwg.mxu0
  %1774 = vmatprep.subr.bf16.mxu0 %v1360
  %1775 = vmatpush1.bf16.msra.mxu0 %v1359
  %1776 = vmatprep.subr.bf16.mxu0 %v1356
  %1777 = vmatpush1.bf16.msra.mxu0 %v1355
  %1778 = vmatprep.subr.bf16.mxu0 %v1352
  %1779 = vmatpush1.bf16.msra.mxu0 %v1351
  %1780 = vmatprep.subr.bf16.mxu0 %v1348
  %1781 = vmatpush1.bf16.msra.mxu0 %v1347
  %1782 = vmatprep.subr.bf16.mxu0 %v1344
  %1783 = vmatpush1.bf16.msra.mxu0 %v1343
  %1784 = vmatprep.subr.bf16.mxu0 %v1340
  %1785 = vmatpush1.bf16.msra.mxu0 %v1339
  %1786 = vmatprep.subr.bf16.mxu0 %v1336
  %1787 = vmatpush1.bf16.msra.mxu0 %v1335
  %1788 = vmatprep.subr.bf16.mxu0 %v1332
  %1789 = vmatpush1.bf16.msra.mxu0 %v1331
  %1790 = vmatprep.subr.bf16.mxu0 %v1392
  %1791 = vmatpush2.bf16.msra.mxu0 %v1391
  %1792 = vmatprep.subr.bf16.mxu0 %v1388
  %1793 = vmatpush2.bf16.msra.mxu0 %v1387
  %1794 = vmatprep.subr.bf16.mxu0 %v1384
  %1795 = vmatpush2.bf16.msra.mxu0 %v1383
  %1796 = vmatprep.subr.bf16.mxu0 %v1380
  %1797 = vmatpush2.bf16.msra.mxu0 %v1379
  %1798 = vmatprep.subr.bf16.mxu0 %v1376
  %1799 = vmatpush2.bf16.msra.mxu0 %v1375
  %1800 = vmatprep.subr.bf16.mxu0 %v1372
  %1801 = vmatpush2.bf16.msra.mxu0 %v1371
  %1802 = vmatprep.subr.bf16.mxu0 %v1368
  %1803 = vmatpush2.bf16.msra.mxu0 %v1367
  %1804 = vmatprep.subr.bf16.mxu0 %v1364
  %1805 = vmatpush2.bf16.msra.mxu0 %v1363
  %1806 = vmatprep.mubr.bf16.mxu0 %v92
  %1807 = vmatmul.mubr.bf16.gmra.mxu0 %v91
  %v1808 = vpop.f32.mrf.mxu0
  %v1809 = vadd.f32 %v1768, %v1808
  %v1810 = vpop.f32.mrf.mxu0
  %v1811 = vadd.f32 %v1770, %v1810
  %v1812 = vpop.f32.mrf.mxu0
  %v1813 = vpop.f32.mrf.mxu0
  %1814 = vdwg.mxu0
  %1815 = vmatprep.subr.bf16.mxu0 %v1170
  %1816 = vmatpush1.bf16.msra.mxu0 %v1169
  %1817 = vmatprep.subr.bf16.mxu0 %v1166
  %1818 = vmatpush1.bf16.msra.mxu0 %v1165
  %1819 = vmatprep.subr.bf16.mxu0 %v1162
  %1820 = vmatpush1.bf16.msra.mxu0 %v1161
  %1821 = vmatprep.subr.bf16.mxu0 %v1158
  %1822 = vmatpush1.bf16.msra.mxu0 %v1157
  %1823 = vmatprep.subr.bf16.mxu0 %v1154
  %1824 = vmatpush1.bf16.msra.mxu0 %v1153
  %1825 = vmatprep.subr.bf16.mxu0 %v1150
  %1826 = vmatpush1.bf16.msra.mxu0 %v1149
  %1827 = vmatprep.subr.bf16.mxu0 %v1146
  %1828 = vmatpush1.bf16.msra.mxu0 %v1145
  %1829 = vmatprep.subr.bf16.mxu0 %v1142
  %1830 = vmatpush1.bf16.msra.mxu0 %v1141
  %1831 = vmatprep.subr.bf16.mxu0 %v1202
  %1832 = vmatpush2.bf16.msra.mxu0 %v1201
  %1833 = vmatprep.subr.bf16.mxu0 %v1198
  %1834 = vmatpush2.bf16.msra.mxu0 %v1197
  %1835 = vmatprep.subr.bf16.mxu0 %v1194
  %1836 = vmatpush2.bf16.msra.mxu0 %v1193
  %1837 = vmatprep.subr.bf16.mxu0 %v1190
  %1838 = vmatpush2.bf16.msra.mxu0 %v1189
  %1839 = vmatprep.subr.bf16.mxu0 %v1186
  %1840 = vmatpush2.bf16.msra.mxu0 %v1185
  %1841 = vmatprep.subr.bf16.mxu0 %v1182
  %1842 = vmatpush2.bf16.msra.mxu0 %v1181
  %1843 = vmatprep.subr.bf16.mxu0 %v1178
  %1844 = vmatpush2.bf16.msra.mxu0 %v1177
  %1845 = vmatprep.subr.bf16.mxu0 %v1174
  %1846 = vmatpush2.bf16.msra.mxu0 %v1173
  %1847 = vmatprep.mubr.bf16.mxu0 %v86
  %1848 = vmatmul.mubr.bf16.gmra.mxu0 %v85
  %v1849 = vpop.f32.mrf.mxu0
  %v1850 = vadd.f32 %v362, %v1849
  %v1851 = vpop.f32.mrf.mxu0
  %v1852 = vadd.f32 %v366, %v1851
  %v1853 = vpop.f32.mrf.mxu0
  %v1854 = vpop.f32.mrf.mxu0
  %1855 = vdwg.mxu0
  %1856 = vmatprep.subr.bf16.mxu0 %v1234
  %1857 = vmatpush1.bf16.msra.mxu0 %v1233
  %1858 = vmatprep.subr.bf16.mxu0 %v1230
  %1859 = vmatpush1.bf16.msra.mxu0 %v1229
  %1860 = vmatprep.subr.bf16.mxu0 %v1226
  %1861 = vmatpush1.bf16.msra.mxu0 %v1225
  %1862 = vmatprep.subr.bf16.mxu0 %v1222
  %1863 = vmatpush1.bf16.msra.mxu0 %v1221
  %1864 = vmatprep.subr.bf16.mxu0 %v1218
  %1865 = vmatpush1.bf16.msra.mxu0 %v1217
  %1866 = vmatprep.subr.bf16.mxu0 %v1214
  %1867 = vmatpush1.bf16.msra.mxu0 %v1213
  %1868 = vmatprep.subr.bf16.mxu0 %v1210
  %1869 = vmatpush1.bf16.msra.mxu0 %v1209
  %1870 = vmatprep.subr.bf16.mxu0 %v1206
  %1871 = vmatpush1.bf16.msra.mxu0 %v1205
  %1872 = vmatprep.subr.bf16.mxu0 %v1266
  %1873 = vmatpush2.bf16.msra.mxu0 %v1265
  %1874 = vmatprep.subr.bf16.mxu0 %v1262
  %1875 = vmatpush2.bf16.msra.mxu0 %v1261
  %1876 = vmatprep.subr.bf16.mxu0 %v1258
  %1877 = vmatpush2.bf16.msra.mxu0 %v1257
  %1878 = vmatprep.subr.bf16.mxu0 %v1254
  %1879 = vmatpush2.bf16.msra.mxu0 %v1253
  %1880 = vmatprep.subr.bf16.mxu0 %v1250
  %1881 = vmatpush2.bf16.msra.mxu0 %v1249
  %1882 = vmatprep.subr.bf16.mxu0 %v1246
  %1883 = vmatpush2.bf16.msra.mxu0 %v1245
  %1884 = vmatprep.subr.bf16.mxu0 %v1242
  %1885 = vmatpush2.bf16.msra.mxu0 %v1241
  %1886 = vmatprep.subr.bf16.mxu0 %v1238
  %1887 = vmatpush2.bf16.msra.mxu0 %v1237
  %1888 = vmatprep.mubr.bf16.mxu0 %v88
  %1889 = vmatmul.mubr.bf16.gmra.mxu0 %v87
  %v1890 = vpop.f32.mrf.mxu0
  %v1891 = vadd.f32 %v1850, %v1890
  %v1892 = vpop.f32.mrf.mxu0
  %v1893 = vadd.f32 %v1852, %v1892
  %v1894 = vpop.f32.mrf.mxu0
  %v1895 = vpop.f32.mrf.mxu0
  %1896 = vdwg.mxu0
  %1897 = vmatprep.subr.bf16.mxu0 %v1298
  %1898 = vmatpush1.bf16.msra.mxu0 %v1297
  %1899 = vmatprep.subr.bf16.mxu0 %v1294
  %1900 = vmatpush1.bf16.msra.mxu0 %v1293
  %1901 = vmatprep.subr.bf16.mxu0 %v1290
  %1902 = vmatpush1.bf16.msra.mxu0 %v1289
  %1903 = vmatprep.subr.bf16.mxu0 %v1286
  %1904 = vmatpush1.bf16.msra.mxu0 %v1285
  %1905 = vmatprep.subr.bf16.mxu0 %v1282
  %1906 = vmatpush1.bf16.msra.mxu0 %v1281
  %1907 = vmatprep.subr.bf16.mxu0 %v1278
  %1908 = vmatpush1.bf16.msra.mxu0 %v1277
  %1909 = vmatprep.subr.bf16.mxu0 %v1274
  %1910 = vmatpush1.bf16.msra.mxu0 %v1273
  %1911 = vmatprep.subr.bf16.mxu0 %v1270
  %1912 = vmatpush1.bf16.msra.mxu0 %v1269
  %1913 = vmatprep.subr.bf16.mxu0 %v1330
  %1914 = vmatpush2.bf16.msra.mxu0 %v1329
  %1915 = vmatprep.subr.bf16.mxu0 %v1326
  %1916 = vmatpush2.bf16.msra.mxu0 %v1325
  %1917 = vmatprep.subr.bf16.mxu0 %v1322
  %1918 = vmatpush2.bf16.msra.mxu0 %v1321
  %1919 = vmatprep.subr.bf16.mxu0 %v1318
  %1920 = vmatpush2.bf16.msra.mxu0 %v1317
  %1921 = vmatprep.subr.bf16.mxu0 %v1314
  %1922 = vmatpush2.bf16.msra.mxu0 %v1313
  %1923 = vmatprep.subr.bf16.mxu0 %v1310
  %1924 = vmatpush2.bf16.msra.mxu0 %v1309
  %1925 = vmatprep.subr.bf16.mxu0 %v1306
  %1926 = vmatpush2.bf16.msra.mxu0 %v1305
  %1927 = vmatprep.subr.bf16.mxu0 %v1302
  %1928 = vmatpush2.bf16.msra.mxu0 %v1301
  %1929 = vmatprep.mubr.bf16.mxu0 %v90
  %1930 = vmatmul.mubr.bf16.gmra.mxu0 %v89
  %v1931 = vpop.f32.mrf.mxu0
  %v1932 = vadd.f32 %v1891, %v1931
  %v1933 = vpop.f32.mrf.mxu0
  %v1934 = vadd.f32 %v1893, %v1933
  %v1935 = vpop.f32.mrf.mxu0
  %v1936 = vpop.f32.mrf.mxu0
  %1937 = vdwg.mxu0
  %1938 = vmatprep.subr.bf16.mxu0 %v1362
  %1939 = vmatpush1.bf16.msra.mxu0 %v1361
  %1940 = vmatprep.subr.bf16.mxu0 %v1358
  %1941 = vmatpush1.bf16.msra.mxu0 %v1357
  %1942 = vmatprep.subr.bf16.mxu0 %v1354
  %1943 = vmatpush1.bf16.msra.mxu0 %v1353
  %1944 = vmatprep.subr.bf16.mxu0 %v1350
  %1945 = vmatpush1.bf16.msra.mxu0 %v1349
  %1946 = vmatprep.subr.bf16.mxu0 %v1346
  %1947 = vmatpush1.bf16.msra.mxu0 %v1345
  %1948 = vmatprep.subr.bf16.mxu0 %v1342
  %1949 = vmatpush1.bf16.msra.mxu0 %v1341
  %1950 = vmatprep.subr.bf16.mxu0 %v1338
  %1951 = vmatpush1.bf16.msra.mxu0 %v1337
  %1952 = vmatprep.subr.bf16.mxu0 %v1334
  %1953 = vmatpush1.bf16.msra.mxu0 %v1333
  %1954 = vmatprep.subr.bf16.mxu0 %v1394
  %1955 = vmatpush2.bf16.msra.mxu0 %v1393
  %1956 = vmatprep.subr.bf16.mxu0 %v1390
  %1957 = vmatpush2.bf16.msra.mxu0 %v1389
  %1958 = vmatprep.subr.bf16.mxu0 %v1386
  %1959 = vmatpush2.bf16.msra.mxu0 %v1385
  %1960 = vmatprep.subr.bf16.mxu0 %v1382
  %1961 = vmatpush2.bf16.msra.mxu0 %v1381
  %1962 = vmatprep.subr.bf16.mxu0 %v1378
  %1963 = vmatpush2.bf16.msra.mxu0 %v1377
  %1964 = vmatprep.subr.bf16.mxu0 %v1374
  %1965 = vmatpush2.bf16.msra.mxu0 %v1373
  %1966 = vmatprep.subr.bf16.mxu0 %v1370
  %1967 = vmatpush2.bf16.msra.mxu0 %v1369
  %1968 = vmatprep.subr.bf16.mxu0 %v1366
  %1969 = vmatpush2.bf16.msra.mxu0 %v1365
  %1970 = vmatprep.mubr.bf16.mxu0 %v92
  %1971 = vmatmul.mubr.bf16.gmra.mxu0 %v91
  %v1972 = vpop.f32.mrf.mxu0
  %v1973 = vadd.f32 %v1932, %v1972
  %v1974 = vpop.f32.mrf.mxu0
  %v1975 = vadd.f32 %v1934, %v1974
  %v1976 = vpop.f32.mrf.mxu0
  %v1977 = vpop.f32.mrf.mxu0
  %1978 = vdwg.mxu0
  %v1979 = vld [vmem:[%s3] sm:$0xf]
  %v1980 = vld [vmem:[%s4] sm:$0xf]
  %vm1981 = vcmask 1041408
  %v1982 = vsel %vm1981, %v1809, 0.0
  %v1983 = vrot.slane %v1982, 4
  %v1984 = vadd.f32 %v1982, %v1983
  %v1985 = vrot.slane %v1984, 2
  %v1986 = vadd.f32 %v1984, %v1985
  %v1987 = vrot.slane %v1986, 1
  %v1988 = vadd.f32 %v1986, %v1987
  %v1989 = vsel %vm1981, %v1811, 0.0
  %v1990 = vrot.slane %v1989, 4
  %v1991 = vadd.f32 %v1989, %v1990
  %v1992 = vrot.slane %v1991, 2
  %v1993 = vadd.f32 %v1991, %v1992
  %v1994 = vrot.slane %v1993, 1
  %v1995 = vadd.f32 %v1993, %v1994
  %v1996 = vsel %vm1981, %v1973, 0.0
  %v1997 = vrot.slane %v1996, 4
  %v1998 = vadd.f32 %v1996, %v1997
  %v1999 = vrot.slane %v1998, 2
  %v2000 = vadd.f32 %v1998, %v1999
  %v2001 = vrot.slane %v2000, 1
  %v2002 = vadd.f32 %v2000, %v2001
  %v2003 = vsel %vm1981, %v1975, 0.0
  %v2004 = vrot.slane %v2003, 4
  %v2005 = vadd.f32 %v2003, %v2004
  %v2006 = vrot.slane %v2005, 2
  %v2007 = vadd.f32 %v2005, %v2006
  %v2008 = vrot.slane %v2007, 1
  %v2009 = vadd.f32 %v2007, %v2008
  %v2010 = vrcp.pop 2.0
  %v2011 = vmul.f32 %v1988, %v2010
  %v2012 = vmul.f32 %v1995, %v2010
  %v2013 = vmul.f32 %v2002, %v2010
  %v2014 = vmul.f32 %v2009, %v2010
  %v2015 = vsub.f32 %v1809, %v2011
  %v2016 = vsub.f32 %v1811, %v2012
  %v2017 = vsub.f32 %v1973, %v2013
  %v2018 = vsub.f32 %v1975, %v2014
  %v2019 = vmul.f32 %v2015, %v2015
  %v2020 = vmul.f32 %v2016, %v2016
  %v2021 = vmul.f32 %v2017, %v2017
  %v2022 = vmul.f32 %v2018, %v2018
  %v2023 = vsel %vm1981, %v2019, 0.0
  %v2024 = vrot.slane %v2023, 4
  %v2025 = vadd.f32 %v2023, %v2024
  %v2026 = vrot.slane %v2025, 2
  %v2027 = vadd.f32 %v2025, %v2026
  %v2028 = vrot.slane %v2027, 1
  %v2029 = vadd.f32 %v2027, %v2028
  %v2030 = vsel %vm1981, %v2020, 0.0
  %v2031 = vrot.slane %v2030, 4
  %v2032 = vadd.f32 %v2030, %v2031
  %v2033 = vrot.slane %v2032, 2
  %v2034 = vadd.f32 %v2032, %v2033
  %v2035 = vrot.slane %v2034, 1
  %v2036 = vadd.f32 %v2034, %v2035
  %v2037 = vsel %vm1981, %v2021, 0.0
  %v2038 = vrot.slane %v2037, 4
  %v2039 = vadd.f32 %v2037, %v2038
  %v2040 = vrot.slane %v2039, 2
  %v2041 = vadd.f32 %v2039, %v2040
  %v2042 = vrot.slane %v2041, 1
  %v2043 = vadd.f32 %v2041, %v2042
  %v2044 = vsel %vm1981, %v2022, 0.0
  %v2045 = vrot.slane %v2044, 4
  %v2046 = vadd.f32 %v2044, %v2045
  %v2047 = vrot.slane %v2046, 2
  %v2048 = vadd.f32 %v2046, %v2047
  %v2049 = vrot.slane %v2048, 1
  %v2050 = vadd.f32 %v2048, %v2049
  %v2051 = vmul.f32 %v2029, %v2010
  %v2052 = vmul.f32 %v2036, %v2010
  %v2053 = vmul.f32 %v2043, %v2010
  %v2054 = vmul.f32 %v2050, %v2010
  %v2055 = vadd.f32 %v2051, 1e-05
  %v2056 = vadd.f32 %v2052, 1e-05
  %v2057 = vadd.f32 %v2053, 1e-05
  %v2058 = vadd.f32 %v2054, 1e-05
  %v2059 = vrsqrt.pop %v2055
  %v2060 = vrsqrt.pop %v2056
  %v2061 = vrsqrt.pop %v2057
  %v2062 = vrsqrt.pop %v2058
  %v2063 = vmul.f32 %v2015, %v2059
  %v2064 = vmul.f32 %v2016, %v2060
  %v2065 = vmul.f32 %v2017, %v2061
  %v2066 = vmul.f32 %v2018, %v2062
  %v2068 = vlaneseq
  %v2069 = vshrl.u32 %v2068, 7
  %v2070 = vsub.s32 0, %v2069
  %v2071 = vrot.slane %v1979, %v2070
  %v2072 = vlaneseq
  %v2073 = vshrl.u32 %v2072, 7
  %v2074 = vsub.s32 1, %v2073
  %v2075 = vrot.slane %v1979, %v2074
  %v2076 = vlaneseq
  %v2077 = vshrl.u32 %v2076, 7
  %v2078 = vsub.s32 2, %v2077
  %v2079 = vrot.slane %v1979, %v2078
  %v2080 = vlaneseq
  %v2081 = vshrl.u32 %v2080, 7
  %v2082 = vsub.s32 3, %v2081
  %v2083 = vrot.slane %v1979, %v2082
  %v2088 = vmul.f32 %v2063, %v2071
  %v2089 = vmul.f32 %v2064, %v2075
  %v2090 = vmul.f32 %v2065, %v2079
  %v2091 = vmul.f32 %v2066, %v2083
  %v2093 = vlaneseq
  %v2094 = vshrl.u32 %v2093, 7
  %v2095 = vsub.s32 0, %v2094
  %v2096 = vrot.slane %v1980, %v2095
  %v2097 = vlaneseq
  %v2098 = vshrl.u32 %v2097, 7
  %v2099 = vsub.s32 1, %v2098
  %v2100 = vrot.slane %v1980, %v2099
  %v2101 = vlaneseq
  %v2102 = vshrl.u32 %v2101, 7
  %v2103 = vsub.s32 2, %v2102
  %v2104 = vrot.slane %v1980, %v2103
  %v2105 = vlaneseq
  %v2106 = vshrl.u32 %v2105, 7
  %v2107 = vsub.s32 3, %v2106
  %v2108 = vrot.slane %v1980, %v2107
  %v2113 = vadd.f32 %v2088, %v2096
  %v2114 = vadd.f32 %v2089, %v2100
  %v2115 = vadd.f32 %v2090, %v2104
  %v2116 = vadd.f32 %v2091, %v2108
  %vm2117 = vcmp.gt.f32.partialorder %v2113, 0.0
  %vm2118 = vcmp.gt.f32.partialorder %v2114, 0.0
  %vm2119 = vcmp.gt.f32.partialorder %v2115, 0.0
  %vm2120 = vcmp.gt.f32.partialorder %v2116, 0.0
  %v2121 = vmul.f32 %v2113, 0.01
  %v2122 = vmul.f32 %v2114, 0.01
  %v2123 = vmul.f32 %v2115, 0.01
  %v2124 = vmul.f32 %v2116, 0.01
  %v2125 = vsel %vm2117, %v2113, %v2121
  %v2126 = vsel %vm2118, %v2114, %v2122
  %v2127 = vsel %vm2119, %v2115, %v2123
  %v2128 = vsel %vm2120, %v2116, %v2124
  %v2129 = vpack.c.bf16 %v2125, %v2125
  %v2130 = vpack.c.bf16 %v2126, %v2126
  %v2131 = vpack.c.bf16 %v2127, %v2127
  %v2132 = vpack.c.bf16 %v2128, %v2128
  %v2133 = vld [vmem:[%s5] sm:$0xff]
  %v2134 = vld [vmem:[%s5 + $0x8] sm:$0xff]
  %v2135 = vld [vmem:[%s5 + $0x10] sm:$0xff]
  %v2136 = vld [vmem:[%s5 + $0x18] sm:$0xff]
  %v2137 = vld [vmem:[%s5 + $0x20] sm:$0xff]
  %v2138 = vld [vmem:[%s5 + $0x28] sm:$0xff]
  %v2139 = vld [vmem:[%s5 + $0x30] sm:$0xff]
  %v2140 = vld [vmem:[%s5 + $0x38] sm:$0xff]
  %v2141 = vld [vmem:[%s5 + $0x40] sm:$0xff]
  %v2142 = vld [vmem:[%s5 + $0x48] sm:$0xff]
  %v2143 = vld [vmem:[%s5 + $0x50] sm:$0xff]
  %v2144 = vld [vmem:[%s5 + $0x58] sm:$0xff]
  %v2145 = vld [vmem:[%s5 + $0x60] sm:$0xff]
  %v2146 = vld [vmem:[%s5 + $0x68] sm:$0xff]
  %v2147 = vld [vmem:[%s5 + $0x70] sm:$0xff]
  %v2148 = vld [vmem:[%s5 + $0x78] sm:$0xff]
  %v2149 = vld [vmem:[%s5 + $0x80] sm:$0xff]
  %v2150 = vld [vmem:[%s5 + $0x88] sm:$0xff]
  %v2151 = vld [vmem:[%s5 + $0x90] sm:$0xff]
  %v2152 = vld [vmem:[%s5 + $0x98] sm:$0xff]
  %v2153 = vld [vmem:[%s5 + $0xa0] sm:$0xff]
  %v2154 = vld [vmem:[%s5 + $0xa8] sm:$0xff]
  %v2155 = vld [vmem:[%s5 + $0xb0] sm:$0xff]
  %v2156 = vld [vmem:[%s5 + $0xb8] sm:$0xff]
  %v2157 = vld [vmem:[%s5 + $0xc0] sm:$0xff]
  %v2158 = vld [vmem:[%s5 + $0xc8] sm:$0xff]
  %v2159 = vld [vmem:[%s5 + $0xd0] sm:$0xff]
  %v2160 = vld [vmem:[%s5 + $0xd8] sm:$0xff]
  %v2161 = vld [vmem:[%s5 + $0xe0] sm:$0xff]
  %v2162 = vld [vmem:[%s5 + $0xe8] sm:$0xff]
  %v2163 = vld [vmem:[%s5 + $0xf0] sm:$0xff]
  %v2164 = vld [vmem:[%s5 + $0xf8] sm:$0xff]
  %v2165 = vld [vmem:[%s5 + $0x100] sm:$0xff]
  %v2166 = vld [vmem:[%s5 + $0x108] sm:$0xff]
  %v2167 = vld [vmem:[%s5 + $0x110] sm:$0xff]
  %v2168 = vld [vmem:[%s5 + $0x118] sm:$0xff]
  %v2169 = vld [vmem:[%s5 + $0x120] sm:$0xff]
  %v2170 = vld [vmem:[%s5 + $0x128] sm:$0xff]
  %v2171 = vld [vmem:[%s5 + $0x130] sm:$0xff]
  %v2172 = vld [vmem:[%s5 + $0x138] sm:$0xff]
  %v2173 = vld [vmem:[%s5 + $0x140] sm:$0xff]
  %v2174 = vld [vmem:[%s5 + $0x148] sm:$0xff]
  %v2175 = vld [vmem:[%s5 + $0x150] sm:$0xff]
  %v2176 = vld [vmem:[%s5 + $0x158] sm:$0xff]
  %v2177 = vld [vmem:[%s5 + $0x160] sm:$0xff]
  %v2178 = vld [vmem:[%s5 + $0x168] sm:$0xff]
  %v2179 = vld [vmem:[%s5 + $0x170] sm:$0xff]
  %v2180 = vld [vmem:[%s5 + $0x178] sm:$0xff]
  %v2181 = vld [vmem:[%s5 + $0x180] sm:$0xff]
  %v2182 = vld [vmem:[%s5 + $0x188] sm:$0xff]
  %v2183 = vld [vmem:[%s5 + $0x190] sm:$0xff]
  %v2184 = vld [vmem:[%s5 + $0x198] sm:$0xff]
  %v2185 = vld [vmem:[%s5 + $0x1a0] sm:$0xff]
  %v2186 = vld [vmem:[%s5 + $0x1a8] sm:$0xff]
  %v2187 = vld [vmem:[%s5 + $0x1b0] sm:$0xff]
  %v2188 = vld [vmem:[%s5 + $0x1b8] sm:$0xff]
  %v2189 = vld [vmem:[%s5 + $0x1c0] sm:$0xff]
  %v2190 = vld [vmem:[%s5 + $0x1c8] sm:$0xff]
  %v2191 = vld [vmem:[%s5 + $0x1d0] sm:$0xff]
  %v2192 = vld [vmem:[%s5 + $0x1d8] sm:$0xff]
  %v2193 = vld [vmem:[%s5 + $0x1e0] sm:$0xff]
  %v2194 = vld [vmem:[%s5 + $0x1e8] sm:$0xff]
  %v2195 = vld [vmem:[%s5 + $0x1f0] sm:$0xff]
  %v2196 = vld [vmem:[%s5 + $0x1f8] sm:$0xff]
  %v2197 = vld [vmem:[%s6] sm:$0x3]
  %v2199 = vlaneseq
  %v2200 = vshrl.u32 %v2199, 7
  %v2201 = vsub.s32 0, %v2200
  %v2202 = vrot.slane %v2197, %v2201
  %v2203 = vlaneseq
  %v2204 = vshrl.u32 %v2203, 7
  %v2205 = vsub.s32 1, %v2204
  %v2206 = vrot.slane %v2197, %v2205
  %v2273 = vunpack.c.l.b16 %v2133
  %v2274 = vunpack.c.h.b16 %v2133
  %v2275 = vunpack.c.l.b16 %v2134
  %v2276 = vunpack.c.h.b16 %v2134
  %v2277 = vunpack.c.l.b16 %v2135
  %v2278 = vunpack.c.h.b16 %v2135
  %v2279 = vunpack.c.l.b16 %v2136
  %v2280 = vunpack.c.h.b16 %v2136
  %v2281 = vunpack.c.l.b16 %v2137
  %v2282 = vunpack.c.h.b16 %v2137
  %v2283 = vunpack.c.l.b16 %v2138
  %v2284 = vunpack.c.h.b16 %v2138
  %v2285 = vunpack.c.l.b16 %v2139
  %v2286 = vunpack.c.h.b16 %v2139
  %v2287 = vunpack.c.l.b16 %v2140
  %v2288 = vunpack.c.h.b16 %v2140
  %v2289 = vunpack.c.l.b16 %v2141
  %v2290 = vunpack.c.h.b16 %v2141
  %v2291 = vunpack.c.l.b16 %v2142
  %v2292 = vunpack.c.h.b16 %v2142
  %v2293 = vunpack.c.l.b16 %v2143
  %v2294 = vunpack.c.h.b16 %v2143
  %v2295 = vunpack.c.l.b16 %v2144
  %v2296 = vunpack.c.h.b16 %v2144
  %v2297 = vunpack.c.l.b16 %v2145
  %v2298 = vunpack.c.h.b16 %v2145
  %v2299 = vunpack.c.l.b16 %v2146
  %v2300 = vunpack.c.h.b16 %v2146
  %v2301 = vunpack.c.l.b16 %v2147
  %v2302 = vunpack.c.h.b16 %v2147
  %v2303 = vunpack.c.l.b16 %v2148
  %v2304 = vunpack.c.h.b16 %v2148
  %v2305 = vunpack.c.l.b16 %v2149
  %v2306 = vunpack.c.h.b16 %v2149
  %v2307 = vunpack.c.l.b16 %v2150
  %v2308 = vunpack.c.h.b16 %v2150
  %v2309 = vunpack.c.l.b16 %v2151
  %v2310 = vunpack.c.h.b16 %v2151
  %v2311 = vunpack.c.l.b16 %v2152
  %v2312 = vunpack.c.h.b16 %v2152
  %v2313 = vunpack.c.l.b16 %v2153
  %v2314 = vunpack.c.h.b16 %v2153
  %v2315 = vunpack.c.l.b16 %v2154
  %v2316 = vunpack.c.h.b16 %v2154
  %v2317 = vunpack.c.l.b16 %v2155
  %v2318 = vunpack.c.h.b16 %v2155
  %v2319 = vunpack.c.l.b16 %v2156
  %v2320 = vunpack.c.h.b16 %v2156
  %v2321 = vunpack.c.l.b16 %v2157
  %v2322 = vunpack.c.h.b16 %v2157
  %v2323 = vunpack.c.l.b16 %v2158
  %v2324 = vunpack.c.h.b16 %v2158
  %v2325 = vunpack.c.l.b16 %v2159
  %v2326 = vunpack.c.h.b16 %v2159
  %v2327 = vunpack.c.l.b16 %v2160
  %v2328 = vunpack.c.h.b16 %v2160
  %v2329 = vunpack.c.l.b16 %v2161
  %v2330 = vunpack.c.h.b16 %v2161
  %v2331 = vunpack.c.l.b16 %v2162
  %v2332 = vunpack.c.h.b16 %v2162
  %v2333 = vunpack.c.l.b16 %v2163
  %v2334 = vunpack.c.h.b16 %v2163
  %v2335 = vunpack.c.l.b16 %v2164
  %v2336 = vunpack.c.h.b16 %v2164
  %v2337 = vunpack.c.l.b16 %v2165
  %v2338 = vunpack.c.h.b16 %v2165
  %v2339 = vunpack.c.l.b16 %v2166
  %v2340 = vunpack.c.h.b16 %v2166
  %v2341 = vunpack.c.l.b16 %v2167
  %v2342 = vunpack.c.h.b16 %v2167
  %v2343 = vunpack.c.l.b16 %v2168
  %v2344 = vunpack.c.h.b16 %v2168
  %v2345 = vunpack.c.l.b16 %v2169
  %v2346 = vunpack.c.h.b16 %v2169
  %v2347 = vunpack.c.l.b16 %v2170
  %v2348 = vunpack.c.h.b16 %v2170
  %v2349 = vunpack.c.l.b16 %v2171
  %v2350 = vunpack.c.h.b16 %v2171
  %v2351 = vunpack.c.l.b16 %v2172
  %v2352 = vunpack.c.h.b16 %v2172
  %v2353 = vunpack.c.l.b16 %v2173
  %v2354 = vunpack.c.h.b16 %v2173
  %v2355 = vunpack.c.l.b16 %v2174
  %v2356 = vunpack.c.h.b16 %v2174
  %v2357 = vunpack.c.l.b16 %v2175
  %v2358 = vunpack.c.h.b16 %v2175
  %v2359 = vunpack.c.l.b16 %v2176
  %v2360 = vunpack.c.h.b16 %v2176
  %v2361 = vunpack.c.l.b16 %v2177
  %v2362 = vunpack.c.h.b16 %v2177
  %v2363 = vunpack.c.l.b16 %v2178
  %v2364 = vunpack.c.h.b16 %v2178
  %v2365 = vunpack.c.l.b16 %v2179
  %v2366 = vunpack.c.h.b16 %v2179
  %v2367 = vunpack.c.l.b16 %v2180
  %v2368 = vunpack.c.h.b16 %v2180
  %v2369 = vunpack.c.l.b16 %v2181
  %v2370 = vunpack.c.h.b16 %v2181
  %v2371 = vunpack.c.l.b16 %v2182
  %v2372 = vunpack.c.h.b16 %v2182
  %v2373 = vunpack.c.l.b16 %v2183
  %v2374 = vunpack.c.h.b16 %v2183
  %v2375 = vunpack.c.l.b16 %v2184
  %v2376 = vunpack.c.h.b16 %v2184
  %v2377 = vunpack.c.l.b16 %v2185
  %v2378 = vunpack.c.h.b16 %v2185
  %v2379 = vunpack.c.l.b16 %v2186
  %v2380 = vunpack.c.h.b16 %v2186
  %v2381 = vunpack.c.l.b16 %v2187
  %v2382 = vunpack.c.h.b16 %v2187
  %v2383 = vunpack.c.l.b16 %v2188
  %v2384 = vunpack.c.h.b16 %v2188
  %v2385 = vunpack.c.l.b16 %v2189
  %v2386 = vunpack.c.h.b16 %v2189
  %v2387 = vunpack.c.l.b16 %v2190
  %v2388 = vunpack.c.h.b16 %v2190
  %v2389 = vunpack.c.l.b16 %v2191
  %v2390 = vunpack.c.h.b16 %v2191
  %v2391 = vunpack.c.l.b16 %v2192
  %v2392 = vunpack.c.h.b16 %v2192
  %v2393 = vunpack.c.l.b16 %v2193
  %v2394 = vunpack.c.h.b16 %v2193
  %v2395 = vunpack.c.l.b16 %v2194
  %v2396 = vunpack.c.h.b16 %v2194
  %v2397 = vunpack.c.l.b16 %v2195
  %v2398 = vunpack.c.h.b16 %v2195
  %v2399 = vunpack.c.l.b16 %v2196
  %v2400 = vunpack.c.h.b16 %v2196
  %v2401 = vpack.c.b16 %v2275, %v2273
  %v2402 = vpack.c.b16 %v2276, %v2274
  %v2403 = vpack.c.b16 %v2279, %v2277
  %v2404 = vpack.c.b16 %v2280, %v2278
  %v2405 = vpack.c.b16 %v2283, %v2281
  %v2406 = vpack.c.b16 %v2284, %v2282
  %v2407 = vpack.c.b16 %v2287, %v2285
  %v2408 = vpack.c.b16 %v2288, %v2286
  %v2409 = vpack.c.b16 %v2291, %v2289
  %v2410 = vpack.c.b16 %v2292, %v2290
  %v2411 = vpack.c.b16 %v2295, %v2293
  %v2412 = vpack.c.b16 %v2296, %v2294
  %v2413 = vpack.c.b16 %v2299, %v2297
  %v2414 = vpack.c.b16 %v2300, %v2298
  %v2415 = vpack.c.b16 %v2303, %v2301
  %v2416 = vpack.c.b16 %v2304, %v2302
  %v2417 = vpack.c.b16 %v2307, %v2305
  %v2418 = vpack.c.b16 %v2308, %v2306
  %v2419 = vpack.c.b16 %v2311, %v2309
  %v2420 = vpack.c.b16 %v2312, %v2310
  %v2421 = vpack.c.b16 %v2315, %v2313
  %v2422 = vpack.c.b16 %v2316, %v2314
  %v2423 = vpack.c.b16 %v2319, %v2317
  %v2424 = vpack.c.b16 %v2320, %v2318
  %v2425 = vpack.c.b16 %v2323, %v2321
  %v2426 = vpack.c.b16 %v2324, %v2322
  %v2427 = vpack.c.b16 %v2327, %v2325
  %v2428 = vpack.c.b16 %v2328, %v2326
  %v2429 = vpack.c.b16 %v2331, %v2329
  %v2430 = vpack.c.b16 %v2332, %v2330
  %v2431 = vpack.c.b16 %v2335, %v2333
  %v2432 = vpack.c.b16 %v2336, %v2334
  %v2433 = vpack.c.b16 %v2339, %v2337
  %v2434 = vpack.c.b16 %v2340, %v2338
  %v2435 = vpack.c.b16 %v2343, %v2341
  %v2436 = vpack.c.b16 %v2344, %v2342
  %v2437 = vpack.c.b16 %v2347, %v2345
  %v2438 = vpack.c.b16 %v2348, %v2346
  %v2439 = vpack.c.b16 %v2351, %v2349
  %v2440 = vpack.c.b16 %v2352, %v2350
  %v2441 = vpack.c.b16 %v2355, %v2353
  %v2442 = vpack.c.b16 %v2356, %v2354
  %v2443 = vpack.c.b16 %v2359, %v2357
  %v2444 = vpack.c.b16 %v2360, %v2358
  %v2445 = vpack.c.b16 %v2363, %v2361
  %v2446 = vpack.c.b16 %v2364, %v2362
  %v2447 = vpack.c.b16 %v2367, %v2365
  %v2448 = vpack.c.b16 %v2368, %v2366
  %v2449 = vpack.c.b16 %v2371, %v2369
  %v2450 = vpack.c.b16 %v2372, %v2370
  %v2451 = vpack.c.b16 %v2375, %v2373
  %v2452 = vpack.c.b16 %v2376, %v2374
  %v2453 = vpack.c.b16 %v2379, %v2377
  %v2454 = vpack.c.b16 %v2380, %v2378
  %v2455 = vpack.c.b16 %v2383, %v2381
  %v2456 = vpack.c.b16 %v2384, %v2382
  %v2457 = vpack.c.b16 %v2387, %v2385
  %v2458 = vpack.c.b16 %v2388, %v2386
  %v2459 = vpack.c.b16 %v2391, %v2389
  %v2460 = vpack.c.b16 %v2392, %v2390
  %v2461 = vpack.c.b16 %v2395, %v2393
  %v2462 = vpack.c.b16 %v2396, %v2394
  %v2463 = vpack.c.b16 %v2399, %v2397
  %v2464 = vpack.c.b16 %v2400, %v2398
  %2529 = vmatprep.subr.bf16.mxu0 %v2416
  %2530 = vmatpush1.bf16.msra.mxu0 %v2415
  %2531 = vmatprep.subr.bf16.mxu0 %v2414
  %2532 = vmatpush1.bf16.msra.mxu0 %v2413
  %2533 = vmatprep.subr.bf16.mxu0 %v2412
  %2534 = vmatpush1.bf16.msra.mxu0 %v2411
  %2535 = vmatprep.subr.bf16.mxu0 %v2410
  %2536 = vmatpush1.bf16.msra.mxu0 %v2409
  %2537 = vmatprep.subr.bf16.mxu0 %v2408
  %2538 = vmatpush1.bf16.msra.mxu0 %v2407
  %2539 = vmatprep.subr.bf16.mxu0 %v2406
  %2540 = vmatpush1.bf16.msra.mxu0 %v2405
  %2541 = vmatprep.subr.bf16.mxu0 %v2404
  %2542 = vmatpush1.bf16.msra.mxu0 %v2403
  %2543 = vmatprep.subr.bf16.mxu0 %v2402
  %2544 = vmatpush1.bf16.msra.mxu0 %v2401
  %2545 = vmatprep.subr.bf16.mxu0 %v2432
  %2546 = vmatpush2.bf16.msra.mxu0 %v2431
  %2547 = vmatprep.subr.bf16.mxu0 %v2430
  %2548 = vmatpush2.bf16.msra.mxu0 %v2429
  %2549 = vmatprep.subr.bf16.mxu0 %v2428
  %2550 = vmatpush2.bf16.msra.mxu0 %v2427
  %2551 = vmatprep.subr.bf16.mxu0 %v2426
  %2552 = vmatpush2.bf16.msra.mxu0 %v2425
  %2553 = vmatprep.subr.bf16.mxu0 %v2424
  %2554 = vmatpush2.bf16.msra.mxu0 %v2423
  %2555 = vmatprep.subr.bf16.mxu0 %v2422
  %2556 = vmatpush2.bf16.msra.mxu0 %v2421
  %2557 = vmatprep.subr.bf16.mxu0 %v2420
  %2558 = vmatpush2.bf16.msra.mxu0 %v2419
  %2559 = vmatprep.subr.bf16.mxu0 %v2418
  %2560 = vmatpush2.bf16.msra.mxu0 %v2417
  %2561 = vmatprep.mubr.bf16.mxu0 %v2130
  %2562 = vmatmul.mubr.bf16.gmra.mxu0 %v2129
  %v2563 = vpop.f32.mrf.mxu0
  %v2564 = vadd.f32 %v2202, %v2563
  %v2565 = vpop.f32.mrf.mxu0
  %v2566 = vadd.f32 %v2206, %v2565
  %v2567 = vpop.f32.mrf.mxu0
  %v2568 = vpop.f32.mrf.mxu0
  %2569 = vdwg.mxu0
  %2570 = vmatprep.subr.bf16.mxu0 %v2448
  %2571 = vmatpush1.bf16.msra.mxu0 %v2447
  %2572 = vmatprep.subr.bf16.mxu0 %v2446
  %2573 = vmatpush1.bf16.msra.mxu0 %v2445
  %2574 = vmatprep.subr.bf16.mxu0 %v2444
  %2575 = vmatpush1.bf16.msra.mxu0 %v2443
  %2576 = vmatprep.subr.bf16.mxu0 %v2442
  %2577 = vmatpush1.bf16.msra.mxu0 %v2441
  %2578 = vmatprep.subr.bf16.mxu0 %v2440
  %2579 = vmatpush1.bf16.msra.mxu0 %v2439
  %2580 = vmatprep.subr.bf16.mxu0 %v2438
  %2581 = vmatpush1.bf16.msra.mxu0 %v2437
  %2582 = vmatprep.subr.bf16.mxu0 %v2436
  %2583 = vmatpush1.bf16.msra.mxu0 %v2435
  %2584 = vmatprep.subr.bf16.mxu0 %v2434
  %2585 = vmatpush1.bf16.msra.mxu0 %v2433
  %2586 = vmatprep.subr.bf16.mxu0 %v2464
  %2587 = vmatpush2.bf16.msra.mxu0 %v2463
  %2588 = vmatprep.subr.bf16.mxu0 %v2462
  %2589 = vmatpush2.bf16.msra.mxu0 %v2461
  %2590 = vmatprep.subr.bf16.mxu0 %v2460
  %2591 = vmatpush2.bf16.msra.mxu0 %v2459
  %2592 = vmatprep.subr.bf16.mxu0 %v2458
  %2593 = vmatpush2.bf16.msra.mxu0 %v2457
  %2594 = vmatprep.subr.bf16.mxu0 %v2456
  %2595 = vmatpush2.bf16.msra.mxu0 %v2455
  %2596 = vmatprep.subr.bf16.mxu0 %v2454
  %2597 = vmatpush2.bf16.msra.mxu0 %v2453
  %2598 = vmatprep.subr.bf16.mxu0 %v2452
  %2599 = vmatpush2.bf16.msra.mxu0 %v2451
  %2600 = vmatprep.subr.bf16.mxu0 %v2450
  %2601 = vmatpush2.bf16.msra.mxu0 %v2449
  %2602 = vmatprep.mubr.bf16.mxu0 %v2132
  %2603 = vmatmul.mubr.bf16.gmra.mxu0 %v2131
  %v2604 = vpop.f32.mrf.mxu0
  %v2605 = vadd.f32 %v2564, %v2604
  %v2606 = vpop.f32.mrf.mxu0
  %v2607 = vadd.f32 %v2566, %v2606
  %v2608 = vpop.f32.mrf.mxu0
  %v2609 = vpop.f32.mrf.mxu0
  %2610 = vdwg.mxu0
  %v2611 = vld [vmem:[%s7] sm:$0x3]
  %v2612 = vld [vmem:[%s8] sm:$0x3]
  %v2613 = vsel %vm1981, %v2605, 0.0
  %v2614 = vrot.slane %v2613, 4
  %v2615 = vadd.f32 %v2613, %v2614
  %v2616 = vrot.slane %v2615, 2
  %v2617 = vadd.f32 %v2615, %v2616
  %v2618 = vrot.slane %v2617, 1
  %v2619 = vadd.f32 %v2617, %v2618
  %v2620 = vsel %vm1981, %v2607, 0.0
  %v2621 = vrot.slane %v2620, 4
  %v2622 = vadd.f32 %v2620, %v2621
  %v2623 = vrot.slane %v2622, 2
  %v2624 = vadd.f32 %v2622, %v2623
  %v2625 = vrot.slane %v2624, 1
  %v2626 = vadd.f32 %v2624, %v2625
  %v2627 = vmul.f32 %v2619, %v2010
  %v2628 = vmul.f32 %v2626, %v2010
  %v2629 = vsub.f32 %v2605, %v2627
  %v2630 = vsub.f32 %v2607, %v2628
  %v2631 = vmul.f32 %v2629, %v2629
  %v2632 = vmul.f32 %v2630, %v2630
  %v2633 = vsel %vm1981, %v2631, 0.0
  %v2634 = vrot.slane %v2633, 4
  %v2635 = vadd.f32 %v2633, %v2634
  %v2636 = vrot.slane %v2635, 2
  %v2637 = vadd.f32 %v2635, %v2636
  %v2638 = vrot.slane %v2637, 1
  %v2639 = vadd.f32 %v2637, %v2638
  %v2640 = vsel %vm1981, %v2632, 0.0
  %v2641 = vrot.slane %v2640, 4
  %v2642 = vadd.f32 %v2640, %v2641
  %v2643 = vrot.slane %v2642, 2
  %v2644 = vadd.f32 %v2642, %v2643
  %v2645 = vrot.slane %v2644, 1
  %v2646 = vadd.f32 %v2644, %v2645
  %v2647 = vmul.f32 %v2639, %v2010
  %v2648 = vmul.f32 %v2646, %v2010
  %v2649 = vadd.f32 %v2647, 1e-05
  %v2650 = vadd.f32 %v2648, 1e-05
  %v2651 = vrsqrt.pop %v2649
  %v2652 = vrsqrt.pop %v2650
  %v2653 = vmul.f32 %v2629, %v2651
  %v2654 = vmul.f32 %v2630, %v2652
  %v2656 = vlaneseq
  %v2657 = vshrl.u32 %v2656, 7
  %v2658 = vsub.s32 0, %v2657
  %v2659 = vrot.slane %v2611, %v2658
  %v2660 = vlaneseq
  %v2661 = vshrl.u32 %v2660, 7
  %v2662 = vsub.s32 1, %v2661
  %v2663 = vrot.slane %v2611, %v2662
  %v2666 = vmul.f32 %v2653, %v2659
  %v2667 = vmul.f32 %v2654, %v2663
  %v2669 = vlaneseq
  %v2670 = vshrl.u32 %v2669, 7
  %v2671 = vsub.s32 0, %v2670
  %v2672 = vrot.slane %v2612, %v2671
  %v2673 = vlaneseq
  %v2674 = vshrl.u32 %v2673, 7
  %v2675 = vsub.s32 1, %v2674
  %v2676 = vrot.slane %v2612, %v2675
  %v2679 = vadd.f32 %v2666, %v2672
  %v2680 = vadd.f32 %v2667, %v2676
  %vm2681 = vcmp.gt.f32.partialorder %v2679, 0.0
  %vm2682 = vcmp.gt.f32.partialorder %v2680, 0.0
  %v2683 = vmul.f32 %v2679, 0.01
  %v2684 = vmul.f32 %v2680, 0.01
  %v2685 = vsel %vm2681, %v2679, %v2683
  %v2686 = vsel %vm2682, %v2680, %v2684
  %v2687 = vpack.c.bf16 %v2685, %v2685
  %v2688 = vpack.c.bf16 %v2686, %v2686
  %v2689 = vld [vmem:[%s9] sm:$0xf]
  %v2690 = vld [vmem:[%s9 + $0x4] sm:$0xf]
  %v2691 = vld [vmem:[%s9 + $0x8] sm:$0xf]
  %v2692 = vld [vmem:[%s9 + $0xc] sm:$0xf]
  %v2693 = vld [vmem:[%s9 + $0x10] sm:$0xf]
  %v2694 = vld [vmem:[%s9 + $0x14] sm:$0xf]
  %v2695 = vld [vmem:[%s9 + $0x18] sm:$0xf]
  %v2696 = vld [vmem:[%s9 + $0x1c] sm:$0xf]
  %v2697 = vld [vmem:[%s9 + $0x20] sm:$0xf]
  %v2698 = vld [vmem:[%s9 + $0x24] sm:$0xf]
  %v2699 = vld [vmem:[%s9 + $0x28] sm:$0xf]
  %v2700 = vld [vmem:[%s9 + $0x2c] sm:$0xf]
  %v2701 = vld [vmem:[%s9 + $0x30] sm:$0xf]
  %v2702 = vld [vmem:[%s9 + $0x34] sm:$0xf]
  %v2703 = vld [vmem:[%s9 + $0x38] sm:$0xf]
  %v2704 = vld [vmem:[%s9 + $0x3c] sm:$0xf]
  %v2705 = vld [vmem:[%s9 + $0x40] sm:$0xf]
  %v2706 = vld [vmem:[%s9 + $0x44] sm:$0xf]
  %v2707 = vld [vmem:[%s9 + $0x48] sm:$0xf]
  %v2708 = vld [vmem:[%s9 + $0x4c] sm:$0xf]
  %v2709 = vld [vmem:[%s9 + $0x50] sm:$0xf]
  %v2710 = vld [vmem:[%s9 + $0x54] sm:$0xf]
  %v2711 = vld [vmem:[%s9 + $0x58] sm:$0xf]
  %v2712 = vld [vmem:[%s9 + $0x5c] sm:$0xf]
  %v2713 = vld [vmem:[%s9 + $0x60] sm:$0xf]
  %v2714 = vld [vmem:[%s9 + $0x64] sm:$0xf]
  %v2715 = vld [vmem:[%s9 + $0x68] sm:$0xf]
  %v2716 = vld [vmem:[%s9 + $0x6c] sm:$0xf]
  %v2717 = vld [vmem:[%s9 + $0x70] sm:$0xf]
  %v2718 = vld [vmem:[%s9 + $0x74] sm:$0xf]
  %v2719 = vld [vmem:[%s9 + $0x78] sm:$0xf]
  %v2720 = vld [vmem:[%s9 + $0x7c] sm:$0xf]
  %v2721 = vld [vmem:[%s10] sm:$0x1]
  %v2723 = vlaneseq
  %v2724 = vshrl.u32 %v2723, 7
  %v2725 = vsub.s32 0, %v2724
  %v2726 = vrot.slane %v2721, %v2725
  %v2760 = vunpack.c.l.b16 %v2689
  %v2761 = vunpack.c.l.b16 %v2690
  %v2762 = vunpack.c.l.b16 %v2691
  %v2763 = vunpack.c.l.b16 %v2692
  %v2764 = vunpack.c.l.b16 %v2693
  %v2765 = vunpack.c.l.b16 %v2694
  %v2766 = vunpack.c.l.b16 %v2695
  %v2767 = vunpack.c.l.b16 %v2696
  %v2768 = vunpack.c.l.b16 %v2697
  %v2769 = vunpack.c.l.b16 %v2698
  %v2770 = vunpack.c.l.b16 %v2699
  %v2771 = vunpack.c.l.b16 %v2700
  %v2772 = vunpack.c.l.b16 %v2701
  %v2773 = vunpack.c.l.b16 %v2702
  %v2774 = vunpack.c.l.b16 %v2703
  %v2775 = vunpack.c.l.b16 %v2704
  %v2776 = vunpack.c.l.b16 %v2705
  %v2777 = vunpack.c.l.b16 %v2706
  %v2778 = vunpack.c.l.b16 %v2707
  %v2779 = vunpack.c.l.b16 %v2708
  %v2780 = vunpack.c.l.b16 %v2709
  %v2781 = vunpack.c.l.b16 %v2710
  %v2782 = vunpack.c.l.b16 %v2711
  %v2783 = vunpack.c.l.b16 %v2712
  %v2784 = vunpack.c.l.b16 %v2713
  %v2785 = vunpack.c.l.b16 %v2714
  %v2786 = vunpack.c.l.b16 %v2715
  %v2787 = vunpack.c.l.b16 %v2716
  %v2788 = vunpack.c.l.b16 %v2717
  %v2789 = vunpack.c.l.b16 %v2718
  %v2790 = vunpack.c.l.b16 %v2719
  %v2791 = vunpack.c.l.b16 %v2720
  %v2792 = vpack.c.b16 %v2761, %v2760
  %v2793 = vpack.c.b16 %v2763, %v2762
  %v2794 = vpack.c.b16 %v2765, %v2764
  %v2795 = vpack.c.b16 %v2767, %v2766
  %v2796 = vpack.c.b16 %v2769, %v2768
  %v2797 = vpack.c.b16 %v2771, %v2770
  %v2798 = vpack.c.b16 %v2773, %v2772
  %v2799 = vpack.c.b16 %v2775, %v2774
  %v2800 = vpack.c.b16 %v2777, %v2776
  %v2801 = vpack.c.b16 %v2779, %v2778
  %v2802 = vpack.c.b16 %v2781, %v2780
  %v2803 = vpack.c.b16 %v2783, %v2782
  %v2804 = vpack.c.b16 %v2785, %v2784
  %v2805 = vpack.c.b16 %v2787, %v2786
  %v2806 = vpack.c.b16 %v2789, %v2788
  %v2807 = vpack.c.b16 %v2791, %v2790
  %2824 = vmatprep.subr.bf16.mxu0 0
  %2825 = vmatpush1.bf16.msra.mxu0 %v2799
  %2826 = vmatprep.subr.bf16.mxu0 0
  %2827 = vmatpush1.bf16.msra.mxu0 %v2798
  %2828 = vmatprep.subr.bf16.mxu0 0
  %2829 = vmatpush1.bf16.msra.mxu0 %v2797
  %2830 = vmatprep.subr.bf16.mxu0 0
  %2831 = vmatpush1.bf16.msra.mxu0 %v2796
  %2832 = vmatprep.subr.bf16.mxu0 0
  %2833 = vmatpush1.bf16.msra.mxu0 %v2795
  %2834 = vmatprep.subr.bf16.mxu0 0
  %2835 = vmatpush1.bf16.msra.mxu0 %v2794
  %2836 = vmatprep.subr.bf16.mxu0 0
  %2837 = vmatpush1.bf16.msra.mxu0 %v2793
  %2838 = vmatprep.subr.bf16.mxu0 0
  %2839 = vmatpush1.bf16.msra.mxu0 %v2792
  %2840 = vmatprep.subr.bf16.mxu0 0
  %2841 = vmatpush2.bf16.msra.mxu0 %v2807
  %2842 = vmatprep.subr.bf16.mxu0 0
  %2843 = vmatpush2.bf16.msra.mxu0 %v2806
  %2844 = vmatprep.subr.bf16.mxu0 0
  %2845 = vmatpush2.bf16.msra.mxu0 %v2805
  %2846 = vmatprep.subr.bf16.mxu0 0
  %2847 = vmatpush2.bf16.msra.mxu0 %v2804
  %2848 = vmatprep.subr.bf16.mxu0 0
  %2849 = vmatpush2.bf16.msra.mxu0 %v2803
  %2850 = vmatprep.subr.bf16.mxu0 0
  %2851 = vmatpush2.bf16.msra.mxu0 %v2802
  %2852 = vmatprep.subr.bf16.mxu0 0
  %2853 = vmatpush2.bf16.msra.mxu0 %v2801
  %2854 = vmatprep.subr.bf16.mxu0 0
  %2855 = vmatpush2.bf16.msra.mxu0 %v2800
  %2856 = vmatprep.mubr.bf16.mxu0 %v2688
  %2857 = vmatmul.mubr.bf16.gmra.mxu0 %v2687
  %v2858 = vpop.f32.mrf.mxu0
  %v2859 = vadd.f32 %v2726, %v2858
  %v2860 = vpop.f32.mrf.mxu0
  %v2861 = vpop.f32.mrf.mxu0
  %v2862 = vpop.f32.mrf.mxu0
  %2863 = vdwg.mxu0
  %2864 = vst [vmem:[%s11] sm:$0x3] %v2859
  // Predicated region
  $region46: #{transform_net_forward.9} parent=0 // pred_check
    _
  $region47: #{transform_net_forward.9} parent=0 // pred_check_branch
    %2866 = sbr.rel (0) target = $region49
  $region48: #{transform_net_forward.9} parent=0 // pred_region
    _
  $region49: #{transform_net_forward.9} parent=0 // pred_fallthru
    _
  // Predicated region
  $region50: #{transform_net_forward.9} parent=0 // pred_check
    _
  $region51: #{transform_net_forward.9} parent=0 // pred_check_branch
    %2868 = sbr.rel (0) target = $region53
  $region52: #{transform_net_forward.9} parent=0 // pred_region
    _
  $region53: #{transform_net_forward.9} parent=0 // pred_fallthru
    _

</llo_original>
